<compile_context>
chip_gen: v7x
topology: tpu7x:2x2x1
jax: 0.10.0
libtpu: 0.0.40
codegen_flags: <defaults>
</compile_context>

<pallas_src>
import jax
import jax.numpy as jnp
from jax.experimental import pallas as pl
from jax.experimental.pallas import tpu as pltpu

_LANE = 128
_SUBLANE = 8


def _round_up(x, m):
    return ((x + m - 1) // m) * m


def _vmem_capacity_bytes():
    try:
        return int(pltpu.get_tpu_info().vmem_capacity_bytes)
    except Exception:
        return 64 * 1024 * 1024  # conservative fallback (v7x per-TC)


def _plan_tiling(B, K, O, x_itemsize, w_itemsize, out_itemsize):
    """Pick the batch tile TB and a VMEM limit.

    Budget ~60% of the chip's VMEM: double-buffered x and out tiles plus the
    (conservatively assumed double-buffered) lane-padded resident weight.
    Keep TB a multiple of 8, cap at 512 (diminishing returns past ~512 rows),
    and force >= 2 grid steps when B > 8 so v7x's two TensorCores both work.
    """
    vmem_cap = _vmem_capacity_bytes()
    budget = int(vmem_cap * 0.6)
    o_pad = _round_up(O, _LANE)  # O=32 lane-pads to 128 in VMEM
    fixed = 2 * K * o_pad * w_itemsize + 2 * o_pad * 4        # weight + bias
    per_row = 2 * K * x_itemsize + 2 * o_pad * out_itemsize   # x + out tiles
    avail = max(budget - fixed, per_row * _SUBLANE)
    tb_cap = max(_SUBLANE, (avail // per_row) // _SUBLANE * _SUBLANE)
    tb_cap = int(min(tb_cap, 512))

    if B <= _SUBLANE:
        tb = B  # full batch, single block (block dim == full array dim is ok)
    else:
        n_steps = max(2, pl.cdiv(B, tb_cap))  # >=2 steps for v7x megacore
        tb = min(_round_up(pl.cdiv(B, n_steps), _SUBLANE), tb_cap)
        tb = min(tb, _round_up(B, _SUBLANE))

    vmem_limit = int((fixed + tb * per_row) * 1.25) + (4 << 20)
    vmem_limit = max(vmem_limit, 32 << 20)
    vmem_limit = min(vmem_limit, vmem_cap)
    return int(tb), int(vmem_limit)


def _feature_extractor_kernel(x_ref, w_ref, b_ref, o_ref):
    # x_ref: (TB, K)   w_ref: (K, O) bf16 (already scaled by 1/HW)
    # b_ref: (1, O) f32   o_ref: (TB, O)
    x = x_ref[...]
    if x.dtype != jnp.bfloat16:
        x = x.astype(jnp.bfloat16)          # VPU cast; MXU runs bf16 single-pass
    acc = jnp.dot(x, w_ref[...], preferred_element_type=jnp.float32)
    logits = acc + b_ref[...].astype(jnp.float32)
    # Sigmoid on the EUP (separate bundle slot).
    o_ref[...] = jax.nn.sigmoid(logits).astype(o_ref.dtype)


def prepare_fc_params(w, b, H, W, *, weight_dtype=jnp.bfloat16):
    """One-time parameter prep (NOT on the per-call forward path).

    w: [C, O] (transpose of PyTorch's fc weight [O, C]);  b: [O].
    Folds the 1/HW of the GAP into the weight and expands it so that
    W_exp[c*HW + hw, o] = w[c, o] / HW, matching x.reshape(B, C*HW).
    """
    HW = H * W
    w_exp = jnp.repeat((w / HW).astype(weight_dtype), HW, axis=0)  # (C*HW, O)
    b2 = b.reshape(1, -1).astype(jnp.float32)                      # (1, O)
    return w_exp, b2


def feature_extractor_forward(x_nchw, w_exp, b2, *, batch_tile=None):
    """x_nchw: [B, C, H, W]; w_exp: [C*H*W, O] (from prepare_fc_params); b2: [1, O].

    Returns sigmoid(GAP(x) @ w + b) with shape [B, O].
    """
    B, C, H, W = x_nchw.shape
    K = C * H * W
    O = b2.shape[-1]
    assert w_exp.shape == (K, O), (w_exp.shape, (K, O))

    # NCHW reshape to [B, C*HW] is contiguous (free).
    x_flat = x_nchw.reshape(B, K)

    x_item = jnp.dtype(x_flat.dtype).itemsize
    w_item = jnp.dtype(w_exp.dtype).itemsize
    out_item = x_item
    tb, vmem_limit = _plan_tiling(B, K, O, x_item, w_item, out_item)
    if batch_tile is not None:
        tb = batch_tile
    grid = (pl.cdiv(B, tb),)

    cost = pl.CostEstimate(
        flops=2 * B * K * O,
        transcendentals=B * O,
        bytes_accessed=(B * K * x_item + K * O * w_item + 4 * O
                        + B * O * out_item),
    )

    # TODO(synk): output last dim is 32 (<128 lanes) so stores are masked
    # vst.msk; output bytes are negligible vs input here, so left as-is.
    out = pl.pallas_call(
        _feature_extractor_kernel,
        out_shape=jax.ShapeDtypeStruct((B, O), x_nchw.dtype),
        grid_spec=pltpu.PrefetchScalarGridSpec(
            num_scalar_prefetch=0,
            grid=grid,
            in_specs=[
                # Batch-tiled activations: double-buffered HBM->VMEM DMA.
                pl.BlockSpec((tb, K), lambda i: (i, 0)),
                # Weight / bias: same block every step -> stays resident.
                pl.BlockSpec((K, O), lambda i: (0, 0)),
                pl.BlockSpec((1, O), lambda i: (0, 0)),
            ],
            out_specs=pl.BlockSpec((tb, O), lambda i: (i, 0)),
        ),
        compiler_params=pltpu.CompilerParams(
            dimension_semantics=("parallel",),
            vmem_limit_bytes=vmem_limit,
        ),
        cost_estimate=cost,
    )(x_flat, w_exp, b2)
    return out


if __name__ == "__main__":
    # Small shapes consistent with the module: C channels feed the fc
    # (num_in = C, small stand-in for the default 1024), num_out = 32.
    # B=16 gives a 2-step "parallel" grid (TB=8) so both v7x TCs are exercised.
    B, C, H, W = 16, 256, 8, 8
    O = 32

    key = jax.random.PRNGKey(0)
    kx, kw, kb = jax.random.split(key, 3)
    x = jax.random.normal(kx, (B, C, H, W), dtype=jnp.float32)
    # PyTorch fc weight would be [O, C]; we store the transpose [C, O].
    w = jax.random.normal(kw, (C, O), dtype=jnp.float32) * 0.05
    b = jax.random.normal(kb, (O,), dtype=jnp.float32) * 0.05

    # One-time parameter prep (hoisted off the per-call forward path).
    w_exp, b2 = prepare_fc_params(w, b, H, W)

    fwd = jax.jit(feature_extractor_forward)
    out = jax.block_until_ready(fwd(x, w_exp, b2))

    # Pure-JAX reference (GAP -> fc -> sigmoid), full f32.
    pooled_ref = jnp.mean(x.reshape(B, C, H * W), axis=-1)
    ref = jax.nn.sigmoid(jnp.dot(pooled_ref, w) + b[None, :])
    assert out.shape == (B, O)
    # bf16 matmul operands (f32 accumulation) vs f32 reference: loosen tol.
    err = float(jnp.max(jnp.abs(out.astype(jnp.float32) - ref)))
    assert err < 2e-2, err

    print("KERNEL_OK")
</pallas_src>

<mosaic_0001>
module attributes {stable_mosaic.version = 11 : i64} {
  func.func @_feature_extractor_kernel(%arg0: i32, %arg1: memref<8x16384xf32, #tpu.memory_space<vmem>>, %arg2: memref<16384x32xbf16, #tpu.memory_space<vmem>>, %arg3: memref<1x32xf32, #tpu.memory_space<vmem>>, %arg4: memref<8x32xf32, #tpu.memory_space<vmem>>) attributes {dimension_semantics = [#tpu.dimension_semantics<parallel>], iteration_bounds = array<i64: 2>, scalar_prefetch = 0 : i64, scratch_operands = 0 : i64, tpu.core_type = #tpu.core_type<tc>, window_params = [{transform_indices = @transform_0, window_bounds = array<i64: 8, 16384>}, {pipeline_mode = #tpu.pipeline_mode<synchronous>, transform_indices = @transform_1, window_bounds = array<i64: 16384, 32>}, {pipeline_mode = #tpu.pipeline_mode<synchronous>, transform_indices = @transform_2, window_bounds = array<i64: 1, 32>}, {transform_indices = @transform_3, window_bounds = array<i64: 8, 32>}]} {
    %c0 = arith.constant 0 : index
    %c0_0 = arith.constant 0 : index
    %0 = vector.load %arg1[%c0, %c0_0] : memref<8x16384xf32, #tpu.memory_space<vmem>>, vector<8x16384xf32>
    %1 = arith.truncf %0 : vector<8x16384xf32> to vector<8x16384xbf16>
    %c0_1 = arith.constant 0 : index
    %c0_2 = arith.constant 0 : index
    %2 = vector.load %arg2[%c0_1, %c0_2] : memref<16384x32xbf16, #tpu.memory_space<vmem>>, vector<16384x32xbf16>
    %cst = arith.constant dense<0.000000e+00> : vector<8x32xf32>
    %3 = tpu.matmul %1, %2, %cst {dimension_numbers = #tpu.dot_dimension_numbers<[1], [0], [0], [1], [0, 0, 1, 1], [], []>} : vector<8x16384xbf16>, vector<16384x32xbf16>, vector<8x32xf32> -> vector<8x32xf32>
    %c0_3 = arith.constant 0 : index
    %c0_4 = arith.constant 0 : index
    %4 = vector.load %arg3[%c0_3, %c0_4] : memref<1x32xf32, #tpu.memory_space<vmem>>, vector<1x32xf32>
    %5 = vector.broadcast %4 : vector<1x32xf32> to vector<8x32xf32>
    %6 = arith.addf %3, %5 : vector<8x32xf32>
    %7 = arith.negf %6 : vector<8x32xf32>
    %8 = math.exp %7 : vector<8x32xf32>
    %cst_5 = arith.constant 1.000000e+00 : f32
    %9 = vector.broadcast %cst_5 : f32 to vector<8x32xf32>
    %10 = arith.addf %9, %8 : vector<8x32xf32>
    %11 = arith.divf %9, %10 : vector<8x32xf32>
    %c0_6 = arith.constant 0 : index
    %c0_7 = arith.constant 0 : index
    %12 = vector.load %arg4[%c0_6, %c0_7] : memref<8x32xf32, #tpu.memory_space<vmem>>, vector<8x32xf32>
    tpu.vector_store %arg4[%c0_6, %c0_7], %11 {strides = array<i32>} : memref<8x32xf32, #tpu.memory_space<vmem>>, vector<8x32xf32>,
    return
  }
  func.func @transform_0(%arg0: i32) -> (i32, i32) {
    %c0_i32 = arith.constant 0 : i32
    %c0_i32_0 = arith.constant 0 : i32
    return %arg0, %c0_i32 : i32, i32
  }
  func.func @transform_1(%arg0: i32) -> (i32, i32) {
    %c0_i32 = arith.constant 0 : i32
    %c0_i32_0 = arith.constant 0 : i32
    %c0_i32_1 = arith.constant 0 : i32
    return %c0_i32, %c0_i32_0 : i32, i32
  }
  func.func @transform_2(%arg0: i32) -> (i32, i32) {
    %c0_i32 = arith.constant 0 : i32
    %c0_i32_0 = arith.constant 0 : i32
    %c0_i32_1 = arith.constant 0 : i32
    return %c0_i32, %c0_i32_0 : i32, i32
  }
  func.func @transform_3(%arg0: i32) -> (i32, i32) {
    %c0_i32 = arith.constant 0 : i32
    %c0_i32_0 = arith.constant 0 : i32
    return %arg0, %c0_i32 : i32, i32
  }
}

</mosaic_0001>

<llo_original>
// kernel: feature_extractor_forward.1
$region0: #{feature_extractor_forward.1}
  #allocation0 [shape = 'u32[]', space=smem, size = 0x4, offset = 0x4, fixed_abs, tag = 'smem constant byte address 0x4 - core index']
  #allocation1 [shape = 'u32[144,128]{1,0:T(1,128)}', space=vmem, size = 0x12000, scoped, tag = 'internal scratch']
  %s0 = inlined_call_operand.vmem [shape: f32[16,16384], index: 0, kind: input, shape index: {}]
  %s1 = inlined_call_operand.vmem [shape: bf16[16384,32], index: 1, kind: input, shape index: {}]
  %s2 = inlined_call_operand.vmem [shape: f32[1,32], index: 2, kind: input, shape index: {}]
  %s3 = inlined_call_operand.hbm [shape: f32[16,32], index: 3, kind: output, shape index: {}]
  %s4 = sld [smem:[#allocation0]]
  $region45: #{feature_extractor_forward.1} parent=0
    _
  %s6 = ssub.s32 1, %s4
  %s7 = scalar_select 0, %s6, %s4
  $region1: #{feature_extractor_forward.1} parent=0
    #allocation2 [shape = 'u8[8192]{0}', space=vmem, size = 0x2000, scoped, tag = 'output window, operand 0']
    #allocation3 [shape = 's32[2]{0}', space=sflag, size = 0x8, scoped, tag = 'scoped memory for feature_extractor_forward.1']
    %8 = vsyncpa [#allocation3], 0
    %s9 = scalar_lea.sflag [#allocation3], 1
    %10 = vsyncpa %s9, 0
    loop: start=0, step=1, limit=4
    $region2: #{feature_extractor_forward.1} parent=1 // loop_pre_header
      _
    $region3: #{feature_extractor_forward.1} parent=1 // loop_header
      %s12 = sphi 0, %s16
      %p13 = scmp.ge.s32.totalorder %s12, 4
      %s22 = sphi 0, %s24
      %s25 = sphi 0, %s22
      %s26 = sphi 0, %s25
      %s42 = sphi 0, %s26
      %s46 = sphi 0, %s46
      %s48 = sphi 0, %s46
      %s49 = sphi 0, %s48
      %s63 = sphi 0, %s49
      %s67 = sphi 0, %s67
      %s69 = sphi 0, %s67
      %s70 = sphi 0, %s69
      %s84 = sphi 0, %s70
      %s90 = sphi 0, %s92
      %s93 = sphi 0, %s90
      %s94 = sphi 0, %s93
      %s110 = sphi 0, %s94
    $region4: #{feature_extractor_forward.1} parent=1 // loop_header_branch
      %15 = sbr.rel (%p13) target = $region8
    $region5: #{feature_extractor_forward.1} parent=1 // loop_body
      %s17 = ssub.s32 %s12, 1
      %s18 = ssub.s32 %s12, 2
      %s19 = sadd.s32 %s12, 1
      %s20 = ssub.s32 %s12, %s19
      %p21 = scmp.eq.s32.totalorder %s20, 0
      %s23 = sadd.s32 %s22, 1
      %s24 = scalar_select %p21, %s22, %s23
      %p27 = pneg %p21
      %p28 = scmp.eq.s32.totalorder %s12, 1
      %p29 = por %p27, %p28
      %p30 = scmp.ne.s32.totalorder %s22, %s25
      %p31 = scmp.eq.s32.totalorder %s12, 0
      %p32 = por %p30, %p31
      %p33 = scmp.ne.s32.totalorder %s22, %s25
      %p34 = scmp.eq.s32.totalorder %s17, 1
      %p35 = por %p33, %p34
      %p36 = scmp.ne.s32.totalorder %s25, %s26
      %p37 = scmp.eq.s32.totalorder %s17, 0
      %p38 = por %p36, %p37
      %p39 = scmp.ne.s32.totalorder %s25, %s26
      %p40 = scmp.eq.s32.totalorder %s18, 1
      %p41 = por %p39, %p40
      %p43 = scmp.ne.s32.totalorder %s26, %s42
      %p44 = scmp.eq.s32.totalorder %s18, 0
      %p45 = por %p43, %p44
      %s47 = sadd.s32 %s46, 1
      %p50 = scmp.eq.s32.totalorder %s12, 1
      %p51 = scmp.ne.s32.totalorder %s46, %s48
      %p52 = scmp.eq.s32.totalorder %s12, 0
      %p53 = por %p51, %p52
      %p54 = scmp.ne.s32.totalorder %s46, %s48
      %p55 = scmp.eq.s32.totalorder %s17, 1
      %p56 = por %p54, %p55
      %p57 = scmp.ne.s32.totalorder %s48, %s49
      %p58 = scmp.eq.s32.totalorder %s17, 0
      %p59 = por %p57, %p58
      %p60 = scmp.ne.s32.totalorder %s48, %s49
      %p61 = scmp.eq.s32.totalorder %s18, 1
      %p62 = por %p60, %p61
      %p64 = scmp.ne.s32.totalorder %s49, %s63
      %p65 = scmp.eq.s32.totalorder %s18, 0
      %p66 = por %p64, %p65
      %s68 = sadd.s32 %s67, 1
      %p71 = scmp.eq.s32.totalorder %s12, 1
      %p72 = scmp.ne.s32.totalorder %s67, %s69
      %p73 = scmp.eq.s32.totalorder %s12, 0
      %p74 = por %p72, %p73
      %p75 = scmp.ne.s32.totalorder %s67, %s69
      %p76 = scmp.eq.s32.totalorder %s17, 1
      %p77 = por %p75, %p76
      %p78 = scmp.ne.s32.totalorder %s69, %s70
      %p79 = scmp.eq.s32.totalorder %s17, 0
      %p80 = por %p78, %p79
      %p81 = scmp.ne.s32.totalorder %s69, %s70
      %p82 = scmp.eq.s32.totalorder %s18, 1
      %p83 = por %p81, %p82
      %p85 = scmp.ne.s32.totalorder %s70, %s84
      %p86 = scmp.eq.s32.totalorder %s18, 0
      %p87 = por %p85, %p86
      %s88 = ssub.s32 %s12, %s19
      %p89 = scmp.eq.s32.totalorder %s88, 0
      %s91 = sadd.s32 %s90, 1
      %s92 = scalar_select %p89, %s90, %s91
      %p95 = pneg %p89
      %p96 = scmp.eq.s32.totalorder %s12, 1
      %p97 = por %p95, %p96
      %p98 = scmp.ne.s32.totalorder %s90, %s93
      %p99 = scmp.eq.s32.totalorder %s12, 0
      %p100 = por %p98, %p99
      %p101 = scmp.ne.s32.totalorder %s90, %s93
      %p102 = scmp.eq.s32.totalorder %s17, 1
      %p103 = por %p101, %p102
      %p104 = scmp.ne.s32.totalorder %s93, %s94
      %p105 = scmp.eq.s32.totalorder %s17, 0
      %p106 = por %p104, %p105
      %p107 = scmp.ne.s32.totalorder %s93, %s94
      %p108 = scmp.eq.s32.totalorder %s18, 1
      %p109 = por %p107, %p108
      %p111 = scmp.ne.s32.totalorder %s94, %s110
      %p112 = scmp.eq.s32.totalorder %s18, 0
      %p113 = por %p111, %p112
      %p114 = scmp.le.s32.totalorder 1, %s12
      %p115 = scmp.lt.s32.totalorder %s12, 3
      %p116 = pnand %p114, %p115
      %p117 = pneg %p116
      // Predicated region
      $region9: #{feature_extractor_forward.1} parent=5 // pred_check
        _
      $region10: #{feature_extractor_forward.1} parent=5 // pred_check_branch
        %119 = sbr.rel (%p116) target = $region12
      $region11: #{feature_extractor_forward.1} parent=5 // pred_region
        %s120 = ssub.s32 %s12, 1
        // Predicated region
        $region13: #{feature_extractor_forward.1} parent=11 // pred_check
          %p121 = pneg %p59
        $region14: #{feature_extractor_forward.1} parent=11 // pred_check_branch
          %123 = sbr.rel (%p121) target = $region16
        $region15: #{feature_extractor_forward.1} parent=11 // pred_region
          _
        $region16: #{feature_extractor_forward.1} parent=11 // pred_fallthru
          _
        // Predicated region
        $region17: #{feature_extractor_forward.1} parent=11 // pred_check
          %p124 = pneg %p80
        $region18: #{feature_extractor_forward.1} parent=11 // pred_check_branch
          %126 = sbr.rel (%p124) target = $region20
        $region19: #{feature_extractor_forward.1} parent=11 // pred_region
          _
        $region20: #{feature_extractor_forward.1} parent=11 // pred_fallthru
          _
      $region12: #{feature_extractor_forward.1} parent=5 // pred_fallthru
        _
      %p127 = scmp.lt.s32.totalorder %s12, 2
      // Predicated region
      $region21: #{feature_extractor_forward.1} parent=5 // pred_check
        %p128 = pneg %p127
      $region22: #{feature_extractor_forward.1} parent=5 // pred_check_branch
        %130 = sbr.rel (%p128) target = $region24
      $region23: #{feature_extractor_forward.1} parent=5 // pred_region
        // Predicated region
        $region25: #{feature_extractor_forward.1} parent=23 // pred_check
          %p131 = pneg %p32
        $region26: #{feature_extractor_forward.1} parent=23 // pred_check_branch
          %133 = sbr.rel (%p131) target = $region28
        $region27: #{feature_extractor_forward.1} parent=23 // pred_region
          %p134 = scmp.lt.s32.totalorder %s12, 1
          %s135 = scalar_select %p134, %s12, 1
          %s136 = smul.addr %s135, 128
          %s137 = smul.addr %s136, 8
          %s138 = scalar_lea.vmem %s0, %s137
        $region28: #{feature_extractor_forward.1} parent=23 // pred_fallthru
          _
      $region24: #{feature_extractor_forward.1} parent=5 // pred_fallthru
        _
      %p139 = scmp.le.s32.totalorder 1, %s12
      %p140 = scmp.lt.s32.totalorder %s12, 3
      %p141 = pnand %p139, %p140
      %p142 = pneg %p141
      // Predicated region
      $region29: #{feature_extractor_forward.1} parent=5 // pred_check
        _
      $region30: #{feature_extractor_forward.1} parent=5 // pred_check_branch
        %144 = sbr.rel (%p141) target = $region32
      $region31: #{feature_extractor_forward.1} parent=5 // pred_region
        %s145 = ssub.s32 %s12, 1
        %p146 = scmp.lt.s32.totalorder %s17, 1
        %s147 = scalar_select %p146, %s17, 1
        %s148 = smul.addr %s147, 128
        %s149 = smul.addr %s148, 8
        %s150 = scalar_lea.vmem %s0, %s149
        %p151 = pneg %p38
        %p152 = pneg %p35
        %p153 = pneg %p59
        %p154 = pneg %p56
        %p155 = pneg %p80
        %p156 = pneg %p77
        %p157 = pneg %p106
        %p158 = pneg %p103
        %s159 = sand.u32 %s93, 1
        %s160 = scalar_lea.sflag [#allocation3], %s159
        %s161 = sand.u32 %s93, 1
        %s162 = smul.addr %s161, 8
        %s163 = scalar_lea.vmem [#allocation2], %s162
        %p164 = scmp.lt.s32.totalorder %s17, 1
        %s165 = scalar_select %p164, %s17, 1
        %s166 = smul.addr %s165, 128
        %s167 = smul.addr %s166, 8
        %s168 = scalar_lea.vmem %s0, %s167
        %v170 = vld [vmem:[%s168] sm:$0xff]
        %v171 = vld [vmem:[%s168 + $0x8] sm:$0xff]
        %v172 = vld [vmem:[%s168 + $0x10] sm:$0xff]
        %v173 = vld [vmem:[%s168 + $0x18] sm:$0xff]
        %v174 = vld [vmem:[%s168 + $0x20] sm:$0xff]
        %v175 = vld [vmem:[%s168 + $0x28] sm:$0xff]
        %v176 = vld [vmem:[%s168 + $0x30] sm:$0xff]
        %v177 = vld [vmem:[%s168 + $0x38] sm:$0xff]
        %v178 = vld [vmem:[%s168 + $0x40] sm:$0xff]
        %v179 = vld [vmem:[%s168 + $0x48] sm:$0xff]
        %v180 = vld [vmem:[%s168 + $0x50] sm:$0xff]
        %v181 = vld [vmem:[%s168 + $0x58] sm:$0xff]
        %v182 = vld [vmem:[%s168 + $0x60] sm:$0xff]
        %v183 = vld [vmem:[%s168 + $0x68] sm:$0xff]
        %v184 = vld [vmem:[%s168 + $0x70] sm:$0xff]
        %v185 = vld [vmem:[%s168 + $0x78] sm:$0xff]
        %v186 = vld [vmem:[%s168 + $0x80] sm:$0xff]
        %v187 = vld [vmem:[%s168 + $0x88] sm:$0xff]
        %v188 = vld [vmem:[%s168 + $0x90] sm:$0xff]
        %v189 = vld [vmem:[%s168 + $0x98] sm:$0xff]
        %v190 = vld [vmem:[%s168 + $0xa0] sm:$0xff]
        %v191 = vld [vmem:[%s168 + $0xa8] sm:$0xff]
        %v192 = vld [vmem:[%s168 + $0xb0] sm:$0xff]
        %v193 = vld [vmem:[%s168 + $0xb8] sm:$0xff]
        %v194 = vld [vmem:[%s168 + $0xc0] sm:$0xff]
        %v195 = vld [vmem:[%s168 + $0xc8] sm:$0xff]
        %v196 = vld [vmem:[%s168 + $0xd0] sm:$0xff]
        %v197 = vld [vmem:[%s168 + $0xd8] sm:$0xff]
        %v198 = vld [vmem:[%s168 + $0xe0] sm:$0xff]
        %v199 = vld [vmem:[%s168 + $0xe8] sm:$0xff]
        %v200 = vld [vmem:[%s168 + $0xf0] sm:$0xff]
        %v201 = vld [vmem:[%s168 + $0xf8] sm:$0xff]
        %v202 = vld [vmem:[%s168 + $0x100] sm:$0xff]
        %v203 = vld [vmem:[%s168 + $0x108] sm:$0xff]
        %v204 = vld [vmem:[%s168 + $0x110] sm:$0xff]
        %v205 = vld [vmem:[%s168 + $0x118] sm:$0xff]
        %v206 = vld [vmem:[%s168 + $0x120] sm:$0xff]
        %v207 = vld [vmem:[%s168 + $0x128] sm:$0xff]
        %v208 = vld [vmem:[%s168 + $0x130] sm:$0xff]
        %v209 = vld [vmem:[%s168 + $0x138] sm:$0xff]
        %v210 = vld [vmem:[%s168 + $0x140] sm:$0xff]
        %v211 = vld [vmem:[%s168 + $0x148] sm:$0xff]
        %v212 = vld [vmem:[%s168 + $0x150] sm:$0xff]
        %v213 = vld [vmem:[%s168 + $0x158] sm:$0xff]
        %v214 = vld [vmem:[%s168 + $0x160] sm:$0xff]
        %v215 = vld [vmem:[%s168 + $0x168] sm:$0xff]
        %v216 = vld [vmem:[%s168 + $0x170] sm:$0xff]
        %v217 = vld [vmem:[%s168 + $0x178] sm:$0xff]
        %v218 = vld [vmem:[%s168 + $0x180] sm:$0xff]
        %v219 = vld [vmem:[%s168 + $0x188] sm:$0xff]
        %v220 = vld [vmem:[%s168 + $0x190] sm:$0xff]
        %v221 = vld [vmem:[%s168 + $0x198] sm:$0xff]
        %v222 = vld [vmem:[%s168 + $0x1a0] sm:$0xff]
        %v223 = vld [vmem:[%s168 + $0x1a8] sm:$0xff]
        %v224 = vld [vmem:[%s168 + $0x1b0] sm:$0xff]
        %v225 = vld [vmem:[%s168 + $0x1b8] sm:$0xff]
        %v226 = vld [vmem:[%s168 + $0x1c0] sm:$0xff]
        %v227 = vld [vmem:[%s168 + $0x1c8] sm:$0xff]
        %v228 = vld [vmem:[%s168 + $0x1d0] sm:$0xff]
        %v229 = vld [vmem:[%s168 + $0x1d8] sm:$0xff]
        %v230 = vld [vmem:[%s168 + $0x1e0] sm:$0xff]
        %v231 = vld [vmem:[%s168 + $0x1e8] sm:$0xff]
        %v232 = vld [vmem:[%s168 + $0x1f0] sm:$0xff]
        %v233 = vld [vmem:[%s168 + $0x1f8] sm:$0xff]
        %v234 = vld [vmem:[%s168 + $0x200] sm:$0xff]
        %v235 = vld [vmem:[%s168 + $0x208] sm:$0xff]
        %v236 = vld [vmem:[%s168 + $0x210] sm:$0xff]
        %v237 = vld [vmem:[%s168 + $0x218] sm:$0xff]
        %v238 = vld [vmem:[%s168 + $0x220] sm:$0xff]
        %v239 = vld [vmem:[%s168 + $0x228] sm:$0xff]
        %v240 = vld [vmem:[%s168 + $0x230] sm:$0xff]
        %v241 = vld [vmem:[%s168 + $0x238] sm:$0xff]
        %v242 = vld [vmem:[%s168 + $0x240] sm:$0xff]
        %v243 = vld [vmem:[%s168 + $0x248] sm:$0xff]
        %v244 = vld [vmem:[%s168 + $0x250] sm:$0xff]
        %v245 = vld [vmem:[%s168 + $0x258] sm:$0xff]
        %v246 = vld [vmem:[%s168 + $0x260] sm:$0xff]
        %v247 = vld [vmem:[%s168 + $0x268] sm:$0xff]
        %v248 = vld [vmem:[%s168 + $0x270] sm:$0xff]
        %v249 = vld [vmem:[%s168 + $0x278] sm:$0xff]
        %v250 = vld [vmem:[%s168 + $0x280] sm:$0xff]
        %v251 = vld [vmem:[%s168 + $0x288] sm:$0xff]
        %v252 = vld [vmem:[%s168 + $0x290] sm:$0xff]
        %v253 = vld [vmem:[%s168 + $0x298] sm:$0xff]
        %v254 = vld [vmem:[%s168 + $0x2a0] sm:$0xff]
        %v255 = vld [vmem:[%s168 + $0x2a8] sm:$0xff]
        %v256 = vld [vmem:[%s168 + $0x2b0] sm:$0xff]
        %v257 = vld [vmem:[%s168 + $0x2b8] sm:$0xff]
        %v258 = vld [vmem:[%s168 + $0x2c0] sm:$0xff]
        %v259 = vld [vmem:[%s168 + $0x2c8] sm:$0xff]
        %v260 = vld [vmem:[%s168 + $0x2d0] sm:$0xff]
        %v261 = vld [vmem:[%s168 + $0x2d8] sm:$0xff]
        %v262 = vld [vmem:[%s168 + $0x2e0] sm:$0xff]
        %v263 = vld [vmem:[%s168 + $0x2e8] sm:$0xff]
        %v264 = vld [vmem:[%s168 + $0x2f0] sm:$0xff]
        %v265 = vld [vmem:[%s168 + $0x2f8] sm:$0xff]
        %v266 = vld [vmem:[%s168 + $0x300] sm:$0xff]
        %v267 = vld [vmem:[%s168 + $0x308] sm:$0xff]
        %v268 = vld [vmem:[%s168 + $0x310] sm:$0xff]
        %v269 = vld [vmem:[%s168 + $0x318] sm:$0xff]
        %v270 = vld [vmem:[%s168 + $0x320] sm:$0xff]
        %v271 = vld [vmem:[%s168 + $0x328] sm:$0xff]
        %v272 = vld [vmem:[%s168 + $0x330] sm:$0xff]
        %v273 = vld [vmem:[%s168 + $0x338] sm:$0xff]
        %v274 = vld [vmem:[%s168 + $0x340] sm:$0xff]
        %v275 = vld [vmem:[%s168 + $0x348] sm:$0xff]
        %v276 = vld [vmem:[%s168 + $0x350] sm:$0xff]
        %v277 = vld [vmem:[%s168 + $0x358] sm:$0xff]
        %v278 = vld [vmem:[%s168 + $0x360] sm:$0xff]
        %v279 = vld [vmem:[%s168 + $0x368] sm:$0xff]
        %v280 = vld [vmem:[%s168 + $0x370] sm:$0xff]
        %v281 = vld [vmem:[%s168 + $0x378] sm:$0xff]
        %v282 = vld [vmem:[%s168 + $0x380] sm:$0xff]
        %v283 = vld [vmem:[%s168 + $0x388] sm:$0xff]
        %v284 = vld [vmem:[%s168 + $0x390] sm:$0xff]
        %v285 = vld [vmem:[%s168 + $0x398] sm:$0xff]
        %v286 = vld [vmem:[%s168 + $0x3a0] sm:$0xff]
        %v287 = vld [vmem:[%s168 + $0x3a8] sm:$0xff]
        %v288 = vld [vmem:[%s168 + $0x3b0] sm:$0xff]
        %v289 = vld [vmem:[%s168 + $0x3b8] sm:$0xff]
        %v290 = vld [vmem:[%s168 + $0x3c0] sm:$0xff]
        %v291 = vld [vmem:[%s168 + $0x3c8] sm:$0xff]
        %v292 = vld [vmem:[%s168 + $0x3d0] sm:$0xff]
        %v293 = vld [vmem:[%s168 + $0x3d8] sm:$0xff]
        %v294 = vld [vmem:[%s168 + $0x3e0] sm:$0xff]
        %v295 = vld [vmem:[%s168 + $0x3e8] sm:$0xff]
        %v296 = vld [vmem:[%s168 + $0x3f0] sm:$0xff]
        %v297 = vld [vmem:[%s168 + $0x3f8] sm:$0xff]
        %v298 = vpack.c.bf16 %v170, %v170
        %v299 = vpack.c.bf16 %v171, %v171
        %v300 = vpack.c.bf16 %v172, %v172
        %v301 = vpack.c.bf16 %v173, %v173
        %v302 = vpack.c.bf16 %v174, %v174
        %v303 = vpack.c.bf16 %v175, %v175
        %v304 = vpack.c.bf16 %v176, %v176
        %v305 = vpack.c.bf16 %v177, %v177
        %v306 = vpack.c.bf16 %v178, %v178
        %v307 = vpack.c.bf16 %v179, %v179
        %v308 = vpack.c.bf16 %v180, %v180
        %v309 = vpack.c.bf16 %v181, %v181
        %v310 = vpack.c.bf16 %v182, %v182
        %v311 = vpack.c.bf16 %v183, %v183
        %v312 = vpack.c.bf16 %v184, %v184
        %v313 = vpack.c.bf16 %v185, %v185
        %v314 = vpack.c.bf16 %v186, %v186
        %v315 = vpack.c.bf16 %v187, %v187
        %v316 = vpack.c.bf16 %v188, %v188
        %v317 = vpack.c.bf16 %v189, %v189
        %v318 = vpack.c.bf16 %v190, %v190
        %v319 = vpack.c.bf16 %v191, %v191
        %v320 = vpack.c.bf16 %v192, %v192
        %v321 = vpack.c.bf16 %v193, %v193
        %v322 = vpack.c.bf16 %v194, %v194
        %v323 = vpack.c.bf16 %v195, %v195
        %v324 = vpack.c.bf16 %v196, %v196
        %v325 = vpack.c.bf16 %v197, %v197
        %v326 = vpack.c.bf16 %v198, %v198
        %v327 = vpack.c.bf16 %v199, %v199
        %v328 = vpack.c.bf16 %v200, %v200
        %v329 = vpack.c.bf16 %v201, %v201
        %v330 = vpack.c.bf16 %v202, %v202
        %v331 = vpack.c.bf16 %v203, %v203
        %v332 = vpack.c.bf16 %v204, %v204
        %v333 = vpack.c.bf16 %v205, %v205
        %v334 = vpack.c.bf16 %v206, %v206
        %v335 = vpack.c.bf16 %v207, %v207
        %v336 = vpack.c.bf16 %v208, %v208
        %v337 = vpack.c.bf16 %v209, %v209
        %v338 = vpack.c.bf16 %v210, %v210
        %v339 = vpack.c.bf16 %v211, %v211
        %v340 = vpack.c.bf16 %v212, %v212
        %v341 = vpack.c.bf16 %v213, %v213
        %v342 = vpack.c.bf16 %v214, %v214
        %v343 = vpack.c.bf16 %v215, %v215
        %v344 = vpack.c.bf16 %v216, %v216
        %v345 = vpack.c.bf16 %v217, %v217
        %v346 = vpack.c.bf16 %v218, %v218
        %v347 = vpack.c.bf16 %v219, %v219
        %v348 = vpack.c.bf16 %v220, %v220
        %v349 = vpack.c.bf16 %v221, %v221
        %v350 = vpack.c.bf16 %v222, %v222
        %v351 = vpack.c.bf16 %v223, %v223
        %v352 = vpack.c.bf16 %v224, %v224
        %v353 = vpack.c.bf16 %v225, %v225
        %v354 = vpack.c.bf16 %v226, %v226
        %v355 = vpack.c.bf16 %v227, %v227
        %v356 = vpack.c.bf16 %v228, %v228
        %v357 = vpack.c.bf16 %v229, %v229
        %v358 = vpack.c.bf16 %v230, %v230
        %v359 = vpack.c.bf16 %v231, %v231
        %v360 = vpack.c.bf16 %v232, %v232
        %v361 = vpack.c.bf16 %v233, %v233
        %v362 = vpack.c.bf16 %v234, %v234
        %v363 = vpack.c.bf16 %v235, %v235
        %v364 = vpack.c.bf16 %v236, %v236
        %v365 = vpack.c.bf16 %v237, %v237
        %v366 = vpack.c.bf16 %v238, %v238
        %v367 = vpack.c.bf16 %v239, %v239
        %v368 = vpack.c.bf16 %v240, %v240
        %v369 = vpack.c.bf16 %v241, %v241
        %v370 = vpack.c.bf16 %v242, %v242
        %v371 = vpack.c.bf16 %v243, %v243
        %v372 = vpack.c.bf16 %v244, %v244
        %v373 = vpack.c.bf16 %v245, %v245
        %v374 = vpack.c.bf16 %v246, %v246
        %v375 = vpack.c.bf16 %v247, %v247
        %v376 = vpack.c.bf16 %v248, %v248
        %v377 = vpack.c.bf16 %v249, %v249
        %v378 = vpack.c.bf16 %v250, %v250
        %v379 = vpack.c.bf16 %v251, %v251
        %v380 = vpack.c.bf16 %v252, %v252
        %v381 = vpack.c.bf16 %v253, %v253
        %v382 = vpack.c.bf16 %v254, %v254
        %v383 = vpack.c.bf16 %v255, %v255
        %v384 = vpack.c.bf16 %v256, %v256
        %v385 = vpack.c.bf16 %v257, %v257
        %v386 = vpack.c.bf16 %v258, %v258
        %v387 = vpack.c.bf16 %v259, %v259
        %v388 = vpack.c.bf16 %v260, %v260
        %v389 = vpack.c.bf16 %v261, %v261
        %v390 = vpack.c.bf16 %v262, %v262
        %v391 = vpack.c.bf16 %v263, %v263
        %v392 = vpack.c.bf16 %v264, %v264
        %v393 = vpack.c.bf16 %v265, %v265
        %v394 = vpack.c.bf16 %v266, %v266
        %v395 = vpack.c.bf16 %v267, %v267
        %v396 = vpack.c.bf16 %v268, %v268
        %v397 = vpack.c.bf16 %v269, %v269
        %v398 = vpack.c.bf16 %v270, %v270
        %v399 = vpack.c.bf16 %v271, %v271
        %v400 = vpack.c.bf16 %v272, %v272
        %v401 = vpack.c.bf16 %v273, %v273
        %v402 = vpack.c.bf16 %v274, %v274
        %v403 = vpack.c.bf16 %v275, %v275
        %v404 = vpack.c.bf16 %v276, %v276
        %v405 = vpack.c.bf16 %v277, %v277
        %v406 = vpack.c.bf16 %v278, %v278
        %v407 = vpack.c.bf16 %v279, %v279
        %v408 = vpack.c.bf16 %v280, %v280
        %v409 = vpack.c.bf16 %v281, %v281
        %v410 = vpack.c.bf16 %v282, %v282
        %v411 = vpack.c.bf16 %v283, %v283
        %v412 = vpack.c.bf16 %v284, %v284
        %v413 = vpack.c.bf16 %v285, %v285
        %v414 = vpack.c.bf16 %v286, %v286
        %v415 = vpack.c.bf16 %v287, %v287
        %v416 = vpack.c.bf16 %v288, %v288
        %v417 = vpack.c.bf16 %v289, %v289
        %v418 = vpack.c.bf16 %v290, %v290
        %v419 = vpack.c.bf16 %v291, %v291
        %v420 = vpack.c.bf16 %v292, %v292
        %v421 = vpack.c.bf16 %v293, %v293
        %v422 = vpack.c.bf16 %v294, %v294
        %v423 = vpack.c.bf16 %v295, %v295
        %v424 = vpack.c.bf16 %v296, %v296
        %v425 = vpack.c.bf16 %v297, %v297
        %v426 = vld [vmem:[%s1] sm:$0xf]
        %v427 = vld [vmem:[%s1 + $0x4] sm:$0xf]
        %v428 = vld [vmem:[%s1 + $0x8] sm:$0xf]
        %v429 = vld [vmem:[%s1 + $0xc] sm:$0xf]
        %v430 = vld [vmem:[%s1 + $0x10] sm:$0xf]
        %v431 = vld [vmem:[%s1 + $0x14] sm:$0xf]
        %v432 = vld [vmem:[%s1 + $0x18] sm:$0xf]
        %v433 = vld [vmem:[%s1 + $0x1c] sm:$0xf]
        %v434 = vld [vmem:[%s1 + $0x20] sm:$0xf]
        %v435 = vld [vmem:[%s1 + $0x24] sm:$0xf]
        %v436 = vld [vmem:[%s1 + $0x28] sm:$0xf]
        %v437 = vld [vmem:[%s1 + $0x2c] sm:$0xf]
        %v438 = vld [vmem:[%s1 + $0x30] sm:$0xf]
        %v439 = vld [vmem:[%s1 + $0x34] sm:$0xf]
        %v440 = vld [vmem:[%s1 + $0x38] sm:$0xf]
        %v441 = vld [vmem:[%s1 + $0x3c] sm:$0xf]
        %v442 = vld [vmem:[%s1 + $0x40] sm:$0xf]
        %v443 = vld [vmem:[%s1 + $0x44] sm:$0xf]
        %v444 = vld [vmem:[%s1 + $0x48] sm:$0xf]
        %v445 = vld [vmem:[%s1 + $0x4c] sm:$0xf]
        %v446 = vld [vmem:[%s1 + $0x50] sm:$0xf]
        %v447 = vld [vmem:[%s1 + $0x54] sm:$0xf]
        %v448 = vld [vmem:[%s1 + $0x58] sm:$0xf]
        %v449 = vld [vmem:[%s1 + $0x5c] sm:$0xf]
        %v450 = vld [vmem:[%s1 + $0x60] sm:$0xf]
        %v451 = vld [vmem:[%s1 + $0x64] sm:$0xf]
        %v452 = vld [vmem:[%s1 + $0x68] sm:$0xf]
        %v453 = vld [vmem:[%s1 + $0x6c] sm:$0xf]
        %v454 = vld [vmem:[%s1 + $0x70] sm:$0xf]
        %v455 = vld [vmem:[%s1 + $0x74] sm:$0xf]
        %v456 = vld [vmem:[%s1 + $0x78] sm:$0xf]
        %v457 = vld [vmem:[%s1 + $0x7c] sm:$0xf]
        %v458 = vld [vmem:[%s1 + $0x80] sm:$0xf]
        %v459 = vld [vmem:[%s1 + $0x84] sm:$0xf]
        %v460 = vld [vmem:[%s1 + $0x88] sm:$0xf]
        %v461 = vld [vmem:[%s1 + $0x8c] sm:$0xf]
        %v462 = vld [vmem:[%s1 + $0x90] sm:$0xf]
        %v463 = vld [vmem:[%s1 + $0x94] sm:$0xf]
        %v464 = vld [vmem:[%s1 + $0x98] sm:$0xf]
        %v465 = vld [vmem:[%s1 + $0x9c] sm:$0xf]
        %v466 = vld [vmem:[%s1 + $0xa0] sm:$0xf]
        %v467 = vld [vmem:[%s1 + $0xa4] sm:$0xf]
        %v468 = vld [vmem:[%s1 + $0xa8] sm:$0xf]
        %v469 = vld [vmem:[%s1 + $0xac] sm:$0xf]
        %v470 = vld [vmem:[%s1 + $0xb0] sm:$0xf]
        %v471 = vld [vmem:[%s1 + $0xb4] sm:$0xf]
        %v472 = vld [vmem:[%s1 + $0xb8] sm:$0xf]
        %v473 = vld [vmem:[%s1 + $0xbc] sm:$0xf]
        %v474 = vld [vmem:[%s1 + $0xc0] sm:$0xf]
        %v475 = vld [vmem:[%s1 + $0xc4] sm:$0xf]
        %v476 = vld [vmem:[%s1 + $0xc8] sm:$0xf]
        %v477 = vld [vmem:[%s1 + $0xcc] sm:$0xf]
        %v478 = vld [vmem:[%s1 + $0xd0] sm:$0xf]
        %v479 = vld [vmem:[%s1 + $0xd4] sm:$0xf]
        %v480 = vld [vmem:[%s1 + $0xd8] sm:$0xf]
        %v481 = vld [vmem:[%s1 + $0xdc] sm:$0xf]
        %v482 = vld [vmem:[%s1 + $0xe0] sm:$0xf]
        %v483 = vld [vmem:[%s1 + $0xe4] sm:$0xf]
        %v484 = vld [vmem:[%s1 + $0xe8] sm:$0xf]
        %v485 = vld [vmem:[%s1 + $0xec] sm:$0xf]
        %v486 = vld [vmem:[%s1 + $0xf0] sm:$0xf]
        %v487 = vld [vmem:[%s1 + $0xf4] sm:$0xf]
        %v488 = vld [vmem:[%s1 + $0xf8] sm:$0xf]
        %v489 = vld [vmem:[%s1 + $0xfc] sm:$0xf]
        %v490 = vld [vmem:[%s1 + $0x100] sm:$0xf]
        %v491 = vld [vmem:[%s1 + $0x104] sm:$0xf]
        %v492 = vld [vmem:[%s1 + $0x108] sm:$0xf]
        %v493 = vld [vmem:[%s1 + $0x10c] sm:$0xf]
        %v494 = vld [vmem:[%s1 + $0x110] sm:$0xf]
        %v495 = vld [vmem:[%s1 + $0x114] sm:$0xf]
        %v496 = vld [vmem:[%s1 + $0x118] sm:$0xf]
        %v497 = vld [vmem:[%s1 + $0x11c] sm:$0xf]
        %v498 = vld [vmem:[%s1 + $0x120] sm:$0xf]
        %v499 = vld [vmem:[%s1 + $0x124] sm:$0xf]
        %v500 = vld [vmem:[%s1 + $0x128] sm:$0xf]
        %v501 = vld [vmem:[%s1 + $0x12c] sm:$0xf]
        %v502 = vld [vmem:[%s1 + $0x130] sm:$0xf]
        %v503 = vld [vmem:[%s1 + $0x134] sm:$0xf]
        %v504 = vld [vmem:[%s1 + $0x138] sm:$0xf]
        %v505 = vld [vmem:[%s1 + $0x13c] sm:$0xf]
        %v506 = vld [vmem:[%s1 + $0x140] sm:$0xf]
        %v507 = vld [vmem:[%s1 + $0x144] sm:$0xf]
        %v508 = vld [vmem:[%s1 + $0x148] sm:$0xf]
        %v509 = vld [vmem:[%s1 + $0x14c] sm:$0xf]
        %v510 = vld [vmem:[%s1 + $0x150] sm:$0xf]
        %v511 = vld [vmem:[%s1 + $0x154] sm:$0xf]
        %v512 = vld [vmem:[%s1 + $0x158] sm:$0xf]
        %v513 = vld [vmem:[%s1 + $0x15c] sm:$0xf]
        %v514 = vld [vmem:[%s1 + $0x160] sm:$0xf]
        %v515 = vld [vmem:[%s1 + $0x164] sm:$0xf]
        %v516 = vld [vmem:[%s1 + $0x168] sm:$0xf]
        %v517 = vld [vmem:[%s1 + $0x16c] sm:$0xf]
        %v518 = vld [vmem:[%s1 + $0x170] sm:$0xf]
        %v519 = vld [vmem:[%s1 + $0x174] sm:$0xf]
        %v520 = vld [vmem:[%s1 + $0x178] sm:$0xf]
        %v521 = vld [vmem:[%s1 + $0x17c] sm:$0xf]
        %v522 = vld [vmem:[%s1 + $0x180] sm:$0xf]
        %v523 = vld [vmem:[%s1 + $0x184] sm:$0xf]
        %v524 = vld [vmem:[%s1 + $0x188] sm:$0xf]
        %v525 = vld [vmem:[%s1 + $0x18c] sm:$0xf]
        %v526 = vld [vmem:[%s1 + $0x190] sm:$0xf]
        %v527 = vld [vmem:[%s1 + $0x194] sm:$0xf]
        %v528 = vld [vmem:[%s1 + $0x198] sm:$0xf]
        %v529 = vld [vmem:[%s1 + $0x19c] sm:$0xf]
        %v530 = vld [vmem:[%s1 + $0x1a0] sm:$0xf]
        %v531 = vld [vmem:[%s1 + $0x1a4] sm:$0xf]
        %v532 = vld [vmem:[%s1 + $0x1a8] sm:$0xf]
        %v533 = vld [vmem:[%s1 + $0x1ac] sm:$0xf]
        %v534 = vld [vmem:[%s1 + $0x1b0] sm:$0xf]
        %v535 = vld [vmem:[%s1 + $0x1b4] sm:$0xf]
        %v536 = vld [vmem:[%s1 + $0x1b8] sm:$0xf]
        %v537 = vld [vmem:[%s1 + $0x1bc] sm:$0xf]
        %v538 = vld [vmem:[%s1 + $0x1c0] sm:$0xf]
        %v539 = vld [vmem:[%s1 + $0x1c4] sm:$0xf]
        %v540 = vld [vmem:[%s1 + $0x1c8] sm:$0xf]
        %v541 = vld [vmem:[%s1 + $0x1cc] sm:$0xf]
        %v542 = vld [vmem:[%s1 + $0x1d0] sm:$0xf]
        %v543 = vld [vmem:[%s1 + $0x1d4] sm:$0xf]
        %v544 = vld [vmem:[%s1 + $0x1d8] sm:$0xf]
        %v545 = vld [vmem:[%s1 + $0x1dc] sm:$0xf]
        %v546 = vld [vmem:[%s1 + $0x1e0] sm:$0xf]
        %v547 = vld [vmem:[%s1 + $0x1e4] sm:$0xf]
        %v548 = vld [vmem:[%s1 + $0x1e8] sm:$0xf]
        %v549 = vld [vmem:[%s1 + $0x1ec] sm:$0xf]
        %v550 = vld [vmem:[%s1 + $0x1f0] sm:$0xf]
        %v551 = vld [vmem:[%s1 + $0x1f4] sm:$0xf]
        %v552 = vld [vmem:[%s1 + $0x1f8] sm:$0xf]
        %v553 = vld [vmem:[%s1 + $0x1fc] sm:$0xf]
        %v554 = vld [vmem:[%s1 + $0x200] sm:$0xf]
        %v555 = vld [vmem:[%s1 + $0x204] sm:$0xf]
        %v556 = vld [vmem:[%s1 + $0x208] sm:$0xf]
        %v557 = vld [vmem:[%s1 + $0x20c] sm:$0xf]
        %v558 = vld [vmem:[%s1 + $0x210] sm:$0xf]
        %v559 = vld [vmem:[%s1 + $0x214] sm:$0xf]
        %v560 = vld [vmem:[%s1 + $0x218] sm:$0xf]
        %v561 = vld [vmem:[%s1 + $0x21c] sm:$0xf]
        %v562 = vld [vmem:[%s1 + $0x220] sm:$0xf]
        %v563 = vld [vmem:[%s1 + $0x224] sm:$0xf]
        %v564 = vld [vmem:[%s1 + $0x228] sm:$0xf]
        %v565 = vld [vmem:[%s1 + $0x22c] sm:$0xf]
        %v566 = vld [vmem:[%s1 + $0x230] sm:$0xf]
        %v567 = vld [vmem:[%s1 + $0x234] sm:$0xf]
        %v568 = vld [vmem:[%s1 + $0x238] sm:$0xf]
        %v569 = vld [vmem:[%s1 + $0x23c] sm:$0xf]
        %v570 = vld [vmem:[%s1 + $0x240] sm:$0xf]
        %v571 = vld [vmem:[%s1 + $0x244] sm:$0xf]
        %v572 = vld [vmem:[%s1 + $0x248] sm:$0xf]
        %v573 = vld [vmem:[%s1 + $0x24c] sm:$0xf]
        %v574 = vld [vmem:[%s1 + $0x250] sm:$0xf]
        %v575 = vld [vmem:[%s1 + $0x254] sm:$0xf]
        %v576 = vld [vmem:[%s1 + $0x258] sm:$0xf]
        %v577 = vld [vmem:[%s1 + $0x25c] sm:$0xf]
        %v578 = vld [vmem:[%s1 + $0x260] sm:$0xf]
        %v579 = vld [vmem:[%s1 + $0x264] sm:$0xf]
        %v580 = vld [vmem:[%s1 + $0x268] sm:$0xf]
        %v581 = vld [vmem:[%s1 + $0x26c] sm:$0xf]
        %v582 = vld [vmem:[%s1 + $0x270] sm:$0xf]
        %v583 = vld [vmem:[%s1 + $0x274] sm:$0xf]
        %v584 = vld [vmem:[%s1 + $0x278] sm:$0xf]
        %v585 = vld [vmem:[%s1 + $0x27c] sm:$0xf]
        %v586 = vld [vmem:[%s1 + $0x280] sm:$0xf]
        %v587 = vld [vmem:[%s1 + $0x284] sm:$0xf]
        %v588 = vld [vmem:[%s1 + $0x288] sm:$0xf]
        %v589 = vld [vmem:[%s1 + $0x28c] sm:$0xf]
        %v590 = vld [vmem:[%s1 + $0x290] sm:$0xf]
        %v591 = vld [vmem:[%s1 + $0x294] sm:$0xf]
        %v592 = vld [vmem:[%s1 + $0x298] sm:$0xf]
        %v593 = vld [vmem:[%s1 + $0x29c] sm:$0xf]
        %v594 = vld [vmem:[%s1 + $0x2a0] sm:$0xf]
        %v595 = vld [vmem:[%s1 + $0x2a4] sm:$0xf]
        %v596 = vld [vmem:[%s1 + $0x2a8] sm:$0xf]
        %v597 = vld [vmem:[%s1 + $0x2ac] sm:$0xf]
        %v598 = vld [vmem:[%s1 + $0x2b0] sm:$0xf]
        %v599 = vld [vmem:[%s1 + $0x2b4] sm:$0xf]
        %v600 = vld [vmem:[%s1 + $0x2b8] sm:$0xf]
        %v601 = vld [vmem:[%s1 + $0x2bc] sm:$0xf]
        %v602 = vld [vmem:[%s1 + $0x2c0] sm:$0xf]
        %v603 = vld [vmem:[%s1 + $0x2c4] sm:$0xf]
        %v604 = vld [vmem:[%s1 + $0x2c8] sm:$0xf]
        %v605 = vld [vmem:[%s1 + $0x2cc] sm:$0xf]
        %v606 = vld [vmem:[%s1 + $0x2d0] sm:$0xf]
        %v607 = vld [vmem:[%s1 + $0x2d4] sm:$0xf]
        %v608 = vld [vmem:[%s1 + $0x2d8] sm:$0xf]
        %v609 = vld [vmem:[%s1 + $0x2dc] sm:$0xf]
        %v610 = vld [vmem:[%s1 + $0x2e0] sm:$0xf]
        %v611 = vld [vmem:[%s1 + $0x2e4] sm:$0xf]
        %v612 = vld [vmem:[%s1 + $0x2e8] sm:$0xf]
        %v613 = vld [vmem:[%s1 + $0x2ec] sm:$0xf]
        %v614 = vld [vmem:[%s1 + $0x2f0] sm:$0xf]
        %v615 = vld [vmem:[%s1 + $0x2f4] sm:$0xf]
        %v616 = vld [vmem:[%s1 + $0x2f8] sm:$0xf]
        %v617 = vld [vmem:[%s1 + $0x2fc] sm:$0xf]
        %v618 = vld [vmem:[%s1 + $0x300] sm:$0xf]
        %v619 = vld [vmem:[%s1 + $0x304] sm:$0xf]
        %v620 = vld [vmem:[%s1 + $0x308] sm:$0xf]
        %v621 = vld [vmem:[%s1 + $0x30c] sm:$0xf]
        %v622 = vld [vmem:[%s1 + $0x310] sm:$0xf]
        %v623 = vld [vmem:[%s1 + $0x314] sm:$0xf]
        %v624 = vld [vmem:[%s1 + $0x318] sm:$0xf]
        %v625 = vld [vmem:[%s1 + $0x31c] sm:$0xf]
        %v626 = vld [vmem:[%s1 + $0x320] sm:$0xf]
        %v627 = vld [vmem:[%s1 + $0x324] sm:$0xf]
        %v628 = vld [vmem:[%s1 + $0x328] sm:$0xf]
        %v629 = vld [vmem:[%s1 + $0x32c] sm:$0xf]
        %v630 = vld [vmem:[%s1 + $0x330] sm:$0xf]
        %v631 = vld [vmem:[%s1 + $0x334] sm:$0xf]
        %v632 = vld [vmem:[%s1 + $0x338] sm:$0xf]
        %v633 = vld [vmem:[%s1 + $0x33c] sm:$0xf]
        %v634 = vld [vmem:[%s1 + $0x340] sm:$0xf]
        %v635 = vld [vmem:[%s1 + $0x344] sm:$0xf]
        %v636 = vld [vmem:[%s1 + $0x348] sm:$0xf]
        %v637 = vld [vmem:[%s1 + $0x34c] sm:$0xf]
        %v638 = vld [vmem:[%s1 + $0x350] sm:$0xf]
        %v639 = vld [vmem:[%s1 + $0x354] sm:$0xf]
        %v640 = vld [vmem:[%s1 + $0x358] sm:$0xf]
        %v641 = vld [vmem:[%s1 + $0x35c] sm:$0xf]
        %v642 = vld [vmem:[%s1 + $0x360] sm:$0xf]
        %v643 = vld [vmem:[%s1 + $0x364] sm:$0xf]
        %v644 = vld [vmem:[%s1 + $0x368] sm:$0xf]
        %v645 = vld [vmem:[%s1 + $0x36c] sm:$0xf]
        %v646 = vld [vmem:[%s1 + $0x370] sm:$0xf]
        %v647 = vld [vmem:[%s1 + $0x374] sm:$0xf]
        %v648 = vld [vmem:[%s1 + $0x378] sm:$0xf]
        %v649 = vld [vmem:[%s1 + $0x37c] sm:$0xf]
        %v650 = vld [vmem:[%s1 + $0x380] sm:$0xf]
        %v651 = vld [vmem:[%s1 + $0x384] sm:$0xf]
        %v652 = vld [vmem:[%s1 + $0x388] sm:$0xf]
        %v653 = vld [vmem:[%s1 + $0x38c] sm:$0xf]
        %v654 = vld [vmem:[%s1 + $0x390] sm:$0xf]
        %v655 = vld [vmem:[%s1 + $0x394] sm:$0xf]
        %v656 = vld [vmem:[%s1 + $0x398] sm:$0xf]
        %v657 = vld [vmem:[%s1 + $0x39c] sm:$0xf]
        %v658 = vld [vmem:[%s1 + $0x3a0] sm:$0xf]
        %v659 = vld [vmem:[%s1 + $0x3a4] sm:$0xf]
        %v660 = vld [vmem:[%s1 + $0x3a8] sm:$0xf]
        %v661 = vld [vmem:[%s1 + $0x3ac] sm:$0xf]
        %v662 = vld [vmem:[%s1 + $0x3b0] sm:$0xf]
        %v663 = vld [vmem:[%s1 + $0x3b4] sm:$0xf]
        %v664 = vld [vmem:[%s1 + $0x3b8] sm:$0xf]
        %v665 = vld [vmem:[%s1 + $0x3bc] sm:$0xf]
        %v666 = vld [vmem:[%s1 + $0x3c0] sm:$0xf]
        %v667 = vld [vmem:[%s1 + $0x3c4] sm:$0xf]
        %v668 = vld [vmem:[%s1 + $0x3c8] sm:$0xf]
        %v669 = vld [vmem:[%s1 + $0x3cc] sm:$0xf]
        %v670 = vld [vmem:[%s1 + $0x3d0] sm:$0xf]
        %v671 = vld [vmem:[%s1 + $0x3d4] sm:$0xf]
        %v672 = vld [vmem:[%s1 + $0x3d8] sm:$0xf]
        %v673 = vld [vmem:[%s1 + $0x3dc] sm:$0xf]
        %v674 = vld [vmem:[%s1 + $0x3e0] sm:$0xf]
        %v675 = vld [vmem:[%s1 + $0x3e4] sm:$0xf]
        %v676 = vld [vmem:[%s1 + $0x3e8] sm:$0xf]
        %v677 = vld [vmem:[%s1 + $0x3ec] sm:$0xf]
        %v678 = vld [vmem:[%s1 + $0x3f0] sm:$0xf]
        %v679 = vld [vmem:[%s1 + $0x3f4] sm:$0xf]
        %v680 = vld [vmem:[%s1 + $0x3f8] sm:$0xf]
        %v681 = vld [vmem:[%s1 + $0x3fc] sm:$0xf]
        %v682 = vld [vmem:[%s1 + $0x400] sm:$0xf]
        %v683 = vld [vmem:[%s1 + $0x404] sm:$0xf]
        %v684 = vld [vmem:[%s1 + $0x408] sm:$0xf]
        %v685 = vld [vmem:[%s1 + $0x40c] sm:$0xf]
        %v686 = vld [vmem:[%s1 + $0x410] sm:$0xf]
        %v687 = vld [vmem:[%s1 + $0x414] sm:$0xf]
        %v688 = vld [vmem:[%s1 + $0x418] sm:$0xf]
        %v689 = vld [vmem:[%s1 + $0x41c] sm:$0xf]
        %v690 = vld [vmem:[%s1 + $0x420] sm:$0xf]
        %v691 = vld [vmem:[%s1 + $0x424] sm:$0xf]
        %v692 = vld [vmem:[%s1 + $0x428] sm:$0xf]
        %v693 = vld [vmem:[%s1 + $0x42c] sm:$0xf]
        %v694 = vld [vmem:[%s1 + $0x430] sm:$0xf]
        %v695 = vld [vmem:[%s1 + $0x434] sm:$0xf]
        %v696 = vld [vmem:[%s1 + $0x438] sm:$0xf]
        %v697 = vld [vmem:[%s1 + $0x43c] sm:$0xf]
        %v698 = vld [vmem:[%s1 + $0x440] sm:$0xf]
        %v699 = vld [vmem:[%s1 + $0x444] sm:$0xf]
        %v700 = vld [vmem:[%s1 + $0x448] sm:$0xf]
        %v701 = vld [vmem:[%s1 + $0x44c] sm:$0xf]
        %v702 = vld [vmem:[%s1 + $0x450] sm:$0xf]
        %v703 = vld [vmem:[%s1 + $0x454] sm:$0xf]
        %v704 = vld [vmem:[%s1 + $0x458] sm:$0xf]
        %v705 = vld [vmem:[%s1 + $0x45c] sm:$0xf]
        %v706 = vld [vmem:[%s1 + $0x460] sm:$0xf]
        %v707 = vld [vmem:[%s1 + $0x464] sm:$0xf]
        %v708 = vld [vmem:[%s1 + $0x468] sm:$0xf]
        %v709 = vld [vmem:[%s1 + $0x46c] sm:$0xf]
        %v710 = vld [vmem:[%s1 + $0x470] sm:$0xf]
        %v711 = vld [vmem:[%s1 + $0x474] sm:$0xf]
        %v712 = vld [vmem:[%s1 + $0x478] sm:$0xf]
        %v713 = vld [vmem:[%s1 + $0x47c] sm:$0xf]
        %v714 = vld [vmem:[%s1 + $0x480] sm:$0xf]
        %v715 = vld [vmem:[%s1 + $0x484] sm:$0xf]
        %v716 = vld [vmem:[%s1 + $0x488] sm:$0xf]
        %v717 = vld [vmem:[%s1 + $0x48c] sm:$0xf]
        %v718 = vld [vmem:[%s1 + $0x490] sm:$0xf]
        %v719 = vld [vmem:[%s1 + $0x494] sm:$0xf]
        %v720 = vld [vmem:[%s1 + $0x498] sm:$0xf]
        %v721 = vld [vmem:[%s1 + $0x49c] sm:$0xf]
        %v722 = vld [vmem:[%s1 + $0x4a0] sm:$0xf]
        %v723 = vld [vmem:[%s1 + $0x4a4] sm:$0xf]
        %v724 = vld [vmem:[%s1 + $0x4a8] sm:$0xf]
        %v725 = vld [vmem:[%s1 + $0x4ac] sm:$0xf]
        %v726 = vld [vmem:[%s1 + $0x4b0] sm:$0xf]
        %v727 = vld [vmem:[%s1 + $0x4b4] sm:$0xf]
        %v728 = vld [vmem:[%s1 + $0x4b8] sm:$0xf]
        %v729 = vld [vmem:[%s1 + $0x4bc] sm:$0xf]
        %v730 = vld [vmem:[%s1 + $0x4c0] sm:$0xf]
        %v731 = vld [vmem:[%s1 + $0x4c4] sm:$0xf]
        %v732 = vld [vmem:[%s1 + $0x4c8] sm:$0xf]
        %v733 = vld [vmem:[%s1 + $0x4cc] sm:$0xf]
        %v734 = vld [vmem:[%s1 + $0x4d0] sm:$0xf]
        %v735 = vld [vmem:[%s1 + $0x4d4] sm:$0xf]
        %v736 = vld [vmem:[%s1 + $0x4d8] sm:$0xf]
        %v737 = vld [vmem:[%s1 + $0x4dc] sm:$0xf]
        %v738 = vld [vmem:[%s1 + $0x4e0] sm:$0xf]
        %v739 = vld [vmem:[%s1 + $0x4e4] sm:$0xf]
        %v740 = vld [vmem:[%s1 + $0x4e8] sm:$0xf]
        %v741 = vld [vmem:[%s1 + $0x4ec] sm:$0xf]
        %v742 = vld [vmem:[%s1 + $0x4f0] sm:$0xf]
        %v743 = vld [vmem:[%s1 + $0x4f4] sm:$0xf]
        %v744 = vld [vmem:[%s1 + $0x4f8] sm:$0xf]
        %v745 = vld [vmem:[%s1 + $0x4fc] sm:$0xf]
        %v746 = vld [vmem:[%s1 + $0x500] sm:$0xf]
        %v747 = vld [vmem:[%s1 + $0x504] sm:$0xf]
        %v748 = vld [vmem:[%s1 + $0x508] sm:$0xf]
        %v749 = vld [vmem:[%s1 + $0x50c] sm:$0xf]
        %v750 = vld [vmem:[%s1 + $0x510] sm:$0xf]
        %v751 = vld [vmem:[%s1 + $0x514] sm:$0xf]
        %v752 = vld [vmem:[%s1 + $0x518] sm:$0xf]
        %v753 = vld [vmem:[%s1 + $0x51c] sm:$0xf]
        %v754 = vld [vmem:[%s1 + $0x520] sm:$0xf]
        %v755 = vld [vmem:[%s1 + $0x524] sm:$0xf]
        %v756 = vld [vmem:[%s1 + $0x528] sm:$0xf]
        %v757 = vld [vmem:[%s1 + $0x52c] sm:$0xf]
        %v758 = vld [vmem:[%s1 + $0x530] sm:$0xf]
        %v759 = vld [vmem:[%s1 + $0x534] sm:$0xf]
        %v760 = vld [vmem:[%s1 + $0x538] sm:$0xf]
        %v761 = vld [vmem:[%s1 + $0x53c] sm:$0xf]
        %v762 = vld [vmem:[%s1 + $0x540] sm:$0xf]
        %v763 = vld [vmem:[%s1 + $0x544] sm:$0xf]
        %v764 = vld [vmem:[%s1 + $0x548] sm:$0xf]
        %v765 = vld [vmem:[%s1 + $0x54c] sm:$0xf]
        %v766 = vld [vmem:[%s1 + $0x550] sm:$0xf]
        %v767 = vld [vmem:[%s1 + $0x554] sm:$0xf]
        %v768 = vld [vmem:[%s1 + $0x558] sm:$0xf]
        %v769 = vld [vmem:[%s1 + $0x55c] sm:$0xf]
        %v770 = vld [vmem:[%s1 + $0x560] sm:$0xf]
        %v771 = vld [vmem:[%s1 + $0x564] sm:$0xf]
        %v772 = vld [vmem:[%s1 + $0x568] sm:$0xf]
        %v773 = vld [vmem:[%s1 + $0x56c] sm:$0xf]
        %v774 = vld [vmem:[%s1 + $0x570] sm:$0xf]
        %v775 = vld [vmem:[%s1 + $0x574] sm:$0xf]
        %v776 = vld [vmem:[%s1 + $0x578] sm:$0xf]
        %v777 = vld [vmem:[%s1 + $0x57c] sm:$0xf]
        %v778 = vld [vmem:[%s1 + $0x580] sm:$0xf]
        %v779 = vld [vmem:[%s1 + $0x584] sm:$0xf]
        %v780 = vld [vmem:[%s1 + $0x588] sm:$0xf]
        %v781 = vld [vmem:[%s1 + $0x58c] sm:$0xf]
        %v782 = vld [vmem:[%s1 + $0x590] sm:$0xf]
        %v783 = vld [vmem:[%s1 + $0x594] sm:$0xf]
        %v784 = vld [vmem:[%s1 + $0x598] sm:$0xf]
        %v785 = vld [vmem:[%s1 + $0x59c] sm:$0xf]
        %v786 = vld [vmem:[%s1 + $0x5a0] sm:$0xf]
        %v787 = vld [vmem:[%s1 + $0x5a4] sm:$0xf]
        %v788 = vld [vmem:[%s1 + $0x5a8] sm:$0xf]
        %v789 = vld [vmem:[%s1 + $0x5ac] sm:$0xf]
        %v790 = vld [vmem:[%s1 + $0x5b0] sm:$0xf]
        %v791 = vld [vmem:[%s1 + $0x5b4] sm:$0xf]
        %v792 = vld [vmem:[%s1 + $0x5b8] sm:$0xf]
        %v793 = vld [vmem:[%s1 + $0x5bc] sm:$0xf]
        %v794 = vld [vmem:[%s1 + $0x5c0] sm:$0xf]
        %v795 = vld [vmem:[%s1 + $0x5c4] sm:$0xf]
        %v796 = vld [vmem:[%s1 + $0x5c8] sm:$0xf]
        %v797 = vld [vmem:[%s1 + $0x5cc] sm:$0xf]
        %v798 = vld [vmem:[%s1 + $0x5d0] sm:$0xf]
        %v799 = vld [vmem:[%s1 + $0x5d4] sm:$0xf]
        %v800 = vld [vmem:[%s1 + $0x5d8] sm:$0xf]
        %v801 = vld [vmem:[%s1 + $0x5dc] sm:$0xf]
        %v802 = vld [vmem:[%s1 + $0x5e0] sm:$0xf]
        %v803 = vld [vmem:[%s1 + $0x5e4] sm:$0xf]
        %v804 = vld [vmem:[%s1 + $0x5e8] sm:$0xf]
        %v805 = vld [vmem:[%s1 + $0x5ec] sm:$0xf]
        %v806 = vld [vmem:[%s1 + $0x5f0] sm:$0xf]
        %v807 = vld [vmem:[%s1 + $0x5f4] sm:$0xf]
        %v808 = vld [vmem:[%s1 + $0x5f8] sm:$0xf]
        %v809 = vld [vmem:[%s1 + $0x5fc] sm:$0xf]
        %v810 = vld [vmem:[%s1 + $0x600] sm:$0xf]
        %v811 = vld [vmem:[%s1 + $0x604] sm:$0xf]
        %v812 = vld [vmem:[%s1 + $0x608] sm:$0xf]
        %v813 = vld [vmem:[%s1 + $0x60c] sm:$0xf]
        %v814 = vld [vmem:[%s1 + $0x610] sm:$0xf]
        %v815 = vld [vmem:[%s1 + $0x614] sm:$0xf]
        %v816 = vld [vmem:[%s1 + $0x618] sm:$0xf]
        %v817 = vld [vmem:[%s1 + $0x61c] sm:$0xf]
        %v818 = vld [vmem:[%s1 + $0x620] sm:$0xf]
        %v819 = vld [vmem:[%s1 + $0x624] sm:$0xf]
        %v820 = vld [vmem:[%s1 + $0x628] sm:$0xf]
        %v821 = vld [vmem:[%s1 + $0x62c] sm:$0xf]
        %v822 = vld [vmem:[%s1 + $0x630] sm:$0xf]
        %v823 = vld [vmem:[%s1 + $0x634] sm:$0xf]
        %v824 = vld [vmem:[%s1 + $0x638] sm:$0xf]
        %v825 = vld [vmem:[%s1 + $0x63c] sm:$0xf]
        %v826 = vld [vmem:[%s1 + $0x640] sm:$0xf]
        %v827 = vld [vmem:[%s1 + $0x644] sm:$0xf]
        %v828 = vld [vmem:[%s1 + $0x648] sm:$0xf]
        %v829 = vld [vmem:[%s1 + $0x64c] sm:$0xf]
        %v830 = vld [vmem:[%s1 + $0x650] sm:$0xf]
        %v831 = vld [vmem:[%s1 + $0x654] sm:$0xf]
        %v832 = vld [vmem:[%s1 + $0x658] sm:$0xf]
        %v833 = vld [vmem:[%s1 + $0x65c] sm:$0xf]
        %v834 = vld [vmem:[%s1 + $0x660] sm:$0xf]
        %v835 = vld [vmem:[%s1 + $0x664] sm:$0xf]
        %v836 = vld [vmem:[%s1 + $0x668] sm:$0xf]
        %v837 = vld [vmem:[%s1 + $0x66c] sm:$0xf]
        %v838 = vld [vmem:[%s1 + $0x670] sm:$0xf]
        %v839 = vld [vmem:[%s1 + $0x674] sm:$0xf]
        %v840 = vld [vmem:[%s1 + $0x678] sm:$0xf]
        %v841 = vld [vmem:[%s1 + $0x67c] sm:$0xf]
        %v842 = vld [vmem:[%s1 + $0x680] sm:$0xf]
        %v843 = vld [vmem:[%s1 + $0x684] sm:$0xf]
        %v844 = vld [vmem:[%s1 + $0x688] sm:$0xf]
        %v845 = vld [vmem:[%s1 + $0x68c] sm:$0xf]
        %v846 = vld [vmem:[%s1 + $0x690] sm:$0xf]
        %v847 = vld [vmem:[%s1 + $0x694] sm:$0xf]
        %v848 = vld [vmem:[%s1 + $0x698] sm:$0xf]
        %v849 = vld [vmem:[%s1 + $0x69c] sm:$0xf]
        %v850 = vld [vmem:[%s1 + $0x6a0] sm:$0xf]
        %v851 = vld [vmem:[%s1 + $0x6a4] sm:$0xf]
        %v852 = vld [vmem:[%s1 + $0x6a8] sm:$0xf]
        %v853 = vld [vmem:[%s1 + $0x6ac] sm:$0xf]
        %v854 = vld [vmem:[%s1 + $0x6b0] sm:$0xf]
        %v855 = vld [vmem:[%s1 + $0x6b4] sm:$0xf]
        %v856 = vld [vmem:[%s1 + $0x6b8] sm:$0xf]
        %v857 = vld [vmem:[%s1 + $0x6bc] sm:$0xf]
        %v858 = vld [vmem:[%s1 + $0x6c0] sm:$0xf]
        %v859 = vld [vmem:[%s1 + $0x6c4] sm:$0xf]
        %v860 = vld [vmem:[%s1 + $0x6c8] sm:$0xf]
        %v861 = vld [vmem:[%s1 + $0x6cc] sm:$0xf]
        %v862 = vld [vmem:[%s1 + $0x6d0] sm:$0xf]
        %v863 = vld [vmem:[%s1 + $0x6d4] sm:$0xf]
        %v864 = vld [vmem:[%s1 + $0x6d8] sm:$0xf]
        %v865 = vld [vmem:[%s1 + $0x6dc] sm:$0xf]
        %v866 = vld [vmem:[%s1 + $0x6e0] sm:$0xf]
        %v867 = vld [vmem:[%s1 + $0x6e4] sm:$0xf]
        %v868 = vld [vmem:[%s1 + $0x6e8] sm:$0xf]
        %v869 = vld [vmem:[%s1 + $0x6ec] sm:$0xf]
        %v870 = vld [vmem:[%s1 + $0x6f0] sm:$0xf]
        %v871 = vld [vmem:[%s1 + $0x6f4] sm:$0xf]
        %v872 = vld [vmem:[%s1 + $0x6f8] sm:$0xf]
        %v873 = vld [vmem:[%s1 + $0x6fc] sm:$0xf]
        %v874 = vld [vmem:[%s1 + $0x700] sm:$0xf]
        %v875 = vld [vmem:[%s1 + $0x704] sm:$0xf]
        %v876 = vld [vmem:[%s1 + $0x708] sm:$0xf]
        %v877 = vld [vmem:[%s1 + $0x70c] sm:$0xf]
        %v878 = vld [vmem:[%s1 + $0x710] sm:$0xf]
        %v879 = vld [vmem:[%s1 + $0x714] sm:$0xf]
        %v880 = vld [vmem:[%s1 + $0x718] sm:$0xf]
        %v881 = vld [vmem:[%s1 + $0x71c] sm:$0xf]
        %v882 = vld [vmem:[%s1 + $0x720] sm:$0xf]
        %v883 = vld [vmem:[%s1 + $0x724] sm:$0xf]
        %v884 = vld [vmem:[%s1 + $0x728] sm:$0xf]
        %v885 = vld [vmem:[%s1 + $0x72c] sm:$0xf]
        %v886 = vld [vmem:[%s1 + $0x730] sm:$0xf]
        %v887 = vld [vmem:[%s1 + $0x734] sm:$0xf]
        %v888 = vld [vmem:[%s1 + $0x738] sm:$0xf]
        %v889 = vld [vmem:[%s1 + $0x73c] sm:$0xf]
        %v890 = vld [vmem:[%s1 + $0x740] sm:$0xf]
        %v891 = vld [vmem:[%s1 + $0x744] sm:$0xf]
        %v892 = vld [vmem:[%s1 + $0x748] sm:$0xf]
        %v893 = vld [vmem:[%s1 + $0x74c] sm:$0xf]
        %v894 = vld [vmem:[%s1 + $0x750] sm:$0xf]
        %v895 = vld [vmem:[%s1 + $0x754] sm:$0xf]
        %v896 = vld [vmem:[%s1 + $0x758] sm:$0xf]
        %v897 = vld [vmem:[%s1 + $0x75c] sm:$0xf]
        %v898 = vld [vmem:[%s1 + $0x760] sm:$0xf]
        %v899 = vld [vmem:[%s1 + $0x764] sm:$0xf]
        %v900 = vld [vmem:[%s1 + $0x768] sm:$0xf]
        %v901 = vld [vmem:[%s1 + $0x76c] sm:$0xf]
        %v902 = vld [vmem:[%s1 + $0x770] sm:$0xf]
        %v903 = vld [vmem:[%s1 + $0x774] sm:$0xf]
        %v904 = vld [vmem:[%s1 + $0x778] sm:$0xf]
        %v905 = vld [vmem:[%s1 + $0x77c] sm:$0xf]
        %v906 = vld [vmem:[%s1 + $0x780] sm:$0xf]
        %v907 = vld [vmem:[%s1 + $0x784] sm:$0xf]
        %v908 = vld [vmem:[%s1 + $0x788] sm:$0xf]
        %v909 = vld [vmem:[%s1 + $0x78c] sm:$0xf]
        %v910 = vld [vmem:[%s1 + $0x790] sm:$0xf]
        %v911 = vld [vmem:[%s1 + $0x794] sm:$0xf]
        %v912 = vld [vmem:[%s1 + $0x798] sm:$0xf]
        %v913 = vld [vmem:[%s1 + $0x79c] sm:$0xf]
        %v914 = vld [vmem:[%s1 + $0x7a0] sm:$0xf]
        %v915 = vld [vmem:[%s1 + $0x7a4] sm:$0xf]
        %v916 = vld [vmem:[%s1 + $0x7a8] sm:$0xf]
        %v917 = vld [vmem:[%s1 + $0x7ac] sm:$0xf]
        %v918 = vld [vmem:[%s1 + $0x7b0] sm:$0xf]
        %v919 = vld [vmem:[%s1 + $0x7b4] sm:$0xf]
        %v920 = vld [vmem:[%s1 + $0x7b8] sm:$0xf]
        %v921 = vld [vmem:[%s1 + $0x7bc] sm:$0xf]
        %v922 = vld [vmem:[%s1 + $0x7c0] sm:$0xf]
        %v923 = vld [vmem:[%s1 + $0x7c4] sm:$0xf]
        %v924 = vld [vmem:[%s1 + $0x7c8] sm:$0xf]
        %v925 = vld [vmem:[%s1 + $0x7cc] sm:$0xf]
        %v926 = vld [vmem:[%s1 + $0x7d0] sm:$0xf]
        %v927 = vld [vmem:[%s1 + $0x7d4] sm:$0xf]
        %v928 = vld [vmem:[%s1 + $0x7d8] sm:$0xf]
        %v929 = vld [vmem:[%s1 + $0x7dc] sm:$0xf]
        %v930 = vld [vmem:[%s1 + $0x7e0] sm:$0xf]
        %v931 = vld [vmem:[%s1 + $0x7e4] sm:$0xf]
        %v932 = vld [vmem:[%s1 + $0x7e8] sm:$0xf]
        %v933 = vld [vmem:[%s1 + $0x7ec] sm:$0xf]
        %v934 = vld [vmem:[%s1 + $0x7f0] sm:$0xf]
        %v935 = vld [vmem:[%s1 + $0x7f4] sm:$0xf]
        %v936 = vld [vmem:[%s1 + $0x7f8] sm:$0xf]
        %v937 = vld [vmem:[%s1 + $0x7fc] sm:$0xf]
        %v938 = vld [vmem:[%s1 + $0x800] sm:$0xf]
        %v939 = vld [vmem:[%s1 + $0x804] sm:$0xf]
        %v940 = vld [vmem:[%s1 + $0x808] sm:$0xf]
        %v941 = vld [vmem:[%s1 + $0x80c] sm:$0xf]
        %v942 = vld [vmem:[%s1 + $0x810] sm:$0xf]
        %v943 = vld [vmem:[%s1 + $0x814] sm:$0xf]
        %v944 = vld [vmem:[%s1 + $0x818] sm:$0xf]
        %v945 = vld [vmem:[%s1 + $0x81c] sm:$0xf]
        %v946 = vld [vmem:[%s1 + $0x820] sm:$0xf]
        %v947 = vld [vmem:[%s1 + $0x824] sm:$0xf]
        %v948 = vld [vmem:[%s1 + $0x828] sm:$0xf]
        %v949 = vld [vmem:[%s1 + $0x82c] sm:$0xf]
        %v950 = vld [vmem:[%s1 + $0x830] sm:$0xf]
        %v951 = vld [vmem:[%s1 + $0x834] sm:$0xf]
        %v952 = vld [vmem:[%s1 + $0x838] sm:$0xf]
        %v953 = vld [vmem:[%s1 + $0x83c] sm:$0xf]
        %v954 = vld [vmem:[%s1 + $0x840] sm:$0xf]
        %v955 = vld [vmem:[%s1 + $0x844] sm:$0xf]
        %v956 = vld [vmem:[%s1 + $0x848] sm:$0xf]
        %v957 = vld [vmem:[%s1 + $0x84c] sm:$0xf]
        %v958 = vld [vmem:[%s1 + $0x850] sm:$0xf]
        %v959 = vld [vmem:[%s1 + $0x854] sm:$0xf]
        %v960 = vld [vmem:[%s1 + $0x858] sm:$0xf]
        %v961 = vld [vmem:[%s1 + $0x85c] sm:$0xf]
        %v962 = vld [vmem:[%s1 + $0x860] sm:$0xf]
        %v963 = vld [vmem:[%s1 + $0x864] sm:$0xf]
        %v964 = vld [vmem:[%s1 + $0x868] sm:$0xf]
        %v965 = vld [vmem:[%s1 + $0x86c] sm:$0xf]
        %v966 = vld [vmem:[%s1 + $0x870] sm:$0xf]
        %v967 = vld [vmem:[%s1 + $0x874] sm:$0xf]
        %v968 = vld [vmem:[%s1 + $0x878] sm:$0xf]
        %v969 = vld [vmem:[%s1 + $0x87c] sm:$0xf]
        %v970 = vld [vmem:[%s1 + $0x880] sm:$0xf]
        %v971 = vld [vmem:[%s1 + $0x884] sm:$0xf]
        %v972 = vld [vmem:[%s1 + $0x888] sm:$0xf]
        %v973 = vld [vmem:[%s1 + $0x88c] sm:$0xf]
        %v974 = vld [vmem:[%s1 + $0x890] sm:$0xf]
        %v975 = vld [vmem:[%s1 + $0x894] sm:$0xf]
        %v976 = vld [vmem:[%s1 + $0x898] sm:$0xf]
        %v977 = vld [vmem:[%s1 + $0x89c] sm:$0xf]
        %v978 = vld [vmem:[%s1 + $0x8a0] sm:$0xf]
        %v979 = vld [vmem:[%s1 + $0x8a4] sm:$0xf]
        %v980 = vld [vmem:[%s1 + $0x8a8] sm:$0xf]
        %v981 = vld [vmem:[%s1 + $0x8ac] sm:$0xf]
        %v982 = vld [vmem:[%s1 + $0x8b0] sm:$0xf]
        %v983 = vld [vmem:[%s1 + $0x8b4] sm:$0xf]
        %v984 = vld [vmem:[%s1 + $0x8b8] sm:$0xf]
        %v985 = vld [vmem:[%s1 + $0x8bc] sm:$0xf]
        %v986 = vld [vmem:[%s1 + $0x8c0] sm:$0xf]
        %v987 = vld [vmem:[%s1 + $0x8c4] sm:$0xf]
        %v988 = vld [vmem:[%s1 + $0x8c8] sm:$0xf]
        %v989 = vld [vmem:[%s1 + $0x8cc] sm:$0xf]
        %v990 = vld [vmem:[%s1 + $0x8d0] sm:$0xf]
        %v991 = vld [vmem:[%s1 + $0x8d4] sm:$0xf]
        %v992 = vld [vmem:[%s1 + $0x8d8] sm:$0xf]
        %v993 = vld [vmem:[%s1 + $0x8dc] sm:$0xf]
        %v994 = vld [vmem:[%s1 + $0x8e0] sm:$0xf]
        %v995 = vld [vmem:[%s1 + $0x8e4] sm:$0xf]
        %v996 = vld [vmem:[%s1 + $0x8e8] sm:$0xf]
        %v997 = vld [vmem:[%s1 + $0x8ec] sm:$0xf]
        %v998 = vld [vmem:[%s1 + $0x8f0] sm:$0xf]
        %v999 = vld [vmem:[%s1 + $0x8f4] sm:$0xf]
        %v1000 = vld [vmem:[%s1 + $0x8f8] sm:$0xf]
        %v1001 = vld [vmem:[%s1 + $0x8fc] sm:$0xf]
        %v1002 = vld [vmem:[%s1 + $0x900] sm:$0xf]
        %v1003 = vld [vmem:[%s1 + $0x904] sm:$0xf]
        %v1004 = vld [vmem:[%s1 + $0x908] sm:$0xf]
        %v1005 = vld [vmem:[%s1 + $0x90c] sm:$0xf]
        %v1006 = vld [vmem:[%s1 + $0x910] sm:$0xf]
        %v1007 = vld [vmem:[%s1 + $0x914] sm:$0xf]
        %v1008 = vld [vmem:[%s1 + $0x918] sm:$0xf]
        %v1009 = vld [vmem:[%s1 + $0x91c] sm:$0xf]
        %v1010 = vld [vmem:[%s1 + $0x920] sm:$0xf]
        %v1011 = vld [vmem:[%s1 + $0x924] sm:$0xf]
        %v1012 = vld [vmem:[%s1 + $0x928] sm:$0xf]
        %v1013 = vld [vmem:[%s1 + $0x92c] sm:$0xf]
        %v1014 = vld [vmem:[%s1 + $0x930] sm:$0xf]
        %v1015 = vld [vmem:[%s1 + $0x934] sm:$0xf]
        %v1016 = vld [vmem:[%s1 + $0x938] sm:$0xf]
        %v1017 = vld [vmem:[%s1 + $0x93c] sm:$0xf]
        %v1018 = vld [vmem:[%s1 + $0x940] sm:$0xf]
        %v1019 = vld [vmem:[%s1 + $0x944] sm:$0xf]
        %v1020 = vld [vmem:[%s1 + $0x948] sm:$0xf]
        %v1021 = vld [vmem:[%s1 + $0x94c] sm:$0xf]
        %v1022 = vld [vmem:[%s1 + $0x950] sm:$0xf]
        %v1023 = vld [vmem:[%s1 + $0x954] sm:$0xf]
        %v1024 = vld [vmem:[%s1 + $0x958] sm:$0xf]
        %v1025 = vld [vmem:[%s1 + $0x95c] sm:$0xf]
        %v1026 = vld [vmem:[%s1 + $0x960] sm:$0xf]
        %v1027 = vld [vmem:[%s1 + $0x964] sm:$0xf]
        %v1028 = vld [vmem:[%s1 + $0x968] sm:$0xf]
        %v1029 = vld [vmem:[%s1 + $0x96c] sm:$0xf]
        %v1030 = vld [vmem:[%s1 + $0x970] sm:$0xf]
        %v1031 = vld [vmem:[%s1 + $0x974] sm:$0xf]
        %v1032 = vld [vmem:[%s1 + $0x978] sm:$0xf]
        %v1033 = vld [vmem:[%s1 + $0x97c] sm:$0xf]
        %v1034 = vld [vmem:[%s1 + $0x980] sm:$0xf]
        %v1035 = vld [vmem:[%s1 + $0x984] sm:$0xf]
        %v1036 = vld [vmem:[%s1 + $0x988] sm:$0xf]
        %v1037 = vld [vmem:[%s1 + $0x98c] sm:$0xf]
        %v1038 = vld [vmem:[%s1 + $0x990] sm:$0xf]
        %v1039 = vld [vmem:[%s1 + $0x994] sm:$0xf]
        %v1040 = vld [vmem:[%s1 + $0x998] sm:$0xf]
        %v1041 = vld [vmem:[%s1 + $0x99c] sm:$0xf]
        %v1042 = vld [vmem:[%s1 + $0x9a0] sm:$0xf]
        %v1043 = vld [vmem:[%s1 + $0x9a4] sm:$0xf]
        %v1044 = vld [vmem:[%s1 + $0x9a8] sm:$0xf]
        %v1045 = vld [vmem:[%s1 + $0x9ac] sm:$0xf]
        %v1046 = vld [vmem:[%s1 + $0x9b0] sm:$0xf]
        %v1047 = vld [vmem:[%s1 + $0x9b4] sm:$0xf]
        %v1048 = vld [vmem:[%s1 + $0x9b8] sm:$0xf]
        %v1049 = vld [vmem:[%s1 + $0x9bc] sm:$0xf]
        %v1050 = vld [vmem:[%s1 + $0x9c0] sm:$0xf]
        %v1051 = vld [vmem:[%s1 + $0x9c4] sm:$0xf]
        %v1052 = vld [vmem:[%s1 + $0x9c8] sm:$0xf]
        %v1053 = vld [vmem:[%s1 + $0x9cc] sm:$0xf]
        %v1054 = vld [vmem:[%s1 + $0x9d0] sm:$0xf]
        %v1055 = vld [vmem:[%s1 + $0x9d4] sm:$0xf]
        %v1056 = vld [vmem:[%s1 + $0x9d8] sm:$0xf]
        %v1057 = vld [vmem:[%s1 + $0x9dc] sm:$0xf]
        %v1058 = vld [vmem:[%s1 + $0x9e0] sm:$0xf]
        %v1059 = vld [vmem:[%s1 + $0x9e4] sm:$0xf]
        %v1060 = vld [vmem:[%s1 + $0x9e8] sm:$0xf]
        %v1061 = vld [vmem:[%s1 + $0x9ec] sm:$0xf]
        %v1062 = vld [vmem:[%s1 + $0x9f0] sm:$0xf]
        %v1063 = vld [vmem:[%s1 + $0x9f4] sm:$0xf]
        %v1064 = vld [vmem:[%s1 + $0x9f8] sm:$0xf]
        %v1065 = vld [vmem:[%s1 + $0x9fc] sm:$0xf]
        %v1066 = vld [vmem:[%s1 + $0xa00] sm:$0xf]
        %v1067 = vld [vmem:[%s1 + $0xa04] sm:$0xf]
        %v1068 = vld [vmem:[%s1 + $0xa08] sm:$0xf]
        %v1069 = vld [vmem:[%s1 + $0xa0c] sm:$0xf]
        %v1070 = vld [vmem:[%s1 + $0xa10] sm:$0xf]
        %v1071 = vld [vmem:[%s1 + $0xa14] sm:$0xf]
        %v1072 = vld [vmem:[%s1 + $0xa18] sm:$0xf]
        %v1073 = vld [vmem:[%s1 + $0xa1c] sm:$0xf]
        %v1074 = vld [vmem:[%s1 + $0xa20] sm:$0xf]
        %v1075 = vld [vmem:[%s1 + $0xa24] sm:$0xf]
        %v1076 = vld [vmem:[%s1 + $0xa28] sm:$0xf]
        %v1077 = vld [vmem:[%s1 + $0xa2c] sm:$0xf]
        %v1078 = vld [vmem:[%s1 + $0xa30] sm:$0xf]
        %v1079 = vld [vmem:[%s1 + $0xa34] sm:$0xf]
        %v1080 = vld [vmem:[%s1 + $0xa38] sm:$0xf]
        %v1081 = vld [vmem:[%s1 + $0xa3c] sm:$0xf]
        %v1082 = vld [vmem:[%s1 + $0xa40] sm:$0xf]
        %v1083 = vld [vmem:[%s1 + $0xa44] sm:$0xf]
        %v1084 = vld [vmem:[%s1 + $0xa48] sm:$0xf]
        %v1085 = vld [vmem:[%s1 + $0xa4c] sm:$0xf]
        %v1086 = vld [vmem:[%s1 + $0xa50] sm:$0xf]
        %v1087 = vld [vmem:[%s1 + $0xa54] sm:$0xf]
        %v1088 = vld [vmem:[%s1 + $0xa58] sm:$0xf]
        %v1089 = vld [vmem:[%s1 + $0xa5c] sm:$0xf]
        %v1090 = vld [vmem:[%s1 + $0xa60] sm:$0xf]
        %v1091 = vld [vmem:[%s1 + $0xa64] sm:$0xf]
        %v1092 = vld [vmem:[%s1 + $0xa68] sm:$0xf]
        %v1093 = vld [vmem:[%s1 + $0xa6c] sm:$0xf]
        %v1094 = vld [vmem:[%s1 + $0xa70] sm:$0xf]
        %v1095 = vld [vmem:[%s1 + $0xa74] sm:$0xf]
        %v1096 = vld [vmem:[%s1 + $0xa78] sm:$0xf]
        %v1097 = vld [vmem:[%s1 + $0xa7c] sm:$0xf]
        %v1098 = vld [vmem:[%s1 + $0xa80] sm:$0xf]
        %v1099 = vld [vmem:[%s1 + $0xa84] sm:$0xf]
        %v1100 = vld [vmem:[%s1 + $0xa88] sm:$0xf]
        %v1101 = vld [vmem:[%s1 + $0xa8c] sm:$0xf]
        %v1102 = vld [vmem:[%s1 + $0xa90] sm:$0xf]
        %v1103 = vld [vmem:[%s1 + $0xa94] sm:$0xf]
        %v1104 = vld [vmem:[%s1 + $0xa98] sm:$0xf]
        %v1105 = vld [vmem:[%s1 + $0xa9c] sm:$0xf]
        %v1106 = vld [vmem:[%s1 + $0xaa0] sm:$0xf]
        %v1107 = vld [vmem:[%s1 + $0xaa4] sm:$0xf]
        %v1108 = vld [vmem:[%s1 + $0xaa8] sm:$0xf]
        %v1109 = vld [vmem:[%s1 + $0xaac] sm:$0xf]
        %v1110 = vld [vmem:[%s1 + $0xab0] sm:$0xf]
        %v1111 = vld [vmem:[%s1 + $0xab4] sm:$0xf]
        %v1112 = vld [vmem:[%s1 + $0xab8] sm:$0xf]
        %v1113 = vld [vmem:[%s1 + $0xabc] sm:$0xf]
        %v1114 = vld [vmem:[%s1 + $0xac0] sm:$0xf]
        %v1115 = vld [vmem:[%s1 + $0xac4] sm:$0xf]
        %v1116 = vld [vmem:[%s1 + $0xac8] sm:$0xf]
        %v1117 = vld [vmem:[%s1 + $0xacc] sm:$0xf]
        %v1118 = vld [vmem:[%s1 + $0xad0] sm:$0xf]
        %v1119 = vld [vmem:[%s1 + $0xad4] sm:$0xf]
        %v1120 = vld [vmem:[%s1 + $0xad8] sm:$0xf]
        %v1121 = vld [vmem:[%s1 + $0xadc] sm:$0xf]
        %v1122 = vld [vmem:[%s1 + $0xae0] sm:$0xf]
        %v1123 = vld [vmem:[%s1 + $0xae4] sm:$0xf]
        %v1124 = vld [vmem:[%s1 + $0xae8] sm:$0xf]
        %v1125 = vld [vmem:[%s1 + $0xaec] sm:$0xf]
        %v1126 = vld [vmem:[%s1 + $0xaf0] sm:$0xf]
        %v1127 = vld [vmem:[%s1 + $0xaf4] sm:$0xf]
        %v1128 = vld [vmem:[%s1 + $0xaf8] sm:$0xf]
        %v1129 = vld [vmem:[%s1 + $0xafc] sm:$0xf]
        %v1130 = vld [vmem:[%s1 + $0xb00] sm:$0xf]
        %v1131 = vld [vmem:[%s1 + $0xb04] sm:$0xf]
        %v1132 = vld [vmem:[%s1 + $0xb08] sm:$0xf]
        %v1133 = vld [vmem:[%s1 + $0xb0c] sm:$0xf]
        %v1134 = vld [vmem:[%s1 + $0xb10] sm:$0xf]
        %v1135 = vld [vmem:[%s1 + $0xb14] sm:$0xf]
        %v1136 = vld [vmem:[%s1 + $0xb18] sm:$0xf]
        %v1137 = vld [vmem:[%s1 + $0xb1c] sm:$0xf]
        %v1138 = vld [vmem:[%s1 + $0xb20] sm:$0xf]
        %v1139 = vld [vmem:[%s1 + $0xb24] sm:$0xf]
        %v1140 = vld [vmem:[%s1 + $0xb28] sm:$0xf]
        %v1141 = vld [vmem:[%s1 + $0xb2c] sm:$0xf]
        %v1142 = vld [vmem:[%s1 + $0xb30] sm:$0xf]
        %v1143 = vld [vmem:[%s1 + $0xb34] sm:$0xf]
        %v1144 = vld [vmem:[%s1 + $0xb38] sm:$0xf]
        %v1145 = vld [vmem:[%s1 + $0xb3c] sm:$0xf]
        %v1146 = vld [vmem:[%s1 + $0xb40] sm:$0xf]
        %v1147 = vld [vmem:[%s1 + $0xb44] sm:$0xf]
        %v1148 = vld [vmem:[%s1 + $0xb48] sm:$0xf]
        %v1149 = vld [vmem:[%s1 + $0xb4c] sm:$0xf]
        %v1150 = vld [vmem:[%s1 + $0xb50] sm:$0xf]
        %v1151 = vld [vmem:[%s1 + $0xb54] sm:$0xf]
        %v1152 = vld [vmem:[%s1 + $0xb58] sm:$0xf]
        %v1153 = vld [vmem:[%s1 + $0xb5c] sm:$0xf]
        %v1154 = vld [vmem:[%s1 + $0xb60] sm:$0xf]
        %v1155 = vld [vmem:[%s1 + $0xb64] sm:$0xf]
        %v1156 = vld [vmem:[%s1 + $0xb68] sm:$0xf]
        %v1157 = vld [vmem:[%s1 + $0xb6c] sm:$0xf]
        %v1158 = vld [vmem:[%s1 + $0xb70] sm:$0xf]
        %v1159 = vld [vmem:[%s1 + $0xb74] sm:$0xf]
        %v1160 = vld [vmem:[%s1 + $0xb78] sm:$0xf]
        %v1161 = vld [vmem:[%s1 + $0xb7c] sm:$0xf]
        %v1162 = vld [vmem:[%s1 + $0xb80] sm:$0xf]
        %v1163 = vld [vmem:[%s1 + $0xb84] sm:$0xf]
        %v1164 = vld [vmem:[%s1 + $0xb88] sm:$0xf]
        %v1165 = vld [vmem:[%s1 + $0xb8c] sm:$0xf]
        %v1166 = vld [vmem:[%s1 + $0xb90] sm:$0xf]
        %v1167 = vld [vmem:[%s1 + $0xb94] sm:$0xf]
        %v1168 = vld [vmem:[%s1 + $0xb98] sm:$0xf]
        %v1169 = vld [vmem:[%s1 + $0xb9c] sm:$0xf]
        %v1170 = vld [vmem:[%s1 + $0xba0] sm:$0xf]
        %v1171 = vld [vmem:[%s1 + $0xba4] sm:$0xf]
        %v1172 = vld [vmem:[%s1 + $0xba8] sm:$0xf]
        %v1173 = vld [vmem:[%s1 + $0xbac] sm:$0xf]
        %v1174 = vld [vmem:[%s1 + $0xbb0] sm:$0xf]
        %v1175 = vld [vmem:[%s1 + $0xbb4] sm:$0xf]
        %v1176 = vld [vmem:[%s1 + $0xbb8] sm:$0xf]
        %v1177 = vld [vmem:[%s1 + $0xbbc] sm:$0xf]
        %v1178 = vld [vmem:[%s1 + $0xbc0] sm:$0xf]
        %v1179 = vld [vmem:[%s1 + $0xbc4] sm:$0xf]
        %v1180 = vld [vmem:[%s1 + $0xbc8] sm:$0xf]
        %v1181 = vld [vmem:[%s1 + $0xbcc] sm:$0xf]
        %v1182 = vld [vmem:[%s1 + $0xbd0] sm:$0xf]
        %v1183 = vld [vmem:[%s1 + $0xbd4] sm:$0xf]
        %v1184 = vld [vmem:[%s1 + $0xbd8] sm:$0xf]
        %v1185 = vld [vmem:[%s1 + $0xbdc] sm:$0xf]
        %v1186 = vld [vmem:[%s1 + $0xbe0] sm:$0xf]
        %v1187 = vld [vmem:[%s1 + $0xbe4] sm:$0xf]
        %v1188 = vld [vmem:[%s1 + $0xbe8] sm:$0xf]
        %v1189 = vld [vmem:[%s1 + $0xbec] sm:$0xf]
        %v1190 = vld [vmem:[%s1 + $0xbf0] sm:$0xf]
        %v1191 = vld [vmem:[%s1 + $0xbf4] sm:$0xf]
        %v1192 = vld [vmem:[%s1 + $0xbf8] sm:$0xf]
        %v1193 = vld [vmem:[%s1 + $0xbfc] sm:$0xf]
        %v1194 = vld [vmem:[%s1 + $0xc00] sm:$0xf]
        %v1195 = vld [vmem:[%s1 + $0xc04] sm:$0xf]
        %v1196 = vld [vmem:[%s1 + $0xc08] sm:$0xf]
        %v1197 = vld [vmem:[%s1 + $0xc0c] sm:$0xf]
        %v1198 = vld [vmem:[%s1 + $0xc10] sm:$0xf]
        %v1199 = vld [vmem:[%s1 + $0xc14] sm:$0xf]
        %v1200 = vld [vmem:[%s1 + $0xc18] sm:$0xf]
        %v1201 = vld [vmem:[%s1 + $0xc1c] sm:$0xf]
        %v1202 = vld [vmem:[%s1 + $0xc20] sm:$0xf]
        %v1203 = vld [vmem:[%s1 + $0xc24] sm:$0xf]
        %v1204 = vld [vmem:[%s1 + $0xc28] sm:$0xf]
        %v1205 = vld [vmem:[%s1 + $0xc2c] sm:$0xf]
        %v1206 = vld [vmem:[%s1 + $0xc30] sm:$0xf]
        %v1207 = vld [vmem:[%s1 + $0xc34] sm:$0xf]
        %v1208 = vld [vmem:[%s1 + $0xc38] sm:$0xf]
        %v1209 = vld [vmem:[%s1 + $0xc3c] sm:$0xf]
        %v1210 = vld [vmem:[%s1 + $0xc40] sm:$0xf]
        %v1211 = vld [vmem:[%s1 + $0xc44] sm:$0xf]
        %v1212 = vld [vmem:[%s1 + $0xc48] sm:$0xf]
        %v1213 = vld [vmem:[%s1 + $0xc4c] sm:$0xf]
        %v1214 = vld [vmem:[%s1 + $0xc50] sm:$0xf]
        %v1215 = vld [vmem:[%s1 + $0xc54] sm:$0xf]
        %v1216 = vld [vmem:[%s1 + $0xc58] sm:$0xf]
        %v1217 = vld [vmem:[%s1 + $0xc5c] sm:$0xf]
        %v1218 = vld [vmem:[%s1 + $0xc60] sm:$0xf]
        %v1219 = vld [vmem:[%s1 + $0xc64] sm:$0xf]
        %v1220 = vld [vmem:[%s1 + $0xc68] sm:$0xf]
        %v1221 = vld [vmem:[%s1 + $0xc6c] sm:$0xf]
        %v1222 = vld [vmem:[%s1 + $0xc70] sm:$0xf]
        %v1223 = vld [vmem:[%s1 + $0xc74] sm:$0xf]
        %v1224 = vld [vmem:[%s1 + $0xc78] sm:$0xf]
        %v1225 = vld [vmem:[%s1 + $0xc7c] sm:$0xf]
        %v1226 = vld [vmem:[%s1 + $0xc80] sm:$0xf]
        %v1227 = vld [vmem:[%s1 + $0xc84] sm:$0xf]
        %v1228 = vld [vmem:[%s1 + $0xc88] sm:$0xf]
        %v1229 = vld [vmem:[%s1 + $0xc8c] sm:$0xf]
        %v1230 = vld [vmem:[%s1 + $0xc90] sm:$0xf]
        %v1231 = vld [vmem:[%s1 + $0xc94] sm:$0xf]
        %v1232 = vld [vmem:[%s1 + $0xc98] sm:$0xf]
        %v1233 = vld [vmem:[%s1 + $0xc9c] sm:$0xf]
        %v1234 = vld [vmem:[%s1 + $0xca0] sm:$0xf]
        %v1235 = vld [vmem:[%s1 + $0xca4] sm:$0xf]
        %v1236 = vld [vmem:[%s1 + $0xca8] sm:$0xf]
        %v1237 = vld [vmem:[%s1 + $0xcac] sm:$0xf]
        %v1238 = vld [vmem:[%s1 + $0xcb0] sm:$0xf]
        %v1239 = vld [vmem:[%s1 + $0xcb4] sm:$0xf]
        %v1240 = vld [vmem:[%s1 + $0xcb8] sm:$0xf]
        %v1241 = vld [vmem:[%s1 + $0xcbc] sm:$0xf]
        %v1242 = vld [vmem:[%s1 + $0xcc0] sm:$0xf]
        %v1243 = vld [vmem:[%s1 + $0xcc4] sm:$0xf]
        %v1244 = vld [vmem:[%s1 + $0xcc8] sm:$0xf]
        %v1245 = vld [vmem:[%s1 + $0xccc] sm:$0xf]
        %v1246 = vld [vmem:[%s1 + $0xcd0] sm:$0xf]
        %v1247 = vld [vmem:[%s1 + $0xcd4] sm:$0xf]
        %v1248 = vld [vmem:[%s1 + $0xcd8] sm:$0xf]
        %v1249 = vld [vmem:[%s1 + $0xcdc] sm:$0xf]
        %v1250 = vld [vmem:[%s1 + $0xce0] sm:$0xf]
        %v1251 = vld [vmem:[%s1 + $0xce4] sm:$0xf]
        %v1252 = vld [vmem:[%s1 + $0xce8] sm:$0xf]
        %v1253 = vld [vmem:[%s1 + $0xcec] sm:$0xf]
        %v1254 = vld [vmem:[%s1 + $0xcf0] sm:$0xf]
        %v1255 = vld [vmem:[%s1 + $0xcf4] sm:$0xf]
        %v1256 = vld [vmem:[%s1 + $0xcf8] sm:$0xf]
        %v1257 = vld [vmem:[%s1 + $0xcfc] sm:$0xf]
        %v1258 = vld [vmem:[%s1 + $0xd00] sm:$0xf]
        %v1259 = vld [vmem:[%s1 + $0xd04] sm:$0xf]
        %v1260 = vld [vmem:[%s1 + $0xd08] sm:$0xf]
        %v1261 = vld [vmem:[%s1 + $0xd0c] sm:$0xf]
        %v1262 = vld [vmem:[%s1 + $0xd10] sm:$0xf]
        %v1263 = vld [vmem:[%s1 + $0xd14] sm:$0xf]
        %v1264 = vld [vmem:[%s1 + $0xd18] sm:$0xf]
        %v1265 = vld [vmem:[%s1 + $0xd1c] sm:$0xf]
        %v1266 = vld [vmem:[%s1 + $0xd20] sm:$0xf]
        %v1267 = vld [vmem:[%s1 + $0xd24] sm:$0xf]
        %v1268 = vld [vmem:[%s1 + $0xd28] sm:$0xf]
        %v1269 = vld [vmem:[%s1 + $0xd2c] sm:$0xf]
        %v1270 = vld [vmem:[%s1 + $0xd30] sm:$0xf]
        %v1271 = vld [vmem:[%s1 + $0xd34] sm:$0xf]
        %v1272 = vld [vmem:[%s1 + $0xd38] sm:$0xf]
        %v1273 = vld [vmem:[%s1 + $0xd3c] sm:$0xf]
        %v1274 = vld [vmem:[%s1 + $0xd40] sm:$0xf]
        %v1275 = vld [vmem:[%s1 + $0xd44] sm:$0xf]
        %v1276 = vld [vmem:[%s1 + $0xd48] sm:$0xf]
        %v1277 = vld [vmem:[%s1 + $0xd4c] sm:$0xf]
        %v1278 = vld [vmem:[%s1 + $0xd50] sm:$0xf]
        %v1279 = vld [vmem:[%s1 + $0xd54] sm:$0xf]
        %v1280 = vld [vmem:[%s1 + $0xd58] sm:$0xf]
        %v1281 = vld [vmem:[%s1 + $0xd5c] sm:$0xf]
        %v1282 = vld [vmem:[%s1 + $0xd60] sm:$0xf]
        %v1283 = vld [vmem:[%s1 + $0xd64] sm:$0xf]
        %v1284 = vld [vmem:[%s1 + $0xd68] sm:$0xf]
        %v1285 = vld [vmem:[%s1 + $0xd6c] sm:$0xf]
        %v1286 = vld [vmem:[%s1 + $0xd70] sm:$0xf]
        %v1287 = vld [vmem:[%s1 + $0xd74] sm:$0xf]
        %v1288 = vld [vmem:[%s1 + $0xd78] sm:$0xf]
        %v1289 = vld [vmem:[%s1 + $0xd7c] sm:$0xf]
        %v1290 = vld [vmem:[%s1 + $0xd80] sm:$0xf]
        %v1291 = vld [vmem:[%s1 + $0xd84] sm:$0xf]
        %v1292 = vld [vmem:[%s1 + $0xd88] sm:$0xf]
        %v1293 = vld [vmem:[%s1 + $0xd8c] sm:$0xf]
        %v1294 = vld [vmem:[%s1 + $0xd90] sm:$0xf]
        %v1295 = vld [vmem:[%s1 + $0xd94] sm:$0xf]
        %v1296 = vld [vmem:[%s1 + $0xd98] sm:$0xf]
        %v1297 = vld [vmem:[%s1 + $0xd9c] sm:$0xf]
        %v1298 = vld [vmem:[%s1 + $0xda0] sm:$0xf]
        %v1299 = vld [vmem:[%s1 + $0xda4] sm:$0xf]
        %v1300 = vld [vmem:[%s1 + $0xda8] sm:$0xf]
        %v1301 = vld [vmem:[%s1 + $0xdac] sm:$0xf]
        %v1302 = vld [vmem:[%s1 + $0xdb0] sm:$0xf]
        %v1303 = vld [vmem:[%s1 + $0xdb4] sm:$0xf]
        %v1304 = vld [vmem:[%s1 + $0xdb8] sm:$0xf]
        %v1305 = vld [vmem:[%s1 + $0xdbc] sm:$0xf]
        %v1306 = vld [vmem:[%s1 + $0xdc0] sm:$0xf]
        %v1307 = vld [vmem:[%s1 + $0xdc4] sm:$0xf]
        %v1308 = vld [vmem:[%s1 + $0xdc8] sm:$0xf]
        %v1309 = vld [vmem:[%s1 + $0xdcc] sm:$0xf]
        %v1310 = vld [vmem:[%s1 + $0xdd0] sm:$0xf]
        %v1311 = vld [vmem:[%s1 + $0xdd4] sm:$0xf]
        %v1312 = vld [vmem:[%s1 + $0xdd8] sm:$0xf]
        %v1313 = vld [vmem:[%s1 + $0xddc] sm:$0xf]
        %v1314 = vld [vmem:[%s1 + $0xde0] sm:$0xf]
        %v1315 = vld [vmem:[%s1 + $0xde4] sm:$0xf]
        %v1316 = vld [vmem:[%s1 + $0xde8] sm:$0xf]
        %v1317 = vld [vmem:[%s1 + $0xdec] sm:$0xf]
        %v1318 = vld [vmem:[%s1 + $0xdf0] sm:$0xf]
        %v1319 = vld [vmem:[%s1 + $0xdf4] sm:$0xf]
        %v1320 = vld [vmem:[%s1 + $0xdf8] sm:$0xf]
        %v1321 = vld [vmem:[%s1 + $0xdfc] sm:$0xf]
        %v1322 = vld [vmem:[%s1 + $0xe00] sm:$0xf]
        %v1323 = vld [vmem:[%s1 + $0xe04] sm:$0xf]
        %v1324 = vld [vmem:[%s1 + $0xe08] sm:$0xf]
        %v1325 = vld [vmem:[%s1 + $0xe0c] sm:$0xf]
        %v1326 = vld [vmem:[%s1 + $0xe10] sm:$0xf]
        %v1327 = vld [vmem:[%s1 + $0xe14] sm:$0xf]
        %v1328 = vld [vmem:[%s1 + $0xe18] sm:$0xf]
        %v1329 = vld [vmem:[%s1 + $0xe1c] sm:$0xf]
        %v1330 = vld [vmem:[%s1 + $0xe20] sm:$0xf]
        %v1331 = vld [vmem:[%s1 + $0xe24] sm:$0xf]
        %v1332 = vld [vmem:[%s1 + $0xe28] sm:$0xf]
        %v1333 = vld [vmem:[%s1 + $0xe2c] sm:$0xf]
        %v1334 = vld [vmem:[%s1 + $0xe30] sm:$0xf]
        %v1335 = vld [vmem:[%s1 + $0xe34] sm:$0xf]
        %v1336 = vld [vmem:[%s1 + $0xe38] sm:$0xf]
        %v1337 = vld [vmem:[%s1 + $0xe3c] sm:$0xf]
        %v1338 = vld [vmem:[%s1 + $0xe40] sm:$0xf]
        %v1339 = vld [vmem:[%s1 + $0xe44] sm:$0xf]
        %v1340 = vld [vmem:[%s1 + $0xe48] sm:$0xf]
        %v1341 = vld [vmem:[%s1 + $0xe4c] sm:$0xf]
        %v1342 = vld [vmem:[%s1 + $0xe50] sm:$0xf]
        %v1343 = vld [vmem:[%s1 + $0xe54] sm:$0xf]
        %v1344 = vld [vmem:[%s1 + $0xe58] sm:$0xf]
        %v1345 = vld [vmem:[%s1 + $0xe5c] sm:$0xf]
        %v1346 = vld [vmem:[%s1 + $0xe60] sm:$0xf]
        %v1347 = vld [vmem:[%s1 + $0xe64] sm:$0xf]
        %v1348 = vld [vmem:[%s1 + $0xe68] sm:$0xf]
        %v1349 = vld [vmem:[%s1 + $0xe6c] sm:$0xf]
        %v1350 = vld [vmem:[%s1 + $0xe70] sm:$0xf]
        %v1351 = vld [vmem:[%s1 + $0xe74] sm:$0xf]
        %v1352 = vld [vmem:[%s1 + $0xe78] sm:$0xf]
        %v1353 = vld [vmem:[%s1 + $0xe7c] sm:$0xf]
        %v1354 = vld [vmem:[%s1 + $0xe80] sm:$0xf]
        %v1355 = vld [vmem:[%s1 + $0xe84] sm:$0xf]
        %v1356 = vld [vmem:[%s1 + $0xe88] sm:$0xf]
        %v1357 = vld [vmem:[%s1 + $0xe8c] sm:$0xf]
        %v1358 = vld [vmem:[%s1 + $0xe90] sm:$0xf]
        %v1359 = vld [vmem:[%s1 + $0xe94] sm:$0xf]
        %v1360 = vld [vmem:[%s1 + $0xe98] sm:$0xf]
        %v1361 = vld [vmem:[%s1 + $0xe9c] sm:$0xf]
        %v1362 = vld [vmem:[%s1 + $0xea0] sm:$0xf]
        %v1363 = vld [vmem:[%s1 + $0xea4] sm:$0xf]
        %v1364 = vld [vmem:[%s1 + $0xea8] sm:$0xf]
        %v1365 = vld [vmem:[%s1 + $0xeac] sm:$0xf]
        %v1366 = vld [vmem:[%s1 + $0xeb0] sm:$0xf]
        %v1367 = vld [vmem:[%s1 + $0xeb4] sm:$0xf]
        %v1368 = vld [vmem:[%s1 + $0xeb8] sm:$0xf]
        %v1369 = vld [vmem:[%s1 + $0xebc] sm:$0xf]
        %v1370 = vld [vmem:[%s1 + $0xec0] sm:$0xf]
        %v1371 = vld [vmem:[%s1 + $0xec4] sm:$0xf]
        %v1372 = vld [vmem:[%s1 + $0xec8] sm:$0xf]
        %v1373 = vld [vmem:[%s1 + $0xecc] sm:$0xf]
        %v1374 = vld [vmem:[%s1 + $0xed0] sm:$0xf]
        %v1375 = vld [vmem:[%s1 + $0xed4] sm:$0xf]
        %v1376 = vld [vmem:[%s1 + $0xed8] sm:$0xf]
        %v1377 = vld [vmem:[%s1 + $0xedc] sm:$0xf]
        %v1378 = vld [vmem:[%s1 + $0xee0] sm:$0xf]
        %v1379 = vld [vmem:[%s1 + $0xee4] sm:$0xf]
        %v1380 = vld [vmem:[%s1 + $0xee8] sm:$0xf]
        %v1381 = vld [vmem:[%s1 + $0xeec] sm:$0xf]
        %v1382 = vld [vmem:[%s1 + $0xef0] sm:$0xf]
        %v1383 = vld [vmem:[%s1 + $0xef4] sm:$0xf]
        %v1384 = vld [vmem:[%s1 + $0xef8] sm:$0xf]
        %v1385 = vld [vmem:[%s1 + $0xefc] sm:$0xf]
        %v1386 = vld [vmem:[%s1 + $0xf00] sm:$0xf]
        %v1387 = vld [vmem:[%s1 + $0xf04] sm:$0xf]
        %v1388 = vld [vmem:[%s1 + $0xf08] sm:$0xf]
        %v1389 = vld [vmem:[%s1 + $0xf0c] sm:$0xf]
        %v1390 = vld [vmem:[%s1 + $0xf10] sm:$0xf]
        %v1391 = vld [vmem:[%s1 + $0xf14] sm:$0xf]
        %v1392 = vld [vmem:[%s1 + $0xf18] sm:$0xf]
        %v1393 = vld [vmem:[%s1 + $0xf1c] sm:$0xf]
        %v1394 = vld [vmem:[%s1 + $0xf20] sm:$0xf]
        %v1395 = vld [vmem:[%s1 + $0xf24] sm:$0xf]
        %v1396 = vld [vmem:[%s1 + $0xf28] sm:$0xf]
        %v1397 = vld [vmem:[%s1 + $0xf2c] sm:$0xf]
        %v1398 = vld [vmem:[%s1 + $0xf30] sm:$0xf]
        %v1399 = vld [vmem:[%s1 + $0xf34] sm:$0xf]
        %v1400 = vld [vmem:[%s1 + $0xf38] sm:$0xf]
        %v1401 = vld [vmem:[%s1 + $0xf3c] sm:$0xf]
        %v1402 = vld [vmem:[%s1 + $0xf40] sm:$0xf]
        %v1403 = vld [vmem:[%s1 + $0xf44] sm:$0xf]
        %v1404 = vld [vmem:[%s1 + $0xf48] sm:$0xf]
        %v1405 = vld [vmem:[%s1 + $0xf4c] sm:$0xf]
        %v1406 = vld [vmem:[%s1 + $0xf50] sm:$0xf]
        %v1407 = vld [vmem:[%s1 + $0xf54] sm:$0xf]
        %v1408 = vld [vmem:[%s1 + $0xf58] sm:$0xf]
        %v1409 = vld [vmem:[%s1 + $0xf5c] sm:$0xf]
        %v1410 = vld [vmem:[%s1 + $0xf60] sm:$0xf]
        %v1411 = vld [vmem:[%s1 + $0xf64] sm:$0xf]
        %v1412 = vld [vmem:[%s1 + $0xf68] sm:$0xf]
        %v1413 = vld [vmem:[%s1 + $0xf6c] sm:$0xf]
        %v1414 = vld [vmem:[%s1 + $0xf70] sm:$0xf]
        %v1415 = vld [vmem:[%s1 + $0xf74] sm:$0xf]
        %v1416 = vld [vmem:[%s1 + $0xf78] sm:$0xf]
        %v1417 = vld [vmem:[%s1 + $0xf7c] sm:$0xf]
        %v1418 = vld [vmem:[%s1 + $0xf80] sm:$0xf]
        %v1419 = vld [vmem:[%s1 + $0xf84] sm:$0xf]
        %v1420 = vld [vmem:[%s1 + $0xf88] sm:$0xf]
        %v1421 = vld [vmem:[%s1 + $0xf8c] sm:$0xf]
        %v1422 = vld [vmem:[%s1 + $0xf90] sm:$0xf]
        %v1423 = vld [vmem:[%s1 + $0xf94] sm:$0xf]
        %v1424 = vld [vmem:[%s1 + $0xf98] sm:$0xf]
        %v1425 = vld [vmem:[%s1 + $0xf9c] sm:$0xf]
        %v1426 = vld [vmem:[%s1 + $0xfa0] sm:$0xf]
        %v1427 = vld [vmem:[%s1 + $0xfa4] sm:$0xf]
        %v1428 = vld [vmem:[%s1 + $0xfa8] sm:$0xf]
        %v1429 = vld [vmem:[%s1 + $0xfac] sm:$0xf]
        %v1430 = vld [vmem:[%s1 + $0xfb0] sm:$0xf]
        %v1431 = vld [vmem:[%s1 + $0xfb4] sm:$0xf]
        %v1432 = vld [vmem:[%s1 + $0xfb8] sm:$0xf]
        %v1433 = vld [vmem:[%s1 + $0xfbc] sm:$0xf]
        %v1434 = vld [vmem:[%s1 + $0xfc0] sm:$0xf]
        %v1435 = vld [vmem:[%s1 + $0xfc4] sm:$0xf]
        %v1436 = vld [vmem:[%s1 + $0xfc8] sm:$0xf]
        %v1437 = vld [vmem:[%s1 + $0xfcc] sm:$0xf]
        %v1438 = vld [vmem:[%s1 + $0xfd0] sm:$0xf]
        %v1439 = vld [vmem:[%s1 + $0xfd4] sm:$0xf]
        %v1440 = vld [vmem:[%s1 + $0xfd8] sm:$0xf]
        %v1441 = vld [vmem:[%s1 + $0xfdc] sm:$0xf]
        %v1442 = vld [vmem:[%s1 + $0xfe0] sm:$0xf]
        %v1443 = vld [vmem:[%s1 + $0xfe4] sm:$0xf]
        %v1444 = vld [vmem:[%s1 + $0xfe8] sm:$0xf]
        %v1445 = vld [vmem:[%s1 + $0xfec] sm:$0xf]
        %v1446 = vld [vmem:[%s1 + $0xff0] sm:$0xf]
        %v1447 = vld [vmem:[%s1 + $0xff4] sm:$0xf]
        %v1448 = vld [vmem:[%s1 + $0xff8] sm:$0xf]
        %v1449 = vld [vmem:[%s1 + $0xffc] sm:$0xf]
        %v1450 = vld [vmem:[%s1 + $0x1000] sm:$0xf]
        %v1451 = vld [vmem:[%s1 + $0x1004] sm:$0xf]
        %v1452 = vld [vmem:[%s1 + $0x1008] sm:$0xf]
        %v1453 = vld [vmem:[%s1 + $0x100c] sm:$0xf]
        %v1454 = vld [vmem:[%s1 + $0x1010] sm:$0xf]
        %v1455 = vld [vmem:[%s1 + $0x1014] sm:$0xf]
        %v1456 = vld [vmem:[%s1 + $0x1018] sm:$0xf]
        %v1457 = vld [vmem:[%s1 + $0x101c] sm:$0xf]
        %v1458 = vld [vmem:[%s1 + $0x1020] sm:$0xf]
        %v1459 = vld [vmem:[%s1 + $0x1024] sm:$0xf]
        %v1460 = vld [vmem:[%s1 + $0x1028] sm:$0xf]
        %v1461 = vld [vmem:[%s1 + $0x102c] sm:$0xf]
        %v1462 = vld [vmem:[%s1 + $0x1030] sm:$0xf]
        %v1463 = vld [vmem:[%s1 + $0x1034] sm:$0xf]
        %v1464 = vld [vmem:[%s1 + $0x1038] sm:$0xf]
        %v1465 = vld [vmem:[%s1 + $0x103c] sm:$0xf]
        %v1466 = vld [vmem:[%s1 + $0x1040] sm:$0xf]
        %v1467 = vld [vmem:[%s1 + $0x1044] sm:$0xf]
        %v1468 = vld [vmem:[%s1 + $0x1048] sm:$0xf]
        %v1469 = vld [vmem:[%s1 + $0x104c] sm:$0xf]
        %v1470 = vld [vmem:[%s1 + $0x1050] sm:$0xf]
        %v1471 = vld [vmem:[%s1 + $0x1054] sm:$0xf]
        %v1472 = vld [vmem:[%s1 + $0x1058] sm:$0xf]
        %v1473 = vld [vmem:[%s1 + $0x105c] sm:$0xf]
        %v1474 = vld [vmem:[%s1 + $0x1060] sm:$0xf]
        %v1475 = vld [vmem:[%s1 + $0x1064] sm:$0xf]
        %v1476 = vld [vmem:[%s1 + $0x1068] sm:$0xf]
        %v1477 = vld [vmem:[%s1 + $0x106c] sm:$0xf]
        %v1478 = vld [vmem:[%s1 + $0x1070] sm:$0xf]
        %v1479 = vld [vmem:[%s1 + $0x1074] sm:$0xf]
        %v1480 = vld [vmem:[%s1 + $0x1078] sm:$0xf]
        %v1481 = vld [vmem:[%s1 + $0x107c] sm:$0xf]
        %v1482 = vld [vmem:[%s1 + $0x1080] sm:$0xf]
        %v1483 = vld [vmem:[%s1 + $0x1084] sm:$0xf]
        %v1484 = vld [vmem:[%s1 + $0x1088] sm:$0xf]
        %v1485 = vld [vmem:[%s1 + $0x108c] sm:$0xf]
        %v1486 = vld [vmem:[%s1 + $0x1090] sm:$0xf]
        %v1487 = vld [vmem:[%s1 + $0x1094] sm:$0xf]
        %v1488 = vld [vmem:[%s1 + $0x1098] sm:$0xf]
        %v1489 = vld [vmem:[%s1 + $0x109c] sm:$0xf]
        %v1490 = vld [vmem:[%s1 + $0x10a0] sm:$0xf]
        %v1491 = vld [vmem:[%s1 + $0x10a4] sm:$0xf]
        %v1492 = vld [vmem:[%s1 + $0x10a8] sm:$0xf]
        %v1493 = vld [vmem:[%s1 + $0x10ac] sm:$0xf]
        %v1494 = vld [vmem:[%s1 + $0x10b0] sm:$0xf]
        %v1495 = vld [vmem:[%s1 + $0x10b4] sm:$0xf]
        %v1496 = vld [vmem:[%s1 + $0x10b8] sm:$0xf]
        %v1497 = vld [vmem:[%s1 + $0x10bc] sm:$0xf]
        %v1498 = vld [vmem:[%s1 + $0x10c0] sm:$0xf]
        %v1499 = vld [vmem:[%s1 + $0x10c4] sm:$0xf]
        %v1500 = vld [vmem:[%s1 + $0x10c8] sm:$0xf]
        %v1501 = vld [vmem:[%s1 + $0x10cc] sm:$0xf]
        %v1502 = vld [vmem:[%s1 + $0x10d0] sm:$0xf]
        %v1503 = vld [vmem:[%s1 + $0x10d4] sm:$0xf]
        %v1504 = vld [vmem:[%s1 + $0x10d8] sm:$0xf]
        %v1505 = vld [vmem:[%s1 + $0x10dc] sm:$0xf]
        %v1506 = vld [vmem:[%s1 + $0x10e0] sm:$0xf]
        %v1507 = vld [vmem:[%s1 + $0x10e4] sm:$0xf]
        %v1508 = vld [vmem:[%s1 + $0x10e8] sm:$0xf]
        %v1509 = vld [vmem:[%s1 + $0x10ec] sm:$0xf]
        %v1510 = vld [vmem:[%s1 + $0x10f0] sm:$0xf]
        %v1511 = vld [vmem:[%s1 + $0x10f4] sm:$0xf]
        %v1512 = vld [vmem:[%s1 + $0x10f8] sm:$0xf]
        %v1513 = vld [vmem:[%s1 + $0x10fc] sm:$0xf]
        %v1514 = vld [vmem:[%s1 + $0x1100] sm:$0xf]
        %v1515 = vld [vmem:[%s1 + $0x1104] sm:$0xf]
        %v1516 = vld [vmem:[%s1 + $0x1108] sm:$0xf]
        %v1517 = vld [vmem:[%s1 + $0x110c] sm:$0xf]
        %v1518 = vld [vmem:[%s1 + $0x1110] sm:$0xf]
        %v1519 = vld [vmem:[%s1 + $0x1114] sm:$0xf]
        %v1520 = vld [vmem:[%s1 + $0x1118] sm:$0xf]
        %v1521 = vld [vmem:[%s1 + $0x111c] sm:$0xf]
        %v1522 = vld [vmem:[%s1 + $0x1120] sm:$0xf]
        %v1523 = vld [vmem:[%s1 + $0x1124] sm:$0xf]
        %v1524 = vld [vmem:[%s1 + $0x1128] sm:$0xf]
        %v1525 = vld [vmem:[%s1 + $0x112c] sm:$0xf]
        %v1526 = vld [vmem:[%s1 + $0x1130] sm:$0xf]
        %v1527 = vld [vmem:[%s1 + $0x1134] sm:$0xf]
        %v1528 = vld [vmem:[%s1 + $0x1138] sm:$0xf]
        %v1529 = vld [vmem:[%s1 + $0x113c] sm:$0xf]
        %v1530 = vld [vmem:[%s1 + $0x1140] sm:$0xf]
        %v1531 = vld [vmem:[%s1 + $0x1144] sm:$0xf]
        %v1532 = vld [vmem:[%s1 + $0x1148] sm:$0xf]
        %v1533 = vld [vmem:[%s1 + $0x114c] sm:$0xf]
        %v1534 = vld [vmem:[%s1 + $0x1150] sm:$0xf]
        %v1535 = vld [vmem:[%s1 + $0x1154] sm:$0xf]
        %v1536 = vld [vmem:[%s1 + $0x1158] sm:$0xf]
        %v1537 = vld [vmem:[%s1 + $0x115c] sm:$0xf]
        %v1538 = vld [vmem:[%s1 + $0x1160] sm:$0xf]
        %v1539 = vld [vmem:[%s1 + $0x1164] sm:$0xf]
        %v1540 = vld [vmem:[%s1 + $0x1168] sm:$0xf]
        %v1541 = vld [vmem:[%s1 + $0x116c] sm:$0xf]
        %v1542 = vld [vmem:[%s1 + $0x1170] sm:$0xf]
        %v1543 = vld [vmem:[%s1 + $0x1174] sm:$0xf]
        %v1544 = vld [vmem:[%s1 + $0x1178] sm:$0xf]
        %v1545 = vld [vmem:[%s1 + $0x117c] sm:$0xf]
        %v1546 = vld [vmem:[%s1 + $0x1180] sm:$0xf]
        %v1547 = vld [vmem:[%s1 + $0x1184] sm:$0xf]
        %v1548 = vld [vmem:[%s1 + $0x1188] sm:$0xf]
        %v1549 = vld [vmem:[%s1 + $0x118c] sm:$0xf]
        %v1550 = vld [vmem:[%s1 + $0x1190] sm:$0xf]
        %v1551 = vld [vmem:[%s1 + $0x1194] sm:$0xf]
        %v1552 = vld [vmem:[%s1 + $0x1198] sm:$0xf]
        %v1553 = vld [vmem:[%s1 + $0x119c] sm:$0xf]
        %v1554 = vld [vmem:[%s1 + $0x11a0] sm:$0xf]
        %v1555 = vld [vmem:[%s1 + $0x11a4] sm:$0xf]
        %v1556 = vld [vmem:[%s1 + $0x11a8] sm:$0xf]
        %v1557 = vld [vmem:[%s1 + $0x11ac] sm:$0xf]
        %v1558 = vld [vmem:[%s1 + $0x11b0] sm:$0xf]
        %v1559 = vld [vmem:[%s1 + $0x11b4] sm:$0xf]
        %v1560 = vld [vmem:[%s1 + $0x11b8] sm:$0xf]
        %v1561 = vld [vmem:[%s1 + $0x11bc] sm:$0xf]
        %v1562 = vld [vmem:[%s1 + $0x11c0] sm:$0xf]
        %v1563 = vld [vmem:[%s1 + $0x11c4] sm:$0xf]
        %v1564 = vld [vmem:[%s1 + $0x11c8] sm:$0xf]
        %v1565 = vld [vmem:[%s1 + $0x11cc] sm:$0xf]
        %v1566 = vld [vmem:[%s1 + $0x11d0] sm:$0xf]
        %v1567 = vld [vmem:[%s1 + $0x11d4] sm:$0xf]
        %v1568 = vld [vmem:[%s1 + $0x11d8] sm:$0xf]
        %v1569 = vld [vmem:[%s1 + $0x11dc] sm:$0xf]
        %v1570 = vld [vmem:[%s1 + $0x11e0] sm:$0xf]
        %v1571 = vld [vmem:[%s1 + $0x11e4] sm:$0xf]
        %v1572 = vld [vmem:[%s1 + $0x11e8] sm:$0xf]
        %v1573 = vld [vmem:[%s1 + $0x11ec] sm:$0xf]
        %v1574 = vld [vmem:[%s1 + $0x11f0] sm:$0xf]
        %v1575 = vld [vmem:[%s1 + $0x11f4] sm:$0xf]
        %v1576 = vld [vmem:[%s1 + $0x11f8] sm:$0xf]
        %v1577 = vld [vmem:[%s1 + $0x11fc] sm:$0xf]
        %v1578 = vld [vmem:[%s1 + $0x1200] sm:$0xf]
        %v1579 = vld [vmem:[%s1 + $0x1204] sm:$0xf]
        %v1580 = vld [vmem:[%s1 + $0x1208] sm:$0xf]
        %v1581 = vld [vmem:[%s1 + $0x120c] sm:$0xf]
        %v1582 = vld [vmem:[%s1 + $0x1210] sm:$0xf]
        %v1583 = vld [vmem:[%s1 + $0x1214] sm:$0xf]
        %v1584 = vld [vmem:[%s1 + $0x1218] sm:$0xf]
        %v1585 = vld [vmem:[%s1 + $0x121c] sm:$0xf]
        %v1586 = vld [vmem:[%s1 + $0x1220] sm:$0xf]
        %v1587 = vld [vmem:[%s1 + $0x1224] sm:$0xf]
        %v1588 = vld [vmem:[%s1 + $0x1228] sm:$0xf]
        %v1589 = vld [vmem:[%s1 + $0x122c] sm:$0xf]
        %v1590 = vld [vmem:[%s1 + $0x1230] sm:$0xf]
        %v1591 = vld [vmem:[%s1 + $0x1234] sm:$0xf]
        %v1592 = vld [vmem:[%s1 + $0x1238] sm:$0xf]
        %v1593 = vld [vmem:[%s1 + $0x123c] sm:$0xf]
        %v1594 = vld [vmem:[%s1 + $0x1240] sm:$0xf]
        %v1595 = vld [vmem:[%s1 + $0x1244] sm:$0xf]
        %v1596 = vld [vmem:[%s1 + $0x1248] sm:$0xf]
        %v1597 = vld [vmem:[%s1 + $0x124c] sm:$0xf]
        %v1598 = vld [vmem:[%s1 + $0x1250] sm:$0xf]
        %v1599 = vld [vmem:[%s1 + $0x1254] sm:$0xf]
        %v1600 = vld [vmem:[%s1 + $0x1258] sm:$0xf]
        %v1601 = vld [vmem:[%s1 + $0x125c] sm:$0xf]
        %v1602 = vld [vmem:[%s1 + $0x1260] sm:$0xf]
        %v1603 = vld [vmem:[%s1 + $0x1264] sm:$0xf]
        %v1604 = vld [vmem:[%s1 + $0x1268] sm:$0xf]
        %v1605 = vld [vmem:[%s1 + $0x126c] sm:$0xf]
        %v1606 = vld [vmem:[%s1 + $0x1270] sm:$0xf]
        %v1607 = vld [vmem:[%s1 + $0x1274] sm:$0xf]
        %v1608 = vld [vmem:[%s1 + $0x1278] sm:$0xf]
        %v1609 = vld [vmem:[%s1 + $0x127c] sm:$0xf]
        %v1610 = vld [vmem:[%s1 + $0x1280] sm:$0xf]
        %v1611 = vld [vmem:[%s1 + $0x1284] sm:$0xf]
        %v1612 = vld [vmem:[%s1 + $0x1288] sm:$0xf]
        %v1613 = vld [vmem:[%s1 + $0x128c] sm:$0xf]
        %v1614 = vld [vmem:[%s1 + $0x1290] sm:$0xf]
        %v1615 = vld [vmem:[%s1 + $0x1294] sm:$0xf]
        %v1616 = vld [vmem:[%s1 + $0x1298] sm:$0xf]
        %v1617 = vld [vmem:[%s1 + $0x129c] sm:$0xf]
        %v1618 = vld [vmem:[%s1 + $0x12a0] sm:$0xf]
        %v1619 = vld [vmem:[%s1 + $0x12a4] sm:$0xf]
        %v1620 = vld [vmem:[%s1 + $0x12a8] sm:$0xf]
        %v1621 = vld [vmem:[%s1 + $0x12ac] sm:$0xf]
        %v1622 = vld [vmem:[%s1 + $0x12b0] sm:$0xf]
        %v1623 = vld [vmem:[%s1 + $0x12b4] sm:$0xf]
        %v1624 = vld [vmem:[%s1 + $0x12b8] sm:$0xf]
        %v1625 = vld [vmem:[%s1 + $0x12bc] sm:$0xf]
        %v1626 = vld [vmem:[%s1 + $0x12c0] sm:$0xf]
        %v1627 = vld [vmem:[%s1 + $0x12c4] sm:$0xf]
        %v1628 = vld [vmem:[%s1 + $0x12c8] sm:$0xf]
        %v1629 = vld [vmem:[%s1 + $0x12cc] sm:$0xf]
        %v1630 = vld [vmem:[%s1 + $0x12d0] sm:$0xf]
        %v1631 = vld [vmem:[%s1 + $0x12d4] sm:$0xf]
        %v1632 = vld [vmem:[%s1 + $0x12d8] sm:$0xf]
        %v1633 = vld [vmem:[%s1 + $0x12dc] sm:$0xf]
        %v1634 = vld [vmem:[%s1 + $0x12e0] sm:$0xf]
        %v1635 = vld [vmem:[%s1 + $0x12e4] sm:$0xf]
        %v1636 = vld [vmem:[%s1 + $0x12e8] sm:$0xf]
        %v1637 = vld [vmem:[%s1 + $0x12ec] sm:$0xf]
        %v1638 = vld [vmem:[%s1 + $0x12f0] sm:$0xf]
        %v1639 = vld [vmem:[%s1 + $0x12f4] sm:$0xf]
        %v1640 = vld [vmem:[%s1 + $0x12f8] sm:$0xf]
        %v1641 = vld [vmem:[%s1 + $0x12fc] sm:$0xf]
        %v1642 = vld [vmem:[%s1 + $0x1300] sm:$0xf]
        %v1643 = vld [vmem:[%s1 + $0x1304] sm:$0xf]
        %v1644 = vld [vmem:[%s1 + $0x1308] sm:$0xf]
        %v1645 = vld [vmem:[%s1 + $0x130c] sm:$0xf]
        %v1646 = vld [vmem:[%s1 + $0x1310] sm:$0xf]
        %v1647 = vld [vmem:[%s1 + $0x1314] sm:$0xf]
        %v1648 = vld [vmem:[%s1 + $0x1318] sm:$0xf]
        %v1649 = vld [vmem:[%s1 + $0x131c] sm:$0xf]
        %v1650 = vld [vmem:[%s1 + $0x1320] sm:$0xf]
        %v1651 = vld [vmem:[%s1 + $0x1324] sm:$0xf]
        %v1652 = vld [vmem:[%s1 + $0x1328] sm:$0xf]
        %v1653 = vld [vmem:[%s1 + $0x132c] sm:$0xf]
        %v1654 = vld [vmem:[%s1 + $0x1330] sm:$0xf]
        %v1655 = vld [vmem:[%s1 + $0x1334] sm:$0xf]
        %v1656 = vld [vmem:[%s1 + $0x1338] sm:$0xf]
        %v1657 = vld [vmem:[%s1 + $0x133c] sm:$0xf]
        %v1658 = vld [vmem:[%s1 + $0x1340] sm:$0xf]
        %v1659 = vld [vmem:[%s1 + $0x1344] sm:$0xf]
        %v1660 = vld [vmem:[%s1 + $0x1348] sm:$0xf]
        %v1661 = vld [vmem:[%s1 + $0x134c] sm:$0xf]
        %v1662 = vld [vmem:[%s1 + $0x1350] sm:$0xf]
        %v1663 = vld [vmem:[%s1 + $0x1354] sm:$0xf]
        %v1664 = vld [vmem:[%s1 + $0x1358] sm:$0xf]
        %v1665 = vld [vmem:[%s1 + $0x135c] sm:$0xf]
        %v1666 = vld [vmem:[%s1 + $0x1360] sm:$0xf]
        %v1667 = vld [vmem:[%s1 + $0x1364] sm:$0xf]
        %v1668 = vld [vmem:[%s1 + $0x1368] sm:$0xf]
        %v1669 = vld [vmem:[%s1 + $0x136c] sm:$0xf]
        %v1670 = vld [vmem:[%s1 + $0x1370] sm:$0xf]
        %v1671 = vld [vmem:[%s1 + $0x1374] sm:$0xf]
        %v1672 = vld [vmem:[%s1 + $0x1378] sm:$0xf]
        %v1673 = vld [vmem:[%s1 + $0x137c] sm:$0xf]
        %v1674 = vld [vmem:[%s1 + $0x1380] sm:$0xf]
        %v1675 = vld [vmem:[%s1 + $0x1384] sm:$0xf]
        %v1676 = vld [vmem:[%s1 + $0x1388] sm:$0xf]
        %v1677 = vld [vmem:[%s1 + $0x138c] sm:$0xf]
        %v1678 = vld [vmem:[%s1 + $0x1390] sm:$0xf]
        %v1679 = vld [vmem:[%s1 + $0x1394] sm:$0xf]
        %v1680 = vld [vmem:[%s1 + $0x1398] sm:$0xf]
        %v1681 = vld [vmem:[%s1 + $0x139c] sm:$0xf]
        %v1682 = vld [vmem:[%s1 + $0x13a0] sm:$0xf]
        %v1683 = vld [vmem:[%s1 + $0x13a4] sm:$0xf]
        %v1684 = vld [vmem:[%s1 + $0x13a8] sm:$0xf]
        %v1685 = vld [vmem:[%s1 + $0x13ac] sm:$0xf]
        %v1686 = vld [vmem:[%s1 + $0x13b0] sm:$0xf]
        %v1687 = vld [vmem:[%s1 + $0x13b4] sm:$0xf]
        %v1688 = vld [vmem:[%s1 + $0x13b8] sm:$0xf]
        %v1689 = vld [vmem:[%s1 + $0x13bc] sm:$0xf]
        %v1690 = vld [vmem:[%s1 + $0x13c0] sm:$0xf]
        %v1691 = vld [vmem:[%s1 + $0x13c4] sm:$0xf]
        %v1692 = vld [vmem:[%s1 + $0x13c8] sm:$0xf]
        %v1693 = vld [vmem:[%s1 + $0x13cc] sm:$0xf]
        %v1694 = vld [vmem:[%s1 + $0x13d0] sm:$0xf]
        %v1695 = vld [vmem:[%s1 + $0x13d4] sm:$0xf]
        %v1696 = vld [vmem:[%s1 + $0x13d8] sm:$0xf]
        %v1697 = vld [vmem:[%s1 + $0x13dc] sm:$0xf]
        %v1698 = vld [vmem:[%s1 + $0x13e0] sm:$0xf]
        %v1699 = vld [vmem:[%s1 + $0x13e4] sm:$0xf]
        %v1700 = vld [vmem:[%s1 + $0x13e8] sm:$0xf]
        %v1701 = vld [vmem:[%s1 + $0x13ec] sm:$0xf]
        %v1702 = vld [vmem:[%s1 + $0x13f0] sm:$0xf]
        %v1703 = vld [vmem:[%s1 + $0x13f4] sm:$0xf]
        %v1704 = vld [vmem:[%s1 + $0x13f8] sm:$0xf]
        %v1705 = vld [vmem:[%s1 + $0x13fc] sm:$0xf]
        %v1706 = vld [vmem:[%s1 + $0x1400] sm:$0xf]
        %v1707 = vld [vmem:[%s1 + $0x1404] sm:$0xf]
        %v1708 = vld [vmem:[%s1 + $0x1408] sm:$0xf]
        %v1709 = vld [vmem:[%s1 + $0x140c] sm:$0xf]
        %v1710 = vld [vmem:[%s1 + $0x1410] sm:$0xf]
        %v1711 = vld [vmem:[%s1 + $0x1414] sm:$0xf]
        %v1712 = vld [vmem:[%s1 + $0x1418] sm:$0xf]
        %v1713 = vld [vmem:[%s1 + $0x141c] sm:$0xf]
        %v1714 = vld [vmem:[%s1 + $0x1420] sm:$0xf]
        %v1715 = vld [vmem:[%s1 + $0x1424] sm:$0xf]
        %v1716 = vld [vmem:[%s1 + $0x1428] sm:$0xf]
        %v1717 = vld [vmem:[%s1 + $0x142c] sm:$0xf]
        %v1718 = vld [vmem:[%s1 + $0x1430] sm:$0xf]
        %v1719 = vld [vmem:[%s1 + $0x1434] sm:$0xf]
        %v1720 = vld [vmem:[%s1 + $0x1438] sm:$0xf]
        %v1721 = vld [vmem:[%s1 + $0x143c] sm:$0xf]
        %v1722 = vld [vmem:[%s1 + $0x1440] sm:$0xf]
        %v1723 = vld [vmem:[%s1 + $0x1444] sm:$0xf]
        %v1724 = vld [vmem:[%s1 + $0x1448] sm:$0xf]
        %v1725 = vld [vmem:[%s1 + $0x144c] sm:$0xf]
        %v1726 = vld [vmem:[%s1 + $0x1450] sm:$0xf]
        %v1727 = vld [vmem:[%s1 + $0x1454] sm:$0xf]
        %v1728 = vld [vmem:[%s1 + $0x1458] sm:$0xf]
        %v1729 = vld [vmem:[%s1 + $0x145c] sm:$0xf]
        %v1730 = vld [vmem:[%s1 + $0x1460] sm:$0xf]
        %v1731 = vld [vmem:[%s1 + $0x1464] sm:$0xf]
        %v1732 = vld [vmem:[%s1 + $0x1468] sm:$0xf]
        %v1733 = vld [vmem:[%s1 + $0x146c] sm:$0xf]
        %v1734 = vld [vmem:[%s1 + $0x1470] sm:$0xf]
        %v1735 = vld [vmem:[%s1 + $0x1474] sm:$0xf]
        %v1736 = vld [vmem:[%s1 + $0x1478] sm:$0xf]
        %v1737 = vld [vmem:[%s1 + $0x147c] sm:$0xf]
        %v1738 = vld [vmem:[%s1 + $0x1480] sm:$0xf]
        %v1739 = vld [vmem:[%s1 + $0x1484] sm:$0xf]
        %v1740 = vld [vmem:[%s1 + $0x1488] sm:$0xf]
        %v1741 = vld [vmem:[%s1 + $0x148c] sm:$0xf]
        %v1742 = vld [vmem:[%s1 + $0x1490] sm:$0xf]
        %v1743 = vld [vmem:[%s1 + $0x1494] sm:$0xf]
        %v1744 = vld [vmem:[%s1 + $0x1498] sm:$0xf]
        %v1745 = vld [vmem:[%s1 + $0x149c] sm:$0xf]
        %v1746 = vld [vmem:[%s1 + $0x14a0] sm:$0xf]
        %v1747 = vld [vmem:[%s1 + $0x14a4] sm:$0xf]
        %v1748 = vld [vmem:[%s1 + $0x14a8] sm:$0xf]
        %v1749 = vld [vmem:[%s1 + $0x14ac] sm:$0xf]
        %v1750 = vld [vmem:[%s1 + $0x14b0] sm:$0xf]
        %v1751 = vld [vmem:[%s1 + $0x14b4] sm:$0xf]
        %v1752 = vld [vmem:[%s1 + $0x14b8] sm:$0xf]
        %v1753 = vld [vmem:[%s1 + $0x14bc] sm:$0xf]
        %v1754 = vld [vmem:[%s1 + $0x14c0] sm:$0xf]
        %v1755 = vld [vmem:[%s1 + $0x14c4] sm:$0xf]
        %v1756 = vld [vmem:[%s1 + $0x14c8] sm:$0xf]
        %v1757 = vld [vmem:[%s1 + $0x14cc] sm:$0xf]
        %v1758 = vld [vmem:[%s1 + $0x14d0] sm:$0xf]
        %v1759 = vld [vmem:[%s1 + $0x14d4] sm:$0xf]
        %v1760 = vld [vmem:[%s1 + $0x14d8] sm:$0xf]
        %v1761 = vld [vmem:[%s1 + $0x14dc] sm:$0xf]
        %v1762 = vld [vmem:[%s1 + $0x14e0] sm:$0xf]
        %v1763 = vld [vmem:[%s1 + $0x14e4] sm:$0xf]
        %v1764 = vld [vmem:[%s1 + $0x14e8] sm:$0xf]
        %v1765 = vld [vmem:[%s1 + $0x14ec] sm:$0xf]
        %v1766 = vld [vmem:[%s1 + $0x14f0] sm:$0xf]
        %v1767 = vld [vmem:[%s1 + $0x14f4] sm:$0xf]
        %v1768 = vld [vmem:[%s1 + $0x14f8] sm:$0xf]
        %v1769 = vld [vmem:[%s1 + $0x14fc] sm:$0xf]
        %v1770 = vld [vmem:[%s1 + $0x1500] sm:$0xf]
        %v1771 = vld [vmem:[%s1 + $0x1504] sm:$0xf]
        %v1772 = vld [vmem:[%s1 + $0x1508] sm:$0xf]
        %v1773 = vld [vmem:[%s1 + $0x150c] sm:$0xf]
        %v1774 = vld [vmem:[%s1 + $0x1510] sm:$0xf]
        %v1775 = vld [vmem:[%s1 + $0x1514] sm:$0xf]
        %v1776 = vld [vmem:[%s1 + $0x1518] sm:$0xf]
        %v1777 = vld [vmem:[%s1 + $0x151c] sm:$0xf]
        %v1778 = vld [vmem:[%s1 + $0x1520] sm:$0xf]
        %v1779 = vld [vmem:[%s1 + $0x1524] sm:$0xf]
        %v1780 = vld [vmem:[%s1 + $0x1528] sm:$0xf]
        %v1781 = vld [vmem:[%s1 + $0x152c] sm:$0xf]
        %v1782 = vld [vmem:[%s1 + $0x1530] sm:$0xf]
        %v1783 = vld [vmem:[%s1 + $0x1534] sm:$0xf]
        %v1784 = vld [vmem:[%s1 + $0x1538] sm:$0xf]
        %v1785 = vld [vmem:[%s1 + $0x153c] sm:$0xf]
        %v1786 = vld [vmem:[%s1 + $0x1540] sm:$0xf]
        %v1787 = vld [vmem:[%s1 + $0x1544] sm:$0xf]
        %v1788 = vld [vmem:[%s1 + $0x1548] sm:$0xf]
        %v1789 = vld [vmem:[%s1 + $0x154c] sm:$0xf]
        %v1790 = vld [vmem:[%s1 + $0x1550] sm:$0xf]
        %v1791 = vld [vmem:[%s1 + $0x1554] sm:$0xf]
        %v1792 = vld [vmem:[%s1 + $0x1558] sm:$0xf]
        %v1793 = vld [vmem:[%s1 + $0x155c] sm:$0xf]
        %v1794 = vld [vmem:[%s1 + $0x1560] sm:$0xf]
        %v1795 = vld [vmem:[%s1 + $0x1564] sm:$0xf]
        %v1796 = vld [vmem:[%s1 + $0x1568] sm:$0xf]
        %v1797 = vld [vmem:[%s1 + $0x156c] sm:$0xf]
        %v1798 = vld [vmem:[%s1 + $0x1570] sm:$0xf]
        %v1799 = vld [vmem:[%s1 + $0x1574] sm:$0xf]
        %v1800 = vld [vmem:[%s1 + $0x1578] sm:$0xf]
        %v1801 = vld [vmem:[%s1 + $0x157c] sm:$0xf]
        %v1802 = vld [vmem:[%s1 + $0x1580] sm:$0xf]
        %v1803 = vld [vmem:[%s1 + $0x1584] sm:$0xf]
        %v1804 = vld [vmem:[%s1 + $0x1588] sm:$0xf]
        %v1805 = vld [vmem:[%s1 + $0x158c] sm:$0xf]
        %v1806 = vld [vmem:[%s1 + $0x1590] sm:$0xf]
        %v1807 = vld [vmem:[%s1 + $0x1594] sm:$0xf]
        %v1808 = vld [vmem:[%s1 + $0x1598] sm:$0xf]
        %v1809 = vld [vmem:[%s1 + $0x159c] sm:$0xf]
        %v1810 = vld [vmem:[%s1 + $0x15a0] sm:$0xf]
        %v1811 = vld [vmem:[%s1 + $0x15a4] sm:$0xf]
        %v1812 = vld [vmem:[%s1 + $0x15a8] sm:$0xf]
        %v1813 = vld [vmem:[%s1 + $0x15ac] sm:$0xf]
        %v1814 = vld [vmem:[%s1 + $0x15b0] sm:$0xf]
        %v1815 = vld [vmem:[%s1 + $0x15b4] sm:$0xf]
        %v1816 = vld [vmem:[%s1 + $0x15b8] sm:$0xf]
        %v1817 = vld [vmem:[%s1 + $0x15bc] sm:$0xf]
        %v1818 = vld [vmem:[%s1 + $0x15c0] sm:$0xf]
        %v1819 = vld [vmem:[%s1 + $0x15c4] sm:$0xf]
        %v1820 = vld [vmem:[%s1 + $0x15c8] sm:$0xf]
        %v1821 = vld [vmem:[%s1 + $0x15cc] sm:$0xf]
        %v1822 = vld [vmem:[%s1 + $0x15d0] sm:$0xf]
        %v1823 = vld [vmem:[%s1 + $0x15d4] sm:$0xf]
        %v1824 = vld [vmem:[%s1 + $0x15d8] sm:$0xf]
        %v1825 = vld [vmem:[%s1 + $0x15dc] sm:$0xf]
        %v1826 = vld [vmem:[%s1 + $0x15e0] sm:$0xf]
        %v1827 = vld [vmem:[%s1 + $0x15e4] sm:$0xf]
        %v1828 = vld [vmem:[%s1 + $0x15e8] sm:$0xf]
        %v1829 = vld [vmem:[%s1 + $0x15ec] sm:$0xf]
        %v1830 = vld [vmem:[%s1 + $0x15f0] sm:$0xf]
        %v1831 = vld [vmem:[%s1 + $0x15f4] sm:$0xf]
        %v1832 = vld [vmem:[%s1 + $0x15f8] sm:$0xf]
        %v1833 = vld [vmem:[%s1 + $0x15fc] sm:$0xf]
        %v1834 = vld [vmem:[%s1 + $0x1600] sm:$0xf]
        %v1835 = vld [vmem:[%s1 + $0x1604] sm:$0xf]
        %v1836 = vld [vmem:[%s1 + $0x1608] sm:$0xf]
        %v1837 = vld [vmem:[%s1 + $0x160c] sm:$0xf]
        %v1838 = vld [vmem:[%s1 + $0x1610] sm:$0xf]
        %v1839 = vld [vmem:[%s1 + $0x1614] sm:$0xf]
        %v1840 = vld [vmem:[%s1 + $0x1618] sm:$0xf]
        %v1841 = vld [vmem:[%s1 + $0x161c] sm:$0xf]
        %v1842 = vld [vmem:[%s1 + $0x1620] sm:$0xf]
        %v1843 = vld [vmem:[%s1 + $0x1624] sm:$0xf]
        %v1844 = vld [vmem:[%s1 + $0x1628] sm:$0xf]
        %v1845 = vld [vmem:[%s1 + $0x162c] sm:$0xf]
        %v1846 = vld [vmem:[%s1 + $0x1630] sm:$0xf]
        %v1847 = vld [vmem:[%s1 + $0x1634] sm:$0xf]
        %v1848 = vld [vmem:[%s1 + $0x1638] sm:$0xf]
        %v1849 = vld [vmem:[%s1 + $0x163c] sm:$0xf]
        %v1850 = vld [vmem:[%s1 + $0x1640] sm:$0xf]
        %v1851 = vld [vmem:[%s1 + $0x1644] sm:$0xf]
        %v1852 = vld [vmem:[%s1 + $0x1648] sm:$0xf]
        %v1853 = vld [vmem:[%s1 + $0x164c] sm:$0xf]
        %v1854 = vld [vmem:[%s1 + $0x1650] sm:$0xf]
        %v1855 = vld [vmem:[%s1 + $0x1654] sm:$0xf]
        %v1856 = vld [vmem:[%s1 + $0x1658] sm:$0xf]
        %v1857 = vld [vmem:[%s1 + $0x165c] sm:$0xf]
        %v1858 = vld [vmem:[%s1 + $0x1660] sm:$0xf]
        %v1859 = vld [vmem:[%s1 + $0x1664] sm:$0xf]
        %v1860 = vld [vmem:[%s1 + $0x1668] sm:$0xf]
        %v1861 = vld [vmem:[%s1 + $0x166c] sm:$0xf]
        %v1862 = vld [vmem:[%s1 + $0x1670] sm:$0xf]
        %v1863 = vld [vmem:[%s1 + $0x1674] sm:$0xf]
        %v1864 = vld [vmem:[%s1 + $0x1678] sm:$0xf]
        %v1865 = vld [vmem:[%s1 + $0x167c] sm:$0xf]
        %v1866 = vld [vmem:[%s1 + $0x1680] sm:$0xf]
        %v1867 = vld [vmem:[%s1 + $0x1684] sm:$0xf]
        %v1868 = vld [vmem:[%s1 + $0x1688] sm:$0xf]
        %v1869 = vld [vmem:[%s1 + $0x168c] sm:$0xf]
        %v1870 = vld [vmem:[%s1 + $0x1690] sm:$0xf]
        %v1871 = vld [vmem:[%s1 + $0x1694] sm:$0xf]
        %v1872 = vld [vmem:[%s1 + $0x1698] sm:$0xf]
        %v1873 = vld [vmem:[%s1 + $0x169c] sm:$0xf]
        %v1874 = vld [vmem:[%s1 + $0x16a0] sm:$0xf]
        %v1875 = vld [vmem:[%s1 + $0x16a4] sm:$0xf]
        %v1876 = vld [vmem:[%s1 + $0x16a8] sm:$0xf]
        %v1877 = vld [vmem:[%s1 + $0x16ac] sm:$0xf]
        %v1878 = vld [vmem:[%s1 + $0x16b0] sm:$0xf]
        %v1879 = vld [vmem:[%s1 + $0x16b4] sm:$0xf]
        %v1880 = vld [vmem:[%s1 + $0x16b8] sm:$0xf]
        %v1881 = vld [vmem:[%s1 + $0x16bc] sm:$0xf]
        %v1882 = vld [vmem:[%s1 + $0x16c0] sm:$0xf]
        %v1883 = vld [vmem:[%s1 + $0x16c4] sm:$0xf]
        %v1884 = vld [vmem:[%s1 + $0x16c8] sm:$0xf]
        %v1885 = vld [vmem:[%s1 + $0x16cc] sm:$0xf]
        %v1886 = vld [vmem:[%s1 + $0x16d0] sm:$0xf]
        %v1887 = vld [vmem:[%s1 + $0x16d4] sm:$0xf]
        %v1888 = vld [vmem:[%s1 + $0x16d8] sm:$0xf]
        %v1889 = vld [vmem:[%s1 + $0x16dc] sm:$0xf]
        %v1890 = vld [vmem:[%s1 + $0x16e0] sm:$0xf]
        %v1891 = vld [vmem:[%s1 + $0x16e4] sm:$0xf]
        %v1892 = vld [vmem:[%s1 + $0x16e8] sm:$0xf]
        %v1893 = vld [vmem:[%s1 + $0x16ec] sm:$0xf]
        %v1894 = vld [vmem:[%s1 + $0x16f0] sm:$0xf]
        %v1895 = vld [vmem:[%s1 + $0x16f4] sm:$0xf]
        %v1896 = vld [vmem:[%s1 + $0x16f8] sm:$0xf]
        %v1897 = vld [vmem:[%s1 + $0x16fc] sm:$0xf]
        %v1898 = vld [vmem:[%s1 + $0x1700] sm:$0xf]
        %v1899 = vld [vmem:[%s1 + $0x1704] sm:$0xf]
        %v1900 = vld [vmem:[%s1 + $0x1708] sm:$0xf]
        %v1901 = vld [vmem:[%s1 + $0x170c] sm:$0xf]
        %v1902 = vld [vmem:[%s1 + $0x1710] sm:$0xf]
        %v1903 = vld [vmem:[%s1 + $0x1714] sm:$0xf]
        %v1904 = vld [vmem:[%s1 + $0x1718] sm:$0xf]
        %v1905 = vld [vmem:[%s1 + $0x171c] sm:$0xf]
        %v1906 = vld [vmem:[%s1 + $0x1720] sm:$0xf]
        %v1907 = vld [vmem:[%s1 + $0x1724] sm:$0xf]
        %v1908 = vld [vmem:[%s1 + $0x1728] sm:$0xf]
        %v1909 = vld [vmem:[%s1 + $0x172c] sm:$0xf]
        %v1910 = vld [vmem:[%s1 + $0x1730] sm:$0xf]
        %v1911 = vld [vmem:[%s1 + $0x1734] sm:$0xf]
        %v1912 = vld [vmem:[%s1 + $0x1738] sm:$0xf]
        %v1913 = vld [vmem:[%s1 + $0x173c] sm:$0xf]
        %v1914 = vld [vmem:[%s1 + $0x1740] sm:$0xf]
        %v1915 = vld [vmem:[%s1 + $0x1744] sm:$0xf]
        %v1916 = vld [vmem:[%s1 + $0x1748] sm:$0xf]
        %v1917 = vld [vmem:[%s1 + $0x174c] sm:$0xf]
        %v1918 = vld [vmem:[%s1 + $0x1750] sm:$0xf]
        %v1919 = vld [vmem:[%s1 + $0x1754] sm:$0xf]
        %v1920 = vld [vmem:[%s1 + $0x1758] sm:$0xf]
        %v1921 = vld [vmem:[%s1 + $0x175c] sm:$0xf]
        %v1922 = vld [vmem:[%s1 + $0x1760] sm:$0xf]
        %v1923 = vld [vmem:[%s1 + $0x1764] sm:$0xf]
        %v1924 = vld [vmem:[%s1 + $0x1768] sm:$0xf]
        %v1925 = vld [vmem:[%s1 + $0x176c] sm:$0xf]
        %v1926 = vld [vmem:[%s1 + $0x1770] sm:$0xf]
        %v1927 = vld [vmem:[%s1 + $0x1774] sm:$0xf]
        %v1928 = vld [vmem:[%s1 + $0x1778] sm:$0xf]
        %v1929 = vld [vmem:[%s1 + $0x177c] sm:$0xf]
        %v1930 = vld [vmem:[%s1 + $0x1780] sm:$0xf]
        %v1931 = vld [vmem:[%s1 + $0x1784] sm:$0xf]
        %v1932 = vld [vmem:[%s1 + $0x1788] sm:$0xf]
        %v1933 = vld [vmem:[%s1 + $0x178c] sm:$0xf]
        %v1934 = vld [vmem:[%s1 + $0x1790] sm:$0xf]
        %v1935 = vld [vmem:[%s1 + $0x1794] sm:$0xf]
        %v1936 = vld [vmem:[%s1 + $0x1798] sm:$0xf]
        %v1937 = vld [vmem:[%s1 + $0x179c] sm:$0xf]
        %v1938 = vld [vmem:[%s1 + $0x17a0] sm:$0xf]
        %v1939 = vld [vmem:[%s1 + $0x17a4] sm:$0xf]
        %v1940 = vld [vmem:[%s1 + $0x17a8] sm:$0xf]
        %v1941 = vld [vmem:[%s1 + $0x17ac] sm:$0xf]
        %v1942 = vld [vmem:[%s1 + $0x17b0] sm:$0xf]
        %v1943 = vld [vmem:[%s1 + $0x17b4] sm:$0xf]
        %v1944 = vld [vmem:[%s1 + $0x17b8] sm:$0xf]
        %v1945 = vld [vmem:[%s1 + $0x17bc] sm:$0xf]
        %v1946 = vld [vmem:[%s1 + $0x17c0] sm:$0xf]
        %v1947 = vld [vmem:[%s1 + $0x17c4] sm:$0xf]
        %v1948 = vld [vmem:[%s1 + $0x17c8] sm:$0xf]
        %v1949 = vld [vmem:[%s1 + $0x17cc] sm:$0xf]
        %v1950 = vld [vmem:[%s1 + $0x17d0] sm:$0xf]
        %v1951 = vld [vmem:[%s1 + $0x17d4] sm:$0xf]
        %v1952 = vld [vmem:[%s1 + $0x17d8] sm:$0xf]
        %v1953 = vld [vmem:[%s1 + $0x17dc] sm:$0xf]
        %v1954 = vld [vmem:[%s1 + $0x17e0] sm:$0xf]
        %v1955 = vld [vmem:[%s1 + $0x17e4] sm:$0xf]
        %v1956 = vld [vmem:[%s1 + $0x17e8] sm:$0xf]
        %v1957 = vld [vmem:[%s1 + $0x17ec] sm:$0xf]
        %v1958 = vld [vmem:[%s1 + $0x17f0] sm:$0xf]
        %v1959 = vld [vmem:[%s1 + $0x17f4] sm:$0xf]
        %v1960 = vld [vmem:[%s1 + $0x17f8] sm:$0xf]
        %v1961 = vld [vmem:[%s1 + $0x17fc] sm:$0xf]
        %v1962 = vld [vmem:[%s1 + $0x1800] sm:$0xf]
        %v1963 = vld [vmem:[%s1 + $0x1804] sm:$0xf]
        %v1964 = vld [vmem:[%s1 + $0x1808] sm:$0xf]
        %v1965 = vld [vmem:[%s1 + $0x180c] sm:$0xf]
        %v1966 = vld [vmem:[%s1 + $0x1810] sm:$0xf]
        %v1967 = vld [vmem:[%s1 + $0x1814] sm:$0xf]
        %v1968 = vld [vmem:[%s1 + $0x1818] sm:$0xf]
        %v1969 = vld [vmem:[%s1 + $0x181c] sm:$0xf]
        %v1970 = vld [vmem:[%s1 + $0x1820] sm:$0xf]
        %v1971 = vld [vmem:[%s1 + $0x1824] sm:$0xf]
        %v1972 = vld [vmem:[%s1 + $0x1828] sm:$0xf]
        %v1973 = vld [vmem:[%s1 + $0x182c] sm:$0xf]
        %v1974 = vld [vmem:[%s1 + $0x1830] sm:$0xf]
        %v1975 = vld [vmem:[%s1 + $0x1834] sm:$0xf]
        %v1976 = vld [vmem:[%s1 + $0x1838] sm:$0xf]
        %v1977 = vld [vmem:[%s1 + $0x183c] sm:$0xf]
        %v1978 = vld [vmem:[%s1 + $0x1840] sm:$0xf]
        %v1979 = vld [vmem:[%s1 + $0x1844] sm:$0xf]
        %v1980 = vld [vmem:[%s1 + $0x1848] sm:$0xf]
        %v1981 = vld [vmem:[%s1 + $0x184c] sm:$0xf]
        %v1982 = vld [vmem:[%s1 + $0x1850] sm:$0xf]
        %v1983 = vld [vmem:[%s1 + $0x1854] sm:$0xf]
        %v1984 = vld [vmem:[%s1 + $0x1858] sm:$0xf]
        %v1985 = vld [vmem:[%s1 + $0x185c] sm:$0xf]
        %v1986 = vld [vmem:[%s1 + $0x1860] sm:$0xf]
        %v1987 = vld [vmem:[%s1 + $0x1864] sm:$0xf]
        %v1988 = vld [vmem:[%s1 + $0x1868] sm:$0xf]
        %v1989 = vld [vmem:[%s1 + $0x186c] sm:$0xf]
        %v1990 = vld [vmem:[%s1 + $0x1870] sm:$0xf]
        %v1991 = vld [vmem:[%s1 + $0x1874] sm:$0xf]
        %v1992 = vld [vmem:[%s1 + $0x1878] sm:$0xf]
        %v1993 = vld [vmem:[%s1 + $0x187c] sm:$0xf]
        %v1994 = vld [vmem:[%s1 + $0x1880] sm:$0xf]
        %v1995 = vld [vmem:[%s1 + $0x1884] sm:$0xf]
        %v1996 = vld [vmem:[%s1 + $0x1888] sm:$0xf]
        %v1997 = vld [vmem:[%s1 + $0x188c] sm:$0xf]
        %v1998 = vld [vmem:[%s1 + $0x1890] sm:$0xf]
        %v1999 = vld [vmem:[%s1 + $0x1894] sm:$0xf]
        %v2000 = vld [vmem:[%s1 + $0x1898] sm:$0xf]
        %v2001 = vld [vmem:[%s1 + $0x189c] sm:$0xf]
        %v2002 = vld [vmem:[%s1 + $0x18a0] sm:$0xf]
        %v2003 = vld [vmem:[%s1 + $0x18a4] sm:$0xf]
        %v2004 = vld [vmem:[%s1 + $0x18a8] sm:$0xf]
        %v2005 = vld [vmem:[%s1 + $0x18ac] sm:$0xf]
        %v2006 = vld [vmem:[%s1 + $0x18b0] sm:$0xf]
        %v2007 = vld [vmem:[%s1 + $0x18b4] sm:$0xf]
        %v2008 = vld [vmem:[%s1 + $0x18b8] sm:$0xf]
        %v2009 = vld [vmem:[%s1 + $0x18bc] sm:$0xf]
        %v2010 = vld [vmem:[%s1 + $0x18c0] sm:$0xf]
        %v2011 = vld [vmem:[%s1 + $0x18c4] sm:$0xf]
        %v2012 = vld [vmem:[%s1 + $0x18c8] sm:$0xf]
        %v2013 = vld [vmem:[%s1 + $0x18cc] sm:$0xf]
        %v2014 = vld [vmem:[%s1 + $0x18d0] sm:$0xf]
        %v2015 = vld [vmem:[%s1 + $0x18d4] sm:$0xf]
        %v2016 = vld [vmem:[%s1 + $0x18d8] sm:$0xf]
        %v2017 = vld [vmem:[%s1 + $0x18dc] sm:$0xf]
        %v2018 = vld [vmem:[%s1 + $0x18e0] sm:$0xf]
        %v2019 = vld [vmem:[%s1 + $0x18e4] sm:$0xf]
        %v2020 = vld [vmem:[%s1 + $0x18e8] sm:$0xf]
        %v2021 = vld [vmem:[%s1 + $0x18ec] sm:$0xf]
        %v2022 = vld [vmem:[%s1 + $0x18f0] sm:$0xf]
        %v2023 = vld [vmem:[%s1 + $0x18f4] sm:$0xf]
        %v2024 = vld [vmem:[%s1 + $0x18f8] sm:$0xf]
        %v2025 = vld [vmem:[%s1 + $0x18fc] sm:$0xf]
        %v2026 = vld [vmem:[%s1 + $0x1900] sm:$0xf]
        %v2027 = vld [vmem:[%s1 + $0x1904] sm:$0xf]
        %v2028 = vld [vmem:[%s1 + $0x1908] sm:$0xf]
        %v2029 = vld [vmem:[%s1 + $0x190c] sm:$0xf]
        %v2030 = vld [vmem:[%s1 + $0x1910] sm:$0xf]
        %v2031 = vld [vmem:[%s1 + $0x1914] sm:$0xf]
        %v2032 = vld [vmem:[%s1 + $0x1918] sm:$0xf]
        %v2033 = vld [vmem:[%s1 + $0x191c] sm:$0xf]
        %v2034 = vld [vmem:[%s1 + $0x1920] sm:$0xf]
        %v2035 = vld [vmem:[%s1 + $0x1924] sm:$0xf]
        %v2036 = vld [vmem:[%s1 + $0x1928] sm:$0xf]
        %v2037 = vld [vmem:[%s1 + $0x192c] sm:$0xf]
        %v2038 = vld [vmem:[%s1 + $0x1930] sm:$0xf]
        %v2039 = vld [vmem:[%s1 + $0x1934] sm:$0xf]
        %v2040 = vld [vmem:[%s1 + $0x1938] sm:$0xf]
        %v2041 = vld [vmem:[%s1 + $0x193c] sm:$0xf]
        %v2042 = vld [vmem:[%s1 + $0x1940] sm:$0xf]
        %v2043 = vld [vmem:[%s1 + $0x1944] sm:$0xf]
        %v2044 = vld [vmem:[%s1 + $0x1948] sm:$0xf]
        %v2045 = vld [vmem:[%s1 + $0x194c] sm:$0xf]
        %v2046 = vld [vmem:[%s1 + $0x1950] sm:$0xf]
        %v2047 = vld [vmem:[%s1 + $0x1954] sm:$0xf]
        %v2048 = vld [vmem:[%s1 + $0x1958] sm:$0xf]
        %v2049 = vld [vmem:[%s1 + $0x195c] sm:$0xf]
        %v2050 = vld [vmem:[%s1 + $0x1960] sm:$0xf]
        %v2051 = vld [vmem:[%s1 + $0x1964] sm:$0xf]
        %v2052 = vld [vmem:[%s1 + $0x1968] sm:$0xf]
        %v2053 = vld [vmem:[%s1 + $0x196c] sm:$0xf]
        %v2054 = vld [vmem:[%s1 + $0x1970] sm:$0xf]
        %v2055 = vld [vmem:[%s1 + $0x1974] sm:$0xf]
        %v2056 = vld [vmem:[%s1 + $0x1978] sm:$0xf]
        %v2057 = vld [vmem:[%s1 + $0x197c] sm:$0xf]
        %v2058 = vld [vmem:[%s1 + $0x1980] sm:$0xf]
        %v2059 = vld [vmem:[%s1 + $0x1984] sm:$0xf]
        %v2060 = vld [vmem:[%s1 + $0x1988] sm:$0xf]
        %v2061 = vld [vmem:[%s1 + $0x198c] sm:$0xf]
        %v2062 = vld [vmem:[%s1 + $0x1990] sm:$0xf]
        %v2063 = vld [vmem:[%s1 + $0x1994] sm:$0xf]
        %v2064 = vld [vmem:[%s1 + $0x1998] sm:$0xf]
        %v2065 = vld [vmem:[%s1 + $0x199c] sm:$0xf]
        %v2066 = vld [vmem:[%s1 + $0x19a0] sm:$0xf]
        %v2067 = vld [vmem:[%s1 + $0x19a4] sm:$0xf]
        %v2068 = vld [vmem:[%s1 + $0x19a8] sm:$0xf]
        %v2069 = vld [vmem:[%s1 + $0x19ac] sm:$0xf]
        %v2070 = vld [vmem:[%s1 + $0x19b0] sm:$0xf]
        %v2071 = vld [vmem:[%s1 + $0x19b4] sm:$0xf]
        %v2072 = vld [vmem:[%s1 + $0x19b8] sm:$0xf]
        %v2073 = vld [vmem:[%s1 + $0x19bc] sm:$0xf]
        %v2074 = vld [vmem:[%s1 + $0x19c0] sm:$0xf]
        %v2075 = vld [vmem:[%s1 + $0x19c4] sm:$0xf]
        %v2076 = vld [vmem:[%s1 + $0x19c8] sm:$0xf]
        %v2077 = vld [vmem:[%s1 + $0x19cc] sm:$0xf]
        %v2078 = vld [vmem:[%s1 + $0x19d0] sm:$0xf]
        %v2079 = vld [vmem:[%s1 + $0x19d4] sm:$0xf]
        %v2080 = vld [vmem:[%s1 + $0x19d8] sm:$0xf]
        %v2081 = vld [vmem:[%s1 + $0x19dc] sm:$0xf]
        %v2082 = vld [vmem:[%s1 + $0x19e0] sm:$0xf]
        %v2083 = vld [vmem:[%s1 + $0x19e4] sm:$0xf]
        %v2084 = vld [vmem:[%s1 + $0x19e8] sm:$0xf]
        %v2085 = vld [vmem:[%s1 + $0x19ec] sm:$0xf]
        %v2086 = vld [vmem:[%s1 + $0x19f0] sm:$0xf]
        %v2087 = vld [vmem:[%s1 + $0x19f4] sm:$0xf]
        %v2088 = vld [vmem:[%s1 + $0x19f8] sm:$0xf]
        %v2089 = vld [vmem:[%s1 + $0x19fc] sm:$0xf]
        %v2090 = vld [vmem:[%s1 + $0x1a00] sm:$0xf]
        %v2091 = vld [vmem:[%s1 + $0x1a04] sm:$0xf]
        %v2092 = vld [vmem:[%s1 + $0x1a08] sm:$0xf]
        %v2093 = vld [vmem:[%s1 + $0x1a0c] sm:$0xf]
        %v2094 = vld [vmem:[%s1 + $0x1a10] sm:$0xf]
        %v2095 = vld [vmem:[%s1 + $0x1a14] sm:$0xf]
        %v2096 = vld [vmem:[%s1 + $0x1a18] sm:$0xf]
        %v2097 = vld [vmem:[%s1 + $0x1a1c] sm:$0xf]
        %v2098 = vld [vmem:[%s1 + $0x1a20] sm:$0xf]
        %v2099 = vld [vmem:[%s1 + $0x1a24] sm:$0xf]
        %v2100 = vld [vmem:[%s1 + $0x1a28] sm:$0xf]
        %v2101 = vld [vmem:[%s1 + $0x1a2c] sm:$0xf]
        %v2102 = vld [vmem:[%s1 + $0x1a30] sm:$0xf]
        %v2103 = vld [vmem:[%s1 + $0x1a34] sm:$0xf]
        %v2104 = vld [vmem:[%s1 + $0x1a38] sm:$0xf]
        %v2105 = vld [vmem:[%s1 + $0x1a3c] sm:$0xf]
        %v2106 = vld [vmem:[%s1 + $0x1a40] sm:$0xf]
        %v2107 = vld [vmem:[%s1 + $0x1a44] sm:$0xf]
        %v2108 = vld [vmem:[%s1 + $0x1a48] sm:$0xf]
        %v2109 = vld [vmem:[%s1 + $0x1a4c] sm:$0xf]
        %v2110 = vld [vmem:[%s1 + $0x1a50] sm:$0xf]
        %v2111 = vld [vmem:[%s1 + $0x1a54] sm:$0xf]
        %v2112 = vld [vmem:[%s1 + $0x1a58] sm:$0xf]
        %v2113 = vld [vmem:[%s1 + $0x1a5c] sm:$0xf]
        %v2114 = vld [vmem:[%s1 + $0x1a60] sm:$0xf]
        %v2115 = vld [vmem:[%s1 + $0x1a64] sm:$0xf]
        %v2116 = vld [vmem:[%s1 + $0x1a68] sm:$0xf]
        %v2117 = vld [vmem:[%s1 + $0x1a6c] sm:$0xf]
        %v2118 = vld [vmem:[%s1 + $0x1a70] sm:$0xf]
        %v2119 = vld [vmem:[%s1 + $0x1a74] sm:$0xf]
        %v2120 = vld [vmem:[%s1 + $0x1a78] sm:$0xf]
        %v2121 = vld [vmem:[%s1 + $0x1a7c] sm:$0xf]
        %v2122 = vld [vmem:[%s1 + $0x1a80] sm:$0xf]
        %v2123 = vld [vmem:[%s1 + $0x1a84] sm:$0xf]
        %v2124 = vld [vmem:[%s1 + $0x1a88] sm:$0xf]
        %v2125 = vld [vmem:[%s1 + $0x1a8c] sm:$0xf]
        %v2126 = vld [vmem:[%s1 + $0x1a90] sm:$0xf]
        %v2127 = vld [vmem:[%s1 + $0x1a94] sm:$0xf]
        %v2128 = vld [vmem:[%s1 + $0x1a98] sm:$0xf]
        %v2129 = vld [vmem:[%s1 + $0x1a9c] sm:$0xf]
        %v2130 = vld [vmem:[%s1 + $0x1aa0] sm:$0xf]
        %v2131 = vld [vmem:[%s1 + $0x1aa4] sm:$0xf]
        %v2132 = vld [vmem:[%s1 + $0x1aa8] sm:$0xf]
        %v2133 = vld [vmem:[%s1 + $0x1aac] sm:$0xf]
        %v2134 = vld [vmem:[%s1 + $0x1ab0] sm:$0xf]
        %v2135 = vld [vmem:[%s1 + $0x1ab4] sm:$0xf]
        %v2136 = vld [vmem:[%s1 + $0x1ab8] sm:$0xf]
        %v2137 = vld [vmem:[%s1 + $0x1abc] sm:$0xf]
        %v2138 = vld [vmem:[%s1 + $0x1ac0] sm:$0xf]
        %v2139 = vld [vmem:[%s1 + $0x1ac4] sm:$0xf]
        %v2140 = vld [vmem:[%s1 + $0x1ac8] sm:$0xf]
        %v2141 = vld [vmem:[%s1 + $0x1acc] sm:$0xf]
        %v2142 = vld [vmem:[%s1 + $0x1ad0] sm:$0xf]
        %v2143 = vld [vmem:[%s1 + $0x1ad4] sm:$0xf]
        %v2144 = vld [vmem:[%s1 + $0x1ad8] sm:$0xf]
        %v2145 = vld [vmem:[%s1 + $0x1adc] sm:$0xf]
        %v2146 = vld [vmem:[%s1 + $0x1ae0] sm:$0xf]
        %v2147 = vld [vmem:[%s1 + $0x1ae4] sm:$0xf]
        %v2148 = vld [vmem:[%s1 + $0x1ae8] sm:$0xf]
        %v2149 = vld [vmem:[%s1 + $0x1aec] sm:$0xf]
        %v2150 = vld [vmem:[%s1 + $0x1af0] sm:$0xf]
        %v2151 = vld [vmem:[%s1 + $0x1af4] sm:$0xf]
        %v2152 = vld [vmem:[%s1 + $0x1af8] sm:$0xf]
        %v2153 = vld [vmem:[%s1 + $0x1afc] sm:$0xf]
        %v2154 = vld [vmem:[%s1 + $0x1b00] sm:$0xf]
        %v2155 = vld [vmem:[%s1 + $0x1b04] sm:$0xf]
        %v2156 = vld [vmem:[%s1 + $0x1b08] sm:$0xf]
        %v2157 = vld [vmem:[%s1 + $0x1b0c] sm:$0xf]
        %v2158 = vld [vmem:[%s1 + $0x1b10] sm:$0xf]
        %v2159 = vld [vmem:[%s1 + $0x1b14] sm:$0xf]
        %v2160 = vld [vmem:[%s1 + $0x1b18] sm:$0xf]
        %v2161 = vld [vmem:[%s1 + $0x1b1c] sm:$0xf]
        %v2162 = vld [vmem:[%s1 + $0x1b20] sm:$0xf]
        %v2163 = vld [vmem:[%s1 + $0x1b24] sm:$0xf]
        %v2164 = vld [vmem:[%s1 + $0x1b28] sm:$0xf]
        %v2165 = vld [vmem:[%s1 + $0x1b2c] sm:$0xf]
        %v2166 = vld [vmem:[%s1 + $0x1b30] sm:$0xf]
        %v2167 = vld [vmem:[%s1 + $0x1b34] sm:$0xf]
        %v2168 = vld [vmem:[%s1 + $0x1b38] sm:$0xf]
        %v2169 = vld [vmem:[%s1 + $0x1b3c] sm:$0xf]
        %v2170 = vld [vmem:[%s1 + $0x1b40] sm:$0xf]
        %v2171 = vld [vmem:[%s1 + $0x1b44] sm:$0xf]
        %v2172 = vld [vmem:[%s1 + $0x1b48] sm:$0xf]
        %v2173 = vld [vmem:[%s1 + $0x1b4c] sm:$0xf]
        %v2174 = vld [vmem:[%s1 + $0x1b50] sm:$0xf]
        %v2175 = vld [vmem:[%s1 + $0x1b54] sm:$0xf]
        %v2176 = vld [vmem:[%s1 + $0x1b58] sm:$0xf]
        %v2177 = vld [vmem:[%s1 + $0x1b5c] sm:$0xf]
        %v2178 = vld [vmem:[%s1 + $0x1b60] sm:$0xf]
        %v2179 = vld [vmem:[%s1 + $0x1b64] sm:$0xf]
        %v2180 = vld [vmem:[%s1 + $0x1b68] sm:$0xf]
        %v2181 = vld [vmem:[%s1 + $0x1b6c] sm:$0xf]
        %v2182 = vld [vmem:[%s1 + $0x1b70] sm:$0xf]
        %v2183 = vld [vmem:[%s1 + $0x1b74] sm:$0xf]
        %v2184 = vld [vmem:[%s1 + $0x1b78] sm:$0xf]
        %v2185 = vld [vmem:[%s1 + $0x1b7c] sm:$0xf]
        %v2186 = vld [vmem:[%s1 + $0x1b80] sm:$0xf]
        %v2187 = vld [vmem:[%s1 + $0x1b84] sm:$0xf]
        %v2188 = vld [vmem:[%s1 + $0x1b88] sm:$0xf]
        %v2189 = vld [vmem:[%s1 + $0x1b8c] sm:$0xf]
        %v2190 = vld [vmem:[%s1 + $0x1b90] sm:$0xf]
        %v2191 = vld [vmem:[%s1 + $0x1b94] sm:$0xf]
        %v2192 = vld [vmem:[%s1 + $0x1b98] sm:$0xf]
        %v2193 = vld [vmem:[%s1 + $0x1b9c] sm:$0xf]
        %v2194 = vld [vmem:[%s1 + $0x1ba0] sm:$0xf]
        %v2195 = vld [vmem:[%s1 + $0x1ba4] sm:$0xf]
        %v2196 = vld [vmem:[%s1 + $0x1ba8] sm:$0xf]
        %v2197 = vld [vmem:[%s1 + $0x1bac] sm:$0xf]
        %v2198 = vld [vmem:[%s1 + $0x1bb0] sm:$0xf]
        %v2199 = vld [vmem:[%s1 + $0x1bb4] sm:$0xf]
        %v2200 = vld [vmem:[%s1 + $0x1bb8] sm:$0xf]
        %v2201 = vld [vmem:[%s1 + $0x1bbc] sm:$0xf]
        %v2202 = vld [vmem:[%s1 + $0x1bc0] sm:$0xf]
        %v2203 = vld [vmem:[%s1 + $0x1bc4] sm:$0xf]
        %v2204 = vld [vmem:[%s1 + $0x1bc8] sm:$0xf]
        %v2205 = vld [vmem:[%s1 + $0x1bcc] sm:$0xf]
        %v2206 = vld [vmem:[%s1 + $0x1bd0] sm:$0xf]
        %v2207 = vld [vmem:[%s1 + $0x1bd4] sm:$0xf]
        %v2208 = vld [vmem:[%s1 + $0x1bd8] sm:$0xf]
        %v2209 = vld [vmem:[%s1 + $0x1bdc] sm:$0xf]
        %v2210 = vld [vmem:[%s1 + $0x1be0] sm:$0xf]
        %v2211 = vld [vmem:[%s1 + $0x1be4] sm:$0xf]
        %v2212 = vld [vmem:[%s1 + $0x1be8] sm:$0xf]
        %v2213 = vld [vmem:[%s1 + $0x1bec] sm:$0xf]
        %v2214 = vld [vmem:[%s1 + $0x1bf0] sm:$0xf]
        %v2215 = vld [vmem:[%s1 + $0x1bf4] sm:$0xf]
        %v2216 = vld [vmem:[%s1 + $0x1bf8] sm:$0xf]
        %v2217 = vld [vmem:[%s1 + $0x1bfc] sm:$0xf]
        %v2218 = vld [vmem:[%s1 + $0x1c00] sm:$0xf]
        %v2219 = vld [vmem:[%s1 + $0x1c04] sm:$0xf]
        %v2220 = vld [vmem:[%s1 + $0x1c08] sm:$0xf]
        %v2221 = vld [vmem:[%s1 + $0x1c0c] sm:$0xf]
        %v2222 = vld [vmem:[%s1 + $0x1c10] sm:$0xf]
        %v2223 = vld [vmem:[%s1 + $0x1c14] sm:$0xf]
        %v2224 = vld [vmem:[%s1 + $0x1c18] sm:$0xf]
        %v2225 = vld [vmem:[%s1 + $0x1c1c] sm:$0xf]
        %v2226 = vld [vmem:[%s1 + $0x1c20] sm:$0xf]
        %v2227 = vld [vmem:[%s1 + $0x1c24] sm:$0xf]
        %v2228 = vld [vmem:[%s1 + $0x1c28] sm:$0xf]
        %v2229 = vld [vmem:[%s1 + $0x1c2c] sm:$0xf]
        %v2230 = vld [vmem:[%s1 + $0x1c30] sm:$0xf]
        %v2231 = vld [vmem:[%s1 + $0x1c34] sm:$0xf]
        %v2232 = vld [vmem:[%s1 + $0x1c38] sm:$0xf]
        %v2233 = vld [vmem:[%s1 + $0x1c3c] sm:$0xf]
        %v2234 = vld [vmem:[%s1 + $0x1c40] sm:$0xf]
        %v2235 = vld [vmem:[%s1 + $0x1c44] sm:$0xf]
        %v2236 = vld [vmem:[%s1 + $0x1c48] sm:$0xf]
        %v2237 = vld [vmem:[%s1 + $0x1c4c] sm:$0xf]
        %v2238 = vld [vmem:[%s1 + $0x1c50] sm:$0xf]
        %v2239 = vld [vmem:[%s1 + $0x1c54] sm:$0xf]
        %v2240 = vld [vmem:[%s1 + $0x1c58] sm:$0xf]
        %v2241 = vld [vmem:[%s1 + $0x1c5c] sm:$0xf]
        %v2242 = vld [vmem:[%s1 + $0x1c60] sm:$0xf]
        %v2243 = vld [vmem:[%s1 + $0x1c64] sm:$0xf]
        %v2244 = vld [vmem:[%s1 + $0x1c68] sm:$0xf]
        %v2245 = vld [vmem:[%s1 + $0x1c6c] sm:$0xf]
        %v2246 = vld [vmem:[%s1 + $0x1c70] sm:$0xf]
        %v2247 = vld [vmem:[%s1 + $0x1c74] sm:$0xf]
        %v2248 = vld [vmem:[%s1 + $0x1c78] sm:$0xf]
        %v2249 = vld [vmem:[%s1 + $0x1c7c] sm:$0xf]
        %v2250 = vld [vmem:[%s1 + $0x1c80] sm:$0xf]
        %v2251 = vld [vmem:[%s1 + $0x1c84] sm:$0xf]
        %v2252 = vld [vmem:[%s1 + $0x1c88] sm:$0xf]
        %v2253 = vld [vmem:[%s1 + $0x1c8c] sm:$0xf]
        %v2254 = vld [vmem:[%s1 + $0x1c90] sm:$0xf]
        %v2255 = vld [vmem:[%s1 + $0x1c94] sm:$0xf]
        %v2256 = vld [vmem:[%s1 + $0x1c98] sm:$0xf]
        %v2257 = vld [vmem:[%s1 + $0x1c9c] sm:$0xf]
        %v2258 = vld [vmem:[%s1 + $0x1ca0] sm:$0xf]
        %v2259 = vld [vmem:[%s1 + $0x1ca4] sm:$0xf]
        %v2260 = vld [vmem:[%s1 + $0x1ca8] sm:$0xf]
        %v2261 = vld [vmem:[%s1 + $0x1cac] sm:$0xf]
        %v2262 = vld [vmem:[%s1 + $0x1cb0] sm:$0xf]
        %v2263 = vld [vmem:[%s1 + $0x1cb4] sm:$0xf]
        %v2264 = vld [vmem:[%s1 + $0x1cb8] sm:$0xf]
        %v2265 = vld [vmem:[%s1 + $0x1cbc] sm:$0xf]
        %v2266 = vld [vmem:[%s1 + $0x1cc0] sm:$0xf]
        %v2267 = vld [vmem:[%s1 + $0x1cc4] sm:$0xf]
        %v2268 = vld [vmem:[%s1 + $0x1cc8] sm:$0xf]
        %v2269 = vld [vmem:[%s1 + $0x1ccc] sm:$0xf]
        %v2270 = vld [vmem:[%s1 + $0x1cd0] sm:$0xf]
        %v2271 = vld [vmem:[%s1 + $0x1cd4] sm:$0xf]
        %v2272 = vld [vmem:[%s1 + $0x1cd8] sm:$0xf]
        %v2273 = vld [vmem:[%s1 + $0x1cdc] sm:$0xf]
        %v2274 = vld [vmem:[%s1 + $0x1ce0] sm:$0xf]
        %v2275 = vld [vmem:[%s1 + $0x1ce4] sm:$0xf]
        %v2276 = vld [vmem:[%s1 + $0x1ce8] sm:$0xf]
        %v2277 = vld [vmem:[%s1 + $0x1cec] sm:$0xf]
        %v2278 = vld [vmem:[%s1 + $0x1cf0] sm:$0xf]
        %v2279 = vld [vmem:[%s1 + $0x1cf4] sm:$0xf]
        %v2280 = vld [vmem:[%s1 + $0x1cf8] sm:$0xf]
        %v2281 = vld [vmem:[%s1 + $0x1cfc] sm:$0xf]
        %v2282 = vld [vmem:[%s1 + $0x1d00] sm:$0xf]
        %v2283 = vld [vmem:[%s1 + $0x1d04] sm:$0xf]
        %v2284 = vld [vmem:[%s1 + $0x1d08] sm:$0xf]
        %v2285 = vld [vmem:[%s1 + $0x1d0c] sm:$0xf]
        %v2286 = vld [vmem:[%s1 + $0x1d10] sm:$0xf]
        %v2287 = vld [vmem:[%s1 + $0x1d14] sm:$0xf]
        %v2288 = vld [vmem:[%s1 + $0x1d18] sm:$0xf]
        %v2289 = vld [vmem:[%s1 + $0x1d1c] sm:$0xf]
        %v2290 = vld [vmem:[%s1 + $0x1d20] sm:$0xf]
        %v2291 = vld [vmem:[%s1 + $0x1d24] sm:$0xf]
        %v2292 = vld [vmem:[%s1 + $0x1d28] sm:$0xf]
        %v2293 = vld [vmem:[%s1 + $0x1d2c] sm:$0xf]
        %v2294 = vld [vmem:[%s1 + $0x1d30] sm:$0xf]
        %v2295 = vld [vmem:[%s1 + $0x1d34] sm:$0xf]
        %v2296 = vld [vmem:[%s1 + $0x1d38] sm:$0xf]
        %v2297 = vld [vmem:[%s1 + $0x1d3c] sm:$0xf]
        %v2298 = vld [vmem:[%s1 + $0x1d40] sm:$0xf]
        %v2299 = vld [vmem:[%s1 + $0x1d44] sm:$0xf]
        %v2300 = vld [vmem:[%s1 + $0x1d48] sm:$0xf]
        %v2301 = vld [vmem:[%s1 + $0x1d4c] sm:$0xf]
        %v2302 = vld [vmem:[%s1 + $0x1d50] sm:$0xf]
        %v2303 = vld [vmem:[%s1 + $0x1d54] sm:$0xf]
        %v2304 = vld [vmem:[%s1 + $0x1d58] sm:$0xf]
        %v2305 = vld [vmem:[%s1 + $0x1d5c] sm:$0xf]
        %v2306 = vld [vmem:[%s1 + $0x1d60] sm:$0xf]
        %v2307 = vld [vmem:[%s1 + $0x1d64] sm:$0xf]
        %v2308 = vld [vmem:[%s1 + $0x1d68] sm:$0xf]
        %v2309 = vld [vmem:[%s1 + $0x1d6c] sm:$0xf]
        %v2310 = vld [vmem:[%s1 + $0x1d70] sm:$0xf]
        %v2311 = vld [vmem:[%s1 + $0x1d74] sm:$0xf]
        %v2312 = vld [vmem:[%s1 + $0x1d78] sm:$0xf]
        %v2313 = vld [vmem:[%s1 + $0x1d7c] sm:$0xf]
        %v2314 = vld [vmem:[%s1 + $0x1d80] sm:$0xf]
        %v2315 = vld [vmem:[%s1 + $0x1d84] sm:$0xf]
        %v2316 = vld [vmem:[%s1 + $0x1d88] sm:$0xf]
        %v2317 = vld [vmem:[%s1 + $0x1d8c] sm:$0xf]
        %v2318 = vld [vmem:[%s1 + $0x1d90] sm:$0xf]
        %v2319 = vld [vmem:[%s1 + $0x1d94] sm:$0xf]
        %v2320 = vld [vmem:[%s1 + $0x1d98] sm:$0xf]
        %v2321 = vld [vmem:[%s1 + $0x1d9c] sm:$0xf]
        %v2322 = vld [vmem:[%s1 + $0x1da0] sm:$0xf]
        %v2323 = vld [vmem:[%s1 + $0x1da4] sm:$0xf]
        %v2324 = vld [vmem:[%s1 + $0x1da8] sm:$0xf]
        %v2325 = vld [vmem:[%s1 + $0x1dac] sm:$0xf]
        %v2326 = vld [vmem:[%s1 + $0x1db0] sm:$0xf]
        %v2327 = vld [vmem:[%s1 + $0x1db4] sm:$0xf]
        %v2328 = vld [vmem:[%s1 + $0x1db8] sm:$0xf]
        %v2329 = vld [vmem:[%s1 + $0x1dbc] sm:$0xf]
        %v2330 = vld [vmem:[%s1 + $0x1dc0] sm:$0xf]
        %v2331 = vld [vmem:[%s1 + $0x1dc4] sm:$0xf]
        %v2332 = vld [vmem:[%s1 + $0x1dc8] sm:$0xf]
        %v2333 = vld [vmem:[%s1 + $0x1dcc] sm:$0xf]
        %v2334 = vld [vmem:[%s1 + $0x1dd0] sm:$0xf]
        %v2335 = vld [vmem:[%s1 + $0x1dd4] sm:$0xf]
        %v2336 = vld [vmem:[%s1 + $0x1dd8] sm:$0xf]
        %v2337 = vld [vmem:[%s1 + $0x1ddc] sm:$0xf]
        %v2338 = vld [vmem:[%s1 + $0x1de0] sm:$0xf]
        %v2339 = vld [vmem:[%s1 + $0x1de4] sm:$0xf]
        %v2340 = vld [vmem:[%s1 + $0x1de8] sm:$0xf]
        %v2341 = vld [vmem:[%s1 + $0x1dec] sm:$0xf]
        %v2342 = vld [vmem:[%s1 + $0x1df0] sm:$0xf]
        %v2343 = vld [vmem:[%s1 + $0x1df4] sm:$0xf]
        %v2344 = vld [vmem:[%s1 + $0x1df8] sm:$0xf]
        %v2345 = vld [vmem:[%s1 + $0x1dfc] sm:$0xf]
        %v2346 = vld [vmem:[%s1 + $0x1e00] sm:$0xf]
        %v2347 = vld [vmem:[%s1 + $0x1e04] sm:$0xf]
        %v2348 = vld [vmem:[%s1 + $0x1e08] sm:$0xf]
        %v2349 = vld [vmem:[%s1 + $0x1e0c] sm:$0xf]
        %v2350 = vld [vmem:[%s1 + $0x1e10] sm:$0xf]
        %v2351 = vld [vmem:[%s1 + $0x1e14] sm:$0xf]
        %v2352 = vld [vmem:[%s1 + $0x1e18] sm:$0xf]
        %v2353 = vld [vmem:[%s1 + $0x1e1c] sm:$0xf]
        %v2354 = vld [vmem:[%s1 + $0x1e20] sm:$0xf]
        %v2355 = vld [vmem:[%s1 + $0x1e24] sm:$0xf]
        %v2356 = vld [vmem:[%s1 + $0x1e28] sm:$0xf]
        %v2357 = vld [vmem:[%s1 + $0x1e2c] sm:$0xf]
        %v2358 = vld [vmem:[%s1 + $0x1e30] sm:$0xf]
        %v2359 = vld [vmem:[%s1 + $0x1e34] sm:$0xf]
        %v2360 = vld [vmem:[%s1 + $0x1e38] sm:$0xf]
        %v2361 = vld [vmem:[%s1 + $0x1e3c] sm:$0xf]
        %v2362 = vld [vmem:[%s1 + $0x1e40] sm:$0xf]
        %v2363 = vld [vmem:[%s1 + $0x1e44] sm:$0xf]
        %v2364 = vld [vmem:[%s1 + $0x1e48] sm:$0xf]
        %v2365 = vld [vmem:[%s1 + $0x1e4c] sm:$0xf]
        %v2366 = vld [vmem:[%s1 + $0x1e50] sm:$0xf]
        %v2367 = vld [vmem:[%s1 + $0x1e54] sm:$0xf]
        %v2368 = vld [vmem:[%s1 + $0x1e58] sm:$0xf]
        %v2369 = vld [vmem:[%s1 + $0x1e5c] sm:$0xf]
        %v2370 = vld [vmem:[%s1 + $0x1e60] sm:$0xf]
        %v2371 = vld [vmem:[%s1 + $0x1e64] sm:$0xf]
        %v2372 = vld [vmem:[%s1 + $0x1e68] sm:$0xf]
        %v2373 = vld [vmem:[%s1 + $0x1e6c] sm:$0xf]
        %v2374 = vld [vmem:[%s1 + $0x1e70] sm:$0xf]
        %v2375 = vld [vmem:[%s1 + $0x1e74] sm:$0xf]
        %v2376 = vld [vmem:[%s1 + $0x1e78] sm:$0xf]
        %v2377 = vld [vmem:[%s1 + $0x1e7c] sm:$0xf]
        %v2378 = vld [vmem:[%s1 + $0x1e80] sm:$0xf]
        %v2379 = vld [vmem:[%s1 + $0x1e84] sm:$0xf]
        %v2380 = vld [vmem:[%s1 + $0x1e88] sm:$0xf]
        %v2381 = vld [vmem:[%s1 + $0x1e8c] sm:$0xf]
        %v2382 = vld [vmem:[%s1 + $0x1e90] sm:$0xf]
        %v2383 = vld [vmem:[%s1 + $0x1e94] sm:$0xf]
        %v2384 = vld [vmem:[%s1 + $0x1e98] sm:$0xf]
        %v2385 = vld [vmem:[%s1 + $0x1e9c] sm:$0xf]
        %v2386 = vld [vmem:[%s1 + $0x1ea0] sm:$0xf]
        %v2387 = vld [vmem:[%s1 + $0x1ea4] sm:$0xf]
        %v2388 = vld [vmem:[%s1 + $0x1ea8] sm:$0xf]
        %v2389 = vld [vmem:[%s1 + $0x1eac] sm:$0xf]
        %v2390 = vld [vmem:[%s1 + $0x1eb0] sm:$0xf]
        %v2391 = vld [vmem:[%s1 + $0x1eb4] sm:$0xf]
        %v2392 = vld [vmem:[%s1 + $0x1eb8] sm:$0xf]
        %v2393 = vld [vmem:[%s1 + $0x1ebc] sm:$0xf]
        %v2394 = vld [vmem:[%s1 + $0x1ec0] sm:$0xf]
        %v2395 = vld [vmem:[%s1 + $0x1ec4] sm:$0xf]
        %v2396 = vld [vmem:[%s1 + $0x1ec8] sm:$0xf]
        %v2397 = vld [vmem:[%s1 + $0x1ecc] sm:$0xf]
        %v2398 = vld [vmem:[%s1 + $0x1ed0] sm:$0xf]
        %v2399 = vld [vmem:[%s1 + $0x1ed4] sm:$0xf]
        %v2400 = vld [vmem:[%s1 + $0x1ed8] sm:$0xf]
        %v2401 = vld [vmem:[%s1 + $0x1edc] sm:$0xf]
        %v2402 = vld [vmem:[%s1 + $0x1ee0] sm:$0xf]
        %v2403 = vld [vmem:[%s1 + $0x1ee4] sm:$0xf]
        %v2404 = vld [vmem:[%s1 + $0x1ee8] sm:$0xf]
        %v2405 = vld [vmem:[%s1 + $0x1eec] sm:$0xf]
        %v2406 = vld [vmem:[%s1 + $0x1ef0] sm:$0xf]
        %v2407 = vld [vmem:[%s1 + $0x1ef4] sm:$0xf]
        %v2408 = vld [vmem:[%s1 + $0x1ef8] sm:$0xf]
        %v2409 = vld [vmem:[%s1 + $0x1efc] sm:$0xf]
        %v2410 = vld [vmem:[%s1 + $0x1f00] sm:$0xf]
        %v2411 = vld [vmem:[%s1 + $0x1f04] sm:$0xf]
        %v2412 = vld [vmem:[%s1 + $0x1f08] sm:$0xf]
        %v2413 = vld [vmem:[%s1 + $0x1f0c] sm:$0xf]
        %v2414 = vld [vmem:[%s1 + $0x1f10] sm:$0xf]
        %v2415 = vld [vmem:[%s1 + $0x1f14] sm:$0xf]
        %v2416 = vld [vmem:[%s1 + $0x1f18] sm:$0xf]
        %v2417 = vld [vmem:[%s1 + $0x1f1c] sm:$0xf]
        %v2418 = vld [vmem:[%s1 + $0x1f20] sm:$0xf]
        %v2419 = vld [vmem:[%s1 + $0x1f24] sm:$0xf]
        %v2420 = vld [vmem:[%s1 + $0x1f28] sm:$0xf]
        %v2421 = vld [vmem:[%s1 + $0x1f2c] sm:$0xf]
        %v2422 = vld [vmem:[%s1 + $0x1f30] sm:$0xf]
        %v2423 = vld [vmem:[%s1 + $0x1f34] sm:$0xf]
        %v2424 = vld [vmem:[%s1 + $0x1f38] sm:$0xf]
        %v2425 = vld [vmem:[%s1 + $0x1f3c] sm:$0xf]
        %v2426 = vld [vmem:[%s1 + $0x1f40] sm:$0xf]
        %v2427 = vld [vmem:[%s1 + $0x1f44] sm:$0xf]
        %v2428 = vld [vmem:[%s1 + $0x1f48] sm:$0xf]
        %v2429 = vld [vmem:[%s1 + $0x1f4c] sm:$0xf]
        %v2430 = vld [vmem:[%s1 + $0x1f50] sm:$0xf]
        %v2431 = vld [vmem:[%s1 + $0x1f54] sm:$0xf]
        %v2432 = vld [vmem:[%s1 + $0x1f58] sm:$0xf]
        %v2433 = vld [vmem:[%s1 + $0x1f5c] sm:$0xf]
        %v2434 = vld [vmem:[%s1 + $0x1f60] sm:$0xf]
        %v2435 = vld [vmem:[%s1 + $0x1f64] sm:$0xf]
        %v2436 = vld [vmem:[%s1 + $0x1f68] sm:$0xf]
        %v2437 = vld [vmem:[%s1 + $0x1f6c] sm:$0xf]
        %v2438 = vld [vmem:[%s1 + $0x1f70] sm:$0xf]
        %v2439 = vld [vmem:[%s1 + $0x1f74] sm:$0xf]
        %v2440 = vld [vmem:[%s1 + $0x1f78] sm:$0xf]
        %v2441 = vld [vmem:[%s1 + $0x1f7c] sm:$0xf]
        %v2442 = vld [vmem:[%s1 + $0x1f80] sm:$0xf]
        %v2443 = vld [vmem:[%s1 + $0x1f84] sm:$0xf]
        %v2444 = vld [vmem:[%s1 + $0x1f88] sm:$0xf]
        %v2445 = vld [vmem:[%s1 + $0x1f8c] sm:$0xf]
        %v2446 = vld [vmem:[%s1 + $0x1f90] sm:$0xf]
        %v2447 = vld [vmem:[%s1 + $0x1f94] sm:$0xf]
        %v2448 = vld [vmem:[%s1 + $0x1f98] sm:$0xf]
        %v2449 = vld [vmem:[%s1 + $0x1f9c] sm:$0xf]
        %v2450 = vld [vmem:[%s1 + $0x1fa0] sm:$0xf]
        %v2451 = vld [vmem:[%s1 + $0x1fa4] sm:$0xf]
        %v2452 = vld [vmem:[%s1 + $0x1fa8] sm:$0xf]
        %v2453 = vld [vmem:[%s1 + $0x1fac] sm:$0xf]
        %v2454 = vld [vmem:[%s1 + $0x1fb0] sm:$0xf]
        %v2455 = vld [vmem:[%s1 + $0x1fb4] sm:$0xf]
        %v2456 = vld [vmem:[%s1 + $0x1fb8] sm:$0xf]
        %v2457 = vld [vmem:[%s1 + $0x1fbc] sm:$0xf]
        %v2458 = vld [vmem:[%s1 + $0x1fc0] sm:$0xf]
        %v2459 = vld [vmem:[%s1 + $0x1fc4] sm:$0xf]
        %v2460 = vld [vmem:[%s1 + $0x1fc8] sm:$0xf]
        %v2461 = vld [vmem:[%s1 + $0x1fcc] sm:$0xf]
        %v2462 = vld [vmem:[%s1 + $0x1fd0] sm:$0xf]
        %v2463 = vld [vmem:[%s1 + $0x1fd4] sm:$0xf]
        %v2464 = vld [vmem:[%s1 + $0x1fd8] sm:$0xf]
        %v2465 = vld [vmem:[%s1 + $0x1fdc] sm:$0xf]
        %v2466 = vld [vmem:[%s1 + $0x1fe0] sm:$0xf]
        %v2467 = vld [vmem:[%s1 + $0x1fe4] sm:$0xf]
        %v2468 = vld [vmem:[%s1 + $0x1fe8] sm:$0xf]
        %v2469 = vld [vmem:[%s1 + $0x1fec] sm:$0xf]
        %v2470 = vld [vmem:[%s1 + $0x1ff0] sm:$0xf]
        %v2471 = vld [vmem:[%s1 + $0x1ff4] sm:$0xf]
        %v2472 = vld [vmem:[%s1 + $0x1ff8] sm:$0xf]
        %v2473 = vld [vmem:[%s1 + $0x1ffc] sm:$0xf]
        %v2474 = vld [vmem:[%s2] sm:$0x1]
        %v2476 = vlaneseq
        %v2477 = vshrl.u32 %v2476, 7
        %v2478 = vsub.s32 0, %v2477
        %v2479 = vrot.slane %v2474, %v2478
        %v4529 = vunpack.c.l.b16 %v426
        %v4530 = vunpack.c.l.b16 %v427
        %v4531 = vunpack.c.l.b16 %v428
        %v4532 = vunpack.c.l.b16 %v429
        %v4533 = vunpack.c.l.b16 %v430
        %v4534 = vunpack.c.l.b16 %v431
        %v4535 = vunpack.c.l.b16 %v432
        %v4536 = vunpack.c.l.b16 %v433
        %v4537 = vunpack.c.l.b16 %v434
        %v4538 = vunpack.c.l.b16 %v435
        %v4539 = vunpack.c.l.b16 %v436
        %v4540 = vunpack.c.l.b16 %v437
        %v4541 = vunpack.c.l.b16 %v438
        %v4542 = vunpack.c.l.b16 %v439
        %v4543 = vunpack.c.l.b16 %v440
        %v4544 = vunpack.c.l.b16 %v441
        %v4545 = vunpack.c.l.b16 %v442
        %v4546 = vunpack.c.l.b16 %v443
        %v4547 = vunpack.c.l.b16 %v444
        %v4548 = vunpack.c.l.b16 %v445
        %v4549 = vunpack.c.l.b16 %v446
        %v4550 = vunpack.c.l.b16 %v447
        %v4551 = vunpack.c.l.b16 %v448
        %v4552 = vunpack.c.l.b16 %v449
        %v4553 = vunpack.c.l.b16 %v450
        %v4554 = vunpack.c.l.b16 %v451
        %v4555 = vunpack.c.l.b16 %v452
        %v4556 = vunpack.c.l.b16 %v453
        %v4557 = vunpack.c.l.b16 %v454
        %v4558 = vunpack.c.l.b16 %v455
        %v4559 = vunpack.c.l.b16 %v456
        %v4560 = vunpack.c.l.b16 %v457
        %v4561 = vunpack.c.l.b16 %v458
        %v4562 = vunpack.c.l.b16 %v459
        %v4563 = vunpack.c.l.b16 %v460
        %v4564 = vunpack.c.l.b16 %v461
        %v4565 = vunpack.c.l.b16 %v462
        %v4566 = vunpack.c.l.b16 %v463
        %v4567 = vunpack.c.l.b16 %v464
        %v4568 = vunpack.c.l.b16 %v465
        %v4569 = vunpack.c.l.b16 %v466
        %v4570 = vunpack.c.l.b16 %v467
        %v4571 = vunpack.c.l.b16 %v468
        %v4572 = vunpack.c.l.b16 %v469
        %v4573 = vunpack.c.l.b16 %v470
        %v4574 = vunpack.c.l.b16 %v471
        %v4575 = vunpack.c.l.b16 %v472
        %v4576 = vunpack.c.l.b16 %v473
        %v4577 = vunpack.c.l.b16 %v474
        %v4578 = vunpack.c.l.b16 %v475
        %v4579 = vunpack.c.l.b16 %v476
        %v4580 = vunpack.c.l.b16 %v477
        %v4581 = vunpack.c.l.b16 %v478
        %v4582 = vunpack.c.l.b16 %v479
        %v4583 = vunpack.c.l.b16 %v480
        %v4584 = vunpack.c.l.b16 %v481
        %v4585 = vunpack.c.l.b16 %v482
        %v4586 = vunpack.c.l.b16 %v483
        %v4587 = vunpack.c.l.b16 %v484
        %v4588 = vunpack.c.l.b16 %v485
        %v4589 = vunpack.c.l.b16 %v486
        %v4590 = vunpack.c.l.b16 %v487
        %v4591 = vunpack.c.l.b16 %v488
        %v4592 = vunpack.c.l.b16 %v489
        %v4593 = vunpack.c.l.b16 %v490
        %v4594 = vunpack.c.l.b16 %v491
        %v4595 = vunpack.c.l.b16 %v492
        %v4596 = vunpack.c.l.b16 %v493
        %v4597 = vunpack.c.l.b16 %v494
        %v4598 = vunpack.c.l.b16 %v495
        %v4599 = vunpack.c.l.b16 %v496
        %v4600 = vunpack.c.l.b16 %v497
        %v4601 = vunpack.c.l.b16 %v498
        %v4602 = vunpack.c.l.b16 %v499
        %v4603 = vunpack.c.l.b16 %v500
        %v4604 = vunpack.c.l.b16 %v501
        %v4605 = vunpack.c.l.b16 %v502
        %v4606 = vunpack.c.l.b16 %v503
        %v4607 = vunpack.c.l.b16 %v504
        %v4608 = vunpack.c.l.b16 %v505
        %v4609 = vunpack.c.l.b16 %v506
        %v4610 = vunpack.c.l.b16 %v507
        %v4611 = vunpack.c.l.b16 %v508
        %v4612 = vunpack.c.l.b16 %v509
        %v4613 = vunpack.c.l.b16 %v510
        %v4614 = vunpack.c.l.b16 %v511
        %v4615 = vunpack.c.l.b16 %v512
        %v4616 = vunpack.c.l.b16 %v513
        %v4617 = vunpack.c.l.b16 %v514
        %v4618 = vunpack.c.l.b16 %v515
        %v4619 = vunpack.c.l.b16 %v516
        %v4620 = vunpack.c.l.b16 %v517
        %v4621 = vunpack.c.l.b16 %v518
        %v4622 = vunpack.c.l.b16 %v519
        %v4623 = vunpack.c.l.b16 %v520
        %v4624 = vunpack.c.l.b16 %v521
        %v4625 = vunpack.c.l.b16 %v522
        %v4626 = vunpack.c.l.b16 %v523
        %v4627 = vunpack.c.l.b16 %v524
        %v4628 = vunpack.c.l.b16 %v525
        %v4629 = vunpack.c.l.b16 %v526
        %v4630 = vunpack.c.l.b16 %v527
        %v4631 = vunpack.c.l.b16 %v528
        %v4632 = vunpack.c.l.b16 %v529
        %v4633 = vunpack.c.l.b16 %v530
        %v4634 = vunpack.c.l.b16 %v531
        %v4635 = vunpack.c.l.b16 %v532
        %v4636 = vunpack.c.l.b16 %v533
        %v4637 = vunpack.c.l.b16 %v534
        %v4638 = vunpack.c.l.b16 %v535
        %v4639 = vunpack.c.l.b16 %v536
        %v4640 = vunpack.c.l.b16 %v537
        %v4641 = vunpack.c.l.b16 %v538
        %v4642 = vunpack.c.l.b16 %v539
        %v4643 = vunpack.c.l.b16 %v540
        %v4644 = vunpack.c.l.b16 %v541
        %v4645 = vunpack.c.l.b16 %v542
        %v4646 = vunpack.c.l.b16 %v543
        %v4647 = vunpack.c.l.b16 %v544
        %v4648 = vunpack.c.l.b16 %v545
        %v4649 = vunpack.c.l.b16 %v546
        %v4650 = vunpack.c.l.b16 %v547
        %v4651 = vunpack.c.l.b16 %v548
        %v4652 = vunpack.c.l.b16 %v549
        %v4653 = vunpack.c.l.b16 %v550
        %v4654 = vunpack.c.l.b16 %v551
        %v4655 = vunpack.c.l.b16 %v552
        %v4656 = vunpack.c.l.b16 %v553
        %v4657 = vunpack.c.l.b16 %v554
        %v4658 = vunpack.c.l.b16 %v555
        %v4659 = vunpack.c.l.b16 %v556
        %v4660 = vunpack.c.l.b16 %v557
        %v4661 = vunpack.c.l.b16 %v558
        %v4662 = vunpack.c.l.b16 %v559
        %v4663 = vunpack.c.l.b16 %v560
        %v4664 = vunpack.c.l.b16 %v561
        %v4665 = vunpack.c.l.b16 %v562
        %v4666 = vunpack.c.l.b16 %v563
        %v4667 = vunpack.c.l.b16 %v564
        %v4668 = vunpack.c.l.b16 %v565
        %v4669 = vunpack.c.l.b16 %v566
        %v4670 = vunpack.c.l.b16 %v567
        %v4671 = vunpack.c.l.b16 %v568
        %v4672 = vunpack.c.l.b16 %v569
        %v4673 = vunpack.c.l.b16 %v570
        %v4674 = vunpack.c.l.b16 %v571
        %v4675 = vunpack.c.l.b16 %v572
        %v4676 = vunpack.c.l.b16 %v573
        %v4677 = vunpack.c.l.b16 %v574
        %v4678 = vunpack.c.l.b16 %v575
        %v4679 = vunpack.c.l.b16 %v576
        %v4680 = vunpack.c.l.b16 %v577
        %v4681 = vunpack.c.l.b16 %v578
        %v4682 = vunpack.c.l.b16 %v579
        %v4683 = vunpack.c.l.b16 %v580
        %v4684 = vunpack.c.l.b16 %v581
        %v4685 = vunpack.c.l.b16 %v582
        %v4686 = vunpack.c.l.b16 %v583
        %v4687 = vunpack.c.l.b16 %v584
        %v4688 = vunpack.c.l.b16 %v585
        %v4689 = vunpack.c.l.b16 %v586
        %v4690 = vunpack.c.l.b16 %v587
        %v4691 = vunpack.c.l.b16 %v588
        %v4692 = vunpack.c.l.b16 %v589
        %v4693 = vunpack.c.l.b16 %v590
        %v4694 = vunpack.c.l.b16 %v591
        %v4695 = vunpack.c.l.b16 %v592
        %v4696 = vunpack.c.l.b16 %v593
        %v4697 = vunpack.c.l.b16 %v594
        %v4698 = vunpack.c.l.b16 %v595
        %v4699 = vunpack.c.l.b16 %v596
        %v4700 = vunpack.c.l.b16 %v597
        %v4701 = vunpack.c.l.b16 %v598
        %v4702 = vunpack.c.l.b16 %v599
        %v4703 = vunpack.c.l.b16 %v600
        %v4704 = vunpack.c.l.b16 %v601
        %v4705 = vunpack.c.l.b16 %v602
        %v4706 = vunpack.c.l.b16 %v603
        %v4707 = vunpack.c.l.b16 %v604
        %v4708 = vunpack.c.l.b16 %v605
        %v4709 = vunpack.c.l.b16 %v606
        %v4710 = vunpack.c.l.b16 %v607
        %v4711 = vunpack.c.l.b16 %v608
        %v4712 = vunpack.c.l.b16 %v609
        %v4713 = vunpack.c.l.b16 %v610
        %v4714 = vunpack.c.l.b16 %v611
        %v4715 = vunpack.c.l.b16 %v612
        %v4716 = vunpack.c.l.b16 %v613
        %v4717 = vunpack.c.l.b16 %v614
        %v4718 = vunpack.c.l.b16 %v615
        %v4719 = vunpack.c.l.b16 %v616
        %v4720 = vunpack.c.l.b16 %v617
        %v4721 = vunpack.c.l.b16 %v618
        %v4722 = vunpack.c.l.b16 %v619
        %v4723 = vunpack.c.l.b16 %v620
        %v4724 = vunpack.c.l.b16 %v621
        %v4725 = vunpack.c.l.b16 %v622
        %v4726 = vunpack.c.l.b16 %v623
        %v4727 = vunpack.c.l.b16 %v624
        %v4728 = vunpack.c.l.b16 %v625
        %v4729 = vunpack.c.l.b16 %v626
        %v4730 = vunpack.c.l.b16 %v627
        %v4731 = vunpack.c.l.b16 %v628
        %v4732 = vunpack.c.l.b16 %v629
        %v4733 = vunpack.c.l.b16 %v630
        %v4734 = vunpack.c.l.b16 %v631
        %v4735 = vunpack.c.l.b16 %v632
        %v4736 = vunpack.c.l.b16 %v633
        %v4737 = vunpack.c.l.b16 %v634
        %v4738 = vunpack.c.l.b16 %v635
        %v4739 = vunpack.c.l.b16 %v636
        %v4740 = vunpack.c.l.b16 %v637
        %v4741 = vunpack.c.l.b16 %v638
        %v4742 = vunpack.c.l.b16 %v639
        %v4743 = vunpack.c.l.b16 %v640
        %v4744 = vunpack.c.l.b16 %v641
        %v4745 = vunpack.c.l.b16 %v642
        %v4746 = vunpack.c.l.b16 %v643
        %v4747 = vunpack.c.l.b16 %v644
        %v4748 = vunpack.c.l.b16 %v645
        %v4749 = vunpack.c.l.b16 %v646
        %v4750 = vunpack.c.l.b16 %v647
        %v4751 = vunpack.c.l.b16 %v648
        %v4752 = vunpack.c.l.b16 %v649
        %v4753 = vunpack.c.l.b16 %v650
        %v4754 = vunpack.c.l.b16 %v651
        %v4755 = vunpack.c.l.b16 %v652
        %v4756 = vunpack.c.l.b16 %v653
        %v4757 = vunpack.c.l.b16 %v654
        %v4758 = vunpack.c.l.b16 %v655
        %v4759 = vunpack.c.l.b16 %v656
        %v4760 = vunpack.c.l.b16 %v657
        %v4761 = vunpack.c.l.b16 %v658
        %v4762 = vunpack.c.l.b16 %v659
        %v4763 = vunpack.c.l.b16 %v660
        %v4764 = vunpack.c.l.b16 %v661
        %v4765 = vunpack.c.l.b16 %v662
        %v4766 = vunpack.c.l.b16 %v663
        %v4767 = vunpack.c.l.b16 %v664
        %v4768 = vunpack.c.l.b16 %v665
        %v4769 = vunpack.c.l.b16 %v666
        %v4770 = vunpack.c.l.b16 %v667
        %v4771 = vunpack.c.l.b16 %v668
        %v4772 = vunpack.c.l.b16 %v669
        %v4773 = vunpack.c.l.b16 %v670
        %v4774 = vunpack.c.l.b16 %v671
        %v4775 = vunpack.c.l.b16 %v672
        %v4776 = vunpack.c.l.b16 %v673
        %v4777 = vunpack.c.l.b16 %v674
        %v4778 = vunpack.c.l.b16 %v675
        %v4779 = vunpack.c.l.b16 %v676
        %v4780 = vunpack.c.l.b16 %v677
        %v4781 = vunpack.c.l.b16 %v678
        %v4782 = vunpack.c.l.b16 %v679
        %v4783 = vunpack.c.l.b16 %v680
        %v4784 = vunpack.c.l.b16 %v681
        %v4785 = vunpack.c.l.b16 %v682
        %v4786 = vunpack.c.l.b16 %v683
        %v4787 = vunpack.c.l.b16 %v684
        %v4788 = vunpack.c.l.b16 %v685
        %v4789 = vunpack.c.l.b16 %v686
        %v4790 = vunpack.c.l.b16 %v687
        %v4791 = vunpack.c.l.b16 %v688
        %v4792 = vunpack.c.l.b16 %v689
        %v4793 = vunpack.c.l.b16 %v690
        %v4794 = vunpack.c.l.b16 %v691
        %v4795 = vunpack.c.l.b16 %v692
        %v4796 = vunpack.c.l.b16 %v693
        %v4797 = vunpack.c.l.b16 %v694
        %v4798 = vunpack.c.l.b16 %v695
        %v4799 = vunpack.c.l.b16 %v696
        %v4800 = vunpack.c.l.b16 %v697
        %v4801 = vunpack.c.l.b16 %v698
        %v4802 = vunpack.c.l.b16 %v699
        %v4803 = vunpack.c.l.b16 %v700
        %v4804 = vunpack.c.l.b16 %v701
        %v4805 = vunpack.c.l.b16 %v702
        %v4806 = vunpack.c.l.b16 %v703
        %v4807 = vunpack.c.l.b16 %v704
        %v4808 = vunpack.c.l.b16 %v705
        %v4809 = vunpack.c.l.b16 %v706
        %v4810 = vunpack.c.l.b16 %v707
        %v4811 = vunpack.c.l.b16 %v708
        %v4812 = vunpack.c.l.b16 %v709
        %v4813 = vunpack.c.l.b16 %v710
        %v4814 = vunpack.c.l.b16 %v711
        %v4815 = vunpack.c.l.b16 %v712
        %v4816 = vunpack.c.l.b16 %v713
        %v4817 = vunpack.c.l.b16 %v714
        %v4818 = vunpack.c.l.b16 %v715
        %v4819 = vunpack.c.l.b16 %v716
        %v4820 = vunpack.c.l.b16 %v717
        %v4821 = vunpack.c.l.b16 %v718
        %v4822 = vunpack.c.l.b16 %v719
        %v4823 = vunpack.c.l.b16 %v720
        %v4824 = vunpack.c.l.b16 %v721
        %v4825 = vunpack.c.l.b16 %v722
        %v4826 = vunpack.c.l.b16 %v723
        %v4827 = vunpack.c.l.b16 %v724
        %v4828 = vunpack.c.l.b16 %v725
        %v4829 = vunpack.c.l.b16 %v726
        %v4830 = vunpack.c.l.b16 %v727
        %v4831 = vunpack.c.l.b16 %v728
        %v4832 = vunpack.c.l.b16 %v729
        %v4833 = vunpack.c.l.b16 %v730
        %v4834 = vunpack.c.l.b16 %v731
        %v4835 = vunpack.c.l.b16 %v732
        %v4836 = vunpack.c.l.b16 %v733
        %v4837 = vunpack.c.l.b16 %v734
        %v4838 = vunpack.c.l.b16 %v735
        %v4839 = vunpack.c.l.b16 %v736
        %v4840 = vunpack.c.l.b16 %v737
        %v4841 = vunpack.c.l.b16 %v738
        %v4842 = vunpack.c.l.b16 %v739
        %v4843 = vunpack.c.l.b16 %v740
        %v4844 = vunpack.c.l.b16 %v741
        %v4845 = vunpack.c.l.b16 %v742
        %v4846 = vunpack.c.l.b16 %v743
        %v4847 = vunpack.c.l.b16 %v744
        %v4848 = vunpack.c.l.b16 %v745
        %v4849 = vunpack.c.l.b16 %v746
        %v4850 = vunpack.c.l.b16 %v747
        %v4851 = vunpack.c.l.b16 %v748
        %v4852 = vunpack.c.l.b16 %v749
        %v4853 = vunpack.c.l.b16 %v750
        %v4854 = vunpack.c.l.b16 %v751
        %v4855 = vunpack.c.l.b16 %v752
        %v4856 = vunpack.c.l.b16 %v753
        %v4857 = vunpack.c.l.b16 %v754
        %v4858 = vunpack.c.l.b16 %v755
        %v4859 = vunpack.c.l.b16 %v756
        %v4860 = vunpack.c.l.b16 %v757
        %v4861 = vunpack.c.l.b16 %v758
        %v4862 = vunpack.c.l.b16 %v759
        %v4863 = vunpack.c.l.b16 %v760
        %v4864 = vunpack.c.l.b16 %v761
        %v4865 = vunpack.c.l.b16 %v762
        %v4866 = vunpack.c.l.b16 %v763
        %v4867 = vunpack.c.l.b16 %v764
        %v4868 = vunpack.c.l.b16 %v765
        %v4869 = vunpack.c.l.b16 %v766
        %v4870 = vunpack.c.l.b16 %v767
        %v4871 = vunpack.c.l.b16 %v768
        %v4872 = vunpack.c.l.b16 %v769
        %v4873 = vunpack.c.l.b16 %v770
        %v4874 = vunpack.c.l.b16 %v771
        %v4875 = vunpack.c.l.b16 %v772
        %v4876 = vunpack.c.l.b16 %v773
        %v4877 = vunpack.c.l.b16 %v774
        %v4878 = vunpack.c.l.b16 %v775
        %v4879 = vunpack.c.l.b16 %v776
        %v4880 = vunpack.c.l.b16 %v777
        %v4881 = vunpack.c.l.b16 %v778
        %v4882 = vunpack.c.l.b16 %v779
        %v4883 = vunpack.c.l.b16 %v780
        %v4884 = vunpack.c.l.b16 %v781
        %v4885 = vunpack.c.l.b16 %v782
        %v4886 = vunpack.c.l.b16 %v783
        %v4887 = vunpack.c.l.b16 %v784
        %v4888 = vunpack.c.l.b16 %v785
        %v4889 = vunpack.c.l.b16 %v786
        %v4890 = vunpack.c.l.b16 %v787
        %v4891 = vunpack.c.l.b16 %v788
        %v4892 = vunpack.c.l.b16 %v789
        %v4893 = vunpack.c.l.b16 %v790
        %v4894 = vunpack.c.l.b16 %v791
        %v4895 = vunpack.c.l.b16 %v792
        %v4896 = vunpack.c.l.b16 %v793
        %v4897 = vunpack.c.l.b16 %v794
        %v4898 = vunpack.c.l.b16 %v795
        %v4899 = vunpack.c.l.b16 %v796
        %v4900 = vunpack.c.l.b16 %v797
        %v4901 = vunpack.c.l.b16 %v798
        %v4902 = vunpack.c.l.b16 %v799
        %v4903 = vunpack.c.l.b16 %v800
        %v4904 = vunpack.c.l.b16 %v801
        %v4905 = vunpack.c.l.b16 %v802
        %v4906 = vunpack.c.l.b16 %v803
        %v4907 = vunpack.c.l.b16 %v804
        %v4908 = vunpack.c.l.b16 %v805
        %v4909 = vunpack.c.l.b16 %v806
        %v4910 = vunpack.c.l.b16 %v807
        %v4911 = vunpack.c.l.b16 %v808
        %v4912 = vunpack.c.l.b16 %v809
        %v4913 = vunpack.c.l.b16 %v810
        %v4914 = vunpack.c.l.b16 %v811
        %v4915 = vunpack.c.l.b16 %v812
        %v4916 = vunpack.c.l.b16 %v813
        %v4917 = vunpack.c.l.b16 %v814
        %v4918 = vunpack.c.l.b16 %v815
        %v4919 = vunpack.c.l.b16 %v816
        %v4920 = vunpack.c.l.b16 %v817
        %v4921 = vunpack.c.l.b16 %v818
        %v4922 = vunpack.c.l.b16 %v819
        %v4923 = vunpack.c.l.b16 %v820
        %v4924 = vunpack.c.l.b16 %v821
        %v4925 = vunpack.c.l.b16 %v822
        %v4926 = vunpack.c.l.b16 %v823
        %v4927 = vunpack.c.l.b16 %v824
        %v4928 = vunpack.c.l.b16 %v825
        %v4929 = vunpack.c.l.b16 %v826
        %v4930 = vunpack.c.l.b16 %v827
        %v4931 = vunpack.c.l.b16 %v828
        %v4932 = vunpack.c.l.b16 %v829
        %v4933 = vunpack.c.l.b16 %v830
        %v4934 = vunpack.c.l.b16 %v831
        %v4935 = vunpack.c.l.b16 %v832
        %v4936 = vunpack.c.l.b16 %v833
        %v4937 = vunpack.c.l.b16 %v834
        %v4938 = vunpack.c.l.b16 %v835
        %v4939 = vunpack.c.l.b16 %v836
        %v4940 = vunpack.c.l.b16 %v837
        %v4941 = vunpack.c.l.b16 %v838
        %v4942 = vunpack.c.l.b16 %v839
        %v4943 = vunpack.c.l.b16 %v840
        %v4944 = vunpack.c.l.b16 %v841
        %v4945 = vunpack.c.l.b16 %v842
        %v4946 = vunpack.c.l.b16 %v843
        %v4947 = vunpack.c.l.b16 %v844
        %v4948 = vunpack.c.l.b16 %v845
        %v4949 = vunpack.c.l.b16 %v846
        %v4950 = vunpack.c.l.b16 %v847
        %v4951 = vunpack.c.l.b16 %v848
        %v4952 = vunpack.c.l.b16 %v849
        %v4953 = vunpack.c.l.b16 %v850
        %v4954 = vunpack.c.l.b16 %v851
        %v4955 = vunpack.c.l.b16 %v852
        %v4956 = vunpack.c.l.b16 %v853
        %v4957 = vunpack.c.l.b16 %v854
        %v4958 = vunpack.c.l.b16 %v855
        %v4959 = vunpack.c.l.b16 %v856
        %v4960 = vunpack.c.l.b16 %v857
        %v4961 = vunpack.c.l.b16 %v858
        %v4962 = vunpack.c.l.b16 %v859
        %v4963 = vunpack.c.l.b16 %v860
        %v4964 = vunpack.c.l.b16 %v861
        %v4965 = vunpack.c.l.b16 %v862
        %v4966 = vunpack.c.l.b16 %v863
        %v4967 = vunpack.c.l.b16 %v864
        %v4968 = vunpack.c.l.b16 %v865
        %v4969 = vunpack.c.l.b16 %v866
        %v4970 = vunpack.c.l.b16 %v867
        %v4971 = vunpack.c.l.b16 %v868
        %v4972 = vunpack.c.l.b16 %v869
        %v4973 = vunpack.c.l.b16 %v870
        %v4974 = vunpack.c.l.b16 %v871
        %v4975 = vunpack.c.l.b16 %v872
        %v4976 = vunpack.c.l.b16 %v873
        %v4977 = vunpack.c.l.b16 %v874
        %v4978 = vunpack.c.l.b16 %v875
        %v4979 = vunpack.c.l.b16 %v876
        %v4980 = vunpack.c.l.b16 %v877
        %v4981 = vunpack.c.l.b16 %v878
        %v4982 = vunpack.c.l.b16 %v879
        %v4983 = vunpack.c.l.b16 %v880
        %v4984 = vunpack.c.l.b16 %v881
        %v4985 = vunpack.c.l.b16 %v882
        %v4986 = vunpack.c.l.b16 %v883
        %v4987 = vunpack.c.l.b16 %v884
        %v4988 = vunpack.c.l.b16 %v885
        %v4989 = vunpack.c.l.b16 %v886
        %v4990 = vunpack.c.l.b16 %v887
        %v4991 = vunpack.c.l.b16 %v888
        %v4992 = vunpack.c.l.b16 %v889
        %v4993 = vunpack.c.l.b16 %v890
        %v4994 = vunpack.c.l.b16 %v891
        %v4995 = vunpack.c.l.b16 %v892
        %v4996 = vunpack.c.l.b16 %v893
        %v4997 = vunpack.c.l.b16 %v894
        %v4998 = vunpack.c.l.b16 %v895
        %v4999 = vunpack.c.l.b16 %v896
        %v5000 = vunpack.c.l.b16 %v897
        %v5001 = vunpack.c.l.b16 %v898
        %v5002 = vunpack.c.l.b16 %v899
        %v5003 = vunpack.c.l.b16 %v900
        %v5004 = vunpack.c.l.b16 %v901
        %v5005 = vunpack.c.l.b16 %v902
        %v5006 = vunpack.c.l.b16 %v903
        %v5007 = vunpack.c.l.b16 %v904
        %v5008 = vunpack.c.l.b16 %v905
        %v5009 = vunpack.c.l.b16 %v906
        %v5010 = vunpack.c.l.b16 %v907
        %v5011 = vunpack.c.l.b16 %v908
        %v5012 = vunpack.c.l.b16 %v909
        %v5013 = vunpack.c.l.b16 %v910
        %v5014 = vunpack.c.l.b16 %v911
        %v5015 = vunpack.c.l.b16 %v912
        %v5016 = vunpack.c.l.b16 %v913
        %v5017 = vunpack.c.l.b16 %v914
        %v5018 = vunpack.c.l.b16 %v915
        %v5019 = vunpack.c.l.b16 %v916
        %v5020 = vunpack.c.l.b16 %v917
        %v5021 = vunpack.c.l.b16 %v918
        %v5022 = vunpack.c.l.b16 %v919
        %v5023 = vunpack.c.l.b16 %v920
        %v5024 = vunpack.c.l.b16 %v921
        %v5025 = vunpack.c.l.b16 %v922
        %v5026 = vunpack.c.l.b16 %v923
        %v5027 = vunpack.c.l.b16 %v924
        %v5028 = vunpack.c.l.b16 %v925
        %v5029 = vunpack.c.l.b16 %v926
        %v5030 = vunpack.c.l.b16 %v927
        %v5031 = vunpack.c.l.b16 %v928
        %v5032 = vunpack.c.l.b16 %v929
        %v5033 = vunpack.c.l.b16 %v930
        %v5034 = vunpack.c.l.b16 %v931
        %v5035 = vunpack.c.l.b16 %v932
        %v5036 = vunpack.c.l.b16 %v933
        %v5037 = vunpack.c.l.b16 %v934
        %v5038 = vunpack.c.l.b16 %v935
        %v5039 = vunpack.c.l.b16 %v936
        %v5040 = vunpack.c.l.b16 %v937
        %v5041 = vunpack.c.l.b16 %v938
        %v5042 = vunpack.c.l.b16 %v939
        %v5043 = vunpack.c.l.b16 %v940
        %v5044 = vunpack.c.l.b16 %v941
        %v5045 = vunpack.c.l.b16 %v942
        %v5046 = vunpack.c.l.b16 %v943
        %v5047 = vunpack.c.l.b16 %v944
        %v5048 = vunpack.c.l.b16 %v945
        %v5049 = vunpack.c.l.b16 %v946
        %v5050 = vunpack.c.l.b16 %v947
        %v5051 = vunpack.c.l.b16 %v948
        %v5052 = vunpack.c.l.b16 %v949
        %v5053 = vunpack.c.l.b16 %v950
        %v5054 = vunpack.c.l.b16 %v951
        %v5055 = vunpack.c.l.b16 %v952
        %v5056 = vunpack.c.l.b16 %v953
        %v5057 = vunpack.c.l.b16 %v954
        %v5058 = vunpack.c.l.b16 %v955
        %v5059 = vunpack.c.l.b16 %v956
        %v5060 = vunpack.c.l.b16 %v957
        %v5061 = vunpack.c.l.b16 %v958
        %v5062 = vunpack.c.l.b16 %v959
        %v5063 = vunpack.c.l.b16 %v960
        %v5064 = vunpack.c.l.b16 %v961
        %v5065 = vunpack.c.l.b16 %v962
        %v5066 = vunpack.c.l.b16 %v963
        %v5067 = vunpack.c.l.b16 %v964
        %v5068 = vunpack.c.l.b16 %v965
        %v5069 = vunpack.c.l.b16 %v966
        %v5070 = vunpack.c.l.b16 %v967
        %v5071 = vunpack.c.l.b16 %v968
        %v5072 = vunpack.c.l.b16 %v969
        %v5073 = vunpack.c.l.b16 %v970
        %v5074 = vunpack.c.l.b16 %v971
        %v5075 = vunpack.c.l.b16 %v972
        %v5076 = vunpack.c.l.b16 %v973
        %v5077 = vunpack.c.l.b16 %v974
        %v5078 = vunpack.c.l.b16 %v975
        %v5079 = vunpack.c.l.b16 %v976
        %v5080 = vunpack.c.l.b16 %v977
        %v5081 = vunpack.c.l.b16 %v978
        %v5082 = vunpack.c.l.b16 %v979
        %v5083 = vunpack.c.l.b16 %v980
        %v5084 = vunpack.c.l.b16 %v981
        %v5085 = vunpack.c.l.b16 %v982
        %v5086 = vunpack.c.l.b16 %v983
        %v5087 = vunpack.c.l.b16 %v984
        %v5088 = vunpack.c.l.b16 %v985
        %v5089 = vunpack.c.l.b16 %v986
        %v5090 = vunpack.c.l.b16 %v987
        %v5091 = vunpack.c.l.b16 %v988
        %v5092 = vunpack.c.l.b16 %v989
        %v5093 = vunpack.c.l.b16 %v990
        %v5094 = vunpack.c.l.b16 %v991
        %v5095 = vunpack.c.l.b16 %v992
        %v5096 = vunpack.c.l.b16 %v993
        %v5097 = vunpack.c.l.b16 %v994
        %v5098 = vunpack.c.l.b16 %v995
        %v5099 = vunpack.c.l.b16 %v996
        %v5100 = vunpack.c.l.b16 %v997
        %v5101 = vunpack.c.l.b16 %v998
        %v5102 = vunpack.c.l.b16 %v999
        %v5103 = vunpack.c.l.b16 %v1000
        %v5104 = vunpack.c.l.b16 %v1001
        %v5105 = vunpack.c.l.b16 %v1002
        %v5106 = vunpack.c.l.b16 %v1003
        %v5107 = vunpack.c.l.b16 %v1004
        %v5108 = vunpack.c.l.b16 %v1005
        %v5109 = vunpack.c.l.b16 %v1006
        %v5110 = vunpack.c.l.b16 %v1007
        %v5111 = vunpack.c.l.b16 %v1008
        %v5112 = vunpack.c.l.b16 %v1009
        %v5113 = vunpack.c.l.b16 %v1010
        %v5114 = vunpack.c.l.b16 %v1011
        %v5115 = vunpack.c.l.b16 %v1012
        %v5116 = vunpack.c.l.b16 %v1013
        %v5117 = vunpack.c.l.b16 %v1014
        %v5118 = vunpack.c.l.b16 %v1015
        %v5119 = vunpack.c.l.b16 %v1016
        %v5120 = vunpack.c.l.b16 %v1017
        %v5121 = vunpack.c.l.b16 %v1018
        %v5122 = vunpack.c.l.b16 %v1019
        %v5123 = vunpack.c.l.b16 %v1020
        %v5124 = vunpack.c.l.b16 %v1021
        %v5125 = vunpack.c.l.b16 %v1022
        %v5126 = vunpack.c.l.b16 %v1023
        %v5127 = vunpack.c.l.b16 %v1024
        %v5128 = vunpack.c.l.b16 %v1025
        %v5129 = vunpack.c.l.b16 %v1026
        %v5130 = vunpack.c.l.b16 %v1027
        %v5131 = vunpack.c.l.b16 %v1028
        %v5132 = vunpack.c.l.b16 %v1029
        %v5133 = vunpack.c.l.b16 %v1030
        %v5134 = vunpack.c.l.b16 %v1031
        %v5135 = vunpack.c.l.b16 %v1032
        %v5136 = vunpack.c.l.b16 %v1033
        %v5137 = vunpack.c.l.b16 %v1034
        %v5138 = vunpack.c.l.b16 %v1035
        %v5139 = vunpack.c.l.b16 %v1036
        %v5140 = vunpack.c.l.b16 %v1037
        %v5141 = vunpack.c.l.b16 %v1038
        %v5142 = vunpack.c.l.b16 %v1039
        %v5143 = vunpack.c.l.b16 %v1040
        %v5144 = vunpack.c.l.b16 %v1041
        %v5145 = vunpack.c.l.b16 %v1042
        %v5146 = vunpack.c.l.b16 %v1043
        %v5147 = vunpack.c.l.b16 %v1044
        %v5148 = vunpack.c.l.b16 %v1045
        %v5149 = vunpack.c.l.b16 %v1046
        %v5150 = vunpack.c.l.b16 %v1047
        %v5151 = vunpack.c.l.b16 %v1048
        %v5152 = vunpack.c.l.b16 %v1049
        %v5153 = vunpack.c.l.b16 %v1050
        %v5154 = vunpack.c.l.b16 %v1051
        %v5155 = vunpack.c.l.b16 %v1052
        %v5156 = vunpack.c.l.b16 %v1053
        %v5157 = vunpack.c.l.b16 %v1054
        %v5158 = vunpack.c.l.b16 %v1055
        %v5159 = vunpack.c.l.b16 %v1056
        %v5160 = vunpack.c.l.b16 %v1057
        %v5161 = vunpack.c.l.b16 %v1058
        %v5162 = vunpack.c.l.b16 %v1059
        %v5163 = vunpack.c.l.b16 %v1060
        %v5164 = vunpack.c.l.b16 %v1061
        %v5165 = vunpack.c.l.b16 %v1062
        %v5166 = vunpack.c.l.b16 %v1063
        %v5167 = vunpack.c.l.b16 %v1064
        %v5168 = vunpack.c.l.b16 %v1065
        %v5169 = vunpack.c.l.b16 %v1066
        %v5170 = vunpack.c.l.b16 %v1067
        %v5171 = vunpack.c.l.b16 %v1068
        %v5172 = vunpack.c.l.b16 %v1069
        %v5173 = vunpack.c.l.b16 %v1070
        %v5174 = vunpack.c.l.b16 %v1071
        %v5175 = vunpack.c.l.b16 %v1072
        %v5176 = vunpack.c.l.b16 %v1073
        %v5177 = vunpack.c.l.b16 %v1074
        %v5178 = vunpack.c.l.b16 %v1075
        %v5179 = vunpack.c.l.b16 %v1076
        %v5180 = vunpack.c.l.b16 %v1077
        %v5181 = vunpack.c.l.b16 %v1078
        %v5182 = vunpack.c.l.b16 %v1079
        %v5183 = vunpack.c.l.b16 %v1080
        %v5184 = vunpack.c.l.b16 %v1081
        %v5185 = vunpack.c.l.b16 %v1082
        %v5186 = vunpack.c.l.b16 %v1083
        %v5187 = vunpack.c.l.b16 %v1084
        %v5188 = vunpack.c.l.b16 %v1085
        %v5189 = vunpack.c.l.b16 %v1086
        %v5190 = vunpack.c.l.b16 %v1087
        %v5191 = vunpack.c.l.b16 %v1088
        %v5192 = vunpack.c.l.b16 %v1089
        %v5193 = vunpack.c.l.b16 %v1090
        %v5194 = vunpack.c.l.b16 %v1091
        %v5195 = vunpack.c.l.b16 %v1092
        %v5196 = vunpack.c.l.b16 %v1093
        %v5197 = vunpack.c.l.b16 %v1094
        %v5198 = vunpack.c.l.b16 %v1095
        %v5199 = vunpack.c.l.b16 %v1096
        %v5200 = vunpack.c.l.b16 %v1097
        %v5201 = vunpack.c.l.b16 %v1098
        %v5202 = vunpack.c.l.b16 %v1099
        %v5203 = vunpack.c.l.b16 %v1100
        %v5204 = vunpack.c.l.b16 %v1101
        %v5205 = vunpack.c.l.b16 %v1102
        %v5206 = vunpack.c.l.b16 %v1103
        %v5207 = vunpack.c.l.b16 %v1104
        %v5208 = vunpack.c.l.b16 %v1105
        %v5209 = vunpack.c.l.b16 %v1106
        %v5210 = vunpack.c.l.b16 %v1107
        %v5211 = vunpack.c.l.b16 %v1108
        %v5212 = vunpack.c.l.b16 %v1109
        %v5213 = vunpack.c.l.b16 %v1110
        %v5214 = vunpack.c.l.b16 %v1111
        %v5215 = vunpack.c.l.b16 %v1112
        %v5216 = vunpack.c.l.b16 %v1113
        %v5217 = vunpack.c.l.b16 %v1114
        %v5218 = vunpack.c.l.b16 %v1115
        %v5219 = vunpack.c.l.b16 %v1116
        %v5220 = vunpack.c.l.b16 %v1117
        %v5221 = vunpack.c.l.b16 %v1118
        %v5222 = vunpack.c.l.b16 %v1119
        %v5223 = vunpack.c.l.b16 %v1120
        %v5224 = vunpack.c.l.b16 %v1121
        %v5225 = vunpack.c.l.b16 %v1122
        %v5226 = vunpack.c.l.b16 %v1123
        %v5227 = vunpack.c.l.b16 %v1124
        %v5228 = vunpack.c.l.b16 %v1125
        %v5229 = vunpack.c.l.b16 %v1126
        %v5230 = vunpack.c.l.b16 %v1127
        %v5231 = vunpack.c.l.b16 %v1128
        %v5232 = vunpack.c.l.b16 %v1129
        %v5233 = vunpack.c.l.b16 %v1130
        %v5234 = vunpack.c.l.b16 %v1131
        %v5235 = vunpack.c.l.b16 %v1132
        %v5236 = vunpack.c.l.b16 %v1133
        %v5237 = vunpack.c.l.b16 %v1134
        %v5238 = vunpack.c.l.b16 %v1135
        %v5239 = vunpack.c.l.b16 %v1136
        %v5240 = vunpack.c.l.b16 %v1137
        %v5241 = vunpack.c.l.b16 %v1138
        %v5242 = vunpack.c.l.b16 %v1139
        %v5243 = vunpack.c.l.b16 %v1140
        %v5244 = vunpack.c.l.b16 %v1141
        %v5245 = vunpack.c.l.b16 %v1142
        %v5246 = vunpack.c.l.b16 %v1143
        %v5247 = vunpack.c.l.b16 %v1144
        %v5248 = vunpack.c.l.b16 %v1145
        %v5249 = vunpack.c.l.b16 %v1146
        %v5250 = vunpack.c.l.b16 %v1147
        %v5251 = vunpack.c.l.b16 %v1148
        %v5252 = vunpack.c.l.b16 %v1149
        %v5253 = vunpack.c.l.b16 %v1150
        %v5254 = vunpack.c.l.b16 %v1151
        %v5255 = vunpack.c.l.b16 %v1152
        %v5256 = vunpack.c.l.b16 %v1153
        %v5257 = vunpack.c.l.b16 %v1154
        %v5258 = vunpack.c.l.b16 %v1155
        %v5259 = vunpack.c.l.b16 %v1156
        %v5260 = vunpack.c.l.b16 %v1157
        %v5261 = vunpack.c.l.b16 %v1158
        %v5262 = vunpack.c.l.b16 %v1159
        %v5263 = vunpack.c.l.b16 %v1160
        %v5264 = vunpack.c.l.b16 %v1161
        %v5265 = vunpack.c.l.b16 %v1162
        %v5266 = vunpack.c.l.b16 %v1163
        %v5267 = vunpack.c.l.b16 %v1164
        %v5268 = vunpack.c.l.b16 %v1165
        %v5269 = vunpack.c.l.b16 %v1166
        %v5270 = vunpack.c.l.b16 %v1167
        %v5271 = vunpack.c.l.b16 %v1168
        %v5272 = vunpack.c.l.b16 %v1169
        %v5273 = vunpack.c.l.b16 %v1170
        %v5274 = vunpack.c.l.b16 %v1171
        %v5275 = vunpack.c.l.b16 %v1172
        %v5276 = vunpack.c.l.b16 %v1173
        %v5277 = vunpack.c.l.b16 %v1174
        %v5278 = vunpack.c.l.b16 %v1175
        %v5279 = vunpack.c.l.b16 %v1176
        %v5280 = vunpack.c.l.b16 %v1177
        %v5281 = vunpack.c.l.b16 %v1178
        %v5282 = vunpack.c.l.b16 %v1179
        %v5283 = vunpack.c.l.b16 %v1180
        %v5284 = vunpack.c.l.b16 %v1181
        %v5285 = vunpack.c.l.b16 %v1182
        %v5286 = vunpack.c.l.b16 %v1183
        %v5287 = vunpack.c.l.b16 %v1184
        %v5288 = vunpack.c.l.b16 %v1185
        %v5289 = vunpack.c.l.b16 %v1186
        %v5290 = vunpack.c.l.b16 %v1187
        %v5291 = vunpack.c.l.b16 %v1188
        %v5292 = vunpack.c.l.b16 %v1189
        %v5293 = vunpack.c.l.b16 %v1190
        %v5294 = vunpack.c.l.b16 %v1191
        %v5295 = vunpack.c.l.b16 %v1192
        %v5296 = vunpack.c.l.b16 %v1193
        %v5297 = vunpack.c.l.b16 %v1194
        %v5298 = vunpack.c.l.b16 %v1195
        %v5299 = vunpack.c.l.b16 %v1196
        %v5300 = vunpack.c.l.b16 %v1197
        %v5301 = vunpack.c.l.b16 %v1198
        %v5302 = vunpack.c.l.b16 %v1199
        %v5303 = vunpack.c.l.b16 %v1200
        %v5304 = vunpack.c.l.b16 %v1201
        %v5305 = vunpack.c.l.b16 %v1202
        %v5306 = vunpack.c.l.b16 %v1203
        %v5307 = vunpack.c.l.b16 %v1204
        %v5308 = vunpack.c.l.b16 %v1205
        %v5309 = vunpack.c.l.b16 %v1206
        %v5310 = vunpack.c.l.b16 %v1207
        %v5311 = vunpack.c.l.b16 %v1208
        %v5312 = vunpack.c.l.b16 %v1209
        %v5313 = vunpack.c.l.b16 %v1210
        %v5314 = vunpack.c.l.b16 %v1211
        %v5315 = vunpack.c.l.b16 %v1212
        %v5316 = vunpack.c.l.b16 %v1213
        %v5317 = vunpack.c.l.b16 %v1214
        %v5318 = vunpack.c.l.b16 %v1215
        %v5319 = vunpack.c.l.b16 %v1216
        %v5320 = vunpack.c.l.b16 %v1217
        %v5321 = vunpack.c.l.b16 %v1218
        %v5322 = vunpack.c.l.b16 %v1219
        %v5323 = vunpack.c.l.b16 %v1220
        %v5324 = vunpack.c.l.b16 %v1221
        %v5325 = vunpack.c.l.b16 %v1222
        %v5326 = vunpack.c.l.b16 %v1223
        %v5327 = vunpack.c.l.b16 %v1224
        %v5328 = vunpack.c.l.b16 %v1225
        %v5329 = vunpack.c.l.b16 %v1226
        %v5330 = vunpack.c.l.b16 %v1227
        %v5331 = vunpack.c.l.b16 %v1228
        %v5332 = vunpack.c.l.b16 %v1229
        %v5333 = vunpack.c.l.b16 %v1230
        %v5334 = vunpack.c.l.b16 %v1231
        %v5335 = vunpack.c.l.b16 %v1232
        %v5336 = vunpack.c.l.b16 %v1233
        %v5337 = vunpack.c.l.b16 %v1234
        %v5338 = vunpack.c.l.b16 %v1235
        %v5339 = vunpack.c.l.b16 %v1236
        %v5340 = vunpack.c.l.b16 %v1237
        %v5341 = vunpack.c.l.b16 %v1238
        %v5342 = vunpack.c.l.b16 %v1239
        %v5343 = vunpack.c.l.b16 %v1240
        %v5344 = vunpack.c.l.b16 %v1241
        %v5345 = vunpack.c.l.b16 %v1242
        %v5346 = vunpack.c.l.b16 %v1243
        %v5347 = vunpack.c.l.b16 %v1244
        %v5348 = vunpack.c.l.b16 %v1245
        %v5349 = vunpack.c.l.b16 %v1246
        %v5350 = vunpack.c.l.b16 %v1247
        %v5351 = vunpack.c.l.b16 %v1248
        %v5352 = vunpack.c.l.b16 %v1249
        %v5353 = vunpack.c.l.b16 %v1250
        %v5354 = vunpack.c.l.b16 %v1251
        %v5355 = vunpack.c.l.b16 %v1252
        %v5356 = vunpack.c.l.b16 %v1253
        %v5357 = vunpack.c.l.b16 %v1254
        %v5358 = vunpack.c.l.b16 %v1255
        %v5359 = vunpack.c.l.b16 %v1256
        %v5360 = vunpack.c.l.b16 %v1257
        %v5361 = vunpack.c.l.b16 %v1258
        %v5362 = vunpack.c.l.b16 %v1259
        %v5363 = vunpack.c.l.b16 %v1260
        %v5364 = vunpack.c.l.b16 %v1261
        %v5365 = vunpack.c.l.b16 %v1262
        %v5366 = vunpack.c.l.b16 %v1263
        %v5367 = vunpack.c.l.b16 %v1264
        %v5368 = vunpack.c.l.b16 %v1265
        %v5369 = vunpack.c.l.b16 %v1266
        %v5370 = vunpack.c.l.b16 %v1267
        %v5371 = vunpack.c.l.b16 %v1268
        %v5372 = vunpack.c.l.b16 %v1269
        %v5373 = vunpack.c.l.b16 %v1270
        %v5374 = vunpack.c.l.b16 %v1271
        %v5375 = vunpack.c.l.b16 %v1272
        %v5376 = vunpack.c.l.b16 %v1273
        %v5377 = vunpack.c.l.b16 %v1274
        %v5378 = vunpack.c.l.b16 %v1275
        %v5379 = vunpack.c.l.b16 %v1276
        %v5380 = vunpack.c.l.b16 %v1277
        %v5381 = vunpack.c.l.b16 %v1278
        %v5382 = vunpack.c.l.b16 %v1279
        %v5383 = vunpack.c.l.b16 %v1280
        %v5384 = vunpack.c.l.b16 %v1281
        %v5385 = vunpack.c.l.b16 %v1282
        %v5386 = vunpack.c.l.b16 %v1283
        %v5387 = vunpack.c.l.b16 %v1284
        %v5388 = vunpack.c.l.b16 %v1285
        %v5389 = vunpack.c.l.b16 %v1286
        %v5390 = vunpack.c.l.b16 %v1287
        %v5391 = vunpack.c.l.b16 %v1288
        %v5392 = vunpack.c.l.b16 %v1289
        %v5393 = vunpack.c.l.b16 %v1290
        %v5394 = vunpack.c.l.b16 %v1291
        %v5395 = vunpack.c.l.b16 %v1292
        %v5396 = vunpack.c.l.b16 %v1293
        %v5397 = vunpack.c.l.b16 %v1294
        %v5398 = vunpack.c.l.b16 %v1295
        %v5399 = vunpack.c.l.b16 %v1296
        %v5400 = vunpack.c.l.b16 %v1297
        %v5401 = vunpack.c.l.b16 %v1298
        %v5402 = vunpack.c.l.b16 %v1299
        %v5403 = vunpack.c.l.b16 %v1300
        %v5404 = vunpack.c.l.b16 %v1301
        %v5405 = vunpack.c.l.b16 %v1302
        %v5406 = vunpack.c.l.b16 %v1303
        %v5407 = vunpack.c.l.b16 %v1304
        %v5408 = vunpack.c.l.b16 %v1305
        %v5409 = vunpack.c.l.b16 %v1306
        %v5410 = vunpack.c.l.b16 %v1307
        %v5411 = vunpack.c.l.b16 %v1308
        %v5412 = vunpack.c.l.b16 %v1309
        %v5413 = vunpack.c.l.b16 %v1310
        %v5414 = vunpack.c.l.b16 %v1311
        %v5415 = vunpack.c.l.b16 %v1312
        %v5416 = vunpack.c.l.b16 %v1313
        %v5417 = vunpack.c.l.b16 %v1314
        %v5418 = vunpack.c.l.b16 %v1315
        %v5419 = vunpack.c.l.b16 %v1316
        %v5420 = vunpack.c.l.b16 %v1317
        %v5421 = vunpack.c.l.b16 %v1318
        %v5422 = vunpack.c.l.b16 %v1319
        %v5423 = vunpack.c.l.b16 %v1320
        %v5424 = vunpack.c.l.b16 %v1321
        %v5425 = vunpack.c.l.b16 %v1322
        %v5426 = vunpack.c.l.b16 %v1323
        %v5427 = vunpack.c.l.b16 %v1324
        %v5428 = vunpack.c.l.b16 %v1325
        %v5429 = vunpack.c.l.b16 %v1326
        %v5430 = vunpack.c.l.b16 %v1327
        %v5431 = vunpack.c.l.b16 %v1328
        %v5432 = vunpack.c.l.b16 %v1329
        %v5433 = vunpack.c.l.b16 %v1330
        %v5434 = vunpack.c.l.b16 %v1331
        %v5435 = vunpack.c.l.b16 %v1332
        %v5436 = vunpack.c.l.b16 %v1333
        %v5437 = vunpack.c.l.b16 %v1334
        %v5438 = vunpack.c.l.b16 %v1335
        %v5439 = vunpack.c.l.b16 %v1336
        %v5440 = vunpack.c.l.b16 %v1337
        %v5441 = vunpack.c.l.b16 %v1338
        %v5442 = vunpack.c.l.b16 %v1339
        %v5443 = vunpack.c.l.b16 %v1340
        %v5444 = vunpack.c.l.b16 %v1341
        %v5445 = vunpack.c.l.b16 %v1342
        %v5446 = vunpack.c.l.b16 %v1343
        %v5447 = vunpack.c.l.b16 %v1344
        %v5448 = vunpack.c.l.b16 %v1345
        %v5449 = vunpack.c.l.b16 %v1346
        %v5450 = vunpack.c.l.b16 %v1347
        %v5451 = vunpack.c.l.b16 %v1348
        %v5452 = vunpack.c.l.b16 %v1349
        %v5453 = vunpack.c.l.b16 %v1350
        %v5454 = vunpack.c.l.b16 %v1351
        %v5455 = vunpack.c.l.b16 %v1352
        %v5456 = vunpack.c.l.b16 %v1353
        %v5457 = vunpack.c.l.b16 %v1354
        %v5458 = vunpack.c.l.b16 %v1355
        %v5459 = vunpack.c.l.b16 %v1356
        %v5460 = vunpack.c.l.b16 %v1357
        %v5461 = vunpack.c.l.b16 %v1358
        %v5462 = vunpack.c.l.b16 %v1359
        %v5463 = vunpack.c.l.b16 %v1360
        %v5464 = vunpack.c.l.b16 %v1361
        %v5465 = vunpack.c.l.b16 %v1362
        %v5466 = vunpack.c.l.b16 %v1363
        %v5467 = vunpack.c.l.b16 %v1364
        %v5468 = vunpack.c.l.b16 %v1365
        %v5469 = vunpack.c.l.b16 %v1366
        %v5470 = vunpack.c.l.b16 %v1367
        %v5471 = vunpack.c.l.b16 %v1368
        %v5472 = vunpack.c.l.b16 %v1369
        %v5473 = vunpack.c.l.b16 %v1370
        %v5474 = vunpack.c.l.b16 %v1371
        %v5475 = vunpack.c.l.b16 %v1372
        %v5476 = vunpack.c.l.b16 %v1373
        %v5477 = vunpack.c.l.b16 %v1374
        %v5478 = vunpack.c.l.b16 %v1375
        %v5479 = vunpack.c.l.b16 %v1376
        %v5480 = vunpack.c.l.b16 %v1377
        %v5481 = vunpack.c.l.b16 %v1378
        %v5482 = vunpack.c.l.b16 %v1379
        %v5483 = vunpack.c.l.b16 %v1380
        %v5484 = vunpack.c.l.b16 %v1381
        %v5485 = vunpack.c.l.b16 %v1382
        %v5486 = vunpack.c.l.b16 %v1383
        %v5487 = vunpack.c.l.b16 %v1384
        %v5488 = vunpack.c.l.b16 %v1385
        %v5489 = vunpack.c.l.b16 %v1386
        %v5490 = vunpack.c.l.b16 %v1387
        %v5491 = vunpack.c.l.b16 %v1388
        %v5492 = vunpack.c.l.b16 %v1389
        %v5493 = vunpack.c.l.b16 %v1390
        %v5494 = vunpack.c.l.b16 %v1391
        %v5495 = vunpack.c.l.b16 %v1392
        %v5496 = vunpack.c.l.b16 %v1393
        %v5497 = vunpack.c.l.b16 %v1394
        %v5498 = vunpack.c.l.b16 %v1395
        %v5499 = vunpack.c.l.b16 %v1396
        %v5500 = vunpack.c.l.b16 %v1397
        %v5501 = vunpack.c.l.b16 %v1398
        %v5502 = vunpack.c.l.b16 %v1399
        %v5503 = vunpack.c.l.b16 %v1400
        %v5504 = vunpack.c.l.b16 %v1401
        %v5505 = vunpack.c.l.b16 %v1402
        %v5506 = vunpack.c.l.b16 %v1403
        %v5507 = vunpack.c.l.b16 %v1404
        %v5508 = vunpack.c.l.b16 %v1405
        %v5509 = vunpack.c.l.b16 %v1406
        %v5510 = vunpack.c.l.b16 %v1407
        %v5511 = vunpack.c.l.b16 %v1408
        %v5512 = vunpack.c.l.b16 %v1409
        %v5513 = vunpack.c.l.b16 %v1410
        %v5514 = vunpack.c.l.b16 %v1411
        %v5515 = vunpack.c.l.b16 %v1412
        %v5516 = vunpack.c.l.b16 %v1413
        %v5517 = vunpack.c.l.b16 %v1414
        %v5518 = vunpack.c.l.b16 %v1415
        %v5519 = vunpack.c.l.b16 %v1416
        %v5520 = vunpack.c.l.b16 %v1417
        %v5521 = vunpack.c.l.b16 %v1418
        %v5522 = vunpack.c.l.b16 %v1419
        %v5523 = vunpack.c.l.b16 %v1420
        %v5524 = vunpack.c.l.b16 %v1421
        %v5525 = vunpack.c.l.b16 %v1422
        %v5526 = vunpack.c.l.b16 %v1423
        %v5527 = vunpack.c.l.b16 %v1424
        %v5528 = vunpack.c.l.b16 %v1425
        %v5529 = vunpack.c.l.b16 %v1426
        %v5530 = vunpack.c.l.b16 %v1427
        %v5531 = vunpack.c.l.b16 %v1428
        %v5532 = vunpack.c.l.b16 %v1429
        %v5533 = vunpack.c.l.b16 %v1430
        %v5534 = vunpack.c.l.b16 %v1431
        %v5535 = vunpack.c.l.b16 %v1432
        %v5536 = vunpack.c.l.b16 %v1433
        %v5537 = vunpack.c.l.b16 %v1434
        %v5538 = vunpack.c.l.b16 %v1435
        %v5539 = vunpack.c.l.b16 %v1436
        %v5540 = vunpack.c.l.b16 %v1437
        %v5541 = vunpack.c.l.b16 %v1438
        %v5542 = vunpack.c.l.b16 %v1439
        %v5543 = vunpack.c.l.b16 %v1440
        %v5544 = vunpack.c.l.b16 %v1441
        %v5545 = vunpack.c.l.b16 %v1442
        %v5546 = vunpack.c.l.b16 %v1443
        %v5547 = vunpack.c.l.b16 %v1444
        %v5548 = vunpack.c.l.b16 %v1445
        %v5549 = vunpack.c.l.b16 %v1446
        %v5550 = vunpack.c.l.b16 %v1447
        %v5551 = vunpack.c.l.b16 %v1448
        %v5552 = vunpack.c.l.b16 %v1449
        %v5553 = vunpack.c.l.b16 %v1450
        %v5554 = vunpack.c.l.b16 %v1451
        %v5555 = vunpack.c.l.b16 %v1452
        %v5556 = vunpack.c.l.b16 %v1453
        %v5557 = vunpack.c.l.b16 %v1454
        %v5558 = vunpack.c.l.b16 %v1455
        %v5559 = vunpack.c.l.b16 %v1456
        %v5560 = vunpack.c.l.b16 %v1457
        %v5561 = vunpack.c.l.b16 %v1458
        %v5562 = vunpack.c.l.b16 %v1459
        %v5563 = vunpack.c.l.b16 %v1460
        %v5564 = vunpack.c.l.b16 %v1461
        %v5565 = vunpack.c.l.b16 %v1462
        %v5566 = vunpack.c.l.b16 %v1463
        %v5567 = vunpack.c.l.b16 %v1464
        %v5568 = vunpack.c.l.b16 %v1465
        %v5569 = vunpack.c.l.b16 %v1466
        %v5570 = vunpack.c.l.b16 %v1467
        %v5571 = vunpack.c.l.b16 %v1468
        %v5572 = vunpack.c.l.b16 %v1469
        %v5573 = vunpack.c.l.b16 %v1470
        %v5574 = vunpack.c.l.b16 %v1471
        %v5575 = vunpack.c.l.b16 %v1472
        %v5576 = vunpack.c.l.b16 %v1473
        %v5577 = vunpack.c.l.b16 %v1474
        %v5578 = vunpack.c.l.b16 %v1475
        %v5579 = vunpack.c.l.b16 %v1476
        %v5580 = vunpack.c.l.b16 %v1477
        %v5581 = vunpack.c.l.b16 %v1478
        %v5582 = vunpack.c.l.b16 %v1479
        %v5583 = vunpack.c.l.b16 %v1480
        %v5584 = vunpack.c.l.b16 %v1481
        %v5585 = vunpack.c.l.b16 %v1482
        %v5586 = vunpack.c.l.b16 %v1483
        %v5587 = vunpack.c.l.b16 %v1484
        %v5588 = vunpack.c.l.b16 %v1485
        %v5589 = vunpack.c.l.b16 %v1486
        %v5590 = vunpack.c.l.b16 %v1487
        %v5591 = vunpack.c.l.b16 %v1488
        %v5592 = vunpack.c.l.b16 %v1489
        %v5593 = vunpack.c.l.b16 %v1490
        %v5594 = vunpack.c.l.b16 %v1491
        %v5595 = vunpack.c.l.b16 %v1492
        %v5596 = vunpack.c.l.b16 %v1493
        %v5597 = vunpack.c.l.b16 %v1494
        %v5598 = vunpack.c.l.b16 %v1495
        %v5599 = vunpack.c.l.b16 %v1496
        %v5600 = vunpack.c.l.b16 %v1497
        %v5601 = vunpack.c.l.b16 %v1498
        %v5602 = vunpack.c.l.b16 %v1499
        %v5603 = vunpack.c.l.b16 %v1500
        %v5604 = vunpack.c.l.b16 %v1501
        %v5605 = vunpack.c.l.b16 %v1502
        %v5606 = vunpack.c.l.b16 %v1503
        %v5607 = vunpack.c.l.b16 %v1504
        %v5608 = vunpack.c.l.b16 %v1505
        %v5609 = vunpack.c.l.b16 %v1506
        %v5610 = vunpack.c.l.b16 %v1507
        %v5611 = vunpack.c.l.b16 %v1508
        %v5612 = vunpack.c.l.b16 %v1509
        %v5613 = vunpack.c.l.b16 %v1510
        %v5614 = vunpack.c.l.b16 %v1511
        %v5615 = vunpack.c.l.b16 %v1512
        %v5616 = vunpack.c.l.b16 %v1513
        %v5617 = vunpack.c.l.b16 %v1514
        %v5618 = vunpack.c.l.b16 %v1515
        %v5619 = vunpack.c.l.b16 %v1516
        %v5620 = vunpack.c.l.b16 %v1517
        %v5621 = vunpack.c.l.b16 %v1518
        %v5622 = vunpack.c.l.b16 %v1519
        %v5623 = vunpack.c.l.b16 %v1520
        %v5624 = vunpack.c.l.b16 %v1521
        %v5625 = vunpack.c.l.b16 %v1522
        %v5626 = vunpack.c.l.b16 %v1523
        %v5627 = vunpack.c.l.b16 %v1524
        %v5628 = vunpack.c.l.b16 %v1525
        %v5629 = vunpack.c.l.b16 %v1526
        %v5630 = vunpack.c.l.b16 %v1527
        %v5631 = vunpack.c.l.b16 %v1528
        %v5632 = vunpack.c.l.b16 %v1529
        %v5633 = vunpack.c.l.b16 %v1530
        %v5634 = vunpack.c.l.b16 %v1531
        %v5635 = vunpack.c.l.b16 %v1532
        %v5636 = vunpack.c.l.b16 %v1533
        %v5637 = vunpack.c.l.b16 %v1534
        %v5638 = vunpack.c.l.b16 %v1535
        %v5639 = vunpack.c.l.b16 %v1536
        %v5640 = vunpack.c.l.b16 %v1537
        %v5641 = vunpack.c.l.b16 %v1538
        %v5642 = vunpack.c.l.b16 %v1539
        %v5643 = vunpack.c.l.b16 %v1540
        %v5644 = vunpack.c.l.b16 %v1541
        %v5645 = vunpack.c.l.b16 %v1542
        %v5646 = vunpack.c.l.b16 %v1543
        %v5647 = vunpack.c.l.b16 %v1544
        %v5648 = vunpack.c.l.b16 %v1545
        %v5649 = vunpack.c.l.b16 %v1546
        %v5650 = vunpack.c.l.b16 %v1547
        %v5651 = vunpack.c.l.b16 %v1548
        %v5652 = vunpack.c.l.b16 %v1549
        %v5653 = vunpack.c.l.b16 %v1550
        %v5654 = vunpack.c.l.b16 %v1551
        %v5655 = vunpack.c.l.b16 %v1552
        %v5656 = vunpack.c.l.b16 %v1553
        %v5657 = vunpack.c.l.b16 %v1554
        %v5658 = vunpack.c.l.b16 %v1555
        %v5659 = vunpack.c.l.b16 %v1556
        %v5660 = vunpack.c.l.b16 %v1557
        %v5661 = vunpack.c.l.b16 %v1558
        %v5662 = vunpack.c.l.b16 %v1559
        %v5663 = vunpack.c.l.b16 %v1560
        %v5664 = vunpack.c.l.b16 %v1561
        %v5665 = vunpack.c.l.b16 %v1562
        %v5666 = vunpack.c.l.b16 %v1563
        %v5667 = vunpack.c.l.b16 %v1564
        %v5668 = vunpack.c.l.b16 %v1565
        %v5669 = vunpack.c.l.b16 %v1566
        %v5670 = vunpack.c.l.b16 %v1567
        %v5671 = vunpack.c.l.b16 %v1568
        %v5672 = vunpack.c.l.b16 %v1569
        %v5673 = vunpack.c.l.b16 %v1570
        %v5674 = vunpack.c.l.b16 %v1571
        %v5675 = vunpack.c.l.b16 %v1572
        %v5676 = vunpack.c.l.b16 %v1573
        %v5677 = vunpack.c.l.b16 %v1574
        %v5678 = vunpack.c.l.b16 %v1575
        %v5679 = vunpack.c.l.b16 %v1576
        %v5680 = vunpack.c.l.b16 %v1577
        %v5681 = vunpack.c.l.b16 %v1578
        %v5682 = vunpack.c.l.b16 %v1579
        %v5683 = vunpack.c.l.b16 %v1580
        %v5684 = vunpack.c.l.b16 %v1581
        %v5685 = vunpack.c.l.b16 %v1582
        %v5686 = vunpack.c.l.b16 %v1583
        %v5687 = vunpack.c.l.b16 %v1584
        %v5688 = vunpack.c.l.b16 %v1585
        %v5689 = vunpack.c.l.b16 %v1586
        %v5690 = vunpack.c.l.b16 %v1587
        %v5691 = vunpack.c.l.b16 %v1588
        %v5692 = vunpack.c.l.b16 %v1589
        %v5693 = vunpack.c.l.b16 %v1590
        %v5694 = vunpack.c.l.b16 %v1591
        %v5695 = vunpack.c.l.b16 %v1592
        %v5696 = vunpack.c.l.b16 %v1593
        %v5697 = vunpack.c.l.b16 %v1594
        %v5698 = vunpack.c.l.b16 %v1595
        %v5699 = vunpack.c.l.b16 %v1596
        %v5700 = vunpack.c.l.b16 %v1597
        %v5701 = vunpack.c.l.b16 %v1598
        %v5702 = vunpack.c.l.b16 %v1599
        %v5703 = vunpack.c.l.b16 %v1600
        %v5704 = vunpack.c.l.b16 %v1601
        %v5705 = vunpack.c.l.b16 %v1602
        %v5706 = vunpack.c.l.b16 %v1603
        %v5707 = vunpack.c.l.b16 %v1604
        %v5708 = vunpack.c.l.b16 %v1605
        %v5709 = vunpack.c.l.b16 %v1606
        %v5710 = vunpack.c.l.b16 %v1607
        %v5711 = vunpack.c.l.b16 %v1608
        %v5712 = vunpack.c.l.b16 %v1609
        %v5713 = vunpack.c.l.b16 %v1610
        %v5714 = vunpack.c.l.b16 %v1611
        %v5715 = vunpack.c.l.b16 %v1612
        %v5716 = vunpack.c.l.b16 %v1613
        %v5717 = vunpack.c.l.b16 %v1614
        %v5718 = vunpack.c.l.b16 %v1615
        %v5719 = vunpack.c.l.b16 %v1616
        %v5720 = vunpack.c.l.b16 %v1617
        %v5721 = vunpack.c.l.b16 %v1618
        %v5722 = vunpack.c.l.b16 %v1619
        %v5723 = vunpack.c.l.b16 %v1620
        %v5724 = vunpack.c.l.b16 %v1621
        %v5725 = vunpack.c.l.b16 %v1622
        %v5726 = vunpack.c.l.b16 %v1623
        %v5727 = vunpack.c.l.b16 %v1624
        %v5728 = vunpack.c.l.b16 %v1625
        %v5729 = vunpack.c.l.b16 %v1626
        %v5730 = vunpack.c.l.b16 %v1627
        %v5731 = vunpack.c.l.b16 %v1628
        %v5732 = vunpack.c.l.b16 %v1629
        %v5733 = vunpack.c.l.b16 %v1630
        %v5734 = vunpack.c.l.b16 %v1631
        %v5735 = vunpack.c.l.b16 %v1632
        %v5736 = vunpack.c.l.b16 %v1633
        %v5737 = vunpack.c.l.b16 %v1634
        %v5738 = vunpack.c.l.b16 %v1635
        %v5739 = vunpack.c.l.b16 %v1636
        %v5740 = vunpack.c.l.b16 %v1637
        %v5741 = vunpack.c.l.b16 %v1638
        %v5742 = vunpack.c.l.b16 %v1639
        %v5743 = vunpack.c.l.b16 %v1640
        %v5744 = vunpack.c.l.b16 %v1641
        %v5745 = vunpack.c.l.b16 %v1642
        %v5746 = vunpack.c.l.b16 %v1643
        %v5747 = vunpack.c.l.b16 %v1644
        %v5748 = vunpack.c.l.b16 %v1645
        %v5749 = vunpack.c.l.b16 %v1646
        %v5750 = vunpack.c.l.b16 %v1647
        %v5751 = vunpack.c.l.b16 %v1648
        %v5752 = vunpack.c.l.b16 %v1649
        %v5753 = vunpack.c.l.b16 %v1650
        %v5754 = vunpack.c.l.b16 %v1651
        %v5755 = vunpack.c.l.b16 %v1652
        %v5756 = vunpack.c.l.b16 %v1653
        %v5757 = vunpack.c.l.b16 %v1654
        %v5758 = vunpack.c.l.b16 %v1655
        %v5759 = vunpack.c.l.b16 %v1656
        %v5760 = vunpack.c.l.b16 %v1657
        %v5761 = vunpack.c.l.b16 %v1658
        %v5762 = vunpack.c.l.b16 %v1659
        %v5763 = vunpack.c.l.b16 %v1660
        %v5764 = vunpack.c.l.b16 %v1661
        %v5765 = vunpack.c.l.b16 %v1662
        %v5766 = vunpack.c.l.b16 %v1663
        %v5767 = vunpack.c.l.b16 %v1664
        %v5768 = vunpack.c.l.b16 %v1665
        %v5769 = vunpack.c.l.b16 %v1666
        %v5770 = vunpack.c.l.b16 %v1667
        %v5771 = vunpack.c.l.b16 %v1668
        %v5772 = vunpack.c.l.b16 %v1669
        %v5773 = vunpack.c.l.b16 %v1670
        %v5774 = vunpack.c.l.b16 %v1671
        %v5775 = vunpack.c.l.b16 %v1672
        %v5776 = vunpack.c.l.b16 %v1673
        %v5777 = vunpack.c.l.b16 %v1674
        %v5778 = vunpack.c.l.b16 %v1675
        %v5779 = vunpack.c.l.b16 %v1676
        %v5780 = vunpack.c.l.b16 %v1677
        %v5781 = vunpack.c.l.b16 %v1678
        %v5782 = vunpack.c.l.b16 %v1679
        %v5783 = vunpack.c.l.b16 %v1680
        %v5784 = vunpack.c.l.b16 %v1681
        %v5785 = vunpack.c.l.b16 %v1682
        %v5786 = vunpack.c.l.b16 %v1683
        %v5787 = vunpack.c.l.b16 %v1684
        %v5788 = vunpack.c.l.b16 %v1685
        %v5789 = vunpack.c.l.b16 %v1686
        %v5790 = vunpack.c.l.b16 %v1687
        %v5791 = vunpack.c.l.b16 %v1688
        %v5792 = vunpack.c.l.b16 %v1689
        %v5793 = vunpack.c.l.b16 %v1690
        %v5794 = vunpack.c.l.b16 %v1691
        %v5795 = vunpack.c.l.b16 %v1692
        %v5796 = vunpack.c.l.b16 %v1693
        %v5797 = vunpack.c.l.b16 %v1694
        %v5798 = vunpack.c.l.b16 %v1695
        %v5799 = vunpack.c.l.b16 %v1696
        %v5800 = vunpack.c.l.b16 %v1697
        %v5801 = vunpack.c.l.b16 %v1698
        %v5802 = vunpack.c.l.b16 %v1699
        %v5803 = vunpack.c.l.b16 %v1700
        %v5804 = vunpack.c.l.b16 %v1701
        %v5805 = vunpack.c.l.b16 %v1702
        %v5806 = vunpack.c.l.b16 %v1703
        %v5807 = vunpack.c.l.b16 %v1704
        %v5808 = vunpack.c.l.b16 %v1705
        %v5809 = vunpack.c.l.b16 %v1706
        %v5810 = vunpack.c.l.b16 %v1707
        %v5811 = vunpack.c.l.b16 %v1708
        %v5812 = vunpack.c.l.b16 %v1709
        %v5813 = vunpack.c.l.b16 %v1710
        %v5814 = vunpack.c.l.b16 %v1711
        %v5815 = vunpack.c.l.b16 %v1712
        %v5816 = vunpack.c.l.b16 %v1713
        %v5817 = vunpack.c.l.b16 %v1714
        %v5818 = vunpack.c.l.b16 %v1715
        %v5819 = vunpack.c.l.b16 %v1716
        %v5820 = vunpack.c.l.b16 %v1717
        %v5821 = vunpack.c.l.b16 %v1718
        %v5822 = vunpack.c.l.b16 %v1719
        %v5823 = vunpack.c.l.b16 %v1720
        %v5824 = vunpack.c.l.b16 %v1721
        %v5825 = vunpack.c.l.b16 %v1722
        %v5826 = vunpack.c.l.b16 %v1723
        %v5827 = vunpack.c.l.b16 %v1724
        %v5828 = vunpack.c.l.b16 %v1725
        %v5829 = vunpack.c.l.b16 %v1726
        %v5830 = vunpack.c.l.b16 %v1727
        %v5831 = vunpack.c.l.b16 %v1728
        %v5832 = vunpack.c.l.b16 %v1729
        %v5833 = vunpack.c.l.b16 %v1730
        %v5834 = vunpack.c.l.b16 %v1731
        %v5835 = vunpack.c.l.b16 %v1732
        %v5836 = vunpack.c.l.b16 %v1733
        %v5837 = vunpack.c.l.b16 %v1734
        %v5838 = vunpack.c.l.b16 %v1735
        %v5839 = vunpack.c.l.b16 %v1736
        %v5840 = vunpack.c.l.b16 %v1737
        %v5841 = vunpack.c.l.b16 %v1738
        %v5842 = vunpack.c.l.b16 %v1739
        %v5843 = vunpack.c.l.b16 %v1740
        %v5844 = vunpack.c.l.b16 %v1741
        %v5845 = vunpack.c.l.b16 %v1742
        %v5846 = vunpack.c.l.b16 %v1743
        %v5847 = vunpack.c.l.b16 %v1744
        %v5848 = vunpack.c.l.b16 %v1745
        %v5849 = vunpack.c.l.b16 %v1746
        %v5850 = vunpack.c.l.b16 %v1747
        %v5851 = vunpack.c.l.b16 %v1748
        %v5852 = vunpack.c.l.b16 %v1749
        %v5853 = vunpack.c.l.b16 %v1750
        %v5854 = vunpack.c.l.b16 %v1751
        %v5855 = vunpack.c.l.b16 %v1752
        %v5856 = vunpack.c.l.b16 %v1753
        %v5857 = vunpack.c.l.b16 %v1754
        %v5858 = vunpack.c.l.b16 %v1755
        %v5859 = vunpack.c.l.b16 %v1756
        %v5860 = vunpack.c.l.b16 %v1757
        %v5861 = vunpack.c.l.b16 %v1758
        %v5862 = vunpack.c.l.b16 %v1759
        %v5863 = vunpack.c.l.b16 %v1760
        %v5864 = vunpack.c.l.b16 %v1761
        %v5865 = vunpack.c.l.b16 %v1762
        %v5866 = vunpack.c.l.b16 %v1763
        %v5867 = vunpack.c.l.b16 %v1764
        %v5868 = vunpack.c.l.b16 %v1765
        %v5869 = vunpack.c.l.b16 %v1766
        %v5870 = vunpack.c.l.b16 %v1767
        %v5871 = vunpack.c.l.b16 %v1768
        %v5872 = vunpack.c.l.b16 %v1769
        %v5873 = vunpack.c.l.b16 %v1770
        %v5874 = vunpack.c.l.b16 %v1771
        %v5875 = vunpack.c.l.b16 %v1772
        %v5876 = vunpack.c.l.b16 %v1773
        %v5877 = vunpack.c.l.b16 %v1774
        %v5878 = vunpack.c.l.b16 %v1775
        %v5879 = vunpack.c.l.b16 %v1776
        %v5880 = vunpack.c.l.b16 %v1777
        %v5881 = vunpack.c.l.b16 %v1778
        %v5882 = vunpack.c.l.b16 %v1779
        %v5883 = vunpack.c.l.b16 %v1780
        %v5884 = vunpack.c.l.b16 %v1781
        %v5885 = vunpack.c.l.b16 %v1782
        %v5886 = vunpack.c.l.b16 %v1783
        %v5887 = vunpack.c.l.b16 %v1784
        %v5888 = vunpack.c.l.b16 %v1785
        %v5889 = vunpack.c.l.b16 %v1786
        %v5890 = vunpack.c.l.b16 %v1787
        %v5891 = vunpack.c.l.b16 %v1788
        %v5892 = vunpack.c.l.b16 %v1789
        %v5893 = vunpack.c.l.b16 %v1790
        %v5894 = vunpack.c.l.b16 %v1791
        %v5895 = vunpack.c.l.b16 %v1792
        %v5896 = vunpack.c.l.b16 %v1793
        %v5897 = vunpack.c.l.b16 %v1794
        %v5898 = vunpack.c.l.b16 %v1795
        %v5899 = vunpack.c.l.b16 %v1796
        %v5900 = vunpack.c.l.b16 %v1797
        %v5901 = vunpack.c.l.b16 %v1798
        %v5902 = vunpack.c.l.b16 %v1799
        %v5903 = vunpack.c.l.b16 %v1800
        %v5904 = vunpack.c.l.b16 %v1801
        %v5905 = vunpack.c.l.b16 %v1802
        %v5906 = vunpack.c.l.b16 %v1803
        %v5907 = vunpack.c.l.b16 %v1804
        %v5908 = vunpack.c.l.b16 %v1805
        %v5909 = vunpack.c.l.b16 %v1806
        %v5910 = vunpack.c.l.b16 %v1807
        %v5911 = vunpack.c.l.b16 %v1808
        %v5912 = vunpack.c.l.b16 %v1809
        %v5913 = vunpack.c.l.b16 %v1810
        %v5914 = vunpack.c.l.b16 %v1811
        %v5915 = vunpack.c.l.b16 %v1812
        %v5916 = vunpack.c.l.b16 %v1813
        %v5917 = vunpack.c.l.b16 %v1814
        %v5918 = vunpack.c.l.b16 %v1815
        %v5919 = vunpack.c.l.b16 %v1816
        %v5920 = vunpack.c.l.b16 %v1817
        %v5921 = vunpack.c.l.b16 %v1818
        %v5922 = vunpack.c.l.b16 %v1819
        %v5923 = vunpack.c.l.b16 %v1820
        %v5924 = vunpack.c.l.b16 %v1821
        %v5925 = vunpack.c.l.b16 %v1822
        %v5926 = vunpack.c.l.b16 %v1823
        %v5927 = vunpack.c.l.b16 %v1824
        %v5928 = vunpack.c.l.b16 %v1825
        %v5929 = vunpack.c.l.b16 %v1826
        %v5930 = vunpack.c.l.b16 %v1827
        %v5931 = vunpack.c.l.b16 %v1828
        %v5932 = vunpack.c.l.b16 %v1829
        %v5933 = vunpack.c.l.b16 %v1830
        %v5934 = vunpack.c.l.b16 %v1831
        %v5935 = vunpack.c.l.b16 %v1832
        %v5936 = vunpack.c.l.b16 %v1833
        %v5937 = vunpack.c.l.b16 %v1834
        %v5938 = vunpack.c.l.b16 %v1835
        %v5939 = vunpack.c.l.b16 %v1836
        %v5940 = vunpack.c.l.b16 %v1837
        %v5941 = vunpack.c.l.b16 %v1838
        %v5942 = vunpack.c.l.b16 %v1839
        %v5943 = vunpack.c.l.b16 %v1840
        %v5944 = vunpack.c.l.b16 %v1841
        %v5945 = vunpack.c.l.b16 %v1842
        %v5946 = vunpack.c.l.b16 %v1843
        %v5947 = vunpack.c.l.b16 %v1844
        %v5948 = vunpack.c.l.b16 %v1845
        %v5949 = vunpack.c.l.b16 %v1846
        %v5950 = vunpack.c.l.b16 %v1847
        %v5951 = vunpack.c.l.b16 %v1848
        %v5952 = vunpack.c.l.b16 %v1849
        %v5953 = vunpack.c.l.b16 %v1850
        %v5954 = vunpack.c.l.b16 %v1851
        %v5955 = vunpack.c.l.b16 %v1852
        %v5956 = vunpack.c.l.b16 %v1853
        %v5957 = vunpack.c.l.b16 %v1854
        %v5958 = vunpack.c.l.b16 %v1855
        %v5959 = vunpack.c.l.b16 %v1856
        %v5960 = vunpack.c.l.b16 %v1857
        %v5961 = vunpack.c.l.b16 %v1858
        %v5962 = vunpack.c.l.b16 %v1859
        %v5963 = vunpack.c.l.b16 %v1860
        %v5964 = vunpack.c.l.b16 %v1861
        %v5965 = vunpack.c.l.b16 %v1862
        %v5966 = vunpack.c.l.b16 %v1863
        %v5967 = vunpack.c.l.b16 %v1864
        %v5968 = vunpack.c.l.b16 %v1865
        %v5969 = vunpack.c.l.b16 %v1866
        %v5970 = vunpack.c.l.b16 %v1867
        %v5971 = vunpack.c.l.b16 %v1868
        %v5972 = vunpack.c.l.b16 %v1869
        %v5973 = vunpack.c.l.b16 %v1870
        %v5974 = vunpack.c.l.b16 %v1871
        %v5975 = vunpack.c.l.b16 %v1872
        %v5976 = vunpack.c.l.b16 %v1873
        %v5977 = vunpack.c.l.b16 %v1874
        %v5978 = vunpack.c.l.b16 %v1875
        %v5979 = vunpack.c.l.b16 %v1876
        %v5980 = vunpack.c.l.b16 %v1877
        %v5981 = vunpack.c.l.b16 %v1878
        %v5982 = vunpack.c.l.b16 %v1879
        %v5983 = vunpack.c.l.b16 %v1880
        %v5984 = vunpack.c.l.b16 %v1881
        %v5985 = vunpack.c.l.b16 %v1882
        %v5986 = vunpack.c.l.b16 %v1883
        %v5987 = vunpack.c.l.b16 %v1884
        %v5988 = vunpack.c.l.b16 %v1885
        %v5989 = vunpack.c.l.b16 %v1886
        %v5990 = vunpack.c.l.b16 %v1887
        %v5991 = vunpack.c.l.b16 %v1888
        %v5992 = vunpack.c.l.b16 %v1889
        %v5993 = vunpack.c.l.b16 %v1890
        %v5994 = vunpack.c.l.b16 %v1891
        %v5995 = vunpack.c.l.b16 %v1892
        %v5996 = vunpack.c.l.b16 %v1893
        %v5997 = vunpack.c.l.b16 %v1894
        %v5998 = vunpack.c.l.b16 %v1895
        %v5999 = vunpack.c.l.b16 %v1896
        %v6000 = vunpack.c.l.b16 %v1897
        %v6001 = vunpack.c.l.b16 %v1898
        %v6002 = vunpack.c.l.b16 %v1899
        %v6003 = vunpack.c.l.b16 %v1900
        %v6004 = vunpack.c.l.b16 %v1901
        %v6005 = vunpack.c.l.b16 %v1902
        %v6006 = vunpack.c.l.b16 %v1903
        %v6007 = vunpack.c.l.b16 %v1904
        %v6008 = vunpack.c.l.b16 %v1905
        %v6009 = vunpack.c.l.b16 %v1906
        %v6010 = vunpack.c.l.b16 %v1907
        %v6011 = vunpack.c.l.b16 %v1908
        %v6012 = vunpack.c.l.b16 %v1909
        %v6013 = vunpack.c.l.b16 %v1910
        %v6014 = vunpack.c.l.b16 %v1911
        %v6015 = vunpack.c.l.b16 %v1912
        %v6016 = vunpack.c.l.b16 %v1913
        %v6017 = vunpack.c.l.b16 %v1914
        %v6018 = vunpack.c.l.b16 %v1915
        %v6019 = vunpack.c.l.b16 %v1916
        %v6020 = vunpack.c.l.b16 %v1917
        %v6021 = vunpack.c.l.b16 %v1918
        %v6022 = vunpack.c.l.b16 %v1919
        %v6023 = vunpack.c.l.b16 %v1920
        %v6024 = vunpack.c.l.b16 %v1921
        %v6025 = vunpack.c.l.b16 %v1922
        %v6026 = vunpack.c.l.b16 %v1923
        %v6027 = vunpack.c.l.b16 %v1924
        %v6028 = vunpack.c.l.b16 %v1925
        %v6029 = vunpack.c.l.b16 %v1926
        %v6030 = vunpack.c.l.b16 %v1927
        %v6031 = vunpack.c.l.b16 %v1928
        %v6032 = vunpack.c.l.b16 %v1929
        %v6033 = vunpack.c.l.b16 %v1930
        %v6034 = vunpack.c.l.b16 %v1931
        %v6035 = vunpack.c.l.b16 %v1932
        %v6036 = vunpack.c.l.b16 %v1933
        %v6037 = vunpack.c.l.b16 %v1934
        %v6038 = vunpack.c.l.b16 %v1935
        %v6039 = vunpack.c.l.b16 %v1936
        %v6040 = vunpack.c.l.b16 %v1937
        %v6041 = vunpack.c.l.b16 %v1938
        %v6042 = vunpack.c.l.b16 %v1939
        %v6043 = vunpack.c.l.b16 %v1940
        %v6044 = vunpack.c.l.b16 %v1941
        %v6045 = vunpack.c.l.b16 %v1942
        %v6046 = vunpack.c.l.b16 %v1943
        %v6047 = vunpack.c.l.b16 %v1944
        %v6048 = vunpack.c.l.b16 %v1945
        %v6049 = vunpack.c.l.b16 %v1946
        %v6050 = vunpack.c.l.b16 %v1947
        %v6051 = vunpack.c.l.b16 %v1948
        %v6052 = vunpack.c.l.b16 %v1949
        %v6053 = vunpack.c.l.b16 %v1950
        %v6054 = vunpack.c.l.b16 %v1951
        %v6055 = vunpack.c.l.b16 %v1952
        %v6056 = vunpack.c.l.b16 %v1953
        %v6057 = vunpack.c.l.b16 %v1954
        %v6058 = vunpack.c.l.b16 %v1955
        %v6059 = vunpack.c.l.b16 %v1956
        %v6060 = vunpack.c.l.b16 %v1957
        %v6061 = vunpack.c.l.b16 %v1958
        %v6062 = vunpack.c.l.b16 %v1959
        %v6063 = vunpack.c.l.b16 %v1960
        %v6064 = vunpack.c.l.b16 %v1961
        %v6065 = vunpack.c.l.b16 %v1962
        %v6066 = vunpack.c.l.b16 %v1963
        %v6067 = vunpack.c.l.b16 %v1964
        %v6068 = vunpack.c.l.b16 %v1965
        %v6069 = vunpack.c.l.b16 %v1966
        %v6070 = vunpack.c.l.b16 %v1967
        %v6071 = vunpack.c.l.b16 %v1968
        %v6072 = vunpack.c.l.b16 %v1969
        %v6073 = vunpack.c.l.b16 %v1970
        %v6074 = vunpack.c.l.b16 %v1971
        %v6075 = vunpack.c.l.b16 %v1972
        %v6076 = vunpack.c.l.b16 %v1973
        %v6077 = vunpack.c.l.b16 %v1974
        %v6078 = vunpack.c.l.b16 %v1975
        %v6079 = vunpack.c.l.b16 %v1976
        %v6080 = vunpack.c.l.b16 %v1977
        %v6081 = vunpack.c.l.b16 %v1978
        %v6082 = vunpack.c.l.b16 %v1979
        %v6083 = vunpack.c.l.b16 %v1980
        %v6084 = vunpack.c.l.b16 %v1981
        %v6085 = vunpack.c.l.b16 %v1982
        %v6086 = vunpack.c.l.b16 %v1983
        %v6087 = vunpack.c.l.b16 %v1984
        %v6088 = vunpack.c.l.b16 %v1985
        %v6089 = vunpack.c.l.b16 %v1986
        %v6090 = vunpack.c.l.b16 %v1987
        %v6091 = vunpack.c.l.b16 %v1988
        %v6092 = vunpack.c.l.b16 %v1989
        %v6093 = vunpack.c.l.b16 %v1990
        %v6094 = vunpack.c.l.b16 %v1991
        %v6095 = vunpack.c.l.b16 %v1992
        %v6096 = vunpack.c.l.b16 %v1993
        %v6097 = vunpack.c.l.b16 %v1994
        %v6098 = vunpack.c.l.b16 %v1995
        %v6099 = vunpack.c.l.b16 %v1996
        %v6100 = vunpack.c.l.b16 %v1997
        %v6101 = vunpack.c.l.b16 %v1998
        %v6102 = vunpack.c.l.b16 %v1999
        %v6103 = vunpack.c.l.b16 %v2000
        %v6104 = vunpack.c.l.b16 %v2001
        %v6105 = vunpack.c.l.b16 %v2002
        %v6106 = vunpack.c.l.b16 %v2003
        %v6107 = vunpack.c.l.b16 %v2004
        %v6108 = vunpack.c.l.b16 %v2005
        %v6109 = vunpack.c.l.b16 %v2006
        %v6110 = vunpack.c.l.b16 %v2007
        %v6111 = vunpack.c.l.b16 %v2008
        %v6112 = vunpack.c.l.b16 %v2009
        %v6113 = vunpack.c.l.b16 %v2010
        %v6114 = vunpack.c.l.b16 %v2011
        %v6115 = vunpack.c.l.b16 %v2012
        %v6116 = vunpack.c.l.b16 %v2013
        %v6117 = vunpack.c.l.b16 %v2014
        %v6118 = vunpack.c.l.b16 %v2015
        %v6119 = vunpack.c.l.b16 %v2016
        %v6120 = vunpack.c.l.b16 %v2017
        %v6121 = vunpack.c.l.b16 %v2018
        %v6122 = vunpack.c.l.b16 %v2019
        %v6123 = vunpack.c.l.b16 %v2020
        %v6124 = vunpack.c.l.b16 %v2021
        %v6125 = vunpack.c.l.b16 %v2022
        %v6126 = vunpack.c.l.b16 %v2023
        %v6127 = vunpack.c.l.b16 %v2024
        %v6128 = vunpack.c.l.b16 %v2025
        %v6129 = vunpack.c.l.b16 %v2026
        %v6130 = vunpack.c.l.b16 %v2027
        %v6131 = vunpack.c.l.b16 %v2028
        %v6132 = vunpack.c.l.b16 %v2029
        %v6133 = vunpack.c.l.b16 %v2030
        %v6134 = vunpack.c.l.b16 %v2031
        %v6135 = vunpack.c.l.b16 %v2032
        %v6136 = vunpack.c.l.b16 %v2033
        %v6137 = vunpack.c.l.b16 %v2034
        %v6138 = vunpack.c.l.b16 %v2035
        %v6139 = vunpack.c.l.b16 %v2036
        %v6140 = vunpack.c.l.b16 %v2037
        %v6141 = vunpack.c.l.b16 %v2038
        %v6142 = vunpack.c.l.b16 %v2039
        %v6143 = vunpack.c.l.b16 %v2040
        %v6144 = vunpack.c.l.b16 %v2041
        %v6145 = vunpack.c.l.b16 %v2042
        %v6146 = vunpack.c.l.b16 %v2043
        %v6147 = vunpack.c.l.b16 %v2044
        %v6148 = vunpack.c.l.b16 %v2045
        %v6149 = vunpack.c.l.b16 %v2046
        %v6150 = vunpack.c.l.b16 %v2047
        %v6151 = vunpack.c.l.b16 %v2048
        %v6152 = vunpack.c.l.b16 %v2049
        %v6153 = vunpack.c.l.b16 %v2050
        %v6154 = vunpack.c.l.b16 %v2051
        %v6155 = vunpack.c.l.b16 %v2052
        %v6156 = vunpack.c.l.b16 %v2053
        %v6157 = vunpack.c.l.b16 %v2054
        %v6158 = vunpack.c.l.b16 %v2055
        %v6159 = vunpack.c.l.b16 %v2056
        %v6160 = vunpack.c.l.b16 %v2057
        %v6161 = vunpack.c.l.b16 %v2058
        %v6162 = vunpack.c.l.b16 %v2059
        %v6163 = vunpack.c.l.b16 %v2060
        %v6164 = vunpack.c.l.b16 %v2061
        %v6165 = vunpack.c.l.b16 %v2062
        %v6166 = vunpack.c.l.b16 %v2063
        %v6167 = vunpack.c.l.b16 %v2064
        %v6168 = vunpack.c.l.b16 %v2065
        %v6169 = vunpack.c.l.b16 %v2066
        %v6170 = vunpack.c.l.b16 %v2067
        %v6171 = vunpack.c.l.b16 %v2068
        %v6172 = vunpack.c.l.b16 %v2069
        %v6173 = vunpack.c.l.b16 %v2070
        %v6174 = vunpack.c.l.b16 %v2071
        %v6175 = vunpack.c.l.b16 %v2072
        %v6176 = vunpack.c.l.b16 %v2073
        %v6177 = vunpack.c.l.b16 %v2074
        %v6178 = vunpack.c.l.b16 %v2075
        %v6179 = vunpack.c.l.b16 %v2076
        %v6180 = vunpack.c.l.b16 %v2077
        %v6181 = vunpack.c.l.b16 %v2078
        %v6182 = vunpack.c.l.b16 %v2079
        %v6183 = vunpack.c.l.b16 %v2080
        %v6184 = vunpack.c.l.b16 %v2081
        %v6185 = vunpack.c.l.b16 %v2082
        %v6186 = vunpack.c.l.b16 %v2083
        %v6187 = vunpack.c.l.b16 %v2084
        %v6188 = vunpack.c.l.b16 %v2085
        %v6189 = vunpack.c.l.b16 %v2086
        %v6190 = vunpack.c.l.b16 %v2087
        %v6191 = vunpack.c.l.b16 %v2088
        %v6192 = vunpack.c.l.b16 %v2089
        %v6193 = vunpack.c.l.b16 %v2090
        %v6194 = vunpack.c.l.b16 %v2091
        %v6195 = vunpack.c.l.b16 %v2092
        %v6196 = vunpack.c.l.b16 %v2093
        %v6197 = vunpack.c.l.b16 %v2094
        %v6198 = vunpack.c.l.b16 %v2095
        %v6199 = vunpack.c.l.b16 %v2096
        %v6200 = vunpack.c.l.b16 %v2097
        %v6201 = vunpack.c.l.b16 %v2098
        %v6202 = vunpack.c.l.b16 %v2099
        %v6203 = vunpack.c.l.b16 %v2100
        %v6204 = vunpack.c.l.b16 %v2101
        %v6205 = vunpack.c.l.b16 %v2102
        %v6206 = vunpack.c.l.b16 %v2103
        %v6207 = vunpack.c.l.b16 %v2104
        %v6208 = vunpack.c.l.b16 %v2105
        %v6209 = vunpack.c.l.b16 %v2106
        %v6210 = vunpack.c.l.b16 %v2107
        %v6211 = vunpack.c.l.b16 %v2108
        %v6212 = vunpack.c.l.b16 %v2109
        %v6213 = vunpack.c.l.b16 %v2110
        %v6214 = vunpack.c.l.b16 %v2111
        %v6215 = vunpack.c.l.b16 %v2112
        %v6216 = vunpack.c.l.b16 %v2113
        %v6217 = vunpack.c.l.b16 %v2114
        %v6218 = vunpack.c.l.b16 %v2115
        %v6219 = vunpack.c.l.b16 %v2116
        %v6220 = vunpack.c.l.b16 %v2117
        %v6221 = vunpack.c.l.b16 %v2118
        %v6222 = vunpack.c.l.b16 %v2119
        %v6223 = vunpack.c.l.b16 %v2120
        %v6224 = vunpack.c.l.b16 %v2121
        %v6225 = vunpack.c.l.b16 %v2122
        %v6226 = vunpack.c.l.b16 %v2123
        %v6227 = vunpack.c.l.b16 %v2124
        %v6228 = vunpack.c.l.b16 %v2125
        %v6229 = vunpack.c.l.b16 %v2126
        %v6230 = vunpack.c.l.b16 %v2127
        %v6231 = vunpack.c.l.b16 %v2128
        %v6232 = vunpack.c.l.b16 %v2129
        %v6233 = vunpack.c.l.b16 %v2130
        %v6234 = vunpack.c.l.b16 %v2131
        %v6235 = vunpack.c.l.b16 %v2132
        %v6236 = vunpack.c.l.b16 %v2133
        %v6237 = vunpack.c.l.b16 %v2134
        %v6238 = vunpack.c.l.b16 %v2135
        %v6239 = vunpack.c.l.b16 %v2136
        %v6240 = vunpack.c.l.b16 %v2137
        %v6241 = vunpack.c.l.b16 %v2138
        %v6242 = vunpack.c.l.b16 %v2139
        %v6243 = vunpack.c.l.b16 %v2140
        %v6244 = vunpack.c.l.b16 %v2141
        %v6245 = vunpack.c.l.b16 %v2142
        %v6246 = vunpack.c.l.b16 %v2143
        %v6247 = vunpack.c.l.b16 %v2144
        %v6248 = vunpack.c.l.b16 %v2145
        %v6249 = vunpack.c.l.b16 %v2146
        %v6250 = vunpack.c.l.b16 %v2147
        %v6251 = vunpack.c.l.b16 %v2148
        %v6252 = vunpack.c.l.b16 %v2149
        %v6253 = vunpack.c.l.b16 %v2150
        %v6254 = vunpack.c.l.b16 %v2151
        %v6255 = vunpack.c.l.b16 %v2152
        %v6256 = vunpack.c.l.b16 %v2153
        %v6257 = vunpack.c.l.b16 %v2154
        %v6258 = vunpack.c.l.b16 %v2155
        %v6259 = vunpack.c.l.b16 %v2156
        %v6260 = vunpack.c.l.b16 %v2157
        %v6261 = vunpack.c.l.b16 %v2158
        %v6262 = vunpack.c.l.b16 %v2159
        %v6263 = vunpack.c.l.b16 %v2160
        %v6264 = vunpack.c.l.b16 %v2161
        %v6265 = vunpack.c.l.b16 %v2162
        %v6266 = vunpack.c.l.b16 %v2163
        %v6267 = vunpack.c.l.b16 %v2164
        %v6268 = vunpack.c.l.b16 %v2165
        %v6269 = vunpack.c.l.b16 %v2166
        %v6270 = vunpack.c.l.b16 %v2167
        %v6271 = vunpack.c.l.b16 %v2168
        %v6272 = vunpack.c.l.b16 %v2169
        %v6273 = vunpack.c.l.b16 %v2170
        %v6274 = vunpack.c.l.b16 %v2171
        %v6275 = vunpack.c.l.b16 %v2172
        %v6276 = vunpack.c.l.b16 %v2173
        %v6277 = vunpack.c.l.b16 %v2174
        %v6278 = vunpack.c.l.b16 %v2175
        %v6279 = vunpack.c.l.b16 %v2176
        %v6280 = vunpack.c.l.b16 %v2177
        %v6281 = vunpack.c.l.b16 %v2178
        %v6282 = vunpack.c.l.b16 %v2179
        %v6283 = vunpack.c.l.b16 %v2180
        %v6284 = vunpack.c.l.b16 %v2181
        %v6285 = vunpack.c.l.b16 %v2182
        %v6286 = vunpack.c.l.b16 %v2183
        %v6287 = vunpack.c.l.b16 %v2184
        %v6288 = vunpack.c.l.b16 %v2185
        %v6289 = vunpack.c.l.b16 %v2186
        %v6290 = vunpack.c.l.b16 %v2187
        %v6291 = vunpack.c.l.b16 %v2188
        %v6292 = vunpack.c.l.b16 %v2189
        %v6293 = vunpack.c.l.b16 %v2190
        %v6294 = vunpack.c.l.b16 %v2191
        %v6295 = vunpack.c.l.b16 %v2192
        %v6296 = vunpack.c.l.b16 %v2193
        %v6297 = vunpack.c.l.b16 %v2194
        %v6298 = vunpack.c.l.b16 %v2195
        %v6299 = vunpack.c.l.b16 %v2196
        %v6300 = vunpack.c.l.b16 %v2197
        %v6301 = vunpack.c.l.b16 %v2198
        %v6302 = vunpack.c.l.b16 %v2199
        %v6303 = vunpack.c.l.b16 %v2200
        %v6304 = vunpack.c.l.b16 %v2201
        %v6305 = vunpack.c.l.b16 %v2202
        %v6306 = vunpack.c.l.b16 %v2203
        %v6307 = vunpack.c.l.b16 %v2204
        %v6308 = vunpack.c.l.b16 %v2205
        %v6309 = vunpack.c.l.b16 %v2206
        %v6310 = vunpack.c.l.b16 %v2207
        %v6311 = vunpack.c.l.b16 %v2208
        %v6312 = vunpack.c.l.b16 %v2209
        %v6313 = vunpack.c.l.b16 %v2210
        %v6314 = vunpack.c.l.b16 %v2211
        %v6315 = vunpack.c.l.b16 %v2212
        %v6316 = vunpack.c.l.b16 %v2213
        %v6317 = vunpack.c.l.b16 %v2214
        %v6318 = vunpack.c.l.b16 %v2215
        %v6319 = vunpack.c.l.b16 %v2216
        %v6320 = vunpack.c.l.b16 %v2217
        %v6321 = vunpack.c.l.b16 %v2218
        %v6322 = vunpack.c.l.b16 %v2219
        %v6323 = vunpack.c.l.b16 %v2220
        %v6324 = vunpack.c.l.b16 %v2221
        %v6325 = vunpack.c.l.b16 %v2222
        %v6326 = vunpack.c.l.b16 %v2223
        %v6327 = vunpack.c.l.b16 %v2224
        %v6328 = vunpack.c.l.b16 %v2225
        %v6329 = vunpack.c.l.b16 %v2226
        %v6330 = vunpack.c.l.b16 %v2227
        %v6331 = vunpack.c.l.b16 %v2228
        %v6332 = vunpack.c.l.b16 %v2229
        %v6333 = vunpack.c.l.b16 %v2230
        %v6334 = vunpack.c.l.b16 %v2231
        %v6335 = vunpack.c.l.b16 %v2232
        %v6336 = vunpack.c.l.b16 %v2233
        %v6337 = vunpack.c.l.b16 %v2234
        %v6338 = vunpack.c.l.b16 %v2235
        %v6339 = vunpack.c.l.b16 %v2236
        %v6340 = vunpack.c.l.b16 %v2237
        %v6341 = vunpack.c.l.b16 %v2238
        %v6342 = vunpack.c.l.b16 %v2239
        %v6343 = vunpack.c.l.b16 %v2240
        %v6344 = vunpack.c.l.b16 %v2241
        %v6345 = vunpack.c.l.b16 %v2242
        %v6346 = vunpack.c.l.b16 %v2243
        %v6347 = vunpack.c.l.b16 %v2244
        %v6348 = vunpack.c.l.b16 %v2245
        %v6349 = vunpack.c.l.b16 %v2246
        %v6350 = vunpack.c.l.b16 %v2247
        %v6351 = vunpack.c.l.b16 %v2248
        %v6352 = vunpack.c.l.b16 %v2249
        %v6353 = vunpack.c.l.b16 %v2250
        %v6354 = vunpack.c.l.b16 %v2251
        %v6355 = vunpack.c.l.b16 %v2252
        %v6356 = vunpack.c.l.b16 %v2253
        %v6357 = vunpack.c.l.b16 %v2254
        %v6358 = vunpack.c.l.b16 %v2255
        %v6359 = vunpack.c.l.b16 %v2256
        %v6360 = vunpack.c.l.b16 %v2257
        %v6361 = vunpack.c.l.b16 %v2258
        %v6362 = vunpack.c.l.b16 %v2259
        %v6363 = vunpack.c.l.b16 %v2260
        %v6364 = vunpack.c.l.b16 %v2261
        %v6365 = vunpack.c.l.b16 %v2262
        %v6366 = vunpack.c.l.b16 %v2263
        %v6367 = vunpack.c.l.b16 %v2264
        %v6368 = vunpack.c.l.b16 %v2265
        %v6369 = vunpack.c.l.b16 %v2266
        %v6370 = vunpack.c.l.b16 %v2267
        %v6371 = vunpack.c.l.b16 %v2268
        %v6372 = vunpack.c.l.b16 %v2269
        %v6373 = vunpack.c.l.b16 %v2270
        %v6374 = vunpack.c.l.b16 %v2271
        %v6375 = vunpack.c.l.b16 %v2272
        %v6376 = vunpack.c.l.b16 %v2273
        %v6377 = vunpack.c.l.b16 %v2274
        %v6378 = vunpack.c.l.b16 %v2275
        %v6379 = vunpack.c.l.b16 %v2276
        %v6380 = vunpack.c.l.b16 %v2277
        %v6381 = vunpack.c.l.b16 %v2278
        %v6382 = vunpack.c.l.b16 %v2279
        %v6383 = vunpack.c.l.b16 %v2280
        %v6384 = vunpack.c.l.b16 %v2281
        %v6385 = vunpack.c.l.b16 %v2282
        %v6386 = vunpack.c.l.b16 %v2283
        %v6387 = vunpack.c.l.b16 %v2284
        %v6388 = vunpack.c.l.b16 %v2285
        %v6389 = vunpack.c.l.b16 %v2286
        %v6390 = vunpack.c.l.b16 %v2287
        %v6391 = vunpack.c.l.b16 %v2288
        %v6392 = vunpack.c.l.b16 %v2289
        %v6393 = vunpack.c.l.b16 %v2290
        %v6394 = vunpack.c.l.b16 %v2291
        %v6395 = vunpack.c.l.b16 %v2292
        %v6396 = vunpack.c.l.b16 %v2293
        %v6397 = vunpack.c.l.b16 %v2294
        %v6398 = vunpack.c.l.b16 %v2295
        %v6399 = vunpack.c.l.b16 %v2296
        %v6400 = vunpack.c.l.b16 %v2297
        %v6401 = vunpack.c.l.b16 %v2298
        %v6402 = vunpack.c.l.b16 %v2299
        %v6403 = vunpack.c.l.b16 %v2300
        %v6404 = vunpack.c.l.b16 %v2301
        %v6405 = vunpack.c.l.b16 %v2302
        %v6406 = vunpack.c.l.b16 %v2303
        %v6407 = vunpack.c.l.b16 %v2304
        %v6408 = vunpack.c.l.b16 %v2305
        %v6409 = vunpack.c.l.b16 %v2306
        %v6410 = vunpack.c.l.b16 %v2307
        %v6411 = vunpack.c.l.b16 %v2308
        %v6412 = vunpack.c.l.b16 %v2309
        %v6413 = vunpack.c.l.b16 %v2310
        %v6414 = vunpack.c.l.b16 %v2311
        %v6415 = vunpack.c.l.b16 %v2312
        %v6416 = vunpack.c.l.b16 %v2313
        %v6417 = vunpack.c.l.b16 %v2314
        %v6418 = vunpack.c.l.b16 %v2315
        %v6419 = vunpack.c.l.b16 %v2316
        %v6420 = vunpack.c.l.b16 %v2317
        %v6421 = vunpack.c.l.b16 %v2318
        %v6422 = vunpack.c.l.b16 %v2319
        %v6423 = vunpack.c.l.b16 %v2320
        %v6424 = vunpack.c.l.b16 %v2321
        %v6425 = vunpack.c.l.b16 %v2322
        %v6426 = vunpack.c.l.b16 %v2323
        %v6427 = vunpack.c.l.b16 %v2324
        %v6428 = vunpack.c.l.b16 %v2325
        %v6429 = vunpack.c.l.b16 %v2326
        %v6430 = vunpack.c.l.b16 %v2327
        %v6431 = vunpack.c.l.b16 %v2328
        %v6432 = vunpack.c.l.b16 %v2329
        %v6433 = vunpack.c.l.b16 %v2330
        %v6434 = vunpack.c.l.b16 %v2331
        %v6435 = vunpack.c.l.b16 %v2332
        %v6436 = vunpack.c.l.b16 %v2333
        %v6437 = vunpack.c.l.b16 %v2334
        %v6438 = vunpack.c.l.b16 %v2335
        %v6439 = vunpack.c.l.b16 %v2336
        %v6440 = vunpack.c.l.b16 %v2337
        %v6441 = vunpack.c.l.b16 %v2338
        %v6442 = vunpack.c.l.b16 %v2339
        %v6443 = vunpack.c.l.b16 %v2340
        %v6444 = vunpack.c.l.b16 %v2341
        %v6445 = vunpack.c.l.b16 %v2342
        %v6446 = vunpack.c.l.b16 %v2343
        %v6447 = vunpack.c.l.b16 %v2344
        %v6448 = vunpack.c.l.b16 %v2345
        %v6449 = vunpack.c.l.b16 %v2346
        %v6450 = vunpack.c.l.b16 %v2347
        %v6451 = vunpack.c.l.b16 %v2348
        %v6452 = vunpack.c.l.b16 %v2349
        %v6453 = vunpack.c.l.b16 %v2350
        %v6454 = vunpack.c.l.b16 %v2351
        %v6455 = vunpack.c.l.b16 %v2352
        %v6456 = vunpack.c.l.b16 %v2353
        %v6457 = vunpack.c.l.b16 %v2354
        %v6458 = vunpack.c.l.b16 %v2355
        %v6459 = vunpack.c.l.b16 %v2356
        %v6460 = vunpack.c.l.b16 %v2357
        %v6461 = vunpack.c.l.b16 %v2358
        %v6462 = vunpack.c.l.b16 %v2359
        %v6463 = vunpack.c.l.b16 %v2360
        %v6464 = vunpack.c.l.b16 %v2361
        %v6465 = vunpack.c.l.b16 %v2362
        %v6466 = vunpack.c.l.b16 %v2363
        %v6467 = vunpack.c.l.b16 %v2364
        %v6468 = vunpack.c.l.b16 %v2365
        %v6469 = vunpack.c.l.b16 %v2366
        %v6470 = vunpack.c.l.b16 %v2367
        %v6471 = vunpack.c.l.b16 %v2368
        %v6472 = vunpack.c.l.b16 %v2369
        %v6473 = vunpack.c.l.b16 %v2370
        %v6474 = vunpack.c.l.b16 %v2371
        %v6475 = vunpack.c.l.b16 %v2372
        %v6476 = vunpack.c.l.b16 %v2373
        %v6477 = vunpack.c.l.b16 %v2374
        %v6478 = vunpack.c.l.b16 %v2375
        %v6479 = vunpack.c.l.b16 %v2376
        %v6480 = vunpack.c.l.b16 %v2377
        %v6481 = vunpack.c.l.b16 %v2378
        %v6482 = vunpack.c.l.b16 %v2379
        %v6483 = vunpack.c.l.b16 %v2380
        %v6484 = vunpack.c.l.b16 %v2381
        %v6485 = vunpack.c.l.b16 %v2382
        %v6486 = vunpack.c.l.b16 %v2383
        %v6487 = vunpack.c.l.b16 %v2384
        %v6488 = vunpack.c.l.b16 %v2385
        %v6489 = vunpack.c.l.b16 %v2386
        %v6490 = vunpack.c.l.b16 %v2387
        %v6491 = vunpack.c.l.b16 %v2388
        %v6492 = vunpack.c.l.b16 %v2389
        %v6493 = vunpack.c.l.b16 %v2390
        %v6494 = vunpack.c.l.b16 %v2391
        %v6495 = vunpack.c.l.b16 %v2392
        %v6496 = vunpack.c.l.b16 %v2393
        %v6497 = vunpack.c.l.b16 %v2394
        %v6498 = vunpack.c.l.b16 %v2395
        %v6499 = vunpack.c.l.b16 %v2396
        %v6500 = vunpack.c.l.b16 %v2397
        %v6501 = vunpack.c.l.b16 %v2398
        %v6502 = vunpack.c.l.b16 %v2399
        %v6503 = vunpack.c.l.b16 %v2400
        %v6504 = vunpack.c.l.b16 %v2401
        %v6505 = vunpack.c.l.b16 %v2402
        %v6506 = vunpack.c.l.b16 %v2403
        %v6507 = vunpack.c.l.b16 %v2404
        %v6508 = vunpack.c.l.b16 %v2405
        %v6509 = vunpack.c.l.b16 %v2406
        %v6510 = vunpack.c.l.b16 %v2407
        %v6511 = vunpack.c.l.b16 %v2408
        %v6512 = vunpack.c.l.b16 %v2409
        %v6513 = vunpack.c.l.b16 %v2410
        %v6514 = vunpack.c.l.b16 %v2411
        %v6515 = vunpack.c.l.b16 %v2412
        %v6516 = vunpack.c.l.b16 %v2413
        %v6517 = vunpack.c.l.b16 %v2414
        %v6518 = vunpack.c.l.b16 %v2415
        %v6519 = vunpack.c.l.b16 %v2416
        %v6520 = vunpack.c.l.b16 %v2417
        %v6521 = vunpack.c.l.b16 %v2418
        %v6522 = vunpack.c.l.b16 %v2419
        %v6523 = vunpack.c.l.b16 %v2420
        %v6524 = vunpack.c.l.b16 %v2421
        %v6525 = vunpack.c.l.b16 %v2422
        %v6526 = vunpack.c.l.b16 %v2423
        %v6527 = vunpack.c.l.b16 %v2424
        %v6528 = vunpack.c.l.b16 %v2425
        %v6529 = vunpack.c.l.b16 %v2426
        %v6530 = vunpack.c.l.b16 %v2427
        %v6531 = vunpack.c.l.b16 %v2428
        %v6532 = vunpack.c.l.b16 %v2429
        %v6533 = vunpack.c.l.b16 %v2430
        %v6534 = vunpack.c.l.b16 %v2431
        %v6535 = vunpack.c.l.b16 %v2432
        %v6536 = vunpack.c.l.b16 %v2433
        %v6537 = vunpack.c.l.b16 %v2434
        %v6538 = vunpack.c.l.b16 %v2435
        %v6539 = vunpack.c.l.b16 %v2436
        %v6540 = vunpack.c.l.b16 %v2437
        %v6541 = vunpack.c.l.b16 %v2438
        %v6542 = vunpack.c.l.b16 %v2439
        %v6543 = vunpack.c.l.b16 %v2440
        %v6544 = vunpack.c.l.b16 %v2441
        %v6545 = vunpack.c.l.b16 %v2442
        %v6546 = vunpack.c.l.b16 %v2443
        %v6547 = vunpack.c.l.b16 %v2444
        %v6548 = vunpack.c.l.b16 %v2445
        %v6549 = vunpack.c.l.b16 %v2446
        %v6550 = vunpack.c.l.b16 %v2447
        %v6551 = vunpack.c.l.b16 %v2448
        %v6552 = vunpack.c.l.b16 %v2449
        %v6553 = vunpack.c.l.b16 %v2450
        %v6554 = vunpack.c.l.b16 %v2451
        %v6555 = vunpack.c.l.b16 %v2452
        %v6556 = vunpack.c.l.b16 %v2453
        %v6557 = vunpack.c.l.b16 %v2454
        %v6558 = vunpack.c.l.b16 %v2455
        %v6559 = vunpack.c.l.b16 %v2456
        %v6560 = vunpack.c.l.b16 %v2457
        %v6561 = vunpack.c.l.b16 %v2458
        %v6562 = vunpack.c.l.b16 %v2459
        %v6563 = vunpack.c.l.b16 %v2460
        %v6564 = vunpack.c.l.b16 %v2461
        %v6565 = vunpack.c.l.b16 %v2462
        %v6566 = vunpack.c.l.b16 %v2463
        %v6567 = vunpack.c.l.b16 %v2464
        %v6568 = vunpack.c.l.b16 %v2465
        %v6569 = vunpack.c.l.b16 %v2466
        %v6570 = vunpack.c.l.b16 %v2467
        %v6571 = vunpack.c.l.b16 %v2468
        %v6572 = vunpack.c.l.b16 %v2469
        %v6573 = vunpack.c.l.b16 %v2470
        %v6574 = vunpack.c.l.b16 %v2471
        %v6575 = vunpack.c.l.b16 %v2472
        %v6576 = vunpack.c.l.b16 %v2473
        %v6577 = vpack.c.b16 %v4530, %v4529
        %v6578 = vpack.c.b16 %v4532, %v4531
        %v6579 = vpack.c.b16 %v4534, %v4533
        %v6580 = vpack.c.b16 %v4536, %v4535
        %v6581 = vpack.c.b16 %v4538, %v4537
        %v6582 = vpack.c.b16 %v4540, %v4539
        %v6583 = vpack.c.b16 %v4542, %v4541
        %v6584 = vpack.c.b16 %v4544, %v4543
        %v6585 = vpack.c.b16 %v4546, %v4545
        %v6586 = vpack.c.b16 %v4548, %v4547
        %v6587 = vpack.c.b16 %v4550, %v4549
        %v6588 = vpack.c.b16 %v4552, %v4551
        %v6589 = vpack.c.b16 %v4554, %v4553
        %v6590 = vpack.c.b16 %v4556, %v4555
        %v6591 = vpack.c.b16 %v4558, %v4557
        %v6592 = vpack.c.b16 %v4560, %v4559
        %v6593 = vpack.c.b16 %v4562, %v4561
        %v6594 = vpack.c.b16 %v4564, %v4563
        %v6595 = vpack.c.b16 %v4566, %v4565
        %v6596 = vpack.c.b16 %v4568, %v4567
        %v6597 = vpack.c.b16 %v4570, %v4569
        %v6598 = vpack.c.b16 %v4572, %v4571
        %v6599 = vpack.c.b16 %v4574, %v4573
        %v6600 = vpack.c.b16 %v4576, %v4575
        %v6601 = vpack.c.b16 %v4578, %v4577
        %v6602 = vpack.c.b16 %v4580, %v4579
        %v6603 = vpack.c.b16 %v4582, %v4581
        %v6604 = vpack.c.b16 %v4584, %v4583
        %v6605 = vpack.c.b16 %v4586, %v4585
        %v6606 = vpack.c.b16 %v4588, %v4587
        %v6607 = vpack.c.b16 %v4590, %v4589
        %v6608 = vpack.c.b16 %v4592, %v4591
        %v6609 = vpack.c.b16 %v4594, %v4593
        %v6610 = vpack.c.b16 %v4596, %v4595
        %v6611 = vpack.c.b16 %v4598, %v4597
        %v6612 = vpack.c.b16 %v4600, %v4599
        %v6613 = vpack.c.b16 %v4602, %v4601
        %v6614 = vpack.c.b16 %v4604, %v4603
        %v6615 = vpack.c.b16 %v4606, %v4605
        %v6616 = vpack.c.b16 %v4608, %v4607
        %v6617 = vpack.c.b16 %v4610, %v4609
        %v6618 = vpack.c.b16 %v4612, %v4611
        %v6619 = vpack.c.b16 %v4614, %v4613
        %v6620 = vpack.c.b16 %v4616, %v4615
        %v6621 = vpack.c.b16 %v4618, %v4617
        %v6622 = vpack.c.b16 %v4620, %v4619
        %v6623 = vpack.c.b16 %v4622, %v4621
        %v6624 = vpack.c.b16 %v4624, %v4623
        %v6625 = vpack.c.b16 %v4626, %v4625
        %v6626 = vpack.c.b16 %v4628, %v4627
        %v6627 = vpack.c.b16 %v4630, %v4629
        %v6628 = vpack.c.b16 %v4632, %v4631
        %v6629 = vpack.c.b16 %v4634, %v4633
        %v6630 = vpack.c.b16 %v4636, %v4635
        %v6631 = vpack.c.b16 %v4638, %v4637
        %v6632 = vpack.c.b16 %v4640, %v4639
        %v6633 = vpack.c.b16 %v4642, %v4641
        %v6634 = vpack.c.b16 %v4644, %v4643
        %v6635 = vpack.c.b16 %v4646, %v4645
        %v6636 = vpack.c.b16 %v4648, %v4647
        %v6637 = vpack.c.b16 %v4650, %v4649
        %v6638 = vpack.c.b16 %v4652, %v4651
        %v6639 = vpack.c.b16 %v4654, %v4653
        %v6640 = vpack.c.b16 %v4656, %v4655
        %v6641 = vpack.c.b16 %v4658, %v4657
        %v6642 = vpack.c.b16 %v4660, %v4659
        %v6643 = vpack.c.b16 %v4662, %v4661
        %v6644 = vpack.c.b16 %v4664, %v4663
        %v6645 = vpack.c.b16 %v4666, %v4665
        %v6646 = vpack.c.b16 %v4668, %v4667
        %v6647 = vpack.c.b16 %v4670, %v4669
        %v6648 = vpack.c.b16 %v4672, %v4671
        %v6649 = vpack.c.b16 %v4674, %v4673
        %v6650 = vpack.c.b16 %v4676, %v4675
        %v6651 = vpack.c.b16 %v4678, %v4677
        %v6652 = vpack.c.b16 %v4680, %v4679
        %v6653 = vpack.c.b16 %v4682, %v4681
        %v6654 = vpack.c.b16 %v4684, %v4683
        %v6655 = vpack.c.b16 %v4686, %v4685
        %v6656 = vpack.c.b16 %v4688, %v4687
        %v6657 = vpack.c.b16 %v4690, %v4689
        %v6658 = vpack.c.b16 %v4692, %v4691
        %v6659 = vpack.c.b16 %v4694, %v4693
        %v6660 = vpack.c.b16 %v4696, %v4695
        %v6661 = vpack.c.b16 %v4698, %v4697
        %v6662 = vpack.c.b16 %v4700, %v4699
        %v6663 = vpack.c.b16 %v4702, %v4701
        %v6664 = vpack.c.b16 %v4704, %v4703
        %v6665 = vpack.c.b16 %v4706, %v4705
        %v6666 = vpack.c.b16 %v4708, %v4707
        %v6667 = vpack.c.b16 %v4710, %v4709
        %v6668 = vpack.c.b16 %v4712, %v4711
        %v6669 = vpack.c.b16 %v4714, %v4713
        %v6670 = vpack.c.b16 %v4716, %v4715
        %v6671 = vpack.c.b16 %v4718, %v4717
        %v6672 = vpack.c.b16 %v4720, %v4719
        %v6673 = vpack.c.b16 %v4722, %v4721
        %v6674 = vpack.c.b16 %v4724, %v4723
        %v6675 = vpack.c.b16 %v4726, %v4725
        %v6676 = vpack.c.b16 %v4728, %v4727
        %v6677 = vpack.c.b16 %v4730, %v4729
        %v6678 = vpack.c.b16 %v4732, %v4731
        %v6679 = vpack.c.b16 %v4734, %v4733
        %v6680 = vpack.c.b16 %v4736, %v4735
        %v6681 = vpack.c.b16 %v4738, %v4737
        %v6682 = vpack.c.b16 %v4740, %v4739
        %v6683 = vpack.c.b16 %v4742, %v4741
        %v6684 = vpack.c.b16 %v4744, %v4743
        %v6685 = vpack.c.b16 %v4746, %v4745
        %v6686 = vpack.c.b16 %v4748, %v4747
        %v6687 = vpack.c.b16 %v4750, %v4749
        %v6688 = vpack.c.b16 %v4752, %v4751
        %v6689 = vpack.c.b16 %v4754, %v4753
        %v6690 = vpack.c.b16 %v4756, %v4755
        %v6691 = vpack.c.b16 %v4758, %v4757
        %v6692 = vpack.c.b16 %v4760, %v4759
        %v6693 = vpack.c.b16 %v4762, %v4761
        %v6694 = vpack.c.b16 %v4764, %v4763
        %v6695 = vpack.c.b16 %v4766, %v4765
        %v6696 = vpack.c.b16 %v4768, %v4767
        %v6697 = vpack.c.b16 %v4770, %v4769
        %v6698 = vpack.c.b16 %v4772, %v4771
        %v6699 = vpack.c.b16 %v4774, %v4773
        %v6700 = vpack.c.b16 %v4776, %v4775
        %v6701 = vpack.c.b16 %v4778, %v4777
        %v6702 = vpack.c.b16 %v4780, %v4779
        %v6703 = vpack.c.b16 %v4782, %v4781
        %v6704 = vpack.c.b16 %v4784, %v4783
        %v6705 = vpack.c.b16 %v4786, %v4785
        %v6706 = vpack.c.b16 %v4788, %v4787
        %v6707 = vpack.c.b16 %v4790, %v4789
        %v6708 = vpack.c.b16 %v4792, %v4791
        %v6709 = vpack.c.b16 %v4794, %v4793
        %v6710 = vpack.c.b16 %v4796, %v4795
        %v6711 = vpack.c.b16 %v4798, %v4797
        %v6712 = vpack.c.b16 %v4800, %v4799
        %v6713 = vpack.c.b16 %v4802, %v4801
        %v6714 = vpack.c.b16 %v4804, %v4803
        %v6715 = vpack.c.b16 %v4806, %v4805
        %v6716 = vpack.c.b16 %v4808, %v4807
        %v6717 = vpack.c.b16 %v4810, %v4809
        %v6718 = vpack.c.b16 %v4812, %v4811
        %v6719 = vpack.c.b16 %v4814, %v4813
        %v6720 = vpack.c.b16 %v4816, %v4815
        %v6721 = vpack.c.b16 %v4818, %v4817
        %v6722 = vpack.c.b16 %v4820, %v4819
        %v6723 = vpack.c.b16 %v4822, %v4821
        %v6724 = vpack.c.b16 %v4824, %v4823
        %v6725 = vpack.c.b16 %v4826, %v4825
        %v6726 = vpack.c.b16 %v4828, %v4827
        %v6727 = vpack.c.b16 %v4830, %v4829
        %v6728 = vpack.c.b16 %v4832, %v4831
        %v6729 = vpack.c.b16 %v4834, %v4833
        %v6730 = vpack.c.b16 %v4836, %v4835
        %v6731 = vpack.c.b16 %v4838, %v4837
        %v6732 = vpack.c.b16 %v4840, %v4839
        %v6733 = vpack.c.b16 %v4842, %v4841
        %v6734 = vpack.c.b16 %v4844, %v4843
        %v6735 = vpack.c.b16 %v4846, %v4845
        %v6736 = vpack.c.b16 %v4848, %v4847
        %v6737 = vpack.c.b16 %v4850, %v4849
        %v6738 = vpack.c.b16 %v4852, %v4851
        %v6739 = vpack.c.b16 %v4854, %v4853
        %v6740 = vpack.c.b16 %v4856, %v4855
        %v6741 = vpack.c.b16 %v4858, %v4857
        %v6742 = vpack.c.b16 %v4860, %v4859
        %v6743 = vpack.c.b16 %v4862, %v4861
        %v6744 = vpack.c.b16 %v4864, %v4863
        %v6745 = vpack.c.b16 %v4866, %v4865
        %v6746 = vpack.c.b16 %v4868, %v4867
        %v6747 = vpack.c.b16 %v4870, %v4869
        %v6748 = vpack.c.b16 %v4872, %v4871
        %v6749 = vpack.c.b16 %v4874, %v4873
        %v6750 = vpack.c.b16 %v4876, %v4875
        %v6751 = vpack.c.b16 %v4878, %v4877
        %v6752 = vpack.c.b16 %v4880, %v4879
        %v6753 = vpack.c.b16 %v4882, %v4881
        %v6754 = vpack.c.b16 %v4884, %v4883
        %v6755 = vpack.c.b16 %v4886, %v4885
        %v6756 = vpack.c.b16 %v4888, %v4887
        %v6757 = vpack.c.b16 %v4890, %v4889
        %v6758 = vpack.c.b16 %v4892, %v4891
        %v6759 = vpack.c.b16 %v4894, %v4893
        %v6760 = vpack.c.b16 %v4896, %v4895
        %v6761 = vpack.c.b16 %v4898, %v4897
        %v6762 = vpack.c.b16 %v4900, %v4899
        %v6763 = vpack.c.b16 %v4902, %v4901
        %v6764 = vpack.c.b16 %v4904, %v4903
        %v6765 = vpack.c.b16 %v4906, %v4905
        %v6766 = vpack.c.b16 %v4908, %v4907
        %v6767 = vpack.c.b16 %v4910, %v4909
        %v6768 = vpack.c.b16 %v4912, %v4911
        %v6769 = vpack.c.b16 %v4914, %v4913
        %v6770 = vpack.c.b16 %v4916, %v4915
        %v6771 = vpack.c.b16 %v4918, %v4917
        %v6772 = vpack.c.b16 %v4920, %v4919
        %v6773 = vpack.c.b16 %v4922, %v4921
        %v6774 = vpack.c.b16 %v4924, %v4923
        %v6775 = vpack.c.b16 %v4926, %v4925
        %v6776 = vpack.c.b16 %v4928, %v4927
        %v6777 = vpack.c.b16 %v4930, %v4929
        %v6778 = vpack.c.b16 %v4932, %v4931
        %v6779 = vpack.c.b16 %v4934, %v4933
        %v6780 = vpack.c.b16 %v4936, %v4935
        %v6781 = vpack.c.b16 %v4938, %v4937
        %v6782 = vpack.c.b16 %v4940, %v4939
        %v6783 = vpack.c.b16 %v4942, %v4941
        %v6784 = vpack.c.b16 %v4944, %v4943
        %v6785 = vpack.c.b16 %v4946, %v4945
        %v6786 = vpack.c.b16 %v4948, %v4947
        %v6787 = vpack.c.b16 %v4950, %v4949
        %v6788 = vpack.c.b16 %v4952, %v4951
        %v6789 = vpack.c.b16 %v4954, %v4953
        %v6790 = vpack.c.b16 %v4956, %v4955
        %v6791 = vpack.c.b16 %v4958, %v4957
        %v6792 = vpack.c.b16 %v4960, %v4959
        %v6793 = vpack.c.b16 %v4962, %v4961
        %v6794 = vpack.c.b16 %v4964, %v4963
        %v6795 = vpack.c.b16 %v4966, %v4965
        %v6796 = vpack.c.b16 %v4968, %v4967
        %v6797 = vpack.c.b16 %v4970, %v4969
        %v6798 = vpack.c.b16 %v4972, %v4971
        %v6799 = vpack.c.b16 %v4974, %v4973
        %v6800 = vpack.c.b16 %v4976, %v4975
        %v6801 = vpack.c.b16 %v4978, %v4977
        %v6802 = vpack.c.b16 %v4980, %v4979
        %v6803 = vpack.c.b16 %v4982, %v4981
        %v6804 = vpack.c.b16 %v4984, %v4983
        %v6805 = vpack.c.b16 %v4986, %v4985
        %v6806 = vpack.c.b16 %v4988, %v4987
        %v6807 = vpack.c.b16 %v4990, %v4989
        %v6808 = vpack.c.b16 %v4992, %v4991
        %v6809 = vpack.c.b16 %v4994, %v4993
        %v6810 = vpack.c.b16 %v4996, %v4995
        %v6811 = vpack.c.b16 %v4998, %v4997
        %v6812 = vpack.c.b16 %v5000, %v4999
        %v6813 = vpack.c.b16 %v5002, %v5001
        %v6814 = vpack.c.b16 %v5004, %v5003
        %v6815 = vpack.c.b16 %v5006, %v5005
        %v6816 = vpack.c.b16 %v5008, %v5007
        %v6817 = vpack.c.b16 %v5010, %v5009
        %v6818 = vpack.c.b16 %v5012, %v5011
        %v6819 = vpack.c.b16 %v5014, %v5013
        %v6820 = vpack.c.b16 %v5016, %v5015
        %v6821 = vpack.c.b16 %v5018, %v5017
        %v6822 = vpack.c.b16 %v5020, %v5019
        %v6823 = vpack.c.b16 %v5022, %v5021
        %v6824 = vpack.c.b16 %v5024, %v5023
        %v6825 = vpack.c.b16 %v5026, %v5025
        %v6826 = vpack.c.b16 %v5028, %v5027
        %v6827 = vpack.c.b16 %v5030, %v5029
        %v6828 = vpack.c.b16 %v5032, %v5031
        %v6829 = vpack.c.b16 %v5034, %v5033
        %v6830 = vpack.c.b16 %v5036, %v5035
        %v6831 = vpack.c.b16 %v5038, %v5037
        %v6832 = vpack.c.b16 %v5040, %v5039
        %v6833 = vpack.c.b16 %v5042, %v5041
        %v6834 = vpack.c.b16 %v5044, %v5043
        %v6835 = vpack.c.b16 %v5046, %v5045
        %v6836 = vpack.c.b16 %v5048, %v5047
        %v6837 = vpack.c.b16 %v5050, %v5049
        %v6838 = vpack.c.b16 %v5052, %v5051
        %v6839 = vpack.c.b16 %v5054, %v5053
        %v6840 = vpack.c.b16 %v5056, %v5055
        %v6841 = vpack.c.b16 %v5058, %v5057
        %v6842 = vpack.c.b16 %v5060, %v5059
        %v6843 = vpack.c.b16 %v5062, %v5061
        %v6844 = vpack.c.b16 %v5064, %v5063
        %v6845 = vpack.c.b16 %v5066, %v5065
        %v6846 = vpack.c.b16 %v5068, %v5067
        %v6847 = vpack.c.b16 %v5070, %v5069
        %v6848 = vpack.c.b16 %v5072, %v5071
        %v6849 = vpack.c.b16 %v5074, %v5073
        %v6850 = vpack.c.b16 %v5076, %v5075
        %v6851 = vpack.c.b16 %v5078, %v5077
        %v6852 = vpack.c.b16 %v5080, %v5079
        %v6853 = vpack.c.b16 %v5082, %v5081
        %v6854 = vpack.c.b16 %v5084, %v5083
        %v6855 = vpack.c.b16 %v5086, %v5085
        %v6856 = vpack.c.b16 %v5088, %v5087
        %v6857 = vpack.c.b16 %v5090, %v5089
        %v6858 = vpack.c.b16 %v5092, %v5091
        %v6859 = vpack.c.b16 %v5094, %v5093
        %v6860 = vpack.c.b16 %v5096, %v5095
        %v6861 = vpack.c.b16 %v5098, %v5097
        %v6862 = vpack.c.b16 %v5100, %v5099
        %v6863 = vpack.c.b16 %v5102, %v5101
        %v6864 = vpack.c.b16 %v5104, %v5103
        %v6865 = vpack.c.b16 %v5106, %v5105
        %v6866 = vpack.c.b16 %v5108, %v5107
        %v6867 = vpack.c.b16 %v5110, %v5109
        %v6868 = vpack.c.b16 %v5112, %v5111
        %v6869 = vpack.c.b16 %v5114, %v5113
        %v6870 = vpack.c.b16 %v5116, %v5115
        %v6871 = vpack.c.b16 %v5118, %v5117
        %v6872 = vpack.c.b16 %v5120, %v5119
        %v6873 = vpack.c.b16 %v5122, %v5121
        %v6874 = vpack.c.b16 %v5124, %v5123
        %v6875 = vpack.c.b16 %v5126, %v5125
        %v6876 = vpack.c.b16 %v5128, %v5127
        %v6877 = vpack.c.b16 %v5130, %v5129
        %v6878 = vpack.c.b16 %v5132, %v5131
        %v6879 = vpack.c.b16 %v5134, %v5133
        %v6880 = vpack.c.b16 %v5136, %v5135
        %v6881 = vpack.c.b16 %v5138, %v5137
        %v6882 = vpack.c.b16 %v5140, %v5139
        %v6883 = vpack.c.b16 %v5142, %v5141
        %v6884 = vpack.c.b16 %v5144, %v5143
        %v6885 = vpack.c.b16 %v5146, %v5145
        %v6886 = vpack.c.b16 %v5148, %v5147
        %v6887 = vpack.c.b16 %v5150, %v5149
        %v6888 = vpack.c.b16 %v5152, %v5151
        %v6889 = vpack.c.b16 %v5154, %v5153
        %v6890 = vpack.c.b16 %v5156, %v5155
        %v6891 = vpack.c.b16 %v5158, %v5157
        %v6892 = vpack.c.b16 %v5160, %v5159
        %v6893 = vpack.c.b16 %v5162, %v5161
        %v6894 = vpack.c.b16 %v5164, %v5163
        %v6895 = vpack.c.b16 %v5166, %v5165
        %v6896 = vpack.c.b16 %v5168, %v5167
        %v6897 = vpack.c.b16 %v5170, %v5169
        %v6898 = vpack.c.b16 %v5172, %v5171
        %v6899 = vpack.c.b16 %v5174, %v5173
        %v6900 = vpack.c.b16 %v5176, %v5175
        %v6901 = vpack.c.b16 %v5178, %v5177
        %v6902 = vpack.c.b16 %v5180, %v5179
        %v6903 = vpack.c.b16 %v5182, %v5181
        %v6904 = vpack.c.b16 %v5184, %v5183
        %v6905 = vpack.c.b16 %v5186, %v5185
        %v6906 = vpack.c.b16 %v5188, %v5187
        %v6907 = vpack.c.b16 %v5190, %v5189
        %v6908 = vpack.c.b16 %v5192, %v5191
        %v6909 = vpack.c.b16 %v5194, %v5193
        %v6910 = vpack.c.b16 %v5196, %v5195
        %v6911 = vpack.c.b16 %v5198, %v5197
        %v6912 = vpack.c.b16 %v5200, %v5199
        %v6913 = vpack.c.b16 %v5202, %v5201
        %v6914 = vpack.c.b16 %v5204, %v5203
        %v6915 = vpack.c.b16 %v5206, %v5205
        %v6916 = vpack.c.b16 %v5208, %v5207
        %v6917 = vpack.c.b16 %v5210, %v5209
        %v6918 = vpack.c.b16 %v5212, %v5211
        %v6919 = vpack.c.b16 %v5214, %v5213
        %v6920 = vpack.c.b16 %v5216, %v5215
        %v6921 = vpack.c.b16 %v5218, %v5217
        %v6922 = vpack.c.b16 %v5220, %v5219
        %v6923 = vpack.c.b16 %v5222, %v5221
        %v6924 = vpack.c.b16 %v5224, %v5223
        %v6925 = vpack.c.b16 %v5226, %v5225
        %v6926 = vpack.c.b16 %v5228, %v5227
        %v6927 = vpack.c.b16 %v5230, %v5229
        %v6928 = vpack.c.b16 %v5232, %v5231
        %v6929 = vpack.c.b16 %v5234, %v5233
        %v6930 = vpack.c.b16 %v5236, %v5235
        %v6931 = vpack.c.b16 %v5238, %v5237
        %v6932 = vpack.c.b16 %v5240, %v5239
        %v6933 = vpack.c.b16 %v5242, %v5241
        %v6934 = vpack.c.b16 %v5244, %v5243
        %v6935 = vpack.c.b16 %v5246, %v5245
        %v6936 = vpack.c.b16 %v5248, %v5247
        %v6937 = vpack.c.b16 %v5250, %v5249
        %v6938 = vpack.c.b16 %v5252, %v5251
        %v6939 = vpack.c.b16 %v5254, %v5253
        %v6940 = vpack.c.b16 %v5256, %v5255
        %v6941 = vpack.c.b16 %v5258, %v5257
        %v6942 = vpack.c.b16 %v5260, %v5259
        %v6943 = vpack.c.b16 %v5262, %v5261
        %v6944 = vpack.c.b16 %v5264, %v5263
        %v6945 = vpack.c.b16 %v5266, %v5265
        %v6946 = vpack.c.b16 %v5268, %v5267
        %v6947 = vpack.c.b16 %v5270, %v5269
        %v6948 = vpack.c.b16 %v5272, %v5271
        %v6949 = vpack.c.b16 %v5274, %v5273
        %v6950 = vpack.c.b16 %v5276, %v5275
        %v6951 = vpack.c.b16 %v5278, %v5277
        %v6952 = vpack.c.b16 %v5280, %v5279
        %v6953 = vpack.c.b16 %v5282, %v5281
        %v6954 = vpack.c.b16 %v5284, %v5283
        %v6955 = vpack.c.b16 %v5286, %v5285
        %v6956 = vpack.c.b16 %v5288, %v5287
        %v6957 = vpack.c.b16 %v5290, %v5289
        %v6958 = vpack.c.b16 %v5292, %v5291
        %v6959 = vpack.c.b16 %v5294, %v5293
        %v6960 = vpack.c.b16 %v5296, %v5295
        %v6961 = vpack.c.b16 %v5298, %v5297
        %v6962 = vpack.c.b16 %v5300, %v5299
        %v6963 = vpack.c.b16 %v5302, %v5301
        %v6964 = vpack.c.b16 %v5304, %v5303
        %v6965 = vpack.c.b16 %v5306, %v5305
        %v6966 = vpack.c.b16 %v5308, %v5307
        %v6967 = vpack.c.b16 %v5310, %v5309
        %v6968 = vpack.c.b16 %v5312, %v5311
        %v6969 = vpack.c.b16 %v5314, %v5313
        %v6970 = vpack.c.b16 %v5316, %v5315
        %v6971 = vpack.c.b16 %v5318, %v5317
        %v6972 = vpack.c.b16 %v5320, %v5319
        %v6973 = vpack.c.b16 %v5322, %v5321
        %v6974 = vpack.c.b16 %v5324, %v5323
        %v6975 = vpack.c.b16 %v5326, %v5325
        %v6976 = vpack.c.b16 %v5328, %v5327
        %v6977 = vpack.c.b16 %v5330, %v5329
        %v6978 = vpack.c.b16 %v5332, %v5331
        %v6979 = vpack.c.b16 %v5334, %v5333
        %v6980 = vpack.c.b16 %v5336, %v5335
        %v6981 = vpack.c.b16 %v5338, %v5337
        %v6982 = vpack.c.b16 %v5340, %v5339
        %v6983 = vpack.c.b16 %v5342, %v5341
        %v6984 = vpack.c.b16 %v5344, %v5343
        %v6985 = vpack.c.b16 %v5346, %v5345
        %v6986 = vpack.c.b16 %v5348, %v5347
        %v6987 = vpack.c.b16 %v5350, %v5349
        %v6988 = vpack.c.b16 %v5352, %v5351
        %v6989 = vpack.c.b16 %v5354, %v5353
        %v6990 = vpack.c.b16 %v5356, %v5355
        %v6991 = vpack.c.b16 %v5358, %v5357
        %v6992 = vpack.c.b16 %v5360, %v5359
        %v6993 = vpack.c.b16 %v5362, %v5361
        %v6994 = vpack.c.b16 %v5364, %v5363
        %v6995 = vpack.c.b16 %v5366, %v5365
        %v6996 = vpack.c.b16 %v5368, %v5367
        %v6997 = vpack.c.b16 %v5370, %v5369
        %v6998 = vpack.c.b16 %v5372, %v5371
        %v6999 = vpack.c.b16 %v5374, %v5373
        %v7000 = vpack.c.b16 %v5376, %v5375
        %v7001 = vpack.c.b16 %v5378, %v5377
        %v7002 = vpack.c.b16 %v5380, %v5379
        %v7003 = vpack.c.b16 %v5382, %v5381
        %v7004 = vpack.c.b16 %v5384, %v5383
        %v7005 = vpack.c.b16 %v5386, %v5385
        %v7006 = vpack.c.b16 %v5388, %v5387
        %v7007 = vpack.c.b16 %v5390, %v5389
        %v7008 = vpack.c.b16 %v5392, %v5391
        %v7009 = vpack.c.b16 %v5394, %v5393
        %v7010 = vpack.c.b16 %v5396, %v5395
        %v7011 = vpack.c.b16 %v5398, %v5397
        %v7012 = vpack.c.b16 %v5400, %v5399
        %v7013 = vpack.c.b16 %v5402, %v5401
        %v7014 = vpack.c.b16 %v5404, %v5403
        %v7015 = vpack.c.b16 %v5406, %v5405
        %v7016 = vpack.c.b16 %v5408, %v5407
        %v7017 = vpack.c.b16 %v5410, %v5409
        %v7018 = vpack.c.b16 %v5412, %v5411
        %v7019 = vpack.c.b16 %v5414, %v5413
        %v7020 = vpack.c.b16 %v5416, %v5415
        %v7021 = vpack.c.b16 %v5418, %v5417
        %v7022 = vpack.c.b16 %v5420, %v5419
        %v7023 = vpack.c.b16 %v5422, %v5421
        %v7024 = vpack.c.b16 %v5424, %v5423
        %v7025 = vpack.c.b16 %v5426, %v5425
        %v7026 = vpack.c.b16 %v5428, %v5427
        %v7027 = vpack.c.b16 %v5430, %v5429
        %v7028 = vpack.c.b16 %v5432, %v5431
        %v7029 = vpack.c.b16 %v5434, %v5433
        %v7030 = vpack.c.b16 %v5436, %v5435
        %v7031 = vpack.c.b16 %v5438, %v5437
        %v7032 = vpack.c.b16 %v5440, %v5439
        %v7033 = vpack.c.b16 %v5442, %v5441
        %v7034 = vpack.c.b16 %v5444, %v5443
        %v7035 = vpack.c.b16 %v5446, %v5445
        %v7036 = vpack.c.b16 %v5448, %v5447
        %v7037 = vpack.c.b16 %v5450, %v5449
        %v7038 = vpack.c.b16 %v5452, %v5451
        %v7039 = vpack.c.b16 %v5454, %v5453
        %v7040 = vpack.c.b16 %v5456, %v5455
        %v7041 = vpack.c.b16 %v5458, %v5457
        %v7042 = vpack.c.b16 %v5460, %v5459
        %v7043 = vpack.c.b16 %v5462, %v5461
        %v7044 = vpack.c.b16 %v5464, %v5463
        %v7045 = vpack.c.b16 %v5466, %v5465
        %v7046 = vpack.c.b16 %v5468, %v5467
        %v7047 = vpack.c.b16 %v5470, %v5469
        %v7048 = vpack.c.b16 %v5472, %v5471
        %v7049 = vpack.c.b16 %v5474, %v5473
        %v7050 = vpack.c.b16 %v5476, %v5475
        %v7051 = vpack.c.b16 %v5478, %v5477
        %v7052 = vpack.c.b16 %v5480, %v5479
        %v7053 = vpack.c.b16 %v5482, %v5481
        %v7054 = vpack.c.b16 %v5484, %v5483
        %v7055 = vpack.c.b16 %v5486, %v5485
        %v7056 = vpack.c.b16 %v5488, %v5487
        %v7057 = vpack.c.b16 %v5490, %v5489
        %v7058 = vpack.c.b16 %v5492, %v5491
        %v7059 = vpack.c.b16 %v5494, %v5493
        %v7060 = vpack.c.b16 %v5496, %v5495
        %v7061 = vpack.c.b16 %v5498, %v5497
        %v7062 = vpack.c.b16 %v5500, %v5499
        %v7063 = vpack.c.b16 %v5502, %v5501
        %v7064 = vpack.c.b16 %v5504, %v5503
        %v7065 = vpack.c.b16 %v5506, %v5505
        %v7066 = vpack.c.b16 %v5508, %v5507
        %v7067 = vpack.c.b16 %v5510, %v5509
        %v7068 = vpack.c.b16 %v5512, %v5511
        %v7069 = vpack.c.b16 %v5514, %v5513
        %v7070 = vpack.c.b16 %v5516, %v5515
        %v7071 = vpack.c.b16 %v5518, %v5517
        %v7072 = vpack.c.b16 %v5520, %v5519
        %v7073 = vpack.c.b16 %v5522, %v5521
        %v7074 = vpack.c.b16 %v5524, %v5523
        %v7075 = vpack.c.b16 %v5526, %v5525
        %v7076 = vpack.c.b16 %v5528, %v5527
        %v7077 = vpack.c.b16 %v5530, %v5529
        %v7078 = vpack.c.b16 %v5532, %v5531
        %v7079 = vpack.c.b16 %v5534, %v5533
        %v7080 = vpack.c.b16 %v5536, %v5535
        %v7081 = vpack.c.b16 %v5538, %v5537
        %v7082 = vpack.c.b16 %v5540, %v5539
        %v7083 = vpack.c.b16 %v5542, %v5541
        %v7084 = vpack.c.b16 %v5544, %v5543
        %v7085 = vpack.c.b16 %v5546, %v5545
        %v7086 = vpack.c.b16 %v5548, %v5547
        %v7087 = vpack.c.b16 %v5550, %v5549
        %v7088 = vpack.c.b16 %v5552, %v5551
        %v7089 = vpack.c.b16 %v5554, %v5553
        %v7090 = vpack.c.b16 %v5556, %v5555
        %v7091 = vpack.c.b16 %v5558, %v5557
        %v7092 = vpack.c.b16 %v5560, %v5559
        %v7093 = vpack.c.b16 %v5562, %v5561
        %v7094 = vpack.c.b16 %v5564, %v5563
        %v7095 = vpack.c.b16 %v5566, %v5565
        %v7096 = vpack.c.b16 %v5568, %v5567
        %v7097 = vpack.c.b16 %v5570, %v5569
        %v7098 = vpack.c.b16 %v5572, %v5571
        %v7099 = vpack.c.b16 %v5574, %v5573
        %v7100 = vpack.c.b16 %v5576, %v5575
        %v7101 = vpack.c.b16 %v5578, %v5577
        %v7102 = vpack.c.b16 %v5580, %v5579
        %v7103 = vpack.c.b16 %v5582, %v5581
        %v7104 = vpack.c.b16 %v5584, %v5583
        %v7105 = vpack.c.b16 %v5586, %v5585
        %v7106 = vpack.c.b16 %v5588, %v5587
        %v7107 = vpack.c.b16 %v5590, %v5589
        %v7108 = vpack.c.b16 %v5592, %v5591
        %v7109 = vpack.c.b16 %v5594, %v5593
        %v7110 = vpack.c.b16 %v5596, %v5595
        %v7111 = vpack.c.b16 %v5598, %v5597
        %v7112 = vpack.c.b16 %v5600, %v5599
        %v7113 = vpack.c.b16 %v5602, %v5601
        %v7114 = vpack.c.b16 %v5604, %v5603
        %v7115 = vpack.c.b16 %v5606, %v5605
        %v7116 = vpack.c.b16 %v5608, %v5607
        %v7117 = vpack.c.b16 %v5610, %v5609
        %v7118 = vpack.c.b16 %v5612, %v5611
        %v7119 = vpack.c.b16 %v5614, %v5613
        %v7120 = vpack.c.b16 %v5616, %v5615
        %v7121 = vpack.c.b16 %v5618, %v5617
        %v7122 = vpack.c.b16 %v5620, %v5619
        %v7123 = vpack.c.b16 %v5622, %v5621
        %v7124 = vpack.c.b16 %v5624, %v5623
        %v7125 = vpack.c.b16 %v5626, %v5625
        %v7126 = vpack.c.b16 %v5628, %v5627
        %v7127 = vpack.c.b16 %v5630, %v5629
        %v7128 = vpack.c.b16 %v5632, %v5631
        %v7129 = vpack.c.b16 %v5634, %v5633
        %v7130 = vpack.c.b16 %v5636, %v5635
        %v7131 = vpack.c.b16 %v5638, %v5637
        %v7132 = vpack.c.b16 %v5640, %v5639
        %v7133 = vpack.c.b16 %v5642, %v5641
        %v7134 = vpack.c.b16 %v5644, %v5643
        %v7135 = vpack.c.b16 %v5646, %v5645
        %v7136 = vpack.c.b16 %v5648, %v5647
        %v7137 = vpack.c.b16 %v5650, %v5649
        %v7138 = vpack.c.b16 %v5652, %v5651
        %v7139 = vpack.c.b16 %v5654, %v5653
        %v7140 = vpack.c.b16 %v5656, %v5655
        %v7141 = vpack.c.b16 %v5658, %v5657
        %v7142 = vpack.c.b16 %v5660, %v5659
        %v7143 = vpack.c.b16 %v5662, %v5661
        %v7144 = vpack.c.b16 %v5664, %v5663
        %v7145 = vpack.c.b16 %v5666, %v5665
        %v7146 = vpack.c.b16 %v5668, %v5667
        %v7147 = vpack.c.b16 %v5670, %v5669
        %v7148 = vpack.c.b16 %v5672, %v5671
        %v7149 = vpack.c.b16 %v5674, %v5673
        %v7150 = vpack.c.b16 %v5676, %v5675
        %v7151 = vpack.c.b16 %v5678, %v5677
        %v7152 = vpack.c.b16 %v5680, %v5679
        %v7153 = vpack.c.b16 %v5682, %v5681
        %v7154 = vpack.c.b16 %v5684, %v5683
        %v7155 = vpack.c.b16 %v5686, %v5685
        %v7156 = vpack.c.b16 %v5688, %v5687
        %v7157 = vpack.c.b16 %v5690, %v5689
        %v7158 = vpack.c.b16 %v5692, %v5691
        %v7159 = vpack.c.b16 %v5694, %v5693
        %v7160 = vpack.c.b16 %v5696, %v5695
        %v7161 = vpack.c.b16 %v5698, %v5697
        %v7162 = vpack.c.b16 %v5700, %v5699
        %v7163 = vpack.c.b16 %v5702, %v5701
        %v7164 = vpack.c.b16 %v5704, %v5703
        %v7165 = vpack.c.b16 %v5706, %v5705
        %v7166 = vpack.c.b16 %v5708, %v5707
        %v7167 = vpack.c.b16 %v5710, %v5709
        %v7168 = vpack.c.b16 %v5712, %v5711
        %v7169 = vpack.c.b16 %v5714, %v5713
        %v7170 = vpack.c.b16 %v5716, %v5715
        %v7171 = vpack.c.b16 %v5718, %v5717
        %v7172 = vpack.c.b16 %v5720, %v5719
        %v7173 = vpack.c.b16 %v5722, %v5721
        %v7174 = vpack.c.b16 %v5724, %v5723
        %v7175 = vpack.c.b16 %v5726, %v5725
        %v7176 = vpack.c.b16 %v5728, %v5727
        %v7177 = vpack.c.b16 %v5730, %v5729
        %v7178 = vpack.c.b16 %v5732, %v5731
        %v7179 = vpack.c.b16 %v5734, %v5733
        %v7180 = vpack.c.b16 %v5736, %v5735
        %v7181 = vpack.c.b16 %v5738, %v5737
        %v7182 = vpack.c.b16 %v5740, %v5739
        %v7183 = vpack.c.b16 %v5742, %v5741
        %v7184 = vpack.c.b16 %v5744, %v5743
        %v7185 = vpack.c.b16 %v5746, %v5745
        %v7186 = vpack.c.b16 %v5748, %v5747
        %v7187 = vpack.c.b16 %v5750, %v5749
        %v7188 = vpack.c.b16 %v5752, %v5751
        %v7189 = vpack.c.b16 %v5754, %v5753
        %v7190 = vpack.c.b16 %v5756, %v5755
        %v7191 = vpack.c.b16 %v5758, %v5757
        %v7192 = vpack.c.b16 %v5760, %v5759
        %v7193 = vpack.c.b16 %v5762, %v5761
        %v7194 = vpack.c.b16 %v5764, %v5763
        %v7195 = vpack.c.b16 %v5766, %v5765
        %v7196 = vpack.c.b16 %v5768, %v5767
        %v7197 = vpack.c.b16 %v5770, %v5769
        %v7198 = vpack.c.b16 %v5772, %v5771
        %v7199 = vpack.c.b16 %v5774, %v5773
        %v7200 = vpack.c.b16 %v5776, %v5775
        %v7201 = vpack.c.b16 %v5778, %v5777
        %v7202 = vpack.c.b16 %v5780, %v5779
        %v7203 = vpack.c.b16 %v5782, %v5781
        %v7204 = vpack.c.b16 %v5784, %v5783
        %v7205 = vpack.c.b16 %v5786, %v5785
        %v7206 = vpack.c.b16 %v5788, %v5787
        %v7207 = vpack.c.b16 %v5790, %v5789
        %v7208 = vpack.c.b16 %v5792, %v5791
        %v7209 = vpack.c.b16 %v5794, %v5793
        %v7210 = vpack.c.b16 %v5796, %v5795
        %v7211 = vpack.c.b16 %v5798, %v5797
        %v7212 = vpack.c.b16 %v5800, %v5799
        %v7213 = vpack.c.b16 %v5802, %v5801
        %v7214 = vpack.c.b16 %v5804, %v5803
        %v7215 = vpack.c.b16 %v5806, %v5805
        %v7216 = vpack.c.b16 %v5808, %v5807
        %v7217 = vpack.c.b16 %v5810, %v5809
        %v7218 = vpack.c.b16 %v5812, %v5811
        %v7219 = vpack.c.b16 %v5814, %v5813
        %v7220 = vpack.c.b16 %v5816, %v5815
        %v7221 = vpack.c.b16 %v5818, %v5817
        %v7222 = vpack.c.b16 %v5820, %v5819
        %v7223 = vpack.c.b16 %v5822, %v5821
        %v7224 = vpack.c.b16 %v5824, %v5823
        %v7225 = vpack.c.b16 %v5826, %v5825
        %v7226 = vpack.c.b16 %v5828, %v5827
        %v7227 = vpack.c.b16 %v5830, %v5829
        %v7228 = vpack.c.b16 %v5832, %v5831
        %v7229 = vpack.c.b16 %v5834, %v5833
        %v7230 = vpack.c.b16 %v5836, %v5835
        %v7231 = vpack.c.b16 %v5838, %v5837
        %v7232 = vpack.c.b16 %v5840, %v5839
        %v7233 = vpack.c.b16 %v5842, %v5841
        %v7234 = vpack.c.b16 %v5844, %v5843
        %v7235 = vpack.c.b16 %v5846, %v5845
        %v7236 = vpack.c.b16 %v5848, %v5847
        %v7237 = vpack.c.b16 %v5850, %v5849
        %v7238 = vpack.c.b16 %v5852, %v5851
        %v7239 = vpack.c.b16 %v5854, %v5853
        %v7240 = vpack.c.b16 %v5856, %v5855
        %v7241 = vpack.c.b16 %v5858, %v5857
        %v7242 = vpack.c.b16 %v5860, %v5859
        %v7243 = vpack.c.b16 %v5862, %v5861
        %v7244 = vpack.c.b16 %v5864, %v5863
        %v7245 = vpack.c.b16 %v5866, %v5865
        %v7246 = vpack.c.b16 %v5868, %v5867
        %v7247 = vpack.c.b16 %v5870, %v5869
        %v7248 = vpack.c.b16 %v5872, %v5871
        %v7249 = vpack.c.b16 %v5874, %v5873
        %v7250 = vpack.c.b16 %v5876, %v5875
        %v7251 = vpack.c.b16 %v5878, %v5877
        %v7252 = vpack.c.b16 %v5880, %v5879
        %v7253 = vpack.c.b16 %v5882, %v5881
        %v7254 = vpack.c.b16 %v5884, %v5883
        %v7255 = vpack.c.b16 %v5886, %v5885
        %v7256 = vpack.c.b16 %v5888, %v5887
        %v7257 = vpack.c.b16 %v5890, %v5889
        %v7258 = vpack.c.b16 %v5892, %v5891
        %v7259 = vpack.c.b16 %v5894, %v5893
        %v7260 = vpack.c.b16 %v5896, %v5895
        %v7261 = vpack.c.b16 %v5898, %v5897
        %v7262 = vpack.c.b16 %v5900, %v5899
        %v7263 = vpack.c.b16 %v5902, %v5901
        %v7264 = vpack.c.b16 %v5904, %v5903
        %v7265 = vpack.c.b16 %v5906, %v5905
        %v7266 = vpack.c.b16 %v5908, %v5907
        %v7267 = vpack.c.b16 %v5910, %v5909
        %v7268 = vpack.c.b16 %v5912, %v5911
        %v7269 = vpack.c.b16 %v5914, %v5913
        %v7270 = vpack.c.b16 %v5916, %v5915
        %v7271 = vpack.c.b16 %v5918, %v5917
        %v7272 = vpack.c.b16 %v5920, %v5919
        %v7273 = vpack.c.b16 %v5922, %v5921
        %v7274 = vpack.c.b16 %v5924, %v5923
        %v7275 = vpack.c.b16 %v5926, %v5925
        %v7276 = vpack.c.b16 %v5928, %v5927
        %v7277 = vpack.c.b16 %v5930, %v5929
        %v7278 = vpack.c.b16 %v5932, %v5931
        %v7279 = vpack.c.b16 %v5934, %v5933
        %v7280 = vpack.c.b16 %v5936, %v5935
        %v7281 = vpack.c.b16 %v5938, %v5937
        %v7282 = vpack.c.b16 %v5940, %v5939
        %v7283 = vpack.c.b16 %v5942, %v5941
        %v7284 = vpack.c.b16 %v5944, %v5943
        %v7285 = vpack.c.b16 %v5946, %v5945
        %v7286 = vpack.c.b16 %v5948, %v5947
        %v7287 = vpack.c.b16 %v5950, %v5949
        %v7288 = vpack.c.b16 %v5952, %v5951
        %v7289 = vpack.c.b16 %v5954, %v5953
        %v7290 = vpack.c.b16 %v5956, %v5955
        %v7291 = vpack.c.b16 %v5958, %v5957
        %v7292 = vpack.c.b16 %v5960, %v5959
        %v7293 = vpack.c.b16 %v5962, %v5961
        %v7294 = vpack.c.b16 %v5964, %v5963
        %v7295 = vpack.c.b16 %v5966, %v5965
        %v7296 = vpack.c.b16 %v5968, %v5967
        %v7297 = vpack.c.b16 %v5970, %v5969
        %v7298 = vpack.c.b16 %v5972, %v5971
        %v7299 = vpack.c.b16 %v5974, %v5973
        %v7300 = vpack.c.b16 %v5976, %v5975
        %v7301 = vpack.c.b16 %v5978, %v5977
        %v7302 = vpack.c.b16 %v5980, %v5979
        %v7303 = vpack.c.b16 %v5982, %v5981
        %v7304 = vpack.c.b16 %v5984, %v5983
        %v7305 = vpack.c.b16 %v5986, %v5985
        %v7306 = vpack.c.b16 %v5988, %v5987
        %v7307 = vpack.c.b16 %v5990, %v5989
        %v7308 = vpack.c.b16 %v5992, %v5991
        %v7309 = vpack.c.b16 %v5994, %v5993
        %v7310 = vpack.c.b16 %v5996, %v5995
        %v7311 = vpack.c.b16 %v5998, %v5997
        %v7312 = vpack.c.b16 %v6000, %v5999
        %v7313 = vpack.c.b16 %v6002, %v6001
        %v7314 = vpack.c.b16 %v6004, %v6003
        %v7315 = vpack.c.b16 %v6006, %v6005
        %v7316 = vpack.c.b16 %v6008, %v6007
        %v7317 = vpack.c.b16 %v6010, %v6009
        %v7318 = vpack.c.b16 %v6012, %v6011
        %v7319 = vpack.c.b16 %v6014, %v6013
        %v7320 = vpack.c.b16 %v6016, %v6015
        %v7321 = vpack.c.b16 %v6018, %v6017
        %v7322 = vpack.c.b16 %v6020, %v6019
        %v7323 = vpack.c.b16 %v6022, %v6021
        %v7324 = vpack.c.b16 %v6024, %v6023
        %v7325 = vpack.c.b16 %v6026, %v6025
        %v7326 = vpack.c.b16 %v6028, %v6027
        %v7327 = vpack.c.b16 %v6030, %v6029
        %v7328 = vpack.c.b16 %v6032, %v6031
        %v7329 = vpack.c.b16 %v6034, %v6033
        %v7330 = vpack.c.b16 %v6036, %v6035
        %v7331 = vpack.c.b16 %v6038, %v6037
        %v7332 = vpack.c.b16 %v6040, %v6039
        %v7333 = vpack.c.b16 %v6042, %v6041
        %v7334 = vpack.c.b16 %v6044, %v6043
        %v7335 = vpack.c.b16 %v6046, %v6045
        %v7336 = vpack.c.b16 %v6048, %v6047
        %v7337 = vpack.c.b16 %v6050, %v6049
        %v7338 = vpack.c.b16 %v6052, %v6051
        %v7339 = vpack.c.b16 %v6054, %v6053
        %v7340 = vpack.c.b16 %v6056, %v6055
        %v7341 = vpack.c.b16 %v6058, %v6057
        %v7342 = vpack.c.b16 %v6060, %v6059
        %v7343 = vpack.c.b16 %v6062, %v6061
        %v7344 = vpack.c.b16 %v6064, %v6063
        %v7345 = vpack.c.b16 %v6066, %v6065
        %v7346 = vpack.c.b16 %v6068, %v6067
        %v7347 = vpack.c.b16 %v6070, %v6069
        %v7348 = vpack.c.b16 %v6072, %v6071
        %v7349 = vpack.c.b16 %v6074, %v6073
        %v7350 = vpack.c.b16 %v6076, %v6075
        %v7351 = vpack.c.b16 %v6078, %v6077
        %v7352 = vpack.c.b16 %v6080, %v6079
        %v7353 = vpack.c.b16 %v6082, %v6081
        %v7354 = vpack.c.b16 %v6084, %v6083
        %v7355 = vpack.c.b16 %v6086, %v6085
        %v7356 = vpack.c.b16 %v6088, %v6087
        %v7357 = vpack.c.b16 %v6090, %v6089
        %v7358 = vpack.c.b16 %v6092, %v6091
        %v7359 = vpack.c.b16 %v6094, %v6093
        %v7360 = vpack.c.b16 %v6096, %v6095
        %v7361 = vpack.c.b16 %v6098, %v6097
        %v7362 = vpack.c.b16 %v6100, %v6099
        %v7363 = vpack.c.b16 %v6102, %v6101
        %v7364 = vpack.c.b16 %v6104, %v6103
        %v7365 = vpack.c.b16 %v6106, %v6105
        %v7366 = vpack.c.b16 %v6108, %v6107
        %v7367 = vpack.c.b16 %v6110, %v6109
        %v7368 = vpack.c.b16 %v6112, %v6111
        %v7369 = vpack.c.b16 %v6114, %v6113
        %v7370 = vpack.c.b16 %v6116, %v6115
        %v7371 = vpack.c.b16 %v6118, %v6117
        %v7372 = vpack.c.b16 %v6120, %v6119
        %v7373 = vpack.c.b16 %v6122, %v6121
        %v7374 = vpack.c.b16 %v6124, %v6123
        %v7375 = vpack.c.b16 %v6126, %v6125
        %v7376 = vpack.c.b16 %v6128, %v6127
        %v7377 = vpack.c.b16 %v6130, %v6129
        %v7378 = vpack.c.b16 %v6132, %v6131
        %v7379 = vpack.c.b16 %v6134, %v6133
        %v7380 = vpack.c.b16 %v6136, %v6135
        %v7381 = vpack.c.b16 %v6138, %v6137
        %v7382 = vpack.c.b16 %v6140, %v6139
        %v7383 = vpack.c.b16 %v6142, %v6141
        %v7384 = vpack.c.b16 %v6144, %v6143
        %v7385 = vpack.c.b16 %v6146, %v6145
        %v7386 = vpack.c.b16 %v6148, %v6147
        %v7387 = vpack.c.b16 %v6150, %v6149
        %v7388 = vpack.c.b16 %v6152, %v6151
        %v7389 = vpack.c.b16 %v6154, %v6153
        %v7390 = vpack.c.b16 %v6156, %v6155
        %v7391 = vpack.c.b16 %v6158, %v6157
        %v7392 = vpack.c.b16 %v6160, %v6159
        %v7393 = vpack.c.b16 %v6162, %v6161
        %v7394 = vpack.c.b16 %v6164, %v6163
        %v7395 = vpack.c.b16 %v6166, %v6165
        %v7396 = vpack.c.b16 %v6168, %v6167
        %v7397 = vpack.c.b16 %v6170, %v6169
        %v7398 = vpack.c.b16 %v6172, %v6171
        %v7399 = vpack.c.b16 %v6174, %v6173
        %v7400 = vpack.c.b16 %v6176, %v6175
        %v7401 = vpack.c.b16 %v6178, %v6177
        %v7402 = vpack.c.b16 %v6180, %v6179
        %v7403 = vpack.c.b16 %v6182, %v6181
        %v7404 = vpack.c.b16 %v6184, %v6183
        %v7405 = vpack.c.b16 %v6186, %v6185
        %v7406 = vpack.c.b16 %v6188, %v6187
        %v7407 = vpack.c.b16 %v6190, %v6189
        %v7408 = vpack.c.b16 %v6192, %v6191
        %v7409 = vpack.c.b16 %v6194, %v6193
        %v7410 = vpack.c.b16 %v6196, %v6195
        %v7411 = vpack.c.b16 %v6198, %v6197
        %v7412 = vpack.c.b16 %v6200, %v6199
        %v7413 = vpack.c.b16 %v6202, %v6201
        %v7414 = vpack.c.b16 %v6204, %v6203
        %v7415 = vpack.c.b16 %v6206, %v6205
        %v7416 = vpack.c.b16 %v6208, %v6207
        %v7417 = vpack.c.b16 %v6210, %v6209
        %v7418 = vpack.c.b16 %v6212, %v6211
        %v7419 = vpack.c.b16 %v6214, %v6213
        %v7420 = vpack.c.b16 %v6216, %v6215
        %v7421 = vpack.c.b16 %v6218, %v6217
        %v7422 = vpack.c.b16 %v6220, %v6219
        %v7423 = vpack.c.b16 %v6222, %v6221
        %v7424 = vpack.c.b16 %v6224, %v6223
        %v7425 = vpack.c.b16 %v6226, %v6225
        %v7426 = vpack.c.b16 %v6228, %v6227
        %v7427 = vpack.c.b16 %v6230, %v6229
        %v7428 = vpack.c.b16 %v6232, %v6231
        %v7429 = vpack.c.b16 %v6234, %v6233
        %v7430 = vpack.c.b16 %v6236, %v6235
        %v7431 = vpack.c.b16 %v6238, %v6237
        %v7432 = vpack.c.b16 %v6240, %v6239
        %v7433 = vpack.c.b16 %v6242, %v6241
        %v7434 = vpack.c.b16 %v6244, %v6243
        %v7435 = vpack.c.b16 %v6246, %v6245
        %v7436 = vpack.c.b16 %v6248, %v6247
        %v7437 = vpack.c.b16 %v6250, %v6249
        %v7438 = vpack.c.b16 %v6252, %v6251
        %v7439 = vpack.c.b16 %v6254, %v6253
        %v7440 = vpack.c.b16 %v6256, %v6255
        %v7441 = vpack.c.b16 %v6258, %v6257
        %v7442 = vpack.c.b16 %v6260, %v6259
        %v7443 = vpack.c.b16 %v6262, %v6261
        %v7444 = vpack.c.b16 %v6264, %v6263
        %v7445 = vpack.c.b16 %v6266, %v6265
        %v7446 = vpack.c.b16 %v6268, %v6267
        %v7447 = vpack.c.b16 %v6270, %v6269
        %v7448 = vpack.c.b16 %v6272, %v6271
        %v7449 = vpack.c.b16 %v6274, %v6273
        %v7450 = vpack.c.b16 %v6276, %v6275
        %v7451 = vpack.c.b16 %v6278, %v6277
        %v7452 = vpack.c.b16 %v6280, %v6279
        %v7453 = vpack.c.b16 %v6282, %v6281
        %v7454 = vpack.c.b16 %v6284, %v6283
        %v7455 = vpack.c.b16 %v6286, %v6285
        %v7456 = vpack.c.b16 %v6288, %v6287
        %v7457 = vpack.c.b16 %v6290, %v6289
        %v7458 = vpack.c.b16 %v6292, %v6291
        %v7459 = vpack.c.b16 %v6294, %v6293
        %v7460 = vpack.c.b16 %v6296, %v6295
        %v7461 = vpack.c.b16 %v6298, %v6297
        %v7462 = vpack.c.b16 %v6300, %v6299
        %v7463 = vpack.c.b16 %v6302, %v6301
        %v7464 = vpack.c.b16 %v6304, %v6303
        %v7465 = vpack.c.b16 %v6306, %v6305
        %v7466 = vpack.c.b16 %v6308, %v6307
        %v7467 = vpack.c.b16 %v6310, %v6309
        %v7468 = vpack.c.b16 %v6312, %v6311
        %v7469 = vpack.c.b16 %v6314, %v6313
        %v7470 = vpack.c.b16 %v6316, %v6315
        %v7471 = vpack.c.b16 %v6318, %v6317
        %v7472 = vpack.c.b16 %v6320, %v6319
        %v7473 = vpack.c.b16 %v6322, %v6321
        %v7474 = vpack.c.b16 %v6324, %v6323
        %v7475 = vpack.c.b16 %v6326, %v6325
        %v7476 = vpack.c.b16 %v6328, %v6327
        %v7477 = vpack.c.b16 %v6330, %v6329
        %v7478 = vpack.c.b16 %v6332, %v6331
        %v7479 = vpack.c.b16 %v6334, %v6333
        %v7480 = vpack.c.b16 %v6336, %v6335
        %v7481 = vpack.c.b16 %v6338, %v6337
        %v7482 = vpack.c.b16 %v6340, %v6339
        %v7483 = vpack.c.b16 %v6342, %v6341
        %v7484 = vpack.c.b16 %v6344, %v6343
        %v7485 = vpack.c.b16 %v6346, %v6345
        %v7486 = vpack.c.b16 %v6348, %v6347
        %v7487 = vpack.c.b16 %v6350, %v6349
        %v7488 = vpack.c.b16 %v6352, %v6351
        %v7489 = vpack.c.b16 %v6354, %v6353
        %v7490 = vpack.c.b16 %v6356, %v6355
        %v7491 = vpack.c.b16 %v6358, %v6357
        %v7492 = vpack.c.b16 %v6360, %v6359
        %v7493 = vpack.c.b16 %v6362, %v6361
        %v7494 = vpack.c.b16 %v6364, %v6363
        %v7495 = vpack.c.b16 %v6366, %v6365
        %v7496 = vpack.c.b16 %v6368, %v6367
        %v7497 = vpack.c.b16 %v6370, %v6369
        %v7498 = vpack.c.b16 %v6372, %v6371
        %v7499 = vpack.c.b16 %v6374, %v6373
        %v7500 = vpack.c.b16 %v6376, %v6375
        %v7501 = vpack.c.b16 %v6378, %v6377
        %v7502 = vpack.c.b16 %v6380, %v6379
        %v7503 = vpack.c.b16 %v6382, %v6381
        %v7504 = vpack.c.b16 %v6384, %v6383
        %v7505 = vpack.c.b16 %v6386, %v6385
        %v7506 = vpack.c.b16 %v6388, %v6387
        %v7507 = vpack.c.b16 %v6390, %v6389
        %v7508 = vpack.c.b16 %v6392, %v6391
        %v7509 = vpack.c.b16 %v6394, %v6393
        %v7510 = vpack.c.b16 %v6396, %v6395
        %v7511 = vpack.c.b16 %v6398, %v6397
        %v7512 = vpack.c.b16 %v6400, %v6399
        %v7513 = vpack.c.b16 %v6402, %v6401
        %v7514 = vpack.c.b16 %v6404, %v6403
        %v7515 = vpack.c.b16 %v6406, %v6405
        %v7516 = vpack.c.b16 %v6408, %v6407
        %v7517 = vpack.c.b16 %v6410, %v6409
        %v7518 = vpack.c.b16 %v6412, %v6411
        %v7519 = vpack.c.b16 %v6414, %v6413
        %v7520 = vpack.c.b16 %v6416, %v6415
        %v7521 = vpack.c.b16 %v6418, %v6417
        %v7522 = vpack.c.b16 %v6420, %v6419
        %v7523 = vpack.c.b16 %v6422, %v6421
        %v7524 = vpack.c.b16 %v6424, %v6423
        %v7525 = vpack.c.b16 %v6426, %v6425
        %v7526 = vpack.c.b16 %v6428, %v6427
        %v7527 = vpack.c.b16 %v6430, %v6429
        %v7528 = vpack.c.b16 %v6432, %v6431
        %v7529 = vpack.c.b16 %v6434, %v6433
        %v7530 = vpack.c.b16 %v6436, %v6435
        %v7531 = vpack.c.b16 %v6438, %v6437
        %v7532 = vpack.c.b16 %v6440, %v6439
        %v7533 = vpack.c.b16 %v6442, %v6441
        %v7534 = vpack.c.b16 %v6444, %v6443
        %v7535 = vpack.c.b16 %v6446, %v6445
        %v7536 = vpack.c.b16 %v6448, %v6447
        %v7537 = vpack.c.b16 %v6450, %v6449
        %v7538 = vpack.c.b16 %v6452, %v6451
        %v7539 = vpack.c.b16 %v6454, %v6453
        %v7540 = vpack.c.b16 %v6456, %v6455
        %v7541 = vpack.c.b16 %v6458, %v6457
        %v7542 = vpack.c.b16 %v6460, %v6459
        %v7543 = vpack.c.b16 %v6462, %v6461
        %v7544 = vpack.c.b16 %v6464, %v6463
        %v7545 = vpack.c.b16 %v6466, %v6465
        %v7546 = vpack.c.b16 %v6468, %v6467
        %v7547 = vpack.c.b16 %v6470, %v6469
        %v7548 = vpack.c.b16 %v6472, %v6471
        %v7549 = vpack.c.b16 %v6474, %v6473
        %v7550 = vpack.c.b16 %v6476, %v6475
        %v7551 = vpack.c.b16 %v6478, %v6477
        %v7552 = vpack.c.b16 %v6480, %v6479
        %v7553 = vpack.c.b16 %v6482, %v6481
        %v7554 = vpack.c.b16 %v6484, %v6483
        %v7555 = vpack.c.b16 %v6486, %v6485
        %v7556 = vpack.c.b16 %v6488, %v6487
        %v7557 = vpack.c.b16 %v6490, %v6489
        %v7558 = vpack.c.b16 %v6492, %v6491
        %v7559 = vpack.c.b16 %v6494, %v6493
        %v7560 = vpack.c.b16 %v6496, %v6495
        %v7561 = vpack.c.b16 %v6498, %v6497
        %v7562 = vpack.c.b16 %v6500, %v6499
        %v7563 = vpack.c.b16 %v6502, %v6501
        %v7564 = vpack.c.b16 %v6504, %v6503
        %v7565 = vpack.c.b16 %v6506, %v6505
        %v7566 = vpack.c.b16 %v6508, %v6507
        %v7567 = vpack.c.b16 %v6510, %v6509
        %v7568 = vpack.c.b16 %v6512, %v6511
        %v7569 = vpack.c.b16 %v6514, %v6513
        %v7570 = vpack.c.b16 %v6516, %v6515
        %v7571 = vpack.c.b16 %v6518, %v6517
        %v7572 = vpack.c.b16 %v6520, %v6519
        %v7573 = vpack.c.b16 %v6522, %v6521
        %v7574 = vpack.c.b16 %v6524, %v6523
        %v7575 = vpack.c.b16 %v6526, %v6525
        %v7576 = vpack.c.b16 %v6528, %v6527
        %v7577 = vpack.c.b16 %v6530, %v6529
        %v7578 = vpack.c.b16 %v6532, %v6531
        %v7579 = vpack.c.b16 %v6534, %v6533
        %v7580 = vpack.c.b16 %v6536, %v6535
        %v7581 = vpack.c.b16 %v6538, %v6537
        %v7582 = vpack.c.b16 %v6540, %v6539
        %v7583 = vpack.c.b16 %v6542, %v6541
        %v7584 = vpack.c.b16 %v6544, %v6543
        %v7585 = vpack.c.b16 %v6546, %v6545
        %v7586 = vpack.c.b16 %v6548, %v6547
        %v7587 = vpack.c.b16 %v6550, %v6549
        %v7588 = vpack.c.b16 %v6552, %v6551
        %v7589 = vpack.c.b16 %v6554, %v6553
        %v7590 = vpack.c.b16 %v6556, %v6555
        %v7591 = vpack.c.b16 %v6558, %v6557
        %v7592 = vpack.c.b16 %v6560, %v6559
        %v7593 = vpack.c.b16 %v6562, %v6561
        %v7594 = vpack.c.b16 %v6564, %v6563
        %v7595 = vpack.c.b16 %v6566, %v6565
        %v7596 = vpack.c.b16 %v6568, %v6567
        %v7597 = vpack.c.b16 %v6570, %v6569
        %v7598 = vpack.c.b16 %v6572, %v6571
        %v7599 = vpack.c.b16 %v6574, %v6573
        %v7600 = vpack.c.b16 %v6576, %v6575
        %8625 = vmatprep.subr.bf16.mxu0 0
        %8626 = vmatpush1.bf16.msra.mxu0 %v6577
        %8627 = vmatprep.subr.bf16.mxu0 0
        %8628 = vmatpush1.bf16.msra.mxu0 %v6578
        %8629 = vmatprep.subr.bf16.mxu0 0
        %8630 = vmatpush1.bf16.msra.mxu0 %v6579
        %8631 = vmatprep.subr.bf16.mxu0 0
        %8632 = vmatpush1.bf16.msra.mxu0 %v6580
        %8633 = vmatprep.subr.bf16.mxu0 0
        %8634 = vmatpush1.bf16.msra.mxu0 %v6581
        %8635 = vmatprep.subr.bf16.mxu0 0
        %8636 = vmatpush1.bf16.msra.mxu0 %v6582
        %8637 = vmatprep.subr.bf16.mxu0 0
        %8638 = vmatpush1.bf16.msra.mxu0 %v6583
        %8639 = vmatprep.subr.bf16.mxu0 0
        %8640 = vmatpush1.bf16.msra.mxu0 %v6584
        %8641 = vmatprep.subr.bf16.mxu0 0
        %8642 = vmatpush1.bf16.msra.mxu0 %v6585
        %8643 = vmatprep.subr.bf16.mxu0 0
        %8644 = vmatpush1.bf16.msra.mxu0 %v6586
        %8645 = vmatprep.subr.bf16.mxu0 0
        %8646 = vmatpush1.bf16.msra.mxu0 %v6587
        %8647 = vmatprep.subr.bf16.mxu0 0
        %8648 = vmatpush1.bf16.msra.mxu0 %v6588
        %8649 = vmatprep.subr.bf16.mxu0 0
        %8650 = vmatpush1.bf16.msra.mxu0 %v6589
        %8651 = vmatprep.subr.bf16.mxu0 0
        %8652 = vmatpush1.bf16.msra.mxu0 %v6590
        %8653 = vmatprep.subr.bf16.mxu0 0
        %8654 = vmatpush1.bf16.msra.mxu0 %v6591
        %8655 = vmatprep.subr.bf16.mxu0 0
        %8656 = vmatpush1.bf16.msra.mxu0 %v6592
        %8657 = vmatprep.mubr.bf16.mxu0 %v299
        %8658 = vmatmul.mubr.bf16.gmra.mrb[0].mxu0 %v298
        %v8659 = vpop.f32.mrb[0].mxu0
        %v8660 = vadd.f32 %v2479, %v8659
        %v8661 = vpop.f32.mrb[0].mxu0
        %v8662 = vpop.f32.mrb[0].mxu0
        %v8663 = vpop.f32.mrb[0].mxu0
        %8664 = vdwg.mxu0
        %8665 = vmatprep.subr.bf16.mxu0 0
        %8666 = vmatpush1.bf16.msra.mxu0 %v6593
        %8667 = vmatprep.subr.bf16.mxu0 0
        %8668 = vmatpush1.bf16.msra.mxu0 %v6594
        %8669 = vmatprep.subr.bf16.mxu0 0
        %8670 = vmatpush1.bf16.msra.mxu0 %v6595
        %8671 = vmatprep.subr.bf16.mxu0 0
        %8672 = vmatpush1.bf16.msra.mxu0 %v6596
        %8673 = vmatprep.subr.bf16.mxu0 0
        %8674 = vmatpush1.bf16.msra.mxu0 %v6597
        %8675 = vmatprep.subr.bf16.mxu0 0
        %8676 = vmatpush1.bf16.msra.mxu0 %v6598
        %8677 = vmatprep.subr.bf16.mxu0 0
        %8678 = vmatpush1.bf16.msra.mxu0 %v6599
        %8679 = vmatprep.subr.bf16.mxu0 0
        %8680 = vmatpush1.bf16.msra.mxu0 %v6600
        %8681 = vmatprep.subr.bf16.mxu0 0
        %8682 = vmatpush1.bf16.msra.mxu0 %v6601
        %8683 = vmatprep.subr.bf16.mxu0 0
        %8684 = vmatpush1.bf16.msra.mxu0 %v6602
        %8685 = vmatprep.subr.bf16.mxu0 0
        %8686 = vmatpush1.bf16.msra.mxu0 %v6603
        %8687 = vmatprep.subr.bf16.mxu0 0
        %8688 = vmatpush1.bf16.msra.mxu0 %v6604
        %8689 = vmatprep.subr.bf16.mxu0 0
        %8690 = vmatpush1.bf16.msra.mxu0 %v6605
        %8691 = vmatprep.subr.bf16.mxu0 0
        %8692 = vmatpush1.bf16.msra.mxu0 %v6606
        %8693 = vmatprep.subr.bf16.mxu0 0
        %8694 = vmatpush1.bf16.msra.mxu0 %v6607
        %8695 = vmatprep.subr.bf16.mxu0 0
        %8696 = vmatpush1.bf16.msra.mxu0 %v6608
        %8697 = vmatprep.mubr.bf16.mxu0 %v301
        %8698 = vmatmul.mubr.bf16.gmra.mrb[0].mxu0 %v300
        %v8699 = vpop.f32.mrb[0].mxu0
        %v8700 = vadd.f32 %v8660, %v8699
        %v8701 = vpop.f32.mrb[0].mxu0
        %v8702 = vpop.f32.mrb[0].mxu0
        %v8703 = vpop.f32.mrb[0].mxu0
        %8704 = vdwg.mxu0
        %8705 = vmatprep.subr.bf16.mxu0 0
        %8706 = vmatpush1.bf16.msra.mxu0 %v6609
        %8707 = vmatprep.subr.bf16.mxu0 0
        %8708 = vmatpush1.bf16.msra.mxu0 %v6610
        %8709 = vmatprep.subr.bf16.mxu0 0
        %8710 = vmatpush1.bf16.msra.mxu0 %v6611
        %8711 = vmatprep.subr.bf16.mxu0 0
        %8712 = vmatpush1.bf16.msra.mxu0 %v6612
        %8713 = vmatprep.subr.bf16.mxu0 0
        %8714 = vmatpush1.bf16.msra.mxu0 %v6613
        %8715 = vmatprep.subr.bf16.mxu0 0
        %8716 = vmatpush1.bf16.msra.mxu0 %v6614
        %8717 = vmatprep.subr.bf16.mxu0 0
        %8718 = vmatpush1.bf16.msra.mxu0 %v6615
        %8719 = vmatprep.subr.bf16.mxu0 0
        %8720 = vmatpush1.bf16.msra.mxu0 %v6616
        %8721 = vmatprep.subr.bf16.mxu0 0
        %8722 = vmatpush1.bf16.msra.mxu0 %v6617
        %8723 = vmatprep.subr.bf16.mxu0 0
        %8724 = vmatpush1.bf16.msra.mxu0 %v6618
        %8725 = vmatprep.subr.bf16.mxu0 0
        %8726 = vmatpush1.bf16.msra.mxu0 %v6619
        %8727 = vmatprep.subr.bf16.mxu0 0
        %8728 = vmatpush1.bf16.msra.mxu0 %v6620
        %8729 = vmatprep.subr.bf16.mxu0 0
        %8730 = vmatpush1.bf16.msra.mxu0 %v6621
        %8731 = vmatprep.subr.bf16.mxu0 0
        %8732 = vmatpush1.bf16.msra.mxu0 %v6622
        %8733 = vmatprep.subr.bf16.mxu0 0
        %8734 = vmatpush1.bf16.msra.mxu0 %v6623
        %8735 = vmatprep.subr.bf16.mxu0 0
        %8736 = vmatpush1.bf16.msra.mxu0 %v6624
        %8737 = vmatprep.mubr.bf16.mxu0 %v303
        %8738 = vmatmul.mubr.bf16.gmra.mrb[0].mxu0 %v302
        %v8739 = vpop.f32.mrb[0].mxu0
        %v8740 = vadd.f32 %v8700, %v8739
        %v8741 = vpop.f32.mrb[0].mxu0
        %v8742 = vpop.f32.mrb[0].mxu0
        %v8743 = vpop.f32.mrb[0].mxu0
        %8744 = vdwg.mxu0
        %8745 = vmatprep.subr.bf16.mxu0 0
        %8746 = vmatpush1.bf16.msra.mxu0 %v6625
        %8747 = vmatprep.subr.bf16.mxu0 0
        %8748 = vmatpush1.bf16.msra.mxu0 %v6626
        %8749 = vmatprep.subr.bf16.mxu0 0
        %8750 = vmatpush1.bf16.msra.mxu0 %v6627
        %8751 = vmatprep.subr.bf16.mxu0 0
        %8752 = vmatpush1.bf16.msra.mxu0 %v6628
        %8753 = vmatprep.subr.bf16.mxu0 0
        %8754 = vmatpush1.bf16.msra.mxu0 %v6629
        %8755 = vmatprep.subr.bf16.mxu0 0
        %8756 = vmatpush1.bf16.msra.mxu0 %v6630
        %8757 = vmatprep.subr.bf16.mxu0 0
        %8758 = vmatpush1.bf16.msra.mxu0 %v6631
        %8759 = vmatprep.subr.bf16.mxu0 0
        %8760 = vmatpush1.bf16.msra.mxu0 %v6632
        %8761 = vmatprep.subr.bf16.mxu0 0
        %8762 = vmatpush1.bf16.msra.mxu0 %v6633
        %8763 = vmatprep.subr.bf16.mxu0 0
        %8764 = vmatpush1.bf16.msra.mxu0 %v6634
        %8765 = vmatprep.subr.bf16.mxu0 0
        %8766 = vmatpush1.bf16.msra.mxu0 %v6635
        %8767 = vmatprep.subr.bf16.mxu0 0
        %8768 = vmatpush1.bf16.msra.mxu0 %v6636
        %8769 = vmatprep.subr.bf16.mxu0 0
        %8770 = vmatpush1.bf16.msra.mxu0 %v6637
        %8771 = vmatprep.subr.bf16.mxu0 0
        %8772 = vmatpush1.bf16.msra.mxu0 %v6638
        %8773 = vmatprep.subr.bf16.mxu0 0
        %8774 = vmatpush1.bf16.msra.mxu0 %v6639
        %8775 = vmatprep.subr.bf16.mxu0 0
        %8776 = vmatpush1.bf16.msra.mxu0 %v6640
        %8777 = vmatprep.mubr.bf16.mxu0 %v305
        %8778 = vmatmul.mubr.bf16.gmra.mrb[0].mxu0 %v304
        %v8779 = vpop.f32.mrb[0].mxu0
        %v8780 = vadd.f32 %v8740, %v8779
        %v8781 = vpop.f32.mrb[0].mxu0
        %v8782 = vpop.f32.mrb[0].mxu0
        %v8783 = vpop.f32.mrb[0].mxu0
        %8784 = vdwg.mxu0
        %8785 = vmatprep.subr.bf16.mxu0 0
        %8786 = vmatpush1.bf16.msra.mxu0 %v6641
        %8787 = vmatprep.subr.bf16.mxu0 0
        %8788 = vmatpush1.bf16.msra.mxu0 %v6642
        %8789 = vmatprep.subr.bf16.mxu0 0
        %8790 = vmatpush1.bf16.msra.mxu0 %v6643
        %8791 = vmatprep.subr.bf16.mxu0 0
        %8792 = vmatpush1.bf16.msra.mxu0 %v6644
        %8793 = vmatprep.subr.bf16.mxu0 0
        %8794 = vmatpush1.bf16.msra.mxu0 %v6645
        %8795 = vmatprep.subr.bf16.mxu0 0
        %8796 = vmatpush1.bf16.msra.mxu0 %v6646
        %8797 = vmatprep.subr.bf16.mxu0 0
        %8798 = vmatpush1.bf16.msra.mxu0 %v6647
        %8799 = vmatprep.subr.bf16.mxu0 0
        %8800 = vmatpush1.bf16.msra.mxu0 %v6648
        %8801 = vmatprep.subr.bf16.mxu0 0
        %8802 = vmatpush1.bf16.msra.mxu0 %v6649
        %8803 = vmatprep.subr.bf16.mxu0 0
        %8804 = vmatpush1.bf16.msra.mxu0 %v6650
        %8805 = vmatprep.subr.bf16.mxu0 0
        %8806 = vmatpush1.bf16.msra.mxu0 %v6651
        %8807 = vmatprep.subr.bf16.mxu0 0
        %8808 = vmatpush1.bf16.msra.mxu0 %v6652
        %8809 = vmatprep.subr.bf16.mxu0 0
        %8810 = vmatpush1.bf16.msra.mxu0 %v6653
        %8811 = vmatprep.subr.bf16.mxu0 0
        %8812 = vmatpush1.bf16.msra.mxu0 %v6654
        %8813 = vmatprep.subr.bf16.mxu0 0
        %8814 = vmatpush1.bf16.msra.mxu0 %v6655
        %8815 = vmatprep.subr.bf16.mxu0 0
        %8816 = vmatpush1.bf16.msra.mxu0 %v6656
        %8817 = vmatprep.mubr.bf16.mxu0 %v307
        %8818 = vmatmul.mubr.bf16.gmra.mrb[0].mxu0 %v306
        %v8819 = vpop.f32.mrb[0].mxu0
        %v8820 = vadd.f32 %v8780, %v8819
        %v8821 = vpop.f32.mrb[0].mxu0
        %v8822 = vpop.f32.mrb[0].mxu0
        %v8823 = vpop.f32.mrb[0].mxu0
        %8824 = vdwg.mxu0
        %8825 = vmatprep.subr.bf16.mxu0 0
        %8826 = vmatpush1.bf16.msra.mxu0 %v6657
        %8827 = vmatprep.subr.bf16.mxu0 0
        %8828 = vmatpush1.bf16.msra.mxu0 %v6658
        %8829 = vmatprep.subr.bf16.mxu0 0
        %8830 = vmatpush1.bf16.msra.mxu0 %v6659
        %8831 = vmatprep.subr.bf16.mxu0 0
        %8832 = vmatpush1.bf16.msra.mxu0 %v6660
        %8833 = vmatprep.subr.bf16.mxu0 0
        %8834 = vmatpush1.bf16.msra.mxu0 %v6661
        %8835 = vmatprep.subr.bf16.mxu0 0
        %8836 = vmatpush1.bf16.msra.mxu0 %v6662
        %8837 = vmatprep.subr.bf16.mxu0 0
        %8838 = vmatpush1.bf16.msra.mxu0 %v6663
        %8839 = vmatprep.subr.bf16.mxu0 0
        %8840 = vmatpush1.bf16.msra.mxu0 %v6664
        %8841 = vmatprep.subr.bf16.mxu0 0
        %8842 = vmatpush1.bf16.msra.mxu0 %v6665
        %8843 = vmatprep.subr.bf16.mxu0 0
        %8844 = vmatpush1.bf16.msra.mxu0 %v6666
        %8845 = vmatprep.subr.bf16.mxu0 0
        %8846 = vmatpush1.bf16.msra.mxu0 %v6667
        %8847 = vmatprep.subr.bf16.mxu0 0
        %8848 = vmatpush1.bf16.msra.mxu0 %v6668
        %8849 = vmatprep.subr.bf16.mxu0 0
        %8850 = vmatpush1.bf16.msra.mxu0 %v6669
        %8851 = vmatprep.subr.bf16.mxu0 0
        %8852 = vmatpush1.bf16.msra.mxu0 %v6670
        %8853 = vmatprep.subr.bf16.mxu0 0
        %8854 = vmatpush1.bf16.msra.mxu0 %v6671
        %8855 = vmatprep.subr.bf16.mxu0 0
        %8856 = vmatpush1.bf16.msra.mxu0 %v6672
        %8857 = vmatprep.mubr.bf16.mxu0 %v309
        %8858 = vmatmul.mubr.bf16.gmra.mrb[0].mxu0 %v308
        %v8859 = vpop.f32.mrb[0].mxu0
        %v8860 = vadd.f32 %v8820, %v8859
        %v8861 = vpop.f32.mrb[0].mxu0
        %v8862 = vpop.f32.mrb[0].mxu0
        %v8863 = vpop.f32.mrb[0].mxu0
        %8864 = vdwg.mxu0
        %8865 = vmatprep.subr.bf16.mxu0 0
        %8866 = vmatpush1.bf16.msra.mxu0 %v6673
        %8867 = vmatprep.subr.bf16.mxu0 0
        %8868 = vmatpush1.bf16.msra.mxu0 %v6674
        %8869 = vmatprep.subr.bf16.mxu0 0
        %8870 = vmatpush1.bf16.msra.mxu0 %v6675
        %8871 = vmatprep.subr.bf16.mxu0 0
        %8872 = vmatpush1.bf16.msra.mxu0 %v6676
        %8873 = vmatprep.subr.bf16.mxu0 0
        %8874 = vmatpush1.bf16.msra.mxu0 %v6677
        %8875 = vmatprep.subr.bf16.mxu0 0
        %8876 = vmatpush1.bf16.msra.mxu0 %v6678
        %8877 = vmatprep.subr.bf16.mxu0 0
        %8878 = vmatpush1.bf16.msra.mxu0 %v6679
        %8879 = vmatprep.subr.bf16.mxu0 0
        %8880 = vmatpush1.bf16.msra.mxu0 %v6680
        %8881 = vmatprep.subr.bf16.mxu0 0
        %8882 = vmatpush1.bf16.msra.mxu0 %v6681
        %8883 = vmatprep.subr.bf16.mxu0 0
        %8884 = vmatpush1.bf16.msra.mxu0 %v6682
        %8885 = vmatprep.subr.bf16.mxu0 0
        %8886 = vmatpush1.bf16.msra.mxu0 %v6683
        %8887 = vmatprep.subr.bf16.mxu0 0
        %8888 = vmatpush1.bf16.msra.mxu0 %v6684
        %8889 = vmatprep.subr.bf16.mxu0 0
        %8890 = vmatpush1.bf16.msra.mxu0 %v6685
        %8891 = vmatprep.subr.bf16.mxu0 0
        %8892 = vmatpush1.bf16.msra.mxu0 %v6686
        %8893 = vmatprep.subr.bf16.mxu0 0
        %8894 = vmatpush1.bf16.msra.mxu0 %v6687
        %8895 = vmatprep.subr.bf16.mxu0 0
        %8896 = vmatpush1.bf16.msra.mxu0 %v6688
        %8897 = vmatprep.mubr.bf16.mxu0 %v311
        %8898 = vmatmul.mubr.bf16.gmra.mrb[0].mxu0 %v310
        %v8899 = vpop.f32.mrb[0].mxu0
        %v8900 = vadd.f32 %v8860, %v8899
        %v8901 = vpop.f32.mrb[0].mxu0
        %v8902 = vpop.f32.mrb[0].mxu0
        %v8903 = vpop.f32.mrb[0].mxu0
        %8904 = vdwg.mxu0
        %8905 = vmatprep.subr.bf16.mxu0 0
        %8906 = vmatpush1.bf16.msra.mxu0 %v6689
        %8907 = vmatprep.subr.bf16.mxu0 0
        %8908 = vmatpush1.bf16.msra.mxu0 %v6690
        %8909 = vmatprep.subr.bf16.mxu0 0
        %8910 = vmatpush1.bf16.msra.mxu0 %v6691
        %8911 = vmatprep.subr.bf16.mxu0 0
        %8912 = vmatpush1.bf16.msra.mxu0 %v6692
        %8913 = vmatprep.subr.bf16.mxu0 0
        %8914 = vmatpush1.bf16.msra.mxu0 %v6693
        %8915 = vmatprep.subr.bf16.mxu0 0
        %8916 = vmatpush1.bf16.msra.mxu0 %v6694
        %8917 = vmatprep.subr.bf16.mxu0 0
        %8918 = vmatpush1.bf16.msra.mxu0 %v6695
        %8919 = vmatprep.subr.bf16.mxu0 0
        %8920 = vmatpush1.bf16.msra.mxu0 %v6696
        %8921 = vmatprep.subr.bf16.mxu0 0
        %8922 = vmatpush1.bf16.msra.mxu0 %v6697
        %8923 = vmatprep.subr.bf16.mxu0 0
        %8924 = vmatpush1.bf16.msra.mxu0 %v6698
        %8925 = vmatprep.subr.bf16.mxu0 0
        %8926 = vmatpush1.bf16.msra.mxu0 %v6699
        %8927 = vmatprep.subr.bf16.mxu0 0
        %8928 = vmatpush1.bf16.msra.mxu0 %v6700
        %8929 = vmatprep.subr.bf16.mxu0 0
        %8930 = vmatpush1.bf16.msra.mxu0 %v6701
        %8931 = vmatprep.subr.bf16.mxu0 0
        %8932 = vmatpush1.bf16.msra.mxu0 %v6702
        %8933 = vmatprep.subr.bf16.mxu0 0
        %8934 = vmatpush1.bf16.msra.mxu0 %v6703
        %8935 = vmatprep.subr.bf16.mxu0 0
        %8936 = vmatpush1.bf16.msra.mxu0 %v6704
        %8937 = vmatprep.mubr.bf16.mxu0 %v313
        %8938 = vmatmul.mubr.bf16.gmra.mrb[0].mxu0 %v312
        %v8939 = vpop.f32.mrb[0].mxu0
        %v8940 = vadd.f32 %v8900, %v8939
        %v8941 = vpop.f32.mrb[0].mxu0
        %v8942 = vpop.f32.mrb[0].mxu0
        %v8943 = vpop.f32.mrb[0].mxu0
        %8944 = vdwg.mxu0
        %8945 = vmatprep.subr.bf16.mxu0 0
        %8946 = vmatpush1.bf16.msra.mxu0 %v6705
        %8947 = vmatprep.subr.bf16.mxu0 0
        %8948 = vmatpush1.bf16.msra.mxu0 %v6706
        %8949 = vmatprep.subr.bf16.mxu0 0
        %8950 = vmatpush1.bf16.msra.mxu0 %v6707
        %8951 = vmatprep.subr.bf16.mxu0 0
        %8952 = vmatpush1.bf16.msra.mxu0 %v6708
        %8953 = vmatprep.subr.bf16.mxu0 0
        %8954 = vmatpush1.bf16.msra.mxu0 %v6709
        %8955 = vmatprep.subr.bf16.mxu0 0
        %8956 = vmatpush1.bf16.msra.mxu0 %v6710
        %8957 = vmatprep.subr.bf16.mxu0 0
        %8958 = vmatpush1.bf16.msra.mxu0 %v6711
        %8959 = vmatprep.subr.bf16.mxu0 0
        %8960 = vmatpush1.bf16.msra.mxu0 %v6712
        %8961 = vmatprep.subr.bf16.mxu0 0
        %8962 = vmatpush1.bf16.msra.mxu0 %v6713
        %8963 = vmatprep.subr.bf16.mxu0 0
        %8964 = vmatpush1.bf16.msra.mxu0 %v6714
        %8965 = vmatprep.subr.bf16.mxu0 0
        %8966 = vmatpush1.bf16.msra.mxu0 %v6715
        %8967 = vmatprep.subr.bf16.mxu0 0
        %8968 = vmatpush1.bf16.msra.mxu0 %v6716
        %8969 = vmatprep.subr.bf16.mxu0 0
        %8970 = vmatpush1.bf16.msra.mxu0 %v6717
        %8971 = vmatprep.subr.bf16.mxu0 0
        %8972 = vmatpush1.bf16.msra.mxu0 %v6718
        %8973 = vmatprep.subr.bf16.mxu0 0
        %8974 = vmatpush1.bf16.msra.mxu0 %v6719
        %8975 = vmatprep.subr.bf16.mxu0 0
        %8976 = vmatpush1.bf16.msra.mxu0 %v6720
        %8977 = vmatprep.mubr.bf16.mxu0 %v315
        %8978 = vmatmul.mubr.bf16.gmra.mrb[0].mxu0 %v314
        %v8979 = vpop.f32.mrb[0].mxu0
        %v8980 = vadd.f32 %v8940, %v8979
        %v8981 = vpop.f32.mrb[0].mxu0
        %v8982 = vpop.f32.mrb[0].mxu0
        %v8983 = vpop.f32.mrb[0].mxu0
        %8984 = vdwg.mxu0
        %8985 = vmatprep.subr.bf16.mxu0 0
        %8986 = vmatpush1.bf16.msra.mxu0 %v6721
        %8987 = vmatprep.subr.bf16.mxu0 0
        %8988 = vmatpush1.bf16.msra.mxu0 %v6722
        %8989 = vmatprep.subr.bf16.mxu0 0
        %8990 = vmatpush1.bf16.msra.mxu0 %v6723
        %8991 = vmatprep.subr.bf16.mxu0 0
        %8992 = vmatpush1.bf16.msra.mxu0 %v6724
        %8993 = vmatprep.subr.bf16.mxu0 0
        %8994 = vmatpush1.bf16.msra.mxu0 %v6725
        %8995 = vmatprep.subr.bf16.mxu0 0
        %8996 = vmatpush1.bf16.msra.mxu0 %v6726
        %8997 = vmatprep.subr.bf16.mxu0 0
        %8998 = vmatpush1.bf16.msra.mxu0 %v6727
        %8999 = vmatprep.subr.bf16.mxu0 0
        %9000 = vmatpush1.bf16.msra.mxu0 %v6728
        %9001 = vmatprep.subr.bf16.mxu0 0
        %9002 = vmatpush1.bf16.msra.mxu0 %v6729
        %9003 = vmatprep.subr.bf16.mxu0 0
        %9004 = vmatpush1.bf16.msra.mxu0 %v6730
        %9005 = vmatprep.subr.bf16.mxu0 0
        %9006 = vmatpush1.bf16.msra.mxu0 %v6731
        %9007 = vmatprep.subr.bf16.mxu0 0
        %9008 = vmatpush1.bf16.msra.mxu0 %v6732
        %9009 = vmatprep.subr.bf16.mxu0 0
        %9010 = vmatpush1.bf16.msra.mxu0 %v6733
        %9011 = vmatprep.subr.bf16.mxu0 0
        %9012 = vmatpush1.bf16.msra.mxu0 %v6734
        %9013 = vmatprep.subr.bf16.mxu0 0
        %9014 = vmatpush1.bf16.msra.mxu0 %v6735
        %9015 = vmatprep.subr.bf16.mxu0 0
        %9016 = vmatpush1.bf16.msra.mxu0 %v6736
        %9017 = vmatprep.mubr.bf16.mxu0 %v317
        %9018 = vmatmul.mubr.bf16.gmra.mrb[0].mxu0 %v316
        %v9019 = vpop.f32.mrb[0].mxu0
        %v9020 = vadd.f32 %v8980, %v9019
        %v9021 = vpop.f32.mrb[0].mxu0
        %v9022 = vpop.f32.mrb[0].mxu0
        %v9023 = vpop.f32.mrb[0].mxu0
        %9024 = vdwg.mxu0
        %9025 = vmatprep.subr.bf16.mxu0 0
        %9026 = vmatpush1.bf16.msra.mxu0 %v6737
        %9027 = vmatprep.subr.bf16.mxu0 0
        %9028 = vmatpush1.bf16.msra.mxu0 %v6738
        %9029 = vmatprep.subr.bf16.mxu0 0
        %9030 = vmatpush1.bf16.msra.mxu0 %v6739
        %9031 = vmatprep.subr.bf16.mxu0 0
        %9032 = vmatpush1.bf16.msra.mxu0 %v6740
        %9033 = vmatprep.subr.bf16.mxu0 0
        %9034 = vmatpush1.bf16.msra.mxu0 %v6741
        %9035 = vmatprep.subr.bf16.mxu0 0
        %9036 = vmatpush1.bf16.msra.mxu0 %v6742
        %9037 = vmatprep.subr.bf16.mxu0 0
        %9038 = vmatpush1.bf16.msra.mxu0 %v6743
        %9039 = vmatprep.subr.bf16.mxu0 0
        %9040 = vmatpush1.bf16.msra.mxu0 %v6744
        %9041 = vmatprep.subr.bf16.mxu0 0
        %9042 = vmatpush1.bf16.msra.mxu0 %v6745
        %9043 = vmatprep.subr.bf16.mxu0 0
        %9044 = vmatpush1.bf16.msra.mxu0 %v6746
        %9045 = vmatprep.subr.bf16.mxu0 0
        %9046 = vmatpush1.bf16.msra.mxu0 %v6747
        %9047 = vmatprep.subr.bf16.mxu0 0
        %9048 = vmatpush1.bf16.msra.mxu0 %v6748
        %9049 = vmatprep.subr.bf16.mxu0 0
        %9050 = vmatpush1.bf16.msra.mxu0 %v6749
        %9051 = vmatprep.subr.bf16.mxu0 0
        %9052 = vmatpush1.bf16.msra.mxu0 %v6750
        %9053 = vmatprep.subr.bf16.mxu0 0
        %9054 = vmatpush1.bf16.msra.mxu0 %v6751
        %9055 = vmatprep.subr.bf16.mxu0 0
        %9056 = vmatpush1.bf16.msra.mxu0 %v6752
        %9057 = vmatprep.mubr.bf16.mxu0 %v319
        %9058 = vmatmul.mubr.bf16.gmra.mrb[0].mxu0 %v318
        %v9059 = vpop.f32.mrb[0].mxu0
        %v9060 = vadd.f32 %v9020, %v9059
        %v9061 = vpop.f32.mrb[0].mxu0
        %v9062 = vpop.f32.mrb[0].mxu0
        %v9063 = vpop.f32.mrb[0].mxu0
        %9064 = vdwg.mxu0
        %9065 = vmatprep.subr.bf16.mxu0 0
        %9066 = vmatpush1.bf16.msra.mxu0 %v6753
        %9067 = vmatprep.subr.bf16.mxu0 0
        %9068 = vmatpush1.bf16.msra.mxu0 %v6754
        %9069 = vmatprep.subr.bf16.mxu0 0
        %9070 = vmatpush1.bf16.msra.mxu0 %v6755
        %9071 = vmatprep.subr.bf16.mxu0 0
        %9072 = vmatpush1.bf16.msra.mxu0 %v6756
        %9073 = vmatprep.subr.bf16.mxu0 0
        %9074 = vmatpush1.bf16.msra.mxu0 %v6757
        %9075 = vmatprep.subr.bf16.mxu0 0
        %9076 = vmatpush1.bf16.msra.mxu0 %v6758
        %9077 = vmatprep.subr.bf16.mxu0 0
        %9078 = vmatpush1.bf16.msra.mxu0 %v6759
        %9079 = vmatprep.subr.bf16.mxu0 0
        %9080 = vmatpush1.bf16.msra.mxu0 %v6760
        %9081 = vmatprep.subr.bf16.mxu0 0
        %9082 = vmatpush1.bf16.msra.mxu0 %v6761
        %9083 = vmatprep.subr.bf16.mxu0 0
        %9084 = vmatpush1.bf16.msra.mxu0 %v6762
        %9085 = vmatprep.subr.bf16.mxu0 0
        %9086 = vmatpush1.bf16.msra.mxu0 %v6763
        %9087 = vmatprep.subr.bf16.mxu0 0
        %9088 = vmatpush1.bf16.msra.mxu0 %v6764
        %9089 = vmatprep.subr.bf16.mxu0 0
        %9090 = vmatpush1.bf16.msra.mxu0 %v6765
        %9091 = vmatprep.subr.bf16.mxu0 0
        %9092 = vmatpush1.bf16.msra.mxu0 %v6766
        %9093 = vmatprep.subr.bf16.mxu0 0
        %9094 = vmatpush1.bf16.msra.mxu0 %v6767
        %9095 = vmatprep.subr.bf16.mxu0 0
        %9096 = vmatpush1.bf16.msra.mxu0 %v6768
        %9097 = vmatprep.mubr.bf16.mxu0 %v321
        %9098 = vmatmul.mubr.bf16.gmra.mrb[0].mxu0 %v320
        %v9099 = vpop.f32.mrb[0].mxu0
        %v9100 = vadd.f32 %v9060, %v9099
        %v9101 = vpop.f32.mrb[0].mxu0
        %v9102 = vpop.f32.mrb[0].mxu0
        %v9103 = vpop.f32.mrb[0].mxu0
        %9104 = vdwg.mxu0
        %9105 = vmatprep.subr.bf16.mxu0 0
        %9106 = vmatpush1.bf16.msra.mxu0 %v6769
        %9107 = vmatprep.subr.bf16.mxu0 0
        %9108 = vmatpush1.bf16.msra.mxu0 %v6770
        %9109 = vmatprep.subr.bf16.mxu0 0
        %9110 = vmatpush1.bf16.msra.mxu0 %v6771
        %9111 = vmatprep.subr.bf16.mxu0 0
        %9112 = vmatpush1.bf16.msra.mxu0 %v6772
        %9113 = vmatprep.subr.bf16.mxu0 0
        %9114 = vmatpush1.bf16.msra.mxu0 %v6773
        %9115 = vmatprep.subr.bf16.mxu0 0
        %9116 = vmatpush1.bf16.msra.mxu0 %v6774
        %9117 = vmatprep.subr.bf16.mxu0 0
        %9118 = vmatpush1.bf16.msra.mxu0 %v6775
        %9119 = vmatprep.subr.bf16.mxu0 0
        %9120 = vmatpush1.bf16.msra.mxu0 %v6776
        %9121 = vmatprep.subr.bf16.mxu0 0
        %9122 = vmatpush1.bf16.msra.mxu0 %v6777
        %9123 = vmatprep.subr.bf16.mxu0 0
        %9124 = vmatpush1.bf16.msra.mxu0 %v6778
        %9125 = vmatprep.subr.bf16.mxu0 0
        %9126 = vmatpush1.bf16.msra.mxu0 %v6779
        %9127 = vmatprep.subr.bf16.mxu0 0
        %9128 = vmatpush1.bf16.msra.mxu0 %v6780
        %9129 = vmatprep.subr.bf16.mxu0 0
        %9130 = vmatpush1.bf16.msra.mxu0 %v6781
        %9131 = vmatprep.subr.bf16.mxu0 0
        %9132 = vmatpush1.bf16.msra.mxu0 %v6782
        %9133 = vmatprep.subr.bf16.mxu0 0
        %9134 = vmatpush1.bf16.msra.mxu0 %v6783
        %9135 = vmatprep.subr.bf16.mxu0 0
        %9136 = vmatpush1.bf16.msra.mxu0 %v6784
        %9137 = vmatprep.mubr.bf16.mxu0 %v323
        %9138 = vmatmul.mubr.bf16.gmra.mrb[0].mxu0 %v322
        %v9139 = vpop.f32.mrb[0].mxu0
        %v9140 = vadd.f32 %v9100, %v9139
        %v9141 = vpop.f32.mrb[0].mxu0
        %v9142 = vpop.f32.mrb[0].mxu0
        %v9143 = vpop.f32.mrb[0].mxu0
        %9144 = vdwg.mxu0
        %9145 = vmatprep.subr.bf16.mxu0 0
        %9146 = vmatpush1.bf16.msra.mxu0 %v6785
        %9147 = vmatprep.subr.bf16.mxu0 0
        %9148 = vmatpush1.bf16.msra.mxu0 %v6786
        %9149 = vmatprep.subr.bf16.mxu0 0
        %9150 = vmatpush1.bf16.msra.mxu0 %v6787
        %9151 = vmatprep.subr.bf16.mxu0 0
        %9152 = vmatpush1.bf16.msra.mxu0 %v6788
        %9153 = vmatprep.subr.bf16.mxu0 0
        %9154 = vmatpush1.bf16.msra.mxu0 %v6789
        %9155 = vmatprep.subr.bf16.mxu0 0
        %9156 = vmatpush1.bf16.msra.mxu0 %v6790
        %9157 = vmatprep.subr.bf16.mxu0 0
        %9158 = vmatpush1.bf16.msra.mxu0 %v6791
        %9159 = vmatprep.subr.bf16.mxu0 0
        %9160 = vmatpush1.bf16.msra.mxu0 %v6792
        %9161 = vmatprep.subr.bf16.mxu0 0
        %9162 = vmatpush1.bf16.msra.mxu0 %v6793
        %9163 = vmatprep.subr.bf16.mxu0 0
        %9164 = vmatpush1.bf16.msra.mxu0 %v6794
        %9165 = vmatprep.subr.bf16.mxu0 0
        %9166 = vmatpush1.bf16.msra.mxu0 %v6795
        %9167 = vmatprep.subr.bf16.mxu0 0
        %9168 = vmatpush1.bf16.msra.mxu0 %v6796
        %9169 = vmatprep.subr.bf16.mxu0 0
        %9170 = vmatpush1.bf16.msra.mxu0 %v6797
        %9171 = vmatprep.subr.bf16.mxu0 0
        %9172 = vmatpush1.bf16.msra.mxu0 %v6798
        %9173 = vmatprep.subr.bf16.mxu0 0
        %9174 = vmatpush1.bf16.msra.mxu0 %v6799
        %9175 = vmatprep.subr.bf16.mxu0 0
        %9176 = vmatpush1.bf16.msra.mxu0 %v6800
        %9177 = vmatprep.mubr.bf16.mxu0 %v325
        %9178 = vmatmul.mubr.bf16.gmra.mrb[0].mxu0 %v324
        %v9179 = vpop.f32.mrb[0].mxu0
        %v9180 = vadd.f32 %v9140, %v9179
        %v9181 = vpop.f32.mrb[0].mxu0
        %v9182 = vpop.f32.mrb[0].mxu0
        %v9183 = vpop.f32.mrb[0].mxu0
        %9184 = vdwg.mxu0
        %9185 = vmatprep.subr.bf16.mxu0 0
        %9186 = vmatpush1.bf16.msra.mxu0 %v6801
        %9187 = vmatprep.subr.bf16.mxu0 0
        %9188 = vmatpush1.bf16.msra.mxu0 %v6802
        %9189 = vmatprep.subr.bf16.mxu0 0
        %9190 = vmatpush1.bf16.msra.mxu0 %v6803
        %9191 = vmatprep.subr.bf16.mxu0 0
        %9192 = vmatpush1.bf16.msra.mxu0 %v6804
        %9193 = vmatprep.subr.bf16.mxu0 0
        %9194 = vmatpush1.bf16.msra.mxu0 %v6805
        %9195 = vmatprep.subr.bf16.mxu0 0
        %9196 = vmatpush1.bf16.msra.mxu0 %v6806
        %9197 = vmatprep.subr.bf16.mxu0 0
        %9198 = vmatpush1.bf16.msra.mxu0 %v6807
        %9199 = vmatprep.subr.bf16.mxu0 0
        %9200 = vmatpush1.bf16.msra.mxu0 %v6808
        %9201 = vmatprep.subr.bf16.mxu0 0
        %9202 = vmatpush1.bf16.msra.mxu0 %v6809
        %9203 = vmatprep.subr.bf16.mxu0 0
        %9204 = vmatpush1.bf16.msra.mxu0 %v6810
        %9205 = vmatprep.subr.bf16.mxu0 0
        %9206 = vmatpush1.bf16.msra.mxu0 %v6811
        %9207 = vmatprep.subr.bf16.mxu0 0
        %9208 = vmatpush1.bf16.msra.mxu0 %v6812
        %9209 = vmatprep.subr.bf16.mxu0 0
        %9210 = vmatpush1.bf16.msra.mxu0 %v6813
        %9211 = vmatprep.subr.bf16.mxu0 0
        %9212 = vmatpush1.bf16.msra.mxu0 %v6814
        %9213 = vmatprep.subr.bf16.mxu0 0
        %9214 = vmatpush1.bf16.msra.mxu0 %v6815
        %9215 = vmatprep.subr.bf16.mxu0 0
        %9216 = vmatpush1.bf16.msra.mxu0 %v6816
        %9217 = vmatprep.mubr.bf16.mxu0 %v327
        %9218 = vmatmul.mubr.bf16.gmra.mrb[0].mxu0 %v326
        %v9219 = vpop.f32.mrb[0].mxu0
        %v9220 = vadd.f32 %v9180, %v9219
        %v9221 = vpop.f32.mrb[0].mxu0
        %v9222 = vpop.f32.mrb[0].mxu0
        %v9223 = vpop.f32.mrb[0].mxu0
        %9224 = vdwg.mxu0
        %9225 = vmatprep.subr.bf16.mxu0 0
        %9226 = vmatpush1.bf16.msra.mxu0 %v6817
        %9227 = vmatprep.subr.bf16.mxu0 0
        %9228 = vmatpush1.bf16.msra.mxu0 %v6818
        %9229 = vmatprep.subr.bf16.mxu0 0
        %9230 = vmatpush1.bf16.msra.mxu0 %v6819
        %9231 = vmatprep.subr.bf16.mxu0 0
        %9232 = vmatpush1.bf16.msra.mxu0 %v6820
        %9233 = vmatprep.subr.bf16.mxu0 0
        %9234 = vmatpush1.bf16.msra.mxu0 %v6821
        %9235 = vmatprep.subr.bf16.mxu0 0
        %9236 = vmatpush1.bf16.msra.mxu0 %v6822
        %9237 = vmatprep.subr.bf16.mxu0 0
        %9238 = vmatpush1.bf16.msra.mxu0 %v6823
        %9239 = vmatprep.subr.bf16.mxu0 0
        %9240 = vmatpush1.bf16.msra.mxu0 %v6824
        %9241 = vmatprep.subr.bf16.mxu0 0
        %9242 = vmatpush1.bf16.msra.mxu0 %v6825
        %9243 = vmatprep.subr.bf16.mxu0 0
        %9244 = vmatpush1.bf16.msra.mxu0 %v6826
        %9245 = vmatprep.subr.bf16.mxu0 0
        %9246 = vmatpush1.bf16.msra.mxu0 %v6827
        %9247 = vmatprep.subr.bf16.mxu0 0
        %9248 = vmatpush1.bf16.msra.mxu0 %v6828
        %9249 = vmatprep.subr.bf16.mxu0 0
        %9250 = vmatpush1.bf16.msra.mxu0 %v6829
        %9251 = vmatprep.subr.bf16.mxu0 0
        %9252 = vmatpush1.bf16.msra.mxu0 %v6830
        %9253 = vmatprep.subr.bf16.mxu0 0
        %9254 = vmatpush1.bf16.msra.mxu0 %v6831
        %9255 = vmatprep.subr.bf16.mxu0 0
        %9256 = vmatpush1.bf16.msra.mxu0 %v6832
        %9257 = vmatprep.mubr.bf16.mxu0 %v329
        %9258 = vmatmul.mubr.bf16.gmra.mrb[0].mxu0 %v328
        %v9259 = vpop.f32.mrb[0].mxu0
        %v9260 = vadd.f32 %v9220, %v9259
        %v9261 = vpop.f32.mrb[0].mxu0
        %v9262 = vpop.f32.mrb[0].mxu0
        %v9263 = vpop.f32.mrb[0].mxu0
        %9264 = vdwg.mxu0
        %9265 = vmatprep.subr.bf16.mxu0 0
        %9266 = vmatpush1.bf16.msra.mxu0 %v6833
        %9267 = vmatprep.subr.bf16.mxu0 0
        %9268 = vmatpush1.bf16.msra.mxu0 %v6834
        %9269 = vmatprep.subr.bf16.mxu0 0
        %9270 = vmatpush1.bf16.msra.mxu0 %v6835
        %9271 = vmatprep.subr.bf16.mxu0 0
        %9272 = vmatpush1.bf16.msra.mxu0 %v6836
        %9273 = vmatprep.subr.bf16.mxu0 0
        %9274 = vmatpush1.bf16.msra.mxu0 %v6837
        %9275 = vmatprep.subr.bf16.mxu0 0
        %9276 = vmatpush1.bf16.msra.mxu0 %v6838
        %9277 = vmatprep.subr.bf16.mxu0 0
        %9278 = vmatpush1.bf16.msra.mxu0 %v6839
        %9279 = vmatprep.subr.bf16.mxu0 0
        %9280 = vmatpush1.bf16.msra.mxu0 %v6840
        %9281 = vmatprep.subr.bf16.mxu0 0
        %9282 = vmatpush1.bf16.msra.mxu0 %v6841
        %9283 = vmatprep.subr.bf16.mxu0 0
        %9284 = vmatpush1.bf16.msra.mxu0 %v6842
        %9285 = vmatprep.subr.bf16.mxu0 0
        %9286 = vmatpush1.bf16.msra.mxu0 %v6843
        %9287 = vmatprep.subr.bf16.mxu0 0
        %9288 = vmatpush1.bf16.msra.mxu0 %v6844
        %9289 = vmatprep.subr.bf16.mxu0 0
        %9290 = vmatpush1.bf16.msra.mxu0 %v6845
        %9291 = vmatprep.subr.bf16.mxu0 0
        %9292 = vmatpush1.bf16.msra.mxu0 %v6846
        %9293 = vmatprep.subr.bf16.mxu0 0
        %9294 = vmatpush1.bf16.msra.mxu0 %v6847
        %9295 = vmatprep.subr.bf16.mxu0 0
        %9296 = vmatpush1.bf16.msra.mxu0 %v6848
        %9297 = vmatprep.mubr.bf16.mxu0 %v331
        %9298 = vmatmul.mubr.bf16.gmra.mrb[0].mxu0 %v330
        %v9299 = vpop.f32.mrb[0].mxu0
        %v9300 = vadd.f32 %v9260, %v9299
        %v9301 = vpop.f32.mrb[0].mxu0
        %v9302 = vpop.f32.mrb[0].mxu0
        %v9303 = vpop.f32.mrb[0].mxu0
        %9304 = vdwg.mxu0
        %9305 = vmatprep.subr.bf16.mxu0 0
        %9306 = vmatpush1.bf16.msra.mxu0 %v6849
        %9307 = vmatprep.subr.bf16.mxu0 0
        %9308 = vmatpush1.bf16.msra.mxu0 %v6850
        %9309 = vmatprep.subr.bf16.mxu0 0
        %9310 = vmatpush1.bf16.msra.mxu0 %v6851
        %9311 = vmatprep.subr.bf16.mxu0 0
        %9312 = vmatpush1.bf16.msra.mxu0 %v6852
        %9313 = vmatprep.subr.bf16.mxu0 0
        %9314 = vmatpush1.bf16.msra.mxu0 %v6853
        %9315 = vmatprep.subr.bf16.mxu0 0
        %9316 = vmatpush1.bf16.msra.mxu0 %v6854
        %9317 = vmatprep.subr.bf16.mxu0 0
        %9318 = vmatpush1.bf16.msra.mxu0 %v6855
        %9319 = vmatprep.subr.bf16.mxu0 0
        %9320 = vmatpush1.bf16.msra.mxu0 %v6856
        %9321 = vmatprep.subr.bf16.mxu0 0
        %9322 = vmatpush1.bf16.msra.mxu0 %v6857
        %9323 = vmatprep.subr.bf16.mxu0 0
        %9324 = vmatpush1.bf16.msra.mxu0 %v6858
        %9325 = vmatprep.subr.bf16.mxu0 0
        %9326 = vmatpush1.bf16.msra.mxu0 %v6859
        %9327 = vmatprep.subr.bf16.mxu0 0
        %9328 = vmatpush1.bf16.msra.mxu0 %v6860
        %9329 = vmatprep.subr.bf16.mxu0 0
        %9330 = vmatpush1.bf16.msra.mxu0 %v6861
        %9331 = vmatprep.subr.bf16.mxu0 0
        %9332 = vmatpush1.bf16.msra.mxu0 %v6862
        %9333 = vmatprep.subr.bf16.mxu0 0
        %9334 = vmatpush1.bf16.msra.mxu0 %v6863
        %9335 = vmatprep.subr.bf16.mxu0 0
        %9336 = vmatpush1.bf16.msra.mxu0 %v6864
        %9337 = vmatprep.mubr.bf16.mxu0 %v333
        %9338 = vmatmul.mubr.bf16.gmra.mrb[0].mxu0 %v332
        %v9339 = vpop.f32.mrb[0].mxu0
        %v9340 = vadd.f32 %v9300, %v9339
        %v9341 = vpop.f32.mrb[0].mxu0
        %v9342 = vpop.f32.mrb[0].mxu0
        %v9343 = vpop.f32.mrb[0].mxu0
        %9344 = vdwg.mxu0
        %9345 = vmatprep.subr.bf16.mxu0 0
        %9346 = vmatpush1.bf16.msra.mxu0 %v6865
        %9347 = vmatprep.subr.bf16.mxu0 0
        %9348 = vmatpush1.bf16.msra.mxu0 %v6866
        %9349 = vmatprep.subr.bf16.mxu0 0
        %9350 = vmatpush1.bf16.msra.mxu0 %v6867
        %9351 = vmatprep.subr.bf16.mxu0 0
        %9352 = vmatpush1.bf16.msra.mxu0 %v6868
        %9353 = vmatprep.subr.bf16.mxu0 0
        %9354 = vmatpush1.bf16.msra.mxu0 %v6869
        %9355 = vmatprep.subr.bf16.mxu0 0
        %9356 = vmatpush1.bf16.msra.mxu0 %v6870
        %9357 = vmatprep.subr.bf16.mxu0 0
        %9358 = vmatpush1.bf16.msra.mxu0 %v6871
        %9359 = vmatprep.subr.bf16.mxu0 0
        %9360 = vmatpush1.bf16.msra.mxu0 %v6872
        %9361 = vmatprep.subr.bf16.mxu0 0
        %9362 = vmatpush1.bf16.msra.mxu0 %v6873
        %9363 = vmatprep.subr.bf16.mxu0 0
        %9364 = vmatpush1.bf16.msra.mxu0 %v6874
        %9365 = vmatprep.subr.bf16.mxu0 0
        %9366 = vmatpush1.bf16.msra.mxu0 %v6875
        %9367 = vmatprep.subr.bf16.mxu0 0
        %9368 = vmatpush1.bf16.msra.mxu0 %v6876
        %9369 = vmatprep.subr.bf16.mxu0 0
        %9370 = vmatpush1.bf16.msra.mxu0 %v6877
        %9371 = vmatprep.subr.bf16.mxu0 0
        %9372 = vmatpush1.bf16.msra.mxu0 %v6878
        %9373 = vmatprep.subr.bf16.mxu0 0
        %9374 = vmatpush1.bf16.msra.mxu0 %v6879
        %9375 = vmatprep.subr.bf16.mxu0 0
        %9376 = vmatpush1.bf16.msra.mxu0 %v6880
        %9377 = vmatprep.mubr.bf16.mxu0 %v335
        %9378 = vmatmul.mubr.bf16.gmra.mrb[0].mxu0 %v334
        %v9379 = vpop.f32.mrb[0].mxu0
        %v9380 = vadd.f32 %v9340, %v9379
        %v9381 = vpop.f32.mrb[0].mxu0
        %v9382 = vpop.f32.mrb[0].mxu0
        %v9383 = vpop.f32.mrb[0].mxu0
        %9384 = vdwg.mxu0
        %9385 = vmatprep.subr.bf16.mxu0 0
        %9386 = vmatpush1.bf16.msra.mxu0 %v6881
        %9387 = vmatprep.subr.bf16.mxu0 0
        %9388 = vmatpush1.bf16.msra.mxu0 %v6882
        %9389 = vmatprep.subr.bf16.mxu0 0
        %9390 = vmatpush1.bf16.msra.mxu0 %v6883
        %9391 = vmatprep.subr.bf16.mxu0 0
        %9392 = vmatpush1.bf16.msra.mxu0 %v6884
        %9393 = vmatprep.subr.bf16.mxu0 0
        %9394 = vmatpush1.bf16.msra.mxu0 %v6885
        %9395 = vmatprep.subr.bf16.mxu0 0
        %9396 = vmatpush1.bf16.msra.mxu0 %v6886
        %9397 = vmatprep.subr.bf16.mxu0 0
        %9398 = vmatpush1.bf16.msra.mxu0 %v6887
        %9399 = vmatprep.subr.bf16.mxu0 0
        %9400 = vmatpush1.bf16.msra.mxu0 %v6888
        %9401 = vmatprep.subr.bf16.mxu0 0
        %9402 = vmatpush1.bf16.msra.mxu0 %v6889
        %9403 = vmatprep.subr.bf16.mxu0 0
        %9404 = vmatpush1.bf16.msra.mxu0 %v6890
        %9405 = vmatprep.subr.bf16.mxu0 0
        %9406 = vmatpush1.bf16.msra.mxu0 %v6891
        %9407 = vmatprep.subr.bf16.mxu0 0
        %9408 = vmatpush1.bf16.msra.mxu0 %v6892
        %9409 = vmatprep.subr.bf16.mxu0 0
        %9410 = vmatpush1.bf16.msra.mxu0 %v6893
        %9411 = vmatprep.subr.bf16.mxu0 0
        %9412 = vmatpush1.bf16.msra.mxu0 %v6894
        %9413 = vmatprep.subr.bf16.mxu0 0
        %9414 = vmatpush1.bf16.msra.mxu0 %v6895
        %9415 = vmatprep.subr.bf16.mxu0 0
        %9416 = vmatpush1.bf16.msra.mxu0 %v6896
        %9417 = vmatprep.mubr.bf16.mxu0 %v337
        %9418 = vmatmul.mubr.bf16.gmra.mrb[0].mxu0 %v336
        %v9419 = vpop.f32.mrb[0].mxu0
        %v9420 = vadd.f32 %v9380, %v9419
        %v9421 = vpop.f32.mrb[0].mxu0
        %v9422 = vpop.f32.mrb[0].mxu0
        %v9423 = vpop.f32.mrb[0].mxu0
        %9424 = vdwg.mxu0
        %9425 = vmatprep.subr.bf16.mxu0 0
        %9426 = vmatpush1.bf16.msra.mxu0 %v6897
        %9427 = vmatprep.subr.bf16.mxu0 0
        %9428 = vmatpush1.bf16.msra.mxu0 %v6898
        %9429 = vmatprep.subr.bf16.mxu0 0
        %9430 = vmatpush1.bf16.msra.mxu0 %v6899
        %9431 = vmatprep.subr.bf16.mxu0 0
        %9432 = vmatpush1.bf16.msra.mxu0 %v6900
        %9433 = vmatprep.subr.bf16.mxu0 0
        %9434 = vmatpush1.bf16.msra.mxu0 %v6901
        %9435 = vmatprep.subr.bf16.mxu0 0
        %9436 = vmatpush1.bf16.msra.mxu0 %v6902
        %9437 = vmatprep.subr.bf16.mxu0 0
        %9438 = vmatpush1.bf16.msra.mxu0 %v6903
        %9439 = vmatprep.subr.bf16.mxu0 0
        %9440 = vmatpush1.bf16.msra.mxu0 %v6904
        %9441 = vmatprep.subr.bf16.mxu0 0
        %9442 = vmatpush1.bf16.msra.mxu0 %v6905
        %9443 = vmatprep.subr.bf16.mxu0 0
        %9444 = vmatpush1.bf16.msra.mxu0 %v6906
        %9445 = vmatprep.subr.bf16.mxu0 0
        %9446 = vmatpush1.bf16.msra.mxu0 %v6907
        %9447 = vmatprep.subr.bf16.mxu0 0
        %9448 = vmatpush1.bf16.msra.mxu0 %v6908
        %9449 = vmatprep.subr.bf16.mxu0 0
        %9450 = vmatpush1.bf16.msra.mxu0 %v6909
        %9451 = vmatprep.subr.bf16.mxu0 0
        %9452 = vmatpush1.bf16.msra.mxu0 %v6910
        %9453 = vmatprep.subr.bf16.mxu0 0
        %9454 = vmatpush1.bf16.msra.mxu0 %v6911
        %9455 = vmatprep.subr.bf16.mxu0 0
        %9456 = vmatpush1.bf16.msra.mxu0 %v6912
        %9457 = vmatprep.mubr.bf16.mxu0 %v339
        %9458 = vmatmul.mubr.bf16.gmra.mrb[0].mxu0 %v338
        %v9459 = vpop.f32.mrb[0].mxu0
        %v9460 = vadd.f32 %v9420, %v9459
        %v9461 = vpop.f32.mrb[0].mxu0
        %v9462 = vpop.f32.mrb[0].mxu0
        %v9463 = vpop.f32.mrb[0].mxu0
        %9464 = vdwg.mxu0
        %9465 = vmatprep.subr.bf16.mxu0 0
        %9466 = vmatpush1.bf16.msra.mxu0 %v6913
        %9467 = vmatprep.subr.bf16.mxu0 0
        %9468 = vmatpush1.bf16.msra.mxu0 %v6914
        %9469 = vmatprep.subr.bf16.mxu0 0
        %9470 = vmatpush1.bf16.msra.mxu0 %v6915
        %9471 = vmatprep.subr.bf16.mxu0 0
        %9472 = vmatpush1.bf16.msra.mxu0 %v6916
        %9473 = vmatprep.subr.bf16.mxu0 0
        %9474 = vmatpush1.bf16.msra.mxu0 %v6917
        %9475 = vmatprep.subr.bf16.mxu0 0
        %9476 = vmatpush1.bf16.msra.mxu0 %v6918
        %9477 = vmatprep.subr.bf16.mxu0 0
        %9478 = vmatpush1.bf16.msra.mxu0 %v6919
        %9479 = vmatprep.subr.bf16.mxu0 0
        %9480 = vmatpush1.bf16.msra.mxu0 %v6920
        %9481 = vmatprep.subr.bf16.mxu0 0
        %9482 = vmatpush1.bf16.msra.mxu0 %v6921
        %9483 = vmatprep.subr.bf16.mxu0 0
        %9484 = vmatpush1.bf16.msra.mxu0 %v6922
        %9485 = vmatprep.subr.bf16.mxu0 0
        %9486 = vmatpush1.bf16.msra.mxu0 %v6923
        %9487 = vmatprep.subr.bf16.mxu0 0
        %9488 = vmatpush1.bf16.msra.mxu0 %v6924
        %9489 = vmatprep.subr.bf16.mxu0 0
        %9490 = vmatpush1.bf16.msra.mxu0 %v6925
        %9491 = vmatprep.subr.bf16.mxu0 0
        %9492 = vmatpush1.bf16.msra.mxu0 %v6926
        %9493 = vmatprep.subr.bf16.mxu0 0
        %9494 = vmatpush1.bf16.msra.mxu0 %v6927
        %9495 = vmatprep.subr.bf16.mxu0 0
        %9496 = vmatpush1.bf16.msra.mxu0 %v6928
        %9497 = vmatprep.mubr.bf16.mxu0 %v341
        %9498 = vmatmul.mubr.bf16.gmra.mrb[0].mxu0 %v340
        %v9499 = vpop.f32.mrb[0].mxu0
        %v9500 = vadd.f32 %v9460, %v9499
        %v9501 = vpop.f32.mrb[0].mxu0
        %v9502 = vpop.f32.mrb[0].mxu0
        %v9503 = vpop.f32.mrb[0].mxu0
        %9504 = vdwg.mxu0
        %9505 = vmatprep.subr.bf16.mxu0 0
        %9506 = vmatpush1.bf16.msra.mxu0 %v6929
        %9507 = vmatprep.subr.bf16.mxu0 0
        %9508 = vmatpush1.bf16.msra.mxu0 %v6930
        %9509 = vmatprep.subr.bf16.mxu0 0
        %9510 = vmatpush1.bf16.msra.mxu0 %v6931
        %9511 = vmatprep.subr.bf16.mxu0 0
        %9512 = vmatpush1.bf16.msra.mxu0 %v6932
        %9513 = vmatprep.subr.bf16.mxu0 0
        %9514 = vmatpush1.bf16.msra.mxu0 %v6933
        %9515 = vmatprep.subr.bf16.mxu0 0
        %9516 = vmatpush1.bf16.msra.mxu0 %v6934
        %9517 = vmatprep.subr.bf16.mxu0 0
        %9518 = vmatpush1.bf16.msra.mxu0 %v6935
        %9519 = vmatprep.subr.bf16.mxu0 0
        %9520 = vmatpush1.bf16.msra.mxu0 %v6936
        %9521 = vmatprep.subr.bf16.mxu0 0
        %9522 = vmatpush1.bf16.msra.mxu0 %v6937
        %9523 = vmatprep.subr.bf16.mxu0 0
        %9524 = vmatpush1.bf16.msra.mxu0 %v6938
        %9525 = vmatprep.subr.bf16.mxu0 0
        %9526 = vmatpush1.bf16.msra.mxu0 %v6939
        %9527 = vmatprep.subr.bf16.mxu0 0
        %9528 = vmatpush1.bf16.msra.mxu0 %v6940
        %9529 = vmatprep.subr.bf16.mxu0 0
        %9530 = vmatpush1.bf16.msra.mxu0 %v6941
        %9531 = vmatprep.subr.bf16.mxu0 0
        %9532 = vmatpush1.bf16.msra.mxu0 %v6942
        %9533 = vmatprep.subr.bf16.mxu0 0
        %9534 = vmatpush1.bf16.msra.mxu0 %v6943
        %9535 = vmatprep.subr.bf16.mxu0 0
        %9536 = vmatpush1.bf16.msra.mxu0 %v6944
        %9537 = vmatprep.mubr.bf16.mxu0 %v343
        %9538 = vmatmul.mubr.bf16.gmra.mrb[0].mxu0 %v342
        %v9539 = vpop.f32.mrb[0].mxu0
        %v9540 = vadd.f32 %v9500, %v9539
        %v9541 = vpop.f32.mrb[0].mxu0
        %v9542 = vpop.f32.mrb[0].mxu0
        %v9543 = vpop.f32.mrb[0].mxu0
        %9544 = vdwg.mxu0
        %9545 = vmatprep.subr.bf16.mxu0 0
        %9546 = vmatpush1.bf16.msra.mxu0 %v6945
        %9547 = vmatprep.subr.bf16.mxu0 0
        %9548 = vmatpush1.bf16.msra.mxu0 %v6946
        %9549 = vmatprep.subr.bf16.mxu0 0
        %9550 = vmatpush1.bf16.msra.mxu0 %v6947
        %9551 = vmatprep.subr.bf16.mxu0 0
        %9552 = vmatpush1.bf16.msra.mxu0 %v6948
        %9553 = vmatprep.subr.bf16.mxu0 0
        %9554 = vmatpush1.bf16.msra.mxu0 %v6949
        %9555 = vmatprep.subr.bf16.mxu0 0
        %9556 = vmatpush1.bf16.msra.mxu0 %v6950
        %9557 = vmatprep.subr.bf16.mxu0 0
        %9558 = vmatpush1.bf16.msra.mxu0 %v6951
        %9559 = vmatprep.subr.bf16.mxu0 0
        %9560 = vmatpush1.bf16.msra.mxu0 %v6952
        %9561 = vmatprep.subr.bf16.mxu0 0
        %9562 = vmatpush1.bf16.msra.mxu0 %v6953
        %9563 = vmatprep.subr.bf16.mxu0 0
        %9564 = vmatpush1.bf16.msra.mxu0 %v6954
        %9565 = vmatprep.subr.bf16.mxu0 0
        %9566 = vmatpush1.bf16.msra.mxu0 %v6955
        %9567 = vmatprep.subr.bf16.mxu0 0
        %9568 = vmatpush1.bf16.msra.mxu0 %v6956
        %9569 = vmatprep.subr.bf16.mxu0 0
        %9570 = vmatpush1.bf16.msra.mxu0 %v6957
        %9571 = vmatprep.subr.bf16.mxu0 0
        %9572 = vmatpush1.bf16.msra.mxu0 %v6958
        %9573 = vmatprep.subr.bf16.mxu0 0
        %9574 = vmatpush1.bf16.msra.mxu0 %v6959
        %9575 = vmatprep.subr.bf16.mxu0 0
        %9576 = vmatpush1.bf16.msra.mxu0 %v6960
        %9577 = vmatprep.mubr.bf16.mxu0 %v345
        %9578 = vmatmul.mubr.bf16.gmra.mrb[0].mxu0 %v344
        %v9579 = vpop.f32.mrb[0].mxu0
        %v9580 = vadd.f32 %v9540, %v9579
        %v9581 = vpop.f32.mrb[0].mxu0
        %v9582 = vpop.f32.mrb[0].mxu0
        %v9583 = vpop.f32.mrb[0].mxu0
        %9584 = vdwg.mxu0
        %9585 = vmatprep.subr.bf16.mxu0 0
        %9586 = vmatpush1.bf16.msra.mxu0 %v6961
        %9587 = vmatprep.subr.bf16.mxu0 0
        %9588 = vmatpush1.bf16.msra.mxu0 %v6962
        %9589 = vmatprep.subr.bf16.mxu0 0
        %9590 = vmatpush1.bf16.msra.mxu0 %v6963
        %9591 = vmatprep.subr.bf16.mxu0 0
        %9592 = vmatpush1.bf16.msra.mxu0 %v6964
        %9593 = vmatprep.subr.bf16.mxu0 0
        %9594 = vmatpush1.bf16.msra.mxu0 %v6965
        %9595 = vmatprep.subr.bf16.mxu0 0
        %9596 = vmatpush1.bf16.msra.mxu0 %v6966
        %9597 = vmatprep.subr.bf16.mxu0 0
        %9598 = vmatpush1.bf16.msra.mxu0 %v6967
        %9599 = vmatprep.subr.bf16.mxu0 0
        %9600 = vmatpush1.bf16.msra.mxu0 %v6968
        %9601 = vmatprep.subr.bf16.mxu0 0
        %9602 = vmatpush1.bf16.msra.mxu0 %v6969
        %9603 = vmatprep.subr.bf16.mxu0 0
        %9604 = vmatpush1.bf16.msra.mxu0 %v6970
        %9605 = vmatprep.subr.bf16.mxu0 0
        %9606 = vmatpush1.bf16.msra.mxu0 %v6971
        %9607 = vmatprep.subr.bf16.mxu0 0
        %9608 = vmatpush1.bf16.msra.mxu0 %v6972
        %9609 = vmatprep.subr.bf16.mxu0 0
        %9610 = vmatpush1.bf16.msra.mxu0 %v6973
        %9611 = vmatprep.subr.bf16.mxu0 0
        %9612 = vmatpush1.bf16.msra.mxu0 %v6974
        %9613 = vmatprep.subr.bf16.mxu0 0
        %9614 = vmatpush1.bf16.msra.mxu0 %v6975
        %9615 = vmatprep.subr.bf16.mxu0 0
        %9616 = vmatpush1.bf16.msra.mxu0 %v6976
        %9617 = vmatprep.mubr.bf16.mxu0 %v347
        %9618 = vmatmul.mubr.bf16.gmra.mrb[0].mxu0 %v346
        %v9619 = vpop.f32.mrb[0].mxu0
        %v9620 = vadd.f32 %v9580, %v9619
        %v9621 = vpop.f32.mrb[0].mxu0
        %v9622 = vpop.f32.mrb[0].mxu0
        %v9623 = vpop.f32.mrb[0].mxu0
        %9624 = vdwg.mxu0
        %9625 = vmatprep.subr.bf16.mxu0 0
        %9626 = vmatpush1.bf16.msra.mxu0 %v6977
        %9627 = vmatprep.subr.bf16.mxu0 0
        %9628 = vmatpush1.bf16.msra.mxu0 %v6978
        %9629 = vmatprep.subr.bf16.mxu0 0
        %9630 = vmatpush1.bf16.msra.mxu0 %v6979
        %9631 = vmatprep.subr.bf16.mxu0 0
        %9632 = vmatpush1.bf16.msra.mxu0 %v6980
        %9633 = vmatprep.subr.bf16.mxu0 0
        %9634 = vmatpush1.bf16.msra.mxu0 %v6981
        %9635 = vmatprep.subr.bf16.mxu0 0
        %9636 = vmatpush1.bf16.msra.mxu0 %v6982
        %9637 = vmatprep.subr.bf16.mxu0 0
        %9638 = vmatpush1.bf16.msra.mxu0 %v6983
        %9639 = vmatprep.subr.bf16.mxu0 0
        %9640 = vmatpush1.bf16.msra.mxu0 %v6984
        %9641 = vmatprep.subr.bf16.mxu0 0
        %9642 = vmatpush1.bf16.msra.mxu0 %v6985
        %9643 = vmatprep.subr.bf16.mxu0 0
        %9644 = vmatpush1.bf16.msra.mxu0 %v6986
        %9645 = vmatprep.subr.bf16.mxu0 0
        %9646 = vmatpush1.bf16.msra.mxu0 %v6987
        %9647 = vmatprep.subr.bf16.mxu0 0
        %9648 = vmatpush1.bf16.msra.mxu0 %v6988
        %9649 = vmatprep.subr.bf16.mxu0 0
        %9650 = vmatpush1.bf16.msra.mxu0 %v6989
        %9651 = vmatprep.subr.bf16.mxu0 0
        %9652 = vmatpush1.bf16.msra.mxu0 %v6990
        %9653 = vmatprep.subr.bf16.mxu0 0
        %9654 = vmatpush1.bf16.msra.mxu0 %v6991
        %9655 = vmatprep.subr.bf16.mxu0 0
        %9656 = vmatpush1.bf16.msra.mxu0 %v6992
        %9657 = vmatprep.mubr.bf16.mxu0 %v349
        %9658 = vmatmul.mubr.bf16.gmra.mrb[0].mxu0 %v348
        %v9659 = vpop.f32.mrb[0].mxu0
        %v9660 = vadd.f32 %v9620, %v9659
        %v9661 = vpop.f32.mrb[0].mxu0
        %v9662 = vpop.f32.mrb[0].mxu0
        %v9663 = vpop.f32.mrb[0].mxu0
        %9664 = vdwg.mxu0
        %9665 = vmatprep.subr.bf16.mxu0 0
        %9666 = vmatpush1.bf16.msra.mxu0 %v6993
        %9667 = vmatprep.subr.bf16.mxu0 0
        %9668 = vmatpush1.bf16.msra.mxu0 %v6994
        %9669 = vmatprep.subr.bf16.mxu0 0
        %9670 = vmatpush1.bf16.msra.mxu0 %v6995
        %9671 = vmatprep.subr.bf16.mxu0 0
        %9672 = vmatpush1.bf16.msra.mxu0 %v6996
        %9673 = vmatprep.subr.bf16.mxu0 0
        %9674 = vmatpush1.bf16.msra.mxu0 %v6997
        %9675 = vmatprep.subr.bf16.mxu0 0
        %9676 = vmatpush1.bf16.msra.mxu0 %v6998
        %9677 = vmatprep.subr.bf16.mxu0 0
        %9678 = vmatpush1.bf16.msra.mxu0 %v6999
        %9679 = vmatprep.subr.bf16.mxu0 0
        %9680 = vmatpush1.bf16.msra.mxu0 %v7000
        %9681 = vmatprep.subr.bf16.mxu0 0
        %9682 = vmatpush1.bf16.msra.mxu0 %v7001
        %9683 = vmatprep.subr.bf16.mxu0 0
        %9684 = vmatpush1.bf16.msra.mxu0 %v7002
        %9685 = vmatprep.subr.bf16.mxu0 0
        %9686 = vmatpush1.bf16.msra.mxu0 %v7003
        %9687 = vmatprep.subr.bf16.mxu0 0
        %9688 = vmatpush1.bf16.msra.mxu0 %v7004
        %9689 = vmatprep.subr.bf16.mxu0 0
        %9690 = vmatpush1.bf16.msra.mxu0 %v7005
        %9691 = vmatprep.subr.bf16.mxu0 0
        %9692 = vmatpush1.bf16.msra.mxu0 %v7006
        %9693 = vmatprep.subr.bf16.mxu0 0
        %9694 = vmatpush1.bf16.msra.mxu0 %v7007
        %9695 = vmatprep.subr.bf16.mxu0 0
        %9696 = vmatpush1.bf16.msra.mxu0 %v7008
        %9697 = vmatprep.mubr.bf16.mxu0 %v351
        %9698 = vmatmul.mubr.bf16.gmra.mrb[0].mxu0 %v350
        %v9699 = vpop.f32.mrb[0].mxu0
        %v9700 = vadd.f32 %v9660, %v9699
        %v9701 = vpop.f32.mrb[0].mxu0
        %v9702 = vpop.f32.mrb[0].mxu0
        %v9703 = vpop.f32.mrb[0].mxu0
        %9704 = vdwg.mxu0
        %9705 = vmatprep.subr.bf16.mxu0 0
        %9706 = vmatpush1.bf16.msra.mxu0 %v7009
        %9707 = vmatprep.subr.bf16.mxu0 0
        %9708 = vmatpush1.bf16.msra.mxu0 %v7010
        %9709 = vmatprep.subr.bf16.mxu0 0
        %9710 = vmatpush1.bf16.msra.mxu0 %v7011
        %9711 = vmatprep.subr.bf16.mxu0 0
        %9712 = vmatpush1.bf16.msra.mxu0 %v7012
        %9713 = vmatprep.subr.bf16.mxu0 0
        %9714 = vmatpush1.bf16.msra.mxu0 %v7013
        %9715 = vmatprep.subr.bf16.mxu0 0
        %9716 = vmatpush1.bf16.msra.mxu0 %v7014
        %9717 = vmatprep.subr.bf16.mxu0 0
        %9718 = vmatpush1.bf16.msra.mxu0 %v7015
        %9719 = vmatprep.subr.bf16.mxu0 0
        %9720 = vmatpush1.bf16.msra.mxu0 %v7016
        %9721 = vmatprep.subr.bf16.mxu0 0
        %9722 = vmatpush1.bf16.msra.mxu0 %v7017
        %9723 = vmatprep.subr.bf16.mxu0 0
        %9724 = vmatpush1.bf16.msra.mxu0 %v7018
        %9725 = vmatprep.subr.bf16.mxu0 0
        %9726 = vmatpush1.bf16.msra.mxu0 %v7019
        %9727 = vmatprep.subr.bf16.mxu0 0
        %9728 = vmatpush1.bf16.msra.mxu0 %v7020
        %9729 = vmatprep.subr.bf16.mxu0 0
        %9730 = vmatpush1.bf16.msra.mxu0 %v7021
        %9731 = vmatprep.subr.bf16.mxu0 0
        %9732 = vmatpush1.bf16.msra.mxu0 %v7022
        %9733 = vmatprep.subr.bf16.mxu0 0
        %9734 = vmatpush1.bf16.msra.mxu0 %v7023
        %9735 = vmatprep.subr.bf16.mxu0 0
        %9736 = vmatpush1.bf16.msra.mxu0 %v7024
        %9737 = vmatprep.mubr.bf16.mxu0 %v353
        %9738 = vmatmul.mubr.bf16.gmra.mrb[0].mxu0 %v352
        %v9739 = vpop.f32.mrb[0].mxu0
        %v9740 = vadd.f32 %v9700, %v9739
        %v9741 = vpop.f32.mrb[0].mxu0
        %v9742 = vpop.f32.mrb[0].mxu0
        %v9743 = vpop.f32.mrb[0].mxu0
        %9744 = vdwg.mxu0
        %9745 = vmatprep.subr.bf16.mxu0 0
        %9746 = vmatpush1.bf16.msra.mxu0 %v7025
        %9747 = vmatprep.subr.bf16.mxu0 0
        %9748 = vmatpush1.bf16.msra.mxu0 %v7026
        %9749 = vmatprep.subr.bf16.mxu0 0
        %9750 = vmatpush1.bf16.msra.mxu0 %v7027
        %9751 = vmatprep.subr.bf16.mxu0 0
        %9752 = vmatpush1.bf16.msra.mxu0 %v7028
        %9753 = vmatprep.subr.bf16.mxu0 0
        %9754 = vmatpush1.bf16.msra.mxu0 %v7029
        %9755 = vmatprep.subr.bf16.mxu0 0
        %9756 = vmatpush1.bf16.msra.mxu0 %v7030
        %9757 = vmatprep.subr.bf16.mxu0 0
        %9758 = vmatpush1.bf16.msra.mxu0 %v7031
        %9759 = vmatprep.subr.bf16.mxu0 0
        %9760 = vmatpush1.bf16.msra.mxu0 %v7032
        %9761 = vmatprep.subr.bf16.mxu0 0
        %9762 = vmatpush1.bf16.msra.mxu0 %v7033
        %9763 = vmatprep.subr.bf16.mxu0 0
        %9764 = vmatpush1.bf16.msra.mxu0 %v7034
        %9765 = vmatprep.subr.bf16.mxu0 0
        %9766 = vmatpush1.bf16.msra.mxu0 %v7035
        %9767 = vmatprep.subr.bf16.mxu0 0
        %9768 = vmatpush1.bf16.msra.mxu0 %v7036
        %9769 = vmatprep.subr.bf16.mxu0 0
        %9770 = vmatpush1.bf16.msra.mxu0 %v7037
        %9771 = vmatprep.subr.bf16.mxu0 0
        %9772 = vmatpush1.bf16.msra.mxu0 %v7038
        %9773 = vmatprep.subr.bf16.mxu0 0
        %9774 = vmatpush1.bf16.msra.mxu0 %v7039
        %9775 = vmatprep.subr.bf16.mxu0 0
        %9776 = vmatpush1.bf16.msra.mxu0 %v7040
        %9777 = vmatprep.mubr.bf16.mxu0 %v355
        %9778 = vmatmul.mubr.bf16.gmra.mrb[0].mxu0 %v354
        %v9779 = vpop.f32.mrb[0].mxu0
        %v9780 = vadd.f32 %v9740, %v9779
        %v9781 = vpop.f32.mrb[0].mxu0
        %v9782 = vpop.f32.mrb[0].mxu0
        %v9783 = vpop.f32.mrb[0].mxu0
        %9784 = vdwg.mxu0
        %9785 = vmatprep.subr.bf16.mxu0 0
        %9786 = vmatpush1.bf16.msra.mxu0 %v7041
        %9787 = vmatprep.subr.bf16.mxu0 0
        %9788 = vmatpush1.bf16.msra.mxu0 %v7042
        %9789 = vmatprep.subr.bf16.mxu0 0
        %9790 = vmatpush1.bf16.msra.mxu0 %v7043
        %9791 = vmatprep.subr.bf16.mxu0 0
        %9792 = vmatpush1.bf16.msra.mxu0 %v7044
        %9793 = vmatprep.subr.bf16.mxu0 0
        %9794 = vmatpush1.bf16.msra.mxu0 %v7045
        %9795 = vmatprep.subr.bf16.mxu0 0
        %9796 = vmatpush1.bf16.msra.mxu0 %v7046
        %9797 = vmatprep.subr.bf16.mxu0 0
        %9798 = vmatpush1.bf16.msra.mxu0 %v7047
        %9799 = vmatprep.subr.bf16.mxu0 0
        %9800 = vmatpush1.bf16.msra.mxu0 %v7048
        %9801 = vmatprep.subr.bf16.mxu0 0
        %9802 = vmatpush1.bf16.msra.mxu0 %v7049
        %9803 = vmatprep.subr.bf16.mxu0 0
        %9804 = vmatpush1.bf16.msra.mxu0 %v7050
        %9805 = vmatprep.subr.bf16.mxu0 0
        %9806 = vmatpush1.bf16.msra.mxu0 %v7051
        %9807 = vmatprep.subr.bf16.mxu0 0
        %9808 = vmatpush1.bf16.msra.mxu0 %v7052
        %9809 = vmatprep.subr.bf16.mxu0 0
        %9810 = vmatpush1.bf16.msra.mxu0 %v7053
        %9811 = vmatprep.subr.bf16.mxu0 0
        %9812 = vmatpush1.bf16.msra.mxu0 %v7054
        %9813 = vmatprep.subr.bf16.mxu0 0
        %9814 = vmatpush1.bf16.msra.mxu0 %v7055
        %9815 = vmatprep.subr.bf16.mxu0 0
        %9816 = vmatpush1.bf16.msra.mxu0 %v7056
        %9817 = vmatprep.mubr.bf16.mxu0 %v357
        %9818 = vmatmul.mubr.bf16.gmra.mrb[0].mxu0 %v356
        %v9819 = vpop.f32.mrb[0].mxu0
        %v9820 = vadd.f32 %v9780, %v9819
        %v9821 = vpop.f32.mrb[0].mxu0
        %v9822 = vpop.f32.mrb[0].mxu0
        %v9823 = vpop.f32.mrb[0].mxu0
        %9824 = vdwg.mxu0
        %9825 = vmatprep.subr.bf16.mxu0 0
        %9826 = vmatpush1.bf16.msra.mxu0 %v7057
        %9827 = vmatprep.subr.bf16.mxu0 0
        %9828 = vmatpush1.bf16.msra.mxu0 %v7058
        %9829 = vmatprep.subr.bf16.mxu0 0
        %9830 = vmatpush1.bf16.msra.mxu0 %v7059
        %9831 = vmatprep.subr.bf16.mxu0 0
        %9832 = vmatpush1.bf16.msra.mxu0 %v7060
        %9833 = vmatprep.subr.bf16.mxu0 0
        %9834 = vmatpush1.bf16.msra.mxu0 %v7061
        %9835 = vmatprep.subr.bf16.mxu0 0
        %9836 = vmatpush1.bf16.msra.mxu0 %v7062
        %9837 = vmatprep.subr.bf16.mxu0 0
        %9838 = vmatpush1.bf16.msra.mxu0 %v7063
        %9839 = vmatprep.subr.bf16.mxu0 0
        %9840 = vmatpush1.bf16.msra.mxu0 %v7064
        %9841 = vmatprep.subr.bf16.mxu0 0
        %9842 = vmatpush1.bf16.msra.mxu0 %v7065
        %9843 = vmatprep.subr.bf16.mxu0 0
        %9844 = vmatpush1.bf16.msra.mxu0 %v7066
        %9845 = vmatprep.subr.bf16.mxu0 0
        %9846 = vmatpush1.bf16.msra.mxu0 %v7067
        %9847 = vmatprep.subr.bf16.mxu0 0
        %9848 = vmatpush1.bf16.msra.mxu0 %v7068
        %9849 = vmatprep.subr.bf16.mxu0 0
        %9850 = vmatpush1.bf16.msra.mxu0 %v7069
        %9851 = vmatprep.subr.bf16.mxu0 0
        %9852 = vmatpush1.bf16.msra.mxu0 %v7070
        %9853 = vmatprep.subr.bf16.mxu0 0
        %9854 = vmatpush1.bf16.msra.mxu0 %v7071
        %9855 = vmatprep.subr.bf16.mxu0 0
        %9856 = vmatpush1.bf16.msra.mxu0 %v7072
        %9857 = vmatprep.mubr.bf16.mxu0 %v359
        %9858 = vmatmul.mubr.bf16.gmra.mrb[0].mxu0 %v358
        %v9859 = vpop.f32.mrb[0].mxu0
        %v9860 = vadd.f32 %v9820, %v9859
        %v9861 = vpop.f32.mrb[0].mxu0
        %v9862 = vpop.f32.mrb[0].mxu0
        %v9863 = vpop.f32.mrb[0].mxu0
        %9864 = vdwg.mxu0
        %9865 = vmatprep.subr.bf16.mxu0 0
        %9866 = vmatpush1.bf16.msra.mxu0 %v7073
        %9867 = vmatprep.subr.bf16.mxu0 0
        %9868 = vmatpush1.bf16.msra.mxu0 %v7074
        %9869 = vmatprep.subr.bf16.mxu0 0
        %9870 = vmatpush1.bf16.msra.mxu0 %v7075
        %9871 = vmatprep.subr.bf16.mxu0 0
        %9872 = vmatpush1.bf16.msra.mxu0 %v7076
        %9873 = vmatprep.subr.bf16.mxu0 0
        %9874 = vmatpush1.bf16.msra.mxu0 %v7077
        %9875 = vmatprep.subr.bf16.mxu0 0
        %9876 = vmatpush1.bf16.msra.mxu0 %v7078
        %9877 = vmatprep.subr.bf16.mxu0 0
        %9878 = vmatpush1.bf16.msra.mxu0 %v7079
        %9879 = vmatprep.subr.bf16.mxu0 0
        %9880 = vmatpush1.bf16.msra.mxu0 %v7080
        %9881 = vmatprep.subr.bf16.mxu0 0
        %9882 = vmatpush1.bf16.msra.mxu0 %v7081
        %9883 = vmatprep.subr.bf16.mxu0 0
        %9884 = vmatpush1.bf16.msra.mxu0 %v7082
        %9885 = vmatprep.subr.bf16.mxu0 0
        %9886 = vmatpush1.bf16.msra.mxu0 %v7083
        %9887 = vmatprep.subr.bf16.mxu0 0
        %9888 = vmatpush1.bf16.msra.mxu0 %v7084
        %9889 = vmatprep.subr.bf16.mxu0 0
        %9890 = vmatpush1.bf16.msra.mxu0 %v7085
        %9891 = vmatprep.subr.bf16.mxu0 0
        %9892 = vmatpush1.bf16.msra.mxu0 %v7086
        %9893 = vmatprep.subr.bf16.mxu0 0
        %9894 = vmatpush1.bf16.msra.mxu0 %v7087
        %9895 = vmatprep.subr.bf16.mxu0 0
        %9896 = vmatpush1.bf16.msra.mxu0 %v7088
        %9897 = vmatprep.mubr.bf16.mxu0 %v361
        %9898 = vmatmul.mubr.bf16.gmra.mrb[0].mxu0 %v360
        %v9899 = vpop.f32.mrb[0].mxu0
        %v9900 = vadd.f32 %v9860, %v9899
        %v9901 = vpop.f32.mrb[0].mxu0
        %v9902 = vpop.f32.mrb[0].mxu0
        %v9903 = vpop.f32.mrb[0].mxu0
        %9904 = vdwg.mxu0
        %9905 = vmatprep.subr.bf16.mxu0 0
        %9906 = vmatpush1.bf16.msra.mxu0 %v7089
        %9907 = vmatprep.subr.bf16.mxu0 0
        %9908 = vmatpush1.bf16.msra.mxu0 %v7090
        %9909 = vmatprep.subr.bf16.mxu0 0
        %9910 = vmatpush1.bf16.msra.mxu0 %v7091
        %9911 = vmatprep.subr.bf16.mxu0 0
        %9912 = vmatpush1.bf16.msra.mxu0 %v7092
        %9913 = vmatprep.subr.bf16.mxu0 0
        %9914 = vmatpush1.bf16.msra.mxu0 %v7093
        %9915 = vmatprep.subr.bf16.mxu0 0
        %9916 = vmatpush1.bf16.msra.mxu0 %v7094
        %9917 = vmatprep.subr.bf16.mxu0 0
        %9918 = vmatpush1.bf16.msra.mxu0 %v7095
        %9919 = vmatprep.subr.bf16.mxu0 0
        %9920 = vmatpush1.bf16.msra.mxu0 %v7096
        %9921 = vmatprep.subr.bf16.mxu0 0
        %9922 = vmatpush1.bf16.msra.mxu0 %v7097
        %9923 = vmatprep.subr.bf16.mxu0 0
        %9924 = vmatpush1.bf16.msra.mxu0 %v7098
        %9925 = vmatprep.subr.bf16.mxu0 0
        %9926 = vmatpush1.bf16.msra.mxu0 %v7099
        %9927 = vmatprep.subr.bf16.mxu0 0
        %9928 = vmatpush1.bf16.msra.mxu0 %v7100
        %9929 = vmatprep.subr.bf16.mxu0 0
        %9930 = vmatpush1.bf16.msra.mxu0 %v7101
        %9931 = vmatprep.subr.bf16.mxu0 0
        %9932 = vmatpush1.bf16.msra.mxu0 %v7102
        %9933 = vmatprep.subr.bf16.mxu0 0
        %9934 = vmatpush1.bf16.msra.mxu0 %v7103
        %9935 = vmatprep.subr.bf16.mxu0 0
        %9936 = vmatpush1.bf16.msra.mxu0 %v7104
        %9937 = vmatprep.mubr.bf16.mxu0 %v363
        %9938 = vmatmul.mubr.bf16.gmra.mrb[0].mxu0 %v362
        %v9939 = vpop.f32.mrb[0].mxu0
        %v9940 = vadd.f32 %v9900, %v9939
        %v9941 = vpop.f32.mrb[0].mxu0
        %v9942 = vpop.f32.mrb[0].mxu0
        %v9943 = vpop.f32.mrb[0].mxu0
        %9944 = vdwg.mxu0
        %9945 = vmatprep.subr.bf16.mxu0 0
        %9946 = vmatpush1.bf16.msra.mxu0 %v7105
        %9947 = vmatprep.subr.bf16.mxu0 0
        %9948 = vmatpush1.bf16.msra.mxu0 %v7106
        %9949 = vmatprep.subr.bf16.mxu0 0
        %9950 = vmatpush1.bf16.msra.mxu0 %v7107
        %9951 = vmatprep.subr.bf16.mxu0 0
        %9952 = vmatpush1.bf16.msra.mxu0 %v7108
        %9953 = vmatprep.subr.bf16.mxu0 0
        %9954 = vmatpush1.bf16.msra.mxu0 %v7109
        %9955 = vmatprep.subr.bf16.mxu0 0
        %9956 = vmatpush1.bf16.msra.mxu0 %v7110
        %9957 = vmatprep.subr.bf16.mxu0 0
        %9958 = vmatpush1.bf16.msra.mxu0 %v7111
        %9959 = vmatprep.subr.bf16.mxu0 0
        %9960 = vmatpush1.bf16.msra.mxu0 %v7112
        %9961 = vmatprep.subr.bf16.mxu0 0
        %9962 = vmatpush1.bf16.msra.mxu0 %v7113
        %9963 = vmatprep.subr.bf16.mxu0 0
        %9964 = vmatpush1.bf16.msra.mxu0 %v7114
        %9965 = vmatprep.subr.bf16.mxu0 0
        %9966 = vmatpush1.bf16.msra.mxu0 %v7115
        %9967 = vmatprep.subr.bf16.mxu0 0
        %9968 = vmatpush1.bf16.msra.mxu0 %v7116
        %9969 = vmatprep.subr.bf16.mxu0 0
        %9970 = vmatpush1.bf16.msra.mxu0 %v7117
        %9971 = vmatprep.subr.bf16.mxu0 0
        %9972 = vmatpush1.bf16.msra.mxu0 %v7118
        %9973 = vmatprep.subr.bf16.mxu0 0
        %9974 = vmatpush1.bf16.msra.mxu0 %v7119
        %9975 = vmatprep.subr.bf16.mxu0 0
        %9976 = vmatpush1.bf16.msra.mxu0 %v7120
        %9977 = vmatprep.mubr.bf16.mxu0 %v365
        %9978 = vmatmul.mubr.bf16.gmra.mrb[0].mxu0 %v364
        %v9979 = vpop.f32.mrb[0].mxu0
        %v9980 = vadd.f32 %v9940, %v9979
        %v9981 = vpop.f32.mrb[0].mxu0
        %v9982 = vpop.f32.mrb[0].mxu0
        %v9983 = vpop.f32.mrb[0].mxu0
        %9984 = vdwg.mxu0
        %9985 = vmatprep.subr.bf16.mxu0 0
        %9986 = vmatpush1.bf16.msra.mxu0 %v7121
        %9987 = vmatprep.subr.bf16.mxu0 0
        %9988 = vmatpush1.bf16.msra.mxu0 %v7122
        %9989 = vmatprep.subr.bf16.mxu0 0
        %9990 = vmatpush1.bf16.msra.mxu0 %v7123
        %9991 = vmatprep.subr.bf16.mxu0 0
        %9992 = vmatpush1.bf16.msra.mxu0 %v7124
        %9993 = vmatprep.subr.bf16.mxu0 0
        %9994 = vmatpush1.bf16.msra.mxu0 %v7125
        %9995 = vmatprep.subr.bf16.mxu0 0
        %9996 = vmatpush1.bf16.msra.mxu0 %v7126
        %9997 = vmatprep.subr.bf16.mxu0 0
        %9998 = vmatpush1.bf16.msra.mxu0 %v7127
        %9999 = vmatprep.subr.bf16.mxu0 0
        %10000 = vmatpush1.bf16.msra.mxu0 %v7128
        %10001 = vmatprep.subr.bf16.mxu0 0
        %10002 = vmatpush1.bf16.msra.mxu0 %v7129
        %10003 = vmatprep.subr.bf16.mxu0 0
        %10004 = vmatpush1.bf16.msra.mxu0 %v7130
        %10005 = vmatprep.subr.bf16.mxu0 0
        %10006 = vmatpush1.bf16.msra.mxu0 %v7131
        %10007 = vmatprep.subr.bf16.mxu0 0
        %10008 = vmatpush1.bf16.msra.mxu0 %v7132
        %10009 = vmatprep.subr.bf16.mxu0 0
        %10010 = vmatpush1.bf16.msra.mxu0 %v7133
        %10011 = vmatprep.subr.bf16.mxu0 0
        %10012 = vmatpush1.bf16.msra.mxu0 %v7134
        %10013 = vmatprep.subr.bf16.mxu0 0
        %10014 = vmatpush1.bf16.msra.mxu0 %v7135
        %10015 = vmatprep.subr.bf16.mxu0 0
        %10016 = vmatpush1.bf16.msra.mxu0 %v7136
        %10017 = vmatprep.mubr.bf16.mxu0 %v367
        %10018 = vmatmul.mubr.bf16.gmra.mrb[0].mxu0 %v366
        %v10019 = vpop.f32.mrb[0].mxu0
        %v10020 = vadd.f32 %v9980, %v10019
        %v10021 = vpop.f32.mrb[0].mxu0
        %v10022 = vpop.f32.mrb[0].mxu0
        %v10023 = vpop.f32.mrb[0].mxu0
        %10024 = vdwg.mxu0
        %10025 = vmatprep.subr.bf16.mxu0 0
        %10026 = vmatpush1.bf16.msra.mxu0 %v7137
        %10027 = vmatprep.subr.bf16.mxu0 0
        %10028 = vmatpush1.bf16.msra.mxu0 %v7138
        %10029 = vmatprep.subr.bf16.mxu0 0
        %10030 = vmatpush1.bf16.msra.mxu0 %v7139
        %10031 = vmatprep.subr.bf16.mxu0 0
        %10032 = vmatpush1.bf16.msra.mxu0 %v7140
        %10033 = vmatprep.subr.bf16.mxu0 0
        %10034 = vmatpush1.bf16.msra.mxu0 %v7141
        %10035 = vmatprep.subr.bf16.mxu0 0
        %10036 = vmatpush1.bf16.msra.mxu0 %v7142
        %10037 = vmatprep.subr.bf16.mxu0 0
        %10038 = vmatpush1.bf16.msra.mxu0 %v7143
        %10039 = vmatprep.subr.bf16.mxu0 0
        %10040 = vmatpush1.bf16.msra.mxu0 %v7144
        %10041 = vmatprep.subr.bf16.mxu0 0
        %10042 = vmatpush1.bf16.msra.mxu0 %v7145
        %10043 = vmatprep.subr.bf16.mxu0 0
        %10044 = vmatpush1.bf16.msra.mxu0 %v7146
        %10045 = vmatprep.subr.bf16.mxu0 0
        %10046 = vmatpush1.bf16.msra.mxu0 %v7147
        %10047 = vmatprep.subr.bf16.mxu0 0
        %10048 = vmatpush1.bf16.msra.mxu0 %v7148
        %10049 = vmatprep.subr.bf16.mxu0 0
        %10050 = vmatpush1.bf16.msra.mxu0 %v7149
        %10051 = vmatprep.subr.bf16.mxu0 0
        %10052 = vmatpush1.bf16.msra.mxu0 %v7150
        %10053 = vmatprep.subr.bf16.mxu0 0
        %10054 = vmatpush1.bf16.msra.mxu0 %v7151
        %10055 = vmatprep.subr.bf16.mxu0 0
        %10056 = vmatpush1.bf16.msra.mxu0 %v7152
        %10057 = vmatprep.mubr.bf16.mxu0 %v369
        %10058 = vmatmul.mubr.bf16.gmra.mrb[0].mxu0 %v368
        %v10059 = vpop.f32.mrb[0].mxu0
        %v10060 = vadd.f32 %v10020, %v10059
        %v10061 = vpop.f32.mrb[0].mxu0
        %v10062 = vpop.f32.mrb[0].mxu0
        %v10063 = vpop.f32.mrb[0].mxu0
        %10064 = vdwg.mxu0
        %10065 = vmatprep.subr.bf16.mxu0 0
        %10066 = vmatpush1.bf16.msra.mxu0 %v7153
        %10067 = vmatprep.subr.bf16.mxu0 0
        %10068 = vmatpush1.bf16.msra.mxu0 %v7154
        %10069 = vmatprep.subr.bf16.mxu0 0
        %10070 = vmatpush1.bf16.msra.mxu0 %v7155
        %10071 = vmatprep.subr.bf16.mxu0 0
        %10072 = vmatpush1.bf16.msra.mxu0 %v7156
        %10073 = vmatprep.subr.bf16.mxu0 0
        %10074 = vmatpush1.bf16.msra.mxu0 %v7157
        %10075 = vmatprep.subr.bf16.mxu0 0
        %10076 = vmatpush1.bf16.msra.mxu0 %v7158
        %10077 = vmatprep.subr.bf16.mxu0 0
        %10078 = vmatpush1.bf16.msra.mxu0 %v7159
        %10079 = vmatprep.subr.bf16.mxu0 0
        %10080 = vmatpush1.bf16.msra.mxu0 %v7160
        %10081 = vmatprep.subr.bf16.mxu0 0
        %10082 = vmatpush1.bf16.msra.mxu0 %v7161
        %10083 = vmatprep.subr.bf16.mxu0 0
        %10084 = vmatpush1.bf16.msra.mxu0 %v7162
        %10085 = vmatprep.subr.bf16.mxu0 0
        %10086 = vmatpush1.bf16.msra.mxu0 %v7163
        %10087 = vmatprep.subr.bf16.mxu0 0
        %10088 = vmatpush1.bf16.msra.mxu0 %v7164
        %10089 = vmatprep.subr.bf16.mxu0 0
        %10090 = vmatpush1.bf16.msra.mxu0 %v7165
        %10091 = vmatprep.subr.bf16.mxu0 0
        %10092 = vmatpush1.bf16.msra.mxu0 %v7166
        %10093 = vmatprep.subr.bf16.mxu0 0
        %10094 = vmatpush1.bf16.msra.mxu0 %v7167
        %10095 = vmatprep.subr.bf16.mxu0 0
        %10096 = vmatpush1.bf16.msra.mxu0 %v7168
        %10097 = vmatprep.mubr.bf16.mxu0 %v371
        %10098 = vmatmul.mubr.bf16.gmra.mrb[0].mxu0 %v370
        %v10099 = vpop.f32.mrb[0].mxu0
        %v10100 = vadd.f32 %v10060, %v10099
        %v10101 = vpop.f32.mrb[0].mxu0
        %v10102 = vpop.f32.mrb[0].mxu0
        %v10103 = vpop.f32.mrb[0].mxu0
        %10104 = vdwg.mxu0
        %10105 = vmatprep.subr.bf16.mxu0 0
        %10106 = vmatpush1.bf16.msra.mxu0 %v7169
        %10107 = vmatprep.subr.bf16.mxu0 0
        %10108 = vmatpush1.bf16.msra.mxu0 %v7170
        %10109 = vmatprep.subr.bf16.mxu0 0
        %10110 = vmatpush1.bf16.msra.mxu0 %v7171
        %10111 = vmatprep.subr.bf16.mxu0 0
        %10112 = vmatpush1.bf16.msra.mxu0 %v7172
        %10113 = vmatprep.subr.bf16.mxu0 0
        %10114 = vmatpush1.bf16.msra.mxu0 %v7173
        %10115 = vmatprep.subr.bf16.mxu0 0
        %10116 = vmatpush1.bf16.msra.mxu0 %v7174
        %10117 = vmatprep.subr.bf16.mxu0 0
        %10118 = vmatpush1.bf16.msra.mxu0 %v7175
        %10119 = vmatprep.subr.bf16.mxu0 0
        %10120 = vmatpush1.bf16.msra.mxu0 %v7176
        %10121 = vmatprep.subr.bf16.mxu0 0
        %10122 = vmatpush1.bf16.msra.mxu0 %v7177
        %10123 = vmatprep.subr.bf16.mxu0 0
        %10124 = vmatpush1.bf16.msra.mxu0 %v7178
        %10125 = vmatprep.subr.bf16.mxu0 0
        %10126 = vmatpush1.bf16.msra.mxu0 %v7179
        %10127 = vmatprep.subr.bf16.mxu0 0
        %10128 = vmatpush1.bf16.msra.mxu0 %v7180
        %10129 = vmatprep.subr.bf16.mxu0 0
        %10130 = vmatpush1.bf16.msra.mxu0 %v7181
        %10131 = vmatprep.subr.bf16.mxu0 0
        %10132 = vmatpush1.bf16.msra.mxu0 %v7182
        %10133 = vmatprep.subr.bf16.mxu0 0
        %10134 = vmatpush1.bf16.msra.mxu0 %v7183
        %10135 = vmatprep.subr.bf16.mxu0 0
        %10136 = vmatpush1.bf16.msra.mxu0 %v7184
        %10137 = vmatprep.mubr.bf16.mxu0 %v373
        %10138 = vmatmul.mubr.bf16.gmra.mrb[0].mxu0 %v372
        %v10139 = vpop.f32.mrb[0].mxu0
        %v10140 = vadd.f32 %v10100, %v10139
        %v10141 = vpop.f32.mrb[0].mxu0
        %v10142 = vpop.f32.mrb[0].mxu0
        %v10143 = vpop.f32.mrb[0].mxu0
        %10144 = vdwg.mxu0
        %10145 = vmatprep.subr.bf16.mxu0 0
        %10146 = vmatpush1.bf16.msra.mxu0 %v7185
        %10147 = vmatprep.subr.bf16.mxu0 0
        %10148 = vmatpush1.bf16.msra.mxu0 %v7186
        %10149 = vmatprep.subr.bf16.mxu0 0
        %10150 = vmatpush1.bf16.msra.mxu0 %v7187
        %10151 = vmatprep.subr.bf16.mxu0 0
        %10152 = vmatpush1.bf16.msra.mxu0 %v7188
        %10153 = vmatprep.subr.bf16.mxu0 0
        %10154 = vmatpush1.bf16.msra.mxu0 %v7189
        %10155 = vmatprep.subr.bf16.mxu0 0
        %10156 = vmatpush1.bf16.msra.mxu0 %v7190
        %10157 = vmatprep.subr.bf16.mxu0 0
        %10158 = vmatpush1.bf16.msra.mxu0 %v7191
        %10159 = vmatprep.subr.bf16.mxu0 0
        %10160 = vmatpush1.bf16.msra.mxu0 %v7192
        %10161 = vmatprep.subr.bf16.mxu0 0
        %10162 = vmatpush1.bf16.msra.mxu0 %v7193
        %10163 = vmatprep.subr.bf16.mxu0 0
        %10164 = vmatpush1.bf16.msra.mxu0 %v7194
        %10165 = vmatprep.subr.bf16.mxu0 0
        %10166 = vmatpush1.bf16.msra.mxu0 %v7195
        %10167 = vmatprep.subr.bf16.mxu0 0
        %10168 = vmatpush1.bf16.msra.mxu0 %v7196
        %10169 = vmatprep.subr.bf16.mxu0 0
        %10170 = vmatpush1.bf16.msra.mxu0 %v7197
        %10171 = vmatprep.subr.bf16.mxu0 0
        %10172 = vmatpush1.bf16.msra.mxu0 %v7198
        %10173 = vmatprep.subr.bf16.mxu0 0
        %10174 = vmatpush1.bf16.msra.mxu0 %v7199
        %10175 = vmatprep.subr.bf16.mxu0 0
        %10176 = vmatpush1.bf16.msra.mxu0 %v7200
        %10177 = vmatprep.mubr.bf16.mxu0 %v375
        %10178 = vmatmul.mubr.bf16.gmra.mrb[0].mxu0 %v374
        %v10179 = vpop.f32.mrb[0].mxu0
        %v10180 = vadd.f32 %v10140, %v10179
        %v10181 = vpop.f32.mrb[0].mxu0
        %v10182 = vpop.f32.mrb[0].mxu0
        %v10183 = vpop.f32.mrb[0].mxu0
        %10184 = vdwg.mxu0
        %10185 = vmatprep.subr.bf16.mxu0 0
        %10186 = vmatpush1.bf16.msra.mxu0 %v7201
        %10187 = vmatprep.subr.bf16.mxu0 0
        %10188 = vmatpush1.bf16.msra.mxu0 %v7202
        %10189 = vmatprep.subr.bf16.mxu0 0
        %10190 = vmatpush1.bf16.msra.mxu0 %v7203
        %10191 = vmatprep.subr.bf16.mxu0 0
        %10192 = vmatpush1.bf16.msra.mxu0 %v7204
        %10193 = vmatprep.subr.bf16.mxu0 0
        %10194 = vmatpush1.bf16.msra.mxu0 %v7205
        %10195 = vmatprep.subr.bf16.mxu0 0
        %10196 = vmatpush1.bf16.msra.mxu0 %v7206
        %10197 = vmatprep.subr.bf16.mxu0 0
        %10198 = vmatpush1.bf16.msra.mxu0 %v7207
        %10199 = vmatprep.subr.bf16.mxu0 0
        %10200 = vmatpush1.bf16.msra.mxu0 %v7208
        %10201 = vmatprep.subr.bf16.mxu0 0
        %10202 = vmatpush1.bf16.msra.mxu0 %v7209
        %10203 = vmatprep.subr.bf16.mxu0 0
        %10204 = vmatpush1.bf16.msra.mxu0 %v7210
        %10205 = vmatprep.subr.bf16.mxu0 0
        %10206 = vmatpush1.bf16.msra.mxu0 %v7211
        %10207 = vmatprep.subr.bf16.mxu0 0
        %10208 = vmatpush1.bf16.msra.mxu0 %v7212
        %10209 = vmatprep.subr.bf16.mxu0 0
        %10210 = vmatpush1.bf16.msra.mxu0 %v7213
        %10211 = vmatprep.subr.bf16.mxu0 0
        %10212 = vmatpush1.bf16.msra.mxu0 %v7214
        %10213 = vmatprep.subr.bf16.mxu0 0
        %10214 = vmatpush1.bf16.msra.mxu0 %v7215
        %10215 = vmatprep.subr.bf16.mxu0 0
        %10216 = vmatpush1.bf16.msra.mxu0 %v7216
        %10217 = vmatprep.mubr.bf16.mxu0 %v377
        %10218 = vmatmul.mubr.bf16.gmra.mrb[0].mxu0 %v376
        %v10219 = vpop.f32.mrb[0].mxu0
        %v10220 = vadd.f32 %v10180, %v10219
        %v10221 = vpop.f32.mrb[0].mxu0
        %v10222 = vpop.f32.mrb[0].mxu0
        %v10223 = vpop.f32.mrb[0].mxu0
        %10224 = vdwg.mxu0
        %10225 = vmatprep.subr.bf16.mxu0 0
        %10226 = vmatpush1.bf16.msra.mxu0 %v7217
        %10227 = vmatprep.subr.bf16.mxu0 0
        %10228 = vmatpush1.bf16.msra.mxu0 %v7218
        %10229 = vmatprep.subr.bf16.mxu0 0
        %10230 = vmatpush1.bf16.msra.mxu0 %v7219
        %10231 = vmatprep.subr.bf16.mxu0 0
        %10232 = vmatpush1.bf16.msra.mxu0 %v7220
        %10233 = vmatprep.subr.bf16.mxu0 0
        %10234 = vmatpush1.bf16.msra.mxu0 %v7221
        %10235 = vmatprep.subr.bf16.mxu0 0
        %10236 = vmatpush1.bf16.msra.mxu0 %v7222
        %10237 = vmatprep.subr.bf16.mxu0 0
        %10238 = vmatpush1.bf16.msra.mxu0 %v7223
        %10239 = vmatprep.subr.bf16.mxu0 0
        %10240 = vmatpush1.bf16.msra.mxu0 %v7224
        %10241 = vmatprep.subr.bf16.mxu0 0
        %10242 = vmatpush1.bf16.msra.mxu0 %v7225
        %10243 = vmatprep.subr.bf16.mxu0 0
        %10244 = vmatpush1.bf16.msra.mxu0 %v7226
        %10245 = vmatprep.subr.bf16.mxu0 0
        %10246 = vmatpush1.bf16.msra.mxu0 %v7227
        %10247 = vmatprep.subr.bf16.mxu0 0
        %10248 = vmatpush1.bf16.msra.mxu0 %v7228
        %10249 = vmatprep.subr.bf16.mxu0 0
        %10250 = vmatpush1.bf16.msra.mxu0 %v7229
        %10251 = vmatprep.subr.bf16.mxu0 0
        %10252 = vmatpush1.bf16.msra.mxu0 %v7230
        %10253 = vmatprep.subr.bf16.mxu0 0
        %10254 = vmatpush1.bf16.msra.mxu0 %v7231
        %10255 = vmatprep.subr.bf16.mxu0 0
        %10256 = vmatpush1.bf16.msra.mxu0 %v7232
        %10257 = vmatprep.mubr.bf16.mxu0 %v379
        %10258 = vmatmul.mubr.bf16.gmra.mrb[0].mxu0 %v378
        %v10259 = vpop.f32.mrb[0].mxu0
        %v10260 = vadd.f32 %v10220, %v10259
        %v10261 = vpop.f32.mrb[0].mxu0
        %v10262 = vpop.f32.mrb[0].mxu0
        %v10263 = vpop.f32.mrb[0].mxu0
        %10264 = vdwg.mxu0
        %10265 = vmatprep.subr.bf16.mxu0 0
        %10266 = vmatpush1.bf16.msra.mxu0 %v7233
        %10267 = vmatprep.subr.bf16.mxu0 0
        %10268 = vmatpush1.bf16.msra.mxu0 %v7234
        %10269 = vmatprep.subr.bf16.mxu0 0
        %10270 = vmatpush1.bf16.msra.mxu0 %v7235
        %10271 = vmatprep.subr.bf16.mxu0 0
        %10272 = vmatpush1.bf16.msra.mxu0 %v7236
        %10273 = vmatprep.subr.bf16.mxu0 0
        %10274 = vmatpush1.bf16.msra.mxu0 %v7237
        %10275 = vmatprep.subr.bf16.mxu0 0
        %10276 = vmatpush1.bf16.msra.mxu0 %v7238
        %10277 = vmatprep.subr.bf16.mxu0 0
        %10278 = vmatpush1.bf16.msra.mxu0 %v7239
        %10279 = vmatprep.subr.bf16.mxu0 0
        %10280 = vmatpush1.bf16.msra.mxu0 %v7240
        %10281 = vmatprep.subr.bf16.mxu0 0
        %10282 = vmatpush1.bf16.msra.mxu0 %v7241
        %10283 = vmatprep.subr.bf16.mxu0 0
        %10284 = vmatpush1.bf16.msra.mxu0 %v7242
        %10285 = vmatprep.subr.bf16.mxu0 0
        %10286 = vmatpush1.bf16.msra.mxu0 %v7243
        %10287 = vmatprep.subr.bf16.mxu0 0
        %10288 = vmatpush1.bf16.msra.mxu0 %v7244
        %10289 = vmatprep.subr.bf16.mxu0 0
        %10290 = vmatpush1.bf16.msra.mxu0 %v7245
        %10291 = vmatprep.subr.bf16.mxu0 0
        %10292 = vmatpush1.bf16.msra.mxu0 %v7246
        %10293 = vmatprep.subr.bf16.mxu0 0
        %10294 = vmatpush1.bf16.msra.mxu0 %v7247
        %10295 = vmatprep.subr.bf16.mxu0 0
        %10296 = vmatpush1.bf16.msra.mxu0 %v7248
        %10297 = vmatprep.mubr.bf16.mxu0 %v381
        %10298 = vmatmul.mubr.bf16.gmra.mrb[0].mxu0 %v380
        %v10299 = vpop.f32.mrb[0].mxu0
        %v10300 = vadd.f32 %v10260, %v10299
        %v10301 = vpop.f32.mrb[0].mxu0
        %v10302 = vpop.f32.mrb[0].mxu0
        %v10303 = vpop.f32.mrb[0].mxu0
        %10304 = vdwg.mxu0
        %10305 = vmatprep.subr.bf16.mxu0 0
        %10306 = vmatpush1.bf16.msra.mxu0 %v7249
        %10307 = vmatprep.subr.bf16.mxu0 0
        %10308 = vmatpush1.bf16.msra.mxu0 %v7250
        %10309 = vmatprep.subr.bf16.mxu0 0
        %10310 = vmatpush1.bf16.msra.mxu0 %v7251
        %10311 = vmatprep.subr.bf16.mxu0 0
        %10312 = vmatpush1.bf16.msra.mxu0 %v7252
        %10313 = vmatprep.subr.bf16.mxu0 0
        %10314 = vmatpush1.bf16.msra.mxu0 %v7253
        %10315 = vmatprep.subr.bf16.mxu0 0
        %10316 = vmatpush1.bf16.msra.mxu0 %v7254
        %10317 = vmatprep.subr.bf16.mxu0 0
        %10318 = vmatpush1.bf16.msra.mxu0 %v7255
        %10319 = vmatprep.subr.bf16.mxu0 0
        %10320 = vmatpush1.bf16.msra.mxu0 %v7256
        %10321 = vmatprep.subr.bf16.mxu0 0
        %10322 = vmatpush1.bf16.msra.mxu0 %v7257
        %10323 = vmatprep.subr.bf16.mxu0 0
        %10324 = vmatpush1.bf16.msra.mxu0 %v7258
        %10325 = vmatprep.subr.bf16.mxu0 0
        %10326 = vmatpush1.bf16.msra.mxu0 %v7259
        %10327 = vmatprep.subr.bf16.mxu0 0
        %10328 = vmatpush1.bf16.msra.mxu0 %v7260
        %10329 = vmatprep.subr.bf16.mxu0 0
        %10330 = vmatpush1.bf16.msra.mxu0 %v7261
        %10331 = vmatprep.subr.bf16.mxu0 0
        %10332 = vmatpush1.bf16.msra.mxu0 %v7262
        %10333 = vmatprep.subr.bf16.mxu0 0
        %10334 = vmatpush1.bf16.msra.mxu0 %v7263
        %10335 = vmatprep.subr.bf16.mxu0 0
        %10336 = vmatpush1.bf16.msra.mxu0 %v7264
        %10337 = vmatprep.mubr.bf16.mxu0 %v383
        %10338 = vmatmul.mubr.bf16.gmra.mrb[0].mxu0 %v382
        %v10339 = vpop.f32.mrb[0].mxu0
        %v10340 = vadd.f32 %v10300, %v10339
        %v10341 = vpop.f32.mrb[0].mxu0
        %v10342 = vpop.f32.mrb[0].mxu0
        %v10343 = vpop.f32.mrb[0].mxu0
        %10344 = vdwg.mxu0
        %10345 = vmatprep.subr.bf16.mxu0 0
        %10346 = vmatpush1.bf16.msra.mxu0 %v7265
        %10347 = vmatprep.subr.bf16.mxu0 0
        %10348 = vmatpush1.bf16.msra.mxu0 %v7266
        %10349 = vmatprep.subr.bf16.mxu0 0
        %10350 = vmatpush1.bf16.msra.mxu0 %v7267
        %10351 = vmatprep.subr.bf16.mxu0 0
        %10352 = vmatpush1.bf16.msra.mxu0 %v7268
        %10353 = vmatprep.subr.bf16.mxu0 0
        %10354 = vmatpush1.bf16.msra.mxu0 %v7269
        %10355 = vmatprep.subr.bf16.mxu0 0
        %10356 = vmatpush1.bf16.msra.mxu0 %v7270
        %10357 = vmatprep.subr.bf16.mxu0 0
        %10358 = vmatpush1.bf16.msra.mxu0 %v7271
        %10359 = vmatprep.subr.bf16.mxu0 0
        %10360 = vmatpush1.bf16.msra.mxu0 %v7272
        %10361 = vmatprep.subr.bf16.mxu0 0
        %10362 = vmatpush1.bf16.msra.mxu0 %v7273
        %10363 = vmatprep.subr.bf16.mxu0 0
        %10364 = vmatpush1.bf16.msra.mxu0 %v7274
        %10365 = vmatprep.subr.bf16.mxu0 0
        %10366 = vmatpush1.bf16.msra.mxu0 %v7275
        %10367 = vmatprep.subr.bf16.mxu0 0
        %10368 = vmatpush1.bf16.msra.mxu0 %v7276
        %10369 = vmatprep.subr.bf16.mxu0 0
        %10370 = vmatpush1.bf16.msra.mxu0 %v7277
        %10371 = vmatprep.subr.bf16.mxu0 0
        %10372 = vmatpush1.bf16.msra.mxu0 %v7278
        %10373 = vmatprep.subr.bf16.mxu0 0
        %10374 = vmatpush1.bf16.msra.mxu0 %v7279
        %10375 = vmatprep.subr.bf16.mxu0 0
        %10376 = vmatpush1.bf16.msra.mxu0 %v7280
        %10377 = vmatprep.mubr.bf16.mxu0 %v385
        %10378 = vmatmul.mubr.bf16.gmra.mrb[0].mxu0 %v384
        %v10379 = vpop.f32.mrb[0].mxu0
        %v10380 = vadd.f32 %v10340, %v10379
        %v10381 = vpop.f32.mrb[0].mxu0
        %v10382 = vpop.f32.mrb[0].mxu0
        %v10383 = vpop.f32.mrb[0].mxu0
        %10384 = vdwg.mxu0
        %10385 = vmatprep.subr.bf16.mxu0 0
        %10386 = vmatpush1.bf16.msra.mxu0 %v7281
        %10387 = vmatprep.subr.bf16.mxu0 0
        %10388 = vmatpush1.bf16.msra.mxu0 %v7282
        %10389 = vmatprep.subr.bf16.mxu0 0
        %10390 = vmatpush1.bf16.msra.mxu0 %v7283
        %10391 = vmatprep.subr.bf16.mxu0 0
        %10392 = vmatpush1.bf16.msra.mxu0 %v7284
        %10393 = vmatprep.subr.bf16.mxu0 0
        %10394 = vmatpush1.bf16.msra.mxu0 %v7285
        %10395 = vmatprep.subr.bf16.mxu0 0
        %10396 = vmatpush1.bf16.msra.mxu0 %v7286
        %10397 = vmatprep.subr.bf16.mxu0 0
        %10398 = vmatpush1.bf16.msra.mxu0 %v7287
        %10399 = vmatprep.subr.bf16.mxu0 0
        %10400 = vmatpush1.bf16.msra.mxu0 %v7288
        %10401 = vmatprep.subr.bf16.mxu0 0
        %10402 = vmatpush1.bf16.msra.mxu0 %v7289
        %10403 = vmatprep.subr.bf16.mxu0 0
        %10404 = vmatpush1.bf16.msra.mxu0 %v7290
        %10405 = vmatprep.subr.bf16.mxu0 0
        %10406 = vmatpush1.bf16.msra.mxu0 %v7291
        %10407 = vmatprep.subr.bf16.mxu0 0
        %10408 = vmatpush1.bf16.msra.mxu0 %v7292
        %10409 = vmatprep.subr.bf16.mxu0 0
        %10410 = vmatpush1.bf16.msra.mxu0 %v7293
        %10411 = vmatprep.subr.bf16.mxu0 0
        %10412 = vmatpush1.bf16.msra.mxu0 %v7294
        %10413 = vmatprep.subr.bf16.mxu0 0
        %10414 = vmatpush1.bf16.msra.mxu0 %v7295
        %10415 = vmatprep.subr.bf16.mxu0 0
        %10416 = vmatpush1.bf16.msra.mxu0 %v7296
        %10417 = vmatprep.mubr.bf16.mxu0 %v387
        %10418 = vmatmul.mubr.bf16.gmra.mrb[0].mxu0 %v386
        %v10419 = vpop.f32.mrb[0].mxu0
        %v10420 = vadd.f32 %v10380, %v10419
        %v10421 = vpop.f32.mrb[0].mxu0
        %v10422 = vpop.f32.mrb[0].mxu0
        %v10423 = vpop.f32.mrb[0].mxu0
        %10424 = vdwg.mxu0
        %10425 = vmatprep.subr.bf16.mxu0 0
        %10426 = vmatpush1.bf16.msra.mxu0 %v7297
        %10427 = vmatprep.subr.bf16.mxu0 0
        %10428 = vmatpush1.bf16.msra.mxu0 %v7298
        %10429 = vmatprep.subr.bf16.mxu0 0
        %10430 = vmatpush1.bf16.msra.mxu0 %v7299
        %10431 = vmatprep.subr.bf16.mxu0 0
        %10432 = vmatpush1.bf16.msra.mxu0 %v7300
        %10433 = vmatprep.subr.bf16.mxu0 0
        %10434 = vmatpush1.bf16.msra.mxu0 %v7301
        %10435 = vmatprep.subr.bf16.mxu0 0
        %10436 = vmatpush1.bf16.msra.mxu0 %v7302
        %10437 = vmatprep.subr.bf16.mxu0 0
        %10438 = vmatpush1.bf16.msra.mxu0 %v7303
        %10439 = vmatprep.subr.bf16.mxu0 0
        %10440 = vmatpush1.bf16.msra.mxu0 %v7304
        %10441 = vmatprep.subr.bf16.mxu0 0
        %10442 = vmatpush1.bf16.msra.mxu0 %v7305
        %10443 = vmatprep.subr.bf16.mxu0 0
        %10444 = vmatpush1.bf16.msra.mxu0 %v7306
        %10445 = vmatprep.subr.bf16.mxu0 0
        %10446 = vmatpush1.bf16.msra.mxu0 %v7307
        %10447 = vmatprep.subr.bf16.mxu0 0
        %10448 = vmatpush1.bf16.msra.mxu0 %v7308
        %10449 = vmatprep.subr.bf16.mxu0 0
        %10450 = vmatpush1.bf16.msra.mxu0 %v7309
        %10451 = vmatprep.subr.bf16.mxu0 0
        %10452 = vmatpush1.bf16.msra.mxu0 %v7310
        %10453 = vmatprep.subr.bf16.mxu0 0
        %10454 = vmatpush1.bf16.msra.mxu0 %v7311
        %10455 = vmatprep.subr.bf16.mxu0 0
        %10456 = vmatpush1.bf16.msra.mxu0 %v7312
        %10457 = vmatprep.mubr.bf16.mxu0 %v389
        %10458 = vmatmul.mubr.bf16.gmra.mrb[0].mxu0 %v388
        %v10459 = vpop.f32.mrb[0].mxu0
        %v10460 = vadd.f32 %v10420, %v10459
        %v10461 = vpop.f32.mrb[0].mxu0
        %v10462 = vpop.f32.mrb[0].mxu0
        %v10463 = vpop.f32.mrb[0].mxu0
        %10464 = vdwg.mxu0
        %10465 = vmatprep.subr.bf16.mxu0 0
        %10466 = vmatpush1.bf16.msra.mxu0 %v7313
        %10467 = vmatprep.subr.bf16.mxu0 0
        %10468 = vmatpush1.bf16.msra.mxu0 %v7314
        %10469 = vmatprep.subr.bf16.mxu0 0
        %10470 = vmatpush1.bf16.msra.mxu0 %v7315
        %10471 = vmatprep.subr.bf16.mxu0 0
        %10472 = vmatpush1.bf16.msra.mxu0 %v7316
        %10473 = vmatprep.subr.bf16.mxu0 0
        %10474 = vmatpush1.bf16.msra.mxu0 %v7317
        %10475 = vmatprep.subr.bf16.mxu0 0
        %10476 = vmatpush1.bf16.msra.mxu0 %v7318
        %10477 = vmatprep.subr.bf16.mxu0 0
        %10478 = vmatpush1.bf16.msra.mxu0 %v7319
        %10479 = vmatprep.subr.bf16.mxu0 0
        %10480 = vmatpush1.bf16.msra.mxu0 %v7320
        %10481 = vmatprep.subr.bf16.mxu0 0
        %10482 = vmatpush1.bf16.msra.mxu0 %v7321
        %10483 = vmatprep.subr.bf16.mxu0 0
        %10484 = vmatpush1.bf16.msra.mxu0 %v7322
        %10485 = vmatprep.subr.bf16.mxu0 0
        %10486 = vmatpush1.bf16.msra.mxu0 %v7323
        %10487 = vmatprep.subr.bf16.mxu0 0
        %10488 = vmatpush1.bf16.msra.mxu0 %v7324
        %10489 = vmatprep.subr.bf16.mxu0 0
        %10490 = vmatpush1.bf16.msra.mxu0 %v7325
        %10491 = vmatprep.subr.bf16.mxu0 0
        %10492 = vmatpush1.bf16.msra.mxu0 %v7326
        %10493 = vmatprep.subr.bf16.mxu0 0
        %10494 = vmatpush1.bf16.msra.mxu0 %v7327
        %10495 = vmatprep.subr.bf16.mxu0 0
        %10496 = vmatpush1.bf16.msra.mxu0 %v7328
        %10497 = vmatprep.mubr.bf16.mxu0 %v391
        %10498 = vmatmul.mubr.bf16.gmra.mrb[0].mxu0 %v390
        %v10499 = vpop.f32.mrb[0].mxu0
        %v10500 = vadd.f32 %v10460, %v10499
        %v10501 = vpop.f32.mrb[0].mxu0
        %v10502 = vpop.f32.mrb[0].mxu0
        %v10503 = vpop.f32.mrb[0].mxu0
        %10504 = vdwg.mxu0
        %10505 = vmatprep.subr.bf16.mxu0 0
        %10506 = vmatpush1.bf16.msra.mxu0 %v7329
        %10507 = vmatprep.subr.bf16.mxu0 0
        %10508 = vmatpush1.bf16.msra.mxu0 %v7330
        %10509 = vmatprep.subr.bf16.mxu0 0
        %10510 = vmatpush1.bf16.msra.mxu0 %v7331
        %10511 = vmatprep.subr.bf16.mxu0 0
        %10512 = vmatpush1.bf16.msra.mxu0 %v7332
        %10513 = vmatprep.subr.bf16.mxu0 0
        %10514 = vmatpush1.bf16.msra.mxu0 %v7333
        %10515 = vmatprep.subr.bf16.mxu0 0
        %10516 = vmatpush1.bf16.msra.mxu0 %v7334
        %10517 = vmatprep.subr.bf16.mxu0 0
        %10518 = vmatpush1.bf16.msra.mxu0 %v7335
        %10519 = vmatprep.subr.bf16.mxu0 0
        %10520 = vmatpush1.bf16.msra.mxu0 %v7336
        %10521 = vmatprep.subr.bf16.mxu0 0
        %10522 = vmatpush1.bf16.msra.mxu0 %v7337
        %10523 = vmatprep.subr.bf16.mxu0 0
        %10524 = vmatpush1.bf16.msra.mxu0 %v7338
        %10525 = vmatprep.subr.bf16.mxu0 0
        %10526 = vmatpush1.bf16.msra.mxu0 %v7339
        %10527 = vmatprep.subr.bf16.mxu0 0
        %10528 = vmatpush1.bf16.msra.mxu0 %v7340
        %10529 = vmatprep.subr.bf16.mxu0 0
        %10530 = vmatpush1.bf16.msra.mxu0 %v7341
        %10531 = vmatprep.subr.bf16.mxu0 0
        %10532 = vmatpush1.bf16.msra.mxu0 %v7342
        %10533 = vmatprep.subr.bf16.mxu0 0
        %10534 = vmatpush1.bf16.msra.mxu0 %v7343
        %10535 = vmatprep.subr.bf16.mxu0 0
        %10536 = vmatpush1.bf16.msra.mxu0 %v7344
        %10537 = vmatprep.mubr.bf16.mxu0 %v393
        %10538 = vmatmul.mubr.bf16.gmra.mrb[0].mxu0 %v392
        %v10539 = vpop.f32.mrb[0].mxu0
        %v10540 = vadd.f32 %v10500, %v10539
        %v10541 = vpop.f32.mrb[0].mxu0
        %v10542 = vpop.f32.mrb[0].mxu0
        %v10543 = vpop.f32.mrb[0].mxu0
        %10544 = vdwg.mxu0
        %10545 = vmatprep.subr.bf16.mxu0 0
        %10546 = vmatpush1.bf16.msra.mxu0 %v7345
        %10547 = vmatprep.subr.bf16.mxu0 0
        %10548 = vmatpush1.bf16.msra.mxu0 %v7346
        %10549 = vmatprep.subr.bf16.mxu0 0
        %10550 = vmatpush1.bf16.msra.mxu0 %v7347
        %10551 = vmatprep.subr.bf16.mxu0 0
        %10552 = vmatpush1.bf16.msra.mxu0 %v7348
        %10553 = vmatprep.subr.bf16.mxu0 0
        %10554 = vmatpush1.bf16.msra.mxu0 %v7349
        %10555 = vmatprep.subr.bf16.mxu0 0
        %10556 = vmatpush1.bf16.msra.mxu0 %v7350
        %10557 = vmatprep.subr.bf16.mxu0 0
        %10558 = vmatpush1.bf16.msra.mxu0 %v7351
        %10559 = vmatprep.subr.bf16.mxu0 0
        %10560 = vmatpush1.bf16.msra.mxu0 %v7352
        %10561 = vmatprep.subr.bf16.mxu0 0
        %10562 = vmatpush1.bf16.msra.mxu0 %v7353
        %10563 = vmatprep.subr.bf16.mxu0 0
        %10564 = vmatpush1.bf16.msra.mxu0 %v7354
        %10565 = vmatprep.subr.bf16.mxu0 0
        %10566 = vmatpush1.bf16.msra.mxu0 %v7355
        %10567 = vmatprep.subr.bf16.mxu0 0
        %10568 = vmatpush1.bf16.msra.mxu0 %v7356
        %10569 = vmatprep.subr.bf16.mxu0 0
        %10570 = vmatpush1.bf16.msra.mxu0 %v7357
        %10571 = vmatprep.subr.bf16.mxu0 0
        %10572 = vmatpush1.bf16.msra.mxu0 %v7358
        %10573 = vmatprep.subr.bf16.mxu0 0
        %10574 = vmatpush1.bf16.msra.mxu0 %v7359
        %10575 = vmatprep.subr.bf16.mxu0 0
        %10576 = vmatpush1.bf16.msra.mxu0 %v7360
        %10577 = vmatprep.mubr.bf16.mxu0 %v395
        %10578 = vmatmul.mubr.bf16.gmra.mrb[0].mxu0 %v394
        %v10579 = vpop.f32.mrb[0].mxu0
        %v10580 = vadd.f32 %v10540, %v10579
        %v10581 = vpop.f32.mrb[0].mxu0
        %v10582 = vpop.f32.mrb[0].mxu0
        %v10583 = vpop.f32.mrb[0].mxu0
        %10584 = vdwg.mxu0
        %10585 = vmatprep.subr.bf16.mxu0 0
        %10586 = vmatpush1.bf16.msra.mxu0 %v7361
        %10587 = vmatprep.subr.bf16.mxu0 0
        %10588 = vmatpush1.bf16.msra.mxu0 %v7362
        %10589 = vmatprep.subr.bf16.mxu0 0
        %10590 = vmatpush1.bf16.msra.mxu0 %v7363
        %10591 = vmatprep.subr.bf16.mxu0 0
        %10592 = vmatpush1.bf16.msra.mxu0 %v7364
        %10593 = vmatprep.subr.bf16.mxu0 0
        %10594 = vmatpush1.bf16.msra.mxu0 %v7365
        %10595 = vmatprep.subr.bf16.mxu0 0
        %10596 = vmatpush1.bf16.msra.mxu0 %v7366
        %10597 = vmatprep.subr.bf16.mxu0 0
        %10598 = vmatpush1.bf16.msra.mxu0 %v7367
        %10599 = vmatprep.subr.bf16.mxu0 0
        %10600 = vmatpush1.bf16.msra.mxu0 %v7368
        %10601 = vmatprep.subr.bf16.mxu0 0
        %10602 = vmatpush1.bf16.msra.mxu0 %v7369
        %10603 = vmatprep.subr.bf16.mxu0 0
        %10604 = vmatpush1.bf16.msra.mxu0 %v7370
        %10605 = vmatprep.subr.bf16.mxu0 0
        %10606 = vmatpush1.bf16.msra.mxu0 %v7371
        %10607 = vmatprep.subr.bf16.mxu0 0
        %10608 = vmatpush1.bf16.msra.mxu0 %v7372
        %10609 = vmatprep.subr.bf16.mxu0 0
        %10610 = vmatpush1.bf16.msra.mxu0 %v7373
        %10611 = vmatprep.subr.bf16.mxu0 0
        %10612 = vmatpush1.bf16.msra.mxu0 %v7374
        %10613 = vmatprep.subr.bf16.mxu0 0
        %10614 = vmatpush1.bf16.msra.mxu0 %v7375
        %10615 = vmatprep.subr.bf16.mxu0 0
        %10616 = vmatpush1.bf16.msra.mxu0 %v7376
        %10617 = vmatprep.mubr.bf16.mxu0 %v397
        %10618 = vmatmul.mubr.bf16.gmra.mrb[0].mxu0 %v396
        %v10619 = vpop.f32.mrb[0].mxu0
        %v10620 = vadd.f32 %v10580, %v10619
        %v10621 = vpop.f32.mrb[0].mxu0
        %v10622 = vpop.f32.mrb[0].mxu0
        %v10623 = vpop.f32.mrb[0].mxu0
        %10624 = vdwg.mxu0
        %10625 = vmatprep.subr.bf16.mxu0 0
        %10626 = vmatpush1.bf16.msra.mxu0 %v7377
        %10627 = vmatprep.subr.bf16.mxu0 0
        %10628 = vmatpush1.bf16.msra.mxu0 %v7378
        %10629 = vmatprep.subr.bf16.mxu0 0
        %10630 = vmatpush1.bf16.msra.mxu0 %v7379
        %10631 = vmatprep.subr.bf16.mxu0 0
        %10632 = vmatpush1.bf16.msra.mxu0 %v7380
        %10633 = vmatprep.subr.bf16.mxu0 0
        %10634 = vmatpush1.bf16.msra.mxu0 %v7381
        %10635 = vmatprep.subr.bf16.mxu0 0
        %10636 = vmatpush1.bf16.msra.mxu0 %v7382
        %10637 = vmatprep.subr.bf16.mxu0 0
        %10638 = vmatpush1.bf16.msra.mxu0 %v7383
        %10639 = vmatprep.subr.bf16.mxu0 0
        %10640 = vmatpush1.bf16.msra.mxu0 %v7384
        %10641 = vmatprep.subr.bf16.mxu0 0
        %10642 = vmatpush1.bf16.msra.mxu0 %v7385
        %10643 = vmatprep.subr.bf16.mxu0 0
        %10644 = vmatpush1.bf16.msra.mxu0 %v7386
        %10645 = vmatprep.subr.bf16.mxu0 0
        %10646 = vmatpush1.bf16.msra.mxu0 %v7387
        %10647 = vmatprep.subr.bf16.mxu0 0
        %10648 = vmatpush1.bf16.msra.mxu0 %v7388
        %10649 = vmatprep.subr.bf16.mxu0 0
        %10650 = vmatpush1.bf16.msra.mxu0 %v7389
        %10651 = vmatprep.subr.bf16.mxu0 0
        %10652 = vmatpush1.bf16.msra.mxu0 %v7390
        %10653 = vmatprep.subr.bf16.mxu0 0
        %10654 = vmatpush1.bf16.msra.mxu0 %v7391
        %10655 = vmatprep.subr.bf16.mxu0 0
        %10656 = vmatpush1.bf16.msra.mxu0 %v7392
        %10657 = vmatprep.mubr.bf16.mxu0 %v399
        %10658 = vmatmul.mubr.bf16.gmra.mrb[0].mxu0 %v398
        %v10659 = vpop.f32.mrb[0].mxu0
        %v10660 = vadd.f32 %v10620, %v10659
        %v10661 = vpop.f32.mrb[0].mxu0
        %v10662 = vpop.f32.mrb[0].mxu0
        %v10663 = vpop.f32.mrb[0].mxu0
        %10664 = vdwg.mxu0
        %10665 = vmatprep.subr.bf16.mxu0 0
        %10666 = vmatpush1.bf16.msra.mxu0 %v7393
        %10667 = vmatprep.subr.bf16.mxu0 0
        %10668 = vmatpush1.bf16.msra.mxu0 %v7394
        %10669 = vmatprep.subr.bf16.mxu0 0
        %10670 = vmatpush1.bf16.msra.mxu0 %v7395
        %10671 = vmatprep.subr.bf16.mxu0 0
        %10672 = vmatpush1.bf16.msra.mxu0 %v7396
        %10673 = vmatprep.subr.bf16.mxu0 0
        %10674 = vmatpush1.bf16.msra.mxu0 %v7397
        %10675 = vmatprep.subr.bf16.mxu0 0
        %10676 = vmatpush1.bf16.msra.mxu0 %v7398
        %10677 = vmatprep.subr.bf16.mxu0 0
        %10678 = vmatpush1.bf16.msra.mxu0 %v7399
        %10679 = vmatprep.subr.bf16.mxu0 0
        %10680 = vmatpush1.bf16.msra.mxu0 %v7400
        %10681 = vmatprep.subr.bf16.mxu0 0
        %10682 = vmatpush1.bf16.msra.mxu0 %v7401
        %10683 = vmatprep.subr.bf16.mxu0 0
        %10684 = vmatpush1.bf16.msra.mxu0 %v7402
        %10685 = vmatprep.subr.bf16.mxu0 0
        %10686 = vmatpush1.bf16.msra.mxu0 %v7403
        %10687 = vmatprep.subr.bf16.mxu0 0
        %10688 = vmatpush1.bf16.msra.mxu0 %v7404
        %10689 = vmatprep.subr.bf16.mxu0 0
        %10690 = vmatpush1.bf16.msra.mxu0 %v7405
        %10691 = vmatprep.subr.bf16.mxu0 0
        %10692 = vmatpush1.bf16.msra.mxu0 %v7406
        %10693 = vmatprep.subr.bf16.mxu0 0
        %10694 = vmatpush1.bf16.msra.mxu0 %v7407
        %10695 = vmatprep.subr.bf16.mxu0 0
        %10696 = vmatpush1.bf16.msra.mxu0 %v7408
        %10697 = vmatprep.mubr.bf16.mxu0 %v401
        %10698 = vmatmul.mubr.bf16.gmra.mrb[0].mxu0 %v400
        %v10699 = vpop.f32.mrb[0].mxu0
        %v10700 = vadd.f32 %v10660, %v10699
        %v10701 = vpop.f32.mrb[0].mxu0
        %v10702 = vpop.f32.mrb[0].mxu0
        %v10703 = vpop.f32.mrb[0].mxu0
        %10704 = vdwg.mxu0
        %10705 = vmatprep.subr.bf16.mxu0 0
        %10706 = vmatpush1.bf16.msra.mxu0 %v7409
        %10707 = vmatprep.subr.bf16.mxu0 0
        %10708 = vmatpush1.bf16.msra.mxu0 %v7410
        %10709 = vmatprep.subr.bf16.mxu0 0
        %10710 = vmatpush1.bf16.msra.mxu0 %v7411
        %10711 = vmatprep.subr.bf16.mxu0 0
        %10712 = vmatpush1.bf16.msra.mxu0 %v7412
        %10713 = vmatprep.subr.bf16.mxu0 0
        %10714 = vmatpush1.bf16.msra.mxu0 %v7413
        %10715 = vmatprep.subr.bf16.mxu0 0
        %10716 = vmatpush1.bf16.msra.mxu0 %v7414
        %10717 = vmatprep.subr.bf16.mxu0 0
        %10718 = vmatpush1.bf16.msra.mxu0 %v7415
        %10719 = vmatprep.subr.bf16.mxu0 0
        %10720 = vmatpush1.bf16.msra.mxu0 %v7416
        %10721 = vmatprep.subr.bf16.mxu0 0
        %10722 = vmatpush1.bf16.msra.mxu0 %v7417
        %10723 = vmatprep.subr.bf16.mxu0 0
        %10724 = vmatpush1.bf16.msra.mxu0 %v7418
        %10725 = vmatprep.subr.bf16.mxu0 0
        %10726 = vmatpush1.bf16.msra.mxu0 %v7419
        %10727 = vmatprep.subr.bf16.mxu0 0
        %10728 = vmatpush1.bf16.msra.mxu0 %v7420
        %10729 = vmatprep.subr.bf16.mxu0 0
        %10730 = vmatpush1.bf16.msra.mxu0 %v7421
        %10731 = vmatprep.subr.bf16.mxu0 0
        %10732 = vmatpush1.bf16.msra.mxu0 %v7422
        %10733 = vmatprep.subr.bf16.mxu0 0
        %10734 = vmatpush1.bf16.msra.mxu0 %v7423
        %10735 = vmatprep.subr.bf16.mxu0 0
        %10736 = vmatpush1.bf16.msra.mxu0 %v7424
        %10737 = vmatprep.mubr.bf16.mxu0 %v403
        %10738 = vmatmul.mubr.bf16.gmra.mrb[0].mxu0 %v402
        %v10739 = vpop.f32.mrb[0].mxu0
        %v10740 = vadd.f32 %v10700, %v10739
        %v10741 = vpop.f32.mrb[0].mxu0
        %v10742 = vpop.f32.mrb[0].mxu0
        %v10743 = vpop.f32.mrb[0].mxu0
        %10744 = vdwg.mxu0
        %10745 = vmatprep.subr.bf16.mxu0 0
        %10746 = vmatpush1.bf16.msra.mxu0 %v7425
        %10747 = vmatprep.subr.bf16.mxu0 0
        %10748 = vmatpush1.bf16.msra.mxu0 %v7426
        %10749 = vmatprep.subr.bf16.mxu0 0
        %10750 = vmatpush1.bf16.msra.mxu0 %v7427
        %10751 = vmatprep.subr.bf16.mxu0 0
        %10752 = vmatpush1.bf16.msra.mxu0 %v7428
        %10753 = vmatprep.subr.bf16.mxu0 0
        %10754 = vmatpush1.bf16.msra.mxu0 %v7429
        %10755 = vmatprep.subr.bf16.mxu0 0
        %10756 = vmatpush1.bf16.msra.mxu0 %v7430
        %10757 = vmatprep.subr.bf16.mxu0 0
        %10758 = vmatpush1.bf16.msra.mxu0 %v7431
        %10759 = vmatprep.subr.bf16.mxu0 0
        %10760 = vmatpush1.bf16.msra.mxu0 %v7432
        %10761 = vmatprep.subr.bf16.mxu0 0
        %10762 = vmatpush1.bf16.msra.mxu0 %v7433
        %10763 = vmatprep.subr.bf16.mxu0 0
        %10764 = vmatpush1.bf16.msra.mxu0 %v7434
        %10765 = vmatprep.subr.bf16.mxu0 0
        %10766 = vmatpush1.bf16.msra.mxu0 %v7435
        %10767 = vmatprep.subr.bf16.mxu0 0
        %10768 = vmatpush1.bf16.msra.mxu0 %v7436
        %10769 = vmatprep.subr.bf16.mxu0 0
        %10770 = vmatpush1.bf16.msra.mxu0 %v7437
        %10771 = vmatprep.subr.bf16.mxu0 0
        %10772 = vmatpush1.bf16.msra.mxu0 %v7438
        %10773 = vmatprep.subr.bf16.mxu0 0
        %10774 = vmatpush1.bf16.msra.mxu0 %v7439
        %10775 = vmatprep.subr.bf16.mxu0 0
        %10776 = vmatpush1.bf16.msra.mxu0 %v7440
        %10777 = vmatprep.mubr.bf16.mxu0 %v405
        %10778 = vmatmul.mubr.bf16.gmra.mrb[0].mxu0 %v404
        %v10779 = vpop.f32.mrb[0].mxu0
        %v10780 = vadd.f32 %v10740, %v10779
        %v10781 = vpop.f32.mrb[0].mxu0
        %v10782 = vpop.f32.mrb[0].mxu0
        %v10783 = vpop.f32.mrb[0].mxu0
        %10784 = vdwg.mxu0
        %10785 = vmatprep.subr.bf16.mxu0 0
        %10786 = vmatpush1.bf16.msra.mxu0 %v7441
        %10787 = vmatprep.subr.bf16.mxu0 0
        %10788 = vmatpush1.bf16.msra.mxu0 %v7442
        %10789 = vmatprep.subr.bf16.mxu0 0
        %10790 = vmatpush1.bf16.msra.mxu0 %v7443
        %10791 = vmatprep.subr.bf16.mxu0 0
        %10792 = vmatpush1.bf16.msra.mxu0 %v7444
        %10793 = vmatprep.subr.bf16.mxu0 0
        %10794 = vmatpush1.bf16.msra.mxu0 %v7445
        %10795 = vmatprep.subr.bf16.mxu0 0
        %10796 = vmatpush1.bf16.msra.mxu0 %v7446
        %10797 = vmatprep.subr.bf16.mxu0 0
        %10798 = vmatpush1.bf16.msra.mxu0 %v7447
        %10799 = vmatprep.subr.bf16.mxu0 0
        %10800 = vmatpush1.bf16.msra.mxu0 %v7448
        %10801 = vmatprep.subr.bf16.mxu0 0
        %10802 = vmatpush1.bf16.msra.mxu0 %v7449
        %10803 = vmatprep.subr.bf16.mxu0 0
        %10804 = vmatpush1.bf16.msra.mxu0 %v7450
        %10805 = vmatprep.subr.bf16.mxu0 0
        %10806 = vmatpush1.bf16.msra.mxu0 %v7451
        %10807 = vmatprep.subr.bf16.mxu0 0
        %10808 = vmatpush1.bf16.msra.mxu0 %v7452
        %10809 = vmatprep.subr.bf16.mxu0 0
        %10810 = vmatpush1.bf16.msra.mxu0 %v7453
        %10811 = vmatprep.subr.bf16.mxu0 0
        %10812 = vmatpush1.bf16.msra.mxu0 %v7454
        %10813 = vmatprep.subr.bf16.mxu0 0
        %10814 = vmatpush1.bf16.msra.mxu0 %v7455
        %10815 = vmatprep.subr.bf16.mxu0 0
        %10816 = vmatpush1.bf16.msra.mxu0 %v7456
        %10817 = vmatprep.mubr.bf16.mxu0 %v407
        %10818 = vmatmul.mubr.bf16.gmra.mrb[0].mxu0 %v406
        %v10819 = vpop.f32.mrb[0].mxu0
        %v10820 = vadd.f32 %v10780, %v10819
        %v10821 = vpop.f32.mrb[0].mxu0
        %v10822 = vpop.f32.mrb[0].mxu0
        %v10823 = vpop.f32.mrb[0].mxu0
        %10824 = vdwg.mxu0
        %10825 = vmatprep.subr.bf16.mxu0 0
        %10826 = vmatpush1.bf16.msra.mxu0 %v7457
        %10827 = vmatprep.subr.bf16.mxu0 0
        %10828 = vmatpush1.bf16.msra.mxu0 %v7458
        %10829 = vmatprep.subr.bf16.mxu0 0
        %10830 = vmatpush1.bf16.msra.mxu0 %v7459
        %10831 = vmatprep.subr.bf16.mxu0 0
        %10832 = vmatpush1.bf16.msra.mxu0 %v7460
        %10833 = vmatprep.subr.bf16.mxu0 0
        %10834 = vmatpush1.bf16.msra.mxu0 %v7461
        %10835 = vmatprep.subr.bf16.mxu0 0
        %10836 = vmatpush1.bf16.msra.mxu0 %v7462
        %10837 = vmatprep.subr.bf16.mxu0 0
        %10838 = vmatpush1.bf16.msra.mxu0 %v7463
        %10839 = vmatprep.subr.bf16.mxu0 0
        %10840 = vmatpush1.bf16.msra.mxu0 %v7464
        %10841 = vmatprep.subr.bf16.mxu0 0
        %10842 = vmatpush1.bf16.msra.mxu0 %v7465
        %10843 = vmatprep.subr.bf16.mxu0 0
        %10844 = vmatpush1.bf16.msra.mxu0 %v7466
        %10845 = vmatprep.subr.bf16.mxu0 0
        %10846 = vmatpush1.bf16.msra.mxu0 %v7467
        %10847 = vmatprep.subr.bf16.mxu0 0
        %10848 = vmatpush1.bf16.msra.mxu0 %v7468
        %10849 = vmatprep.subr.bf16.mxu0 0
        %10850 = vmatpush1.bf16.msra.mxu0 %v7469
        %10851 = vmatprep.subr.bf16.mxu0 0
        %10852 = vmatpush1.bf16.msra.mxu0 %v7470
        %10853 = vmatprep.subr.bf16.mxu0 0
        %10854 = vmatpush1.bf16.msra.mxu0 %v7471
        %10855 = vmatprep.subr.bf16.mxu0 0
        %10856 = vmatpush1.bf16.msra.mxu0 %v7472
        %10857 = vmatprep.mubr.bf16.mxu0 %v409
        %10858 = vmatmul.mubr.bf16.gmra.mrb[0].mxu0 %v408
        %v10859 = vpop.f32.mrb[0].mxu0
        %v10860 = vadd.f32 %v10820, %v10859
        %v10861 = vpop.f32.mrb[0].mxu0
        %v10862 = vpop.f32.mrb[0].mxu0
        %v10863 = vpop.f32.mrb[0].mxu0
        %10864 = vdwg.mxu0
        %10865 = vmatprep.subr.bf16.mxu0 0
        %10866 = vmatpush1.bf16.msra.mxu0 %v7473
        %10867 = vmatprep.subr.bf16.mxu0 0
        %10868 = vmatpush1.bf16.msra.mxu0 %v7474
        %10869 = vmatprep.subr.bf16.mxu0 0
        %10870 = vmatpush1.bf16.msra.mxu0 %v7475
        %10871 = vmatprep.subr.bf16.mxu0 0
        %10872 = vmatpush1.bf16.msra.mxu0 %v7476
        %10873 = vmatprep.subr.bf16.mxu0 0
        %10874 = vmatpush1.bf16.msra.mxu0 %v7477
        %10875 = vmatprep.subr.bf16.mxu0 0
        %10876 = vmatpush1.bf16.msra.mxu0 %v7478
        %10877 = vmatprep.subr.bf16.mxu0 0
        %10878 = vmatpush1.bf16.msra.mxu0 %v7479
        %10879 = vmatprep.subr.bf16.mxu0 0
        %10880 = vmatpush1.bf16.msra.mxu0 %v7480
        %10881 = vmatprep.subr.bf16.mxu0 0
        %10882 = vmatpush1.bf16.msra.mxu0 %v7481
        %10883 = vmatprep.subr.bf16.mxu0 0
        %10884 = vmatpush1.bf16.msra.mxu0 %v7482
        %10885 = vmatprep.subr.bf16.mxu0 0
        %10886 = vmatpush1.bf16.msra.mxu0 %v7483
        %10887 = vmatprep.subr.bf16.mxu0 0
        %10888 = vmatpush1.bf16.msra.mxu0 %v7484
        %10889 = vmatprep.subr.bf16.mxu0 0
        %10890 = vmatpush1.bf16.msra.mxu0 %v7485
        %10891 = vmatprep.subr.bf16.mxu0 0
        %10892 = vmatpush1.bf16.msra.mxu0 %v7486
        %10893 = vmatprep.subr.bf16.mxu0 0
        %10894 = vmatpush1.bf16.msra.mxu0 %v7487
        %10895 = vmatprep.subr.bf16.mxu0 0
        %10896 = vmatpush1.bf16.msra.mxu0 %v7488
        %10897 = vmatprep.mubr.bf16.mxu0 %v411
        %10898 = vmatmul.mubr.bf16.gmra.mrb[0].mxu0 %v410
        %v10899 = vpop.f32.mrb[0].mxu0
        %v10900 = vadd.f32 %v10860, %v10899
        %v10901 = vpop.f32.mrb[0].mxu0
        %v10902 = vpop.f32.mrb[0].mxu0
        %v10903 = vpop.f32.mrb[0].mxu0
        %10904 = vdwg.mxu0
        %10905 = vmatprep.subr.bf16.mxu0 0
        %10906 = vmatpush1.bf16.msra.mxu0 %v7489
        %10907 = vmatprep.subr.bf16.mxu0 0
        %10908 = vmatpush1.bf16.msra.mxu0 %v7490
        %10909 = vmatprep.subr.bf16.mxu0 0
        %10910 = vmatpush1.bf16.msra.mxu0 %v7491
        %10911 = vmatprep.subr.bf16.mxu0 0
        %10912 = vmatpush1.bf16.msra.mxu0 %v7492
        %10913 = vmatprep.subr.bf16.mxu0 0
        %10914 = vmatpush1.bf16.msra.mxu0 %v7493
        %10915 = vmatprep.subr.bf16.mxu0 0
        %10916 = vmatpush1.bf16.msra.mxu0 %v7494
        %10917 = vmatprep.subr.bf16.mxu0 0
        %10918 = vmatpush1.bf16.msra.mxu0 %v7495
        %10919 = vmatprep.subr.bf16.mxu0 0
        %10920 = vmatpush1.bf16.msra.mxu0 %v7496
        %10921 = vmatprep.subr.bf16.mxu0 0
        %10922 = vmatpush1.bf16.msra.mxu0 %v7497
        %10923 = vmatprep.subr.bf16.mxu0 0
        %10924 = vmatpush1.bf16.msra.mxu0 %v7498
        %10925 = vmatprep.subr.bf16.mxu0 0
        %10926 = vmatpush1.bf16.msra.mxu0 %v7499
        %10927 = vmatprep.subr.bf16.mxu0 0
        %10928 = vmatpush1.bf16.msra.mxu0 %v7500
        %10929 = vmatprep.subr.bf16.mxu0 0
        %10930 = vmatpush1.bf16.msra.mxu0 %v7501
        %10931 = vmatprep.subr.bf16.mxu0 0
        %10932 = vmatpush1.bf16.msra.mxu0 %v7502
        %10933 = vmatprep.subr.bf16.mxu0 0
        %10934 = vmatpush1.bf16.msra.mxu0 %v7503
        %10935 = vmatprep.subr.bf16.mxu0 0
        %10936 = vmatpush1.bf16.msra.mxu0 %v7504
        %10937 = vmatprep.mubr.bf16.mxu0 %v413
        %10938 = vmatmul.mubr.bf16.gmra.mrb[0].mxu0 %v412
        %v10939 = vpop.f32.mrb[0].mxu0
        %v10940 = vadd.f32 %v10900, %v10939
        %v10941 = vpop.f32.mrb[0].mxu0
        %v10942 = vpop.f32.mrb[0].mxu0
        %v10943 = vpop.f32.mrb[0].mxu0
        %10944 = vdwg.mxu0
        %10945 = vmatprep.subr.bf16.mxu0 0
        %10946 = vmatpush1.bf16.msra.mxu0 %v7505
        %10947 = vmatprep.subr.bf16.mxu0 0
        %10948 = vmatpush1.bf16.msra.mxu0 %v7506
        %10949 = vmatprep.subr.bf16.mxu0 0
        %10950 = vmatpush1.bf16.msra.mxu0 %v7507
        %10951 = vmatprep.subr.bf16.mxu0 0
        %10952 = vmatpush1.bf16.msra.mxu0 %v7508
        %10953 = vmatprep.subr.bf16.mxu0 0
        %10954 = vmatpush1.bf16.msra.mxu0 %v7509
        %10955 = vmatprep.subr.bf16.mxu0 0
        %10956 = vmatpush1.bf16.msra.mxu0 %v7510
        %10957 = vmatprep.subr.bf16.mxu0 0
        %10958 = vmatpush1.bf16.msra.mxu0 %v7511
        %10959 = vmatprep.subr.bf16.mxu0 0
        %10960 = vmatpush1.bf16.msra.mxu0 %v7512
        %10961 = vmatprep.subr.bf16.mxu0 0
        %10962 = vmatpush1.bf16.msra.mxu0 %v7513
        %10963 = vmatprep.subr.bf16.mxu0 0
        %10964 = vmatpush1.bf16.msra.mxu0 %v7514
        %10965 = vmatprep.subr.bf16.mxu0 0
        %10966 = vmatpush1.bf16.msra.mxu0 %v7515
        %10967 = vmatprep.subr.bf16.mxu0 0
        %10968 = vmatpush1.bf16.msra.mxu0 %v7516
        %10969 = vmatprep.subr.bf16.mxu0 0
        %10970 = vmatpush1.bf16.msra.mxu0 %v7517
        %10971 = vmatprep.subr.bf16.mxu0 0
        %10972 = vmatpush1.bf16.msra.mxu0 %v7518
        %10973 = vmatprep.subr.bf16.mxu0 0
        %10974 = vmatpush1.bf16.msra.mxu0 %v7519
        %10975 = vmatprep.subr.bf16.mxu0 0
        %10976 = vmatpush1.bf16.msra.mxu0 %v7520
        %10977 = vmatprep.mubr.bf16.mxu0 %v415
        %10978 = vmatmul.mubr.bf16.gmra.mrb[0].mxu0 %v414
        %v10979 = vpop.f32.mrb[0].mxu0
        %v10980 = vadd.f32 %v10940, %v10979
        %v10981 = vpop.f32.mrb[0].mxu0
        %v10982 = vpop.f32.mrb[0].mxu0
        %v10983 = vpop.f32.mrb[0].mxu0
        %10984 = vdwg.mxu0
        %10985 = vmatprep.subr.bf16.mxu0 0
        %10986 = vmatpush1.bf16.msra.mxu0 %v7521
        %10987 = vmatprep.subr.bf16.mxu0 0
        %10988 = vmatpush1.bf16.msra.mxu0 %v7522
        %10989 = vmatprep.subr.bf16.mxu0 0
        %10990 = vmatpush1.bf16.msra.mxu0 %v7523
        %10991 = vmatprep.subr.bf16.mxu0 0
        %10992 = vmatpush1.bf16.msra.mxu0 %v7524
        %10993 = vmatprep.subr.bf16.mxu0 0
        %10994 = vmatpush1.bf16.msra.mxu0 %v7525
        %10995 = vmatprep.subr.bf16.mxu0 0
        %10996 = vmatpush1.bf16.msra.mxu0 %v7526
        %10997 = vmatprep.subr.bf16.mxu0 0
        %10998 = vmatpush1.bf16.msra.mxu0 %v7527
        %10999 = vmatprep.subr.bf16.mxu0 0
        %11000 = vmatpush1.bf16.msra.mxu0 %v7528
        %11001 = vmatprep.subr.bf16.mxu0 0
        %11002 = vmatpush1.bf16.msra.mxu0 %v7529
        %11003 = vmatprep.subr.bf16.mxu0 0
        %11004 = vmatpush1.bf16.msra.mxu0 %v7530
        %11005 = vmatprep.subr.bf16.mxu0 0
        %11006 = vmatpush1.bf16.msra.mxu0 %v7531
        %11007 = vmatprep.subr.bf16.mxu0 0
        %11008 = vmatpush1.bf16.msra.mxu0 %v7532
        %11009 = vmatprep.subr.bf16.mxu0 0
        %11010 = vmatpush1.bf16.msra.mxu0 %v7533
        %11011 = vmatprep.subr.bf16.mxu0 0
        %11012 = vmatpush1.bf16.msra.mxu0 %v7534
        %11013 = vmatprep.subr.bf16.mxu0 0
        %11014 = vmatpush1.bf16.msra.mxu0 %v7535
        %11015 = vmatprep.subr.bf16.mxu0 0
        %11016 = vmatpush1.bf16.msra.mxu0 %v7536
        %11017 = vmatprep.mubr.bf16.mxu0 %v417
        %11018 = vmatmul.mubr.bf16.gmra.mrb[0].mxu0 %v416
        %v11019 = vpop.f32.mrb[0].mxu0
        %v11020 = vadd.f32 %v10980, %v11019
        %v11021 = vpop.f32.mrb[0].mxu0
        %v11022 = vpop.f32.mrb[0].mxu0
        %v11023 = vpop.f32.mrb[0].mxu0
        %11024 = vdwg.mxu0
        %11025 = vmatprep.subr.bf16.mxu0 0
        %11026 = vmatpush1.bf16.msra.mxu0 %v7537
        %11027 = vmatprep.subr.bf16.mxu0 0
        %11028 = vmatpush1.bf16.msra.mxu0 %v7538
        %11029 = vmatprep.subr.bf16.mxu0 0
        %11030 = vmatpush1.bf16.msra.mxu0 %v7539
        %11031 = vmatprep.subr.bf16.mxu0 0
        %11032 = vmatpush1.bf16.msra.mxu0 %v7540
        %11033 = vmatprep.subr.bf16.mxu0 0
        %11034 = vmatpush1.bf16.msra.mxu0 %v7541
        %11035 = vmatprep.subr.bf16.mxu0 0
        %11036 = vmatpush1.bf16.msra.mxu0 %v7542
        %11037 = vmatprep.subr.bf16.mxu0 0
        %11038 = vmatpush1.bf16.msra.mxu0 %v7543
        %11039 = vmatprep.subr.bf16.mxu0 0
        %11040 = vmatpush1.bf16.msra.mxu0 %v7544
        %11041 = vmatprep.subr.bf16.mxu0 0
        %11042 = vmatpush1.bf16.msra.mxu0 %v7545
        %11043 = vmatprep.subr.bf16.mxu0 0
        %11044 = vmatpush1.bf16.msra.mxu0 %v7546
        %11045 = vmatprep.subr.bf16.mxu0 0
        %11046 = vmatpush1.bf16.msra.mxu0 %v7547
        %11047 = vmatprep.subr.bf16.mxu0 0
        %11048 = vmatpush1.bf16.msra.mxu0 %v7548
        %11049 = vmatprep.subr.bf16.mxu0 0
        %11050 = vmatpush1.bf16.msra.mxu0 %v7549
        %11051 = vmatprep.subr.bf16.mxu0 0
        %11052 = vmatpush1.bf16.msra.mxu0 %v7550
        %11053 = vmatprep.subr.bf16.mxu0 0
        %11054 = vmatpush1.bf16.msra.mxu0 %v7551
        %11055 = vmatprep.subr.bf16.mxu0 0
        %11056 = vmatpush1.bf16.msra.mxu0 %v7552
        %11057 = vmatprep.mubr.bf16.mxu0 %v419
        %11058 = vmatmul.mubr.bf16.gmra.mrb[0].mxu0 %v418
        %v11059 = vpop.f32.mrb[0].mxu0
        %v11060 = vadd.f32 %v11020, %v11059
        %v11061 = vpop.f32.mrb[0].mxu0
        %v11062 = vpop.f32.mrb[0].mxu0
        %v11063 = vpop.f32.mrb[0].mxu0
        %11064 = vdwg.mxu0
        %11065 = vmatprep.subr.bf16.mxu0 0
        %11066 = vmatpush1.bf16.msra.mxu0 %v7553
        %11067 = vmatprep.subr.bf16.mxu0 0
        %11068 = vmatpush1.bf16.msra.mxu0 %v7554
        %11069 = vmatprep.subr.bf16.mxu0 0
        %11070 = vmatpush1.bf16.msra.mxu0 %v7555
        %11071 = vmatprep.subr.bf16.mxu0 0
        %11072 = vmatpush1.bf16.msra.mxu0 %v7556
        %11073 = vmatprep.subr.bf16.mxu0 0
        %11074 = vmatpush1.bf16.msra.mxu0 %v7557
        %11075 = vmatprep.subr.bf16.mxu0 0
        %11076 = vmatpush1.bf16.msra.mxu0 %v7558
        %11077 = vmatprep.subr.bf16.mxu0 0
        %11078 = vmatpush1.bf16.msra.mxu0 %v7559
        %11079 = vmatprep.subr.bf16.mxu0 0
        %11080 = vmatpush1.bf16.msra.mxu0 %v7560
        %11081 = vmatprep.subr.bf16.mxu0 0
        %11082 = vmatpush1.bf16.msra.mxu0 %v7561
        %11083 = vmatprep.subr.bf16.mxu0 0
        %11084 = vmatpush1.bf16.msra.mxu0 %v7562
        %11085 = vmatprep.subr.bf16.mxu0 0
        %11086 = vmatpush1.bf16.msra.mxu0 %v7563
        %11087 = vmatprep.subr.bf16.mxu0 0
        %11088 = vmatpush1.bf16.msra.mxu0 %v7564
        %11089 = vmatprep.subr.bf16.mxu0 0
        %11090 = vmatpush1.bf16.msra.mxu0 %v7565
        %11091 = vmatprep.subr.bf16.mxu0 0
        %11092 = vmatpush1.bf16.msra.mxu0 %v7566
        %11093 = vmatprep.subr.bf16.mxu0 0
        %11094 = vmatpush1.bf16.msra.mxu0 %v7567
        %11095 = vmatprep.subr.bf16.mxu0 0
        %11096 = vmatpush1.bf16.msra.mxu0 %v7568
        %11097 = vmatprep.mubr.bf16.mxu0 %v421
        %11098 = vmatmul.mubr.bf16.gmra.mrb[0].mxu0 %v420
        %v11099 = vpop.f32.mrb[0].mxu0
        %v11100 = vadd.f32 %v11060, %v11099
        %v11101 = vpop.f32.mrb[0].mxu0
        %v11102 = vpop.f32.mrb[0].mxu0
        %v11103 = vpop.f32.mrb[0].mxu0
        %11104 = vdwg.mxu0
        %11105 = vmatprep.subr.bf16.mxu0 0
        %11106 = vmatpush1.bf16.msra.mxu0 %v7569
        %11107 = vmatprep.subr.bf16.mxu0 0
        %11108 = vmatpush1.bf16.msra.mxu0 %v7570
        %11109 = vmatprep.subr.bf16.mxu0 0
        %11110 = vmatpush1.bf16.msra.mxu0 %v7571
        %11111 = vmatprep.subr.bf16.mxu0 0
        %11112 = vmatpush1.bf16.msra.mxu0 %v7572
        %11113 = vmatprep.subr.bf16.mxu0 0
        %11114 = vmatpush1.bf16.msra.mxu0 %v7573
        %11115 = vmatprep.subr.bf16.mxu0 0
        %11116 = vmatpush1.bf16.msra.mxu0 %v7574
        %11117 = vmatprep.subr.bf16.mxu0 0
        %11118 = vmatpush1.bf16.msra.mxu0 %v7575
        %11119 = vmatprep.subr.bf16.mxu0 0
        %11120 = vmatpush1.bf16.msra.mxu0 %v7576
        %11121 = vmatprep.subr.bf16.mxu0 0
        %11122 = vmatpush1.bf16.msra.mxu0 %v7577
        %11123 = vmatprep.subr.bf16.mxu0 0
        %11124 = vmatpush1.bf16.msra.mxu0 %v7578
        %11125 = vmatprep.subr.bf16.mxu0 0
        %11126 = vmatpush1.bf16.msra.mxu0 %v7579
        %11127 = vmatprep.subr.bf16.mxu0 0
        %11128 = vmatpush1.bf16.msra.mxu0 %v7580
        %11129 = vmatprep.subr.bf16.mxu0 0
        %11130 = vmatpush1.bf16.msra.mxu0 %v7581
        %11131 = vmatprep.subr.bf16.mxu0 0
        %11132 = vmatpush1.bf16.msra.mxu0 %v7582
        %11133 = vmatprep.subr.bf16.mxu0 0
        %11134 = vmatpush1.bf16.msra.mxu0 %v7583
        %11135 = vmatprep.subr.bf16.mxu0 0
        %11136 = vmatpush1.bf16.msra.mxu0 %v7584
        %11137 = vmatprep.mubr.bf16.mxu0 %v423
        %11138 = vmatmul.mubr.bf16.gmra.mrb[0].mxu0 %v422
        %v11139 = vpop.f32.mrb[0].mxu0
        %v11140 = vadd.f32 %v11100, %v11139
        %v11141 = vpop.f32.mrb[0].mxu0
        %v11142 = vpop.f32.mrb[0].mxu0
        %v11143 = vpop.f32.mrb[0].mxu0
        %11144 = vdwg.mxu0
        %11145 = vmatprep.subr.bf16.mxu0 0
        %11146 = vmatpush1.bf16.msra.mxu0 %v7585
        %11147 = vmatprep.subr.bf16.mxu0 0
        %11148 = vmatpush1.bf16.msra.mxu0 %v7586
        %11149 = vmatprep.subr.bf16.mxu0 0
        %11150 = vmatpush1.bf16.msra.mxu0 %v7587
        %11151 = vmatprep.subr.bf16.mxu0 0
        %11152 = vmatpush1.bf16.msra.mxu0 %v7588
        %11153 = vmatprep.subr.bf16.mxu0 0
        %11154 = vmatpush1.bf16.msra.mxu0 %v7589
        %11155 = vmatprep.subr.bf16.mxu0 0
        %11156 = vmatpush1.bf16.msra.mxu0 %v7590
        %11157 = vmatprep.subr.bf16.mxu0 0
        %11158 = vmatpush1.bf16.msra.mxu0 %v7591
        %11159 = vmatprep.subr.bf16.mxu0 0
        %11160 = vmatpush1.bf16.msra.mxu0 %v7592
        %11161 = vmatprep.subr.bf16.mxu0 0
        %11162 = vmatpush1.bf16.msra.mxu0 %v7593
        %11163 = vmatprep.subr.bf16.mxu0 0
        %11164 = vmatpush1.bf16.msra.mxu0 %v7594
        %11165 = vmatprep.subr.bf16.mxu0 0
        %11166 = vmatpush1.bf16.msra.mxu0 %v7595
        %11167 = vmatprep.subr.bf16.mxu0 0
        %11168 = vmatpush1.bf16.msra.mxu0 %v7596
        %11169 = vmatprep.subr.bf16.mxu0 0
        %11170 = vmatpush1.bf16.msra.mxu0 %v7597
        %11171 = vmatprep.subr.bf16.mxu0 0
        %11172 = vmatpush1.bf16.msra.mxu0 %v7598
        %11173 = vmatprep.subr.bf16.mxu0 0
        %11174 = vmatpush1.bf16.msra.mxu0 %v7599
        %11175 = vmatprep.subr.bf16.mxu0 0
        %11176 = vmatpush1.bf16.msra.mxu0 %v7600
        %11177 = vmatprep.mubr.bf16.mxu0 %v425
        %11178 = vmatmul.mubr.bf16.gmra.mrb[0].mxu0 %v424
        %v11179 = vpop.f32.mrb[0].mxu0
        %v11180 = vadd.f32 %v11140, %v11179
        %v11181 = vpop.f32.mrb[0].mxu0
        %v11182 = vpop.f32.mrb[0].mxu0
        %v11183 = vpop.f32.mrb[0].mxu0
        %11184 = vdwg.mxu0
        %v11185 = vxor.u32 %v11180, 2147483648
        %v11186 = vmul.f32 %v11185, 1.442695
        %v11187 = vpow.pop %v11186
        %v11188 = vadd.f32 %v11187, 1.0
        %v11189 = vrcp.pop %v11188
        %v11190 = vmul.f32 1.0, %v11189
        %vm11191 = vcmask 261120
        %11192 = vst.msk [vmem:[%s163] sm:$0xff] %vm11191, %v11190
        %s11193 = sand.u32 %s93, 1
        %s11194 = scalar_lea.sflag [#allocation3], %s11193
        %s11195 = sand.u32 %s93, 1
        %s11196 = smul.addr %s11195, 8
        %s11197 = scalar_lea.vmem [#allocation2], %s11196
        // Predicated region
        $region33: #{feature_extractor_forward.1} parent=31 // pred_check
          %p11198 = pneg %p103
        $region34: #{feature_extractor_forward.1} parent=31 // pred_check_branch
          %11200 = sbr.rel (%p11198) target = $region36
        $region35: #{feature_extractor_forward.1} parent=31 // pred_region
          %s11202 = ssub.s32 128, 128
          %11203 = vsyncadd %s11194, %s11202
          %s11204 = smul.addr %s17, 128
          %s11205 = scalar_lea.hbm %s3, %s11204
          %s11207 = sshll.u32 %s11197, 4
          %s11208 = int_to_ptr.vmem [resolvable:$true] %s11207
          %11210 = dma.vmem_to_hbm [thread:$0]  %s11208, 128, %s11205, %s11194
        $region36: #{feature_extractor_forward.1} parent=31 // pred_fallthru
          _
      $region32: #{feature_extractor_forward.1} parent=5 // pred_fallthru
        _
      %p11211 = scmp.le.s32.totalorder 2, %s12
      // Predicated region
      $region37: #{feature_extractor_forward.1} parent=5 // pred_check
        %p11212 = pneg %p11211
      $region38: #{feature_extractor_forward.1} parent=5 // pred_check_branch
        %11214 = sbr.rel (%p11212) target = $region40
      $region39: #{feature_extractor_forward.1} parent=5 // pred_region
        %s11215 = ssub.s32 %s12, 2
        // Predicated region
        $region41: #{feature_extractor_forward.1} parent=39 // pred_check
          %p11216 = pneg %p109
        $region42: #{feature_extractor_forward.1} parent=39 // pred_check_branch
          %11218 = sbr.rel (%p11216) target = $region44
        $region43: #{feature_extractor_forward.1} parent=39 // pred_region
          %s11219 = sand.u32 %s94, 1
          %s11220 = scalar_lea.sflag [#allocation3], %s11219
          %s11221 = sand.u32 %s94, 1
          %s11222 = smul.addr %s11221, 8
          %s11223 = scalar_lea.vmem [#allocation2], %s11222
          %11224 = dma.done %s11220, 128
        $region44: #{feature_extractor_forward.1} parent=39 // pred_fallthru
          _
      $region40: #{feature_extractor_forward.1} parent=5 // pred_fallthru
        _
    $region6: #{feature_extractor_forward.1} parent=1 // loop_footer
      %s16 = sadd.s32 1, %s12
    $region7: #{feature_extractor_forward.1} parent=1 // loop_footer_branch
      %11 = sbr.rel target = $region3
    $region8: #{feature_extractor_forward.1} parent=1 // loop_exit
      _
    %11225 = vsyncpa [#allocation3], 1
    %s11226 = scalar_lea.sflag [#allocation3], 1
    %11227 = vsyncpa %s11226, 1

</llo_original>
